<compile_context>
chip_gen: v5e
topology: v5e:2x2
jax: 0.10.0
libtpu: 0.0.40
codegen_flags: <defaults>
</compile_context>

<pallas_src>
import math
import functools

import jax
import jax.numpy as jnp
from jax.experimental import pallas as pl
from jax.experimental.pallas import tpu as pltpu

DEFAULTCFG = {
    11: [64, 'M', 128, 'M', 256, 256, 'M', 512, 512, 'M', 512, 512],
    13: [64, 64, 'M', 128, 128, 'M', 256, 256, 'M', 512, 512, 'M', 512, 512],
    16: [64, 64, 'M', 128, 128, 'M', 256, 256, 256, 'M', 512, 512, 512, 'M',
         512, 512, 512],
    19: [64, 64, 'M', 128, 128, 'M', 256, 256, 256, 256, 'M', 512, 512, 512,
         512, 'M', 512, 512, 512, 512],
}

BN_EPS = 1e-5
CONV_TILE_P = 512            # pixel rows per conv / BN tile (multiple of 8)
POOL_TILE_BYTES = 4 << 20    # target f32 bytes per fused-pool input block
VMEM_LIMIT = 64 << 20        # explicit scoped-VMEM budget (v7x-safe)


def _cparams():
    return pltpu.CompilerParams(dimension_semantics=("parallel",),
                                vmem_limit_bytes=VMEM_LIMIT)


def _round_up(x, m):
    return -(-x // m) * m


def _pad_rows(x, rows):
    if x.shape[0] == rows:
        return x
    pad = [(0, rows - x.shape[0])] + [(0, 0)] * (x.ndim - 1)
    return jnp.pad(x, pad)


# --------------------------- Pallas kernels ---------------------------------

def _conv_stats_kernel(x_ref, w_ref, y_ref, s_ref):
    """Tiled 3x3 conv as one K=9*Cin matmul + per-tile BN partial stats.

    x_ref : (TP, 9*Cin) bf16 im2col tile
    w_ref : (9*Cin, Cout) bf16
    y_ref : (TP, Cout) f32 conv output tile
    s_ref : (8, Cout) f32; row0 = sum, row1 = sum of squares (rows 2..7 zero)
    """
    acc = jnp.dot(x_ref[...], w_ref[...], preferred_element_type=jnp.float32)
    y_ref[...] = acc
    cout = acc.shape[1]
    ssum = jnp.sum(acc, axis=0, keepdims=True)
    ssq = jnp.sum(acc * acc, axis=0, keepdims=True)
    s_ref[...] = jnp.concatenate(
        [ssum, ssq, jnp.zeros((6, cout), jnp.float32)], axis=0)


def _bn_relu_kernel(y_ref, sc_ref, sh_ref, o_ref):
    """Per-channel affine (gamma folded into scale) + ReLU on a (TP, C) tile."""
    o_ref[...] = jnp.maximum(y_ref[...] * sc_ref[...] + sh_ref[...],
                             0.0).astype(o_ref.dtype)


def _bn_relu_maxpool_kernel(y_ref, sc_ref, sh_ref, o_ref):
    """BN + ReLU + 2x2/stride-2 max pool.

    y_ref : (TQ, 2, Wo, 2*C) f32  (free reshape of the NHWC conv output;
            H-pairs in axis 1, W-pairs interleaved in the lane axis)
    sc/sh : (1, 2*C) f32 (per-channel scale/shift duplicated along lanes)
    o_ref : (TQ, Wo, C) bf16
    """
    c = o_ref.shape[-1]
    y = jnp.maximum(y_ref[...] * sc_ref[...] + sh_ref[...], 0.0)
    y = jnp.maximum(y[:, 0], y[:, 1])                    # H-direction max
    o_ref[...] = jnp.maximum(y[..., :c], y[..., c:]).astype(o_ref.dtype)


def _bn_relu_avgpool_kernel(y_ref, sc_ref, sh_ref, o_ref):
    """BN + ReLU + 2x2/stride-2 average pool (same layout as max variant)."""
    c = o_ref.shape[-1]
    y = jnp.maximum(y_ref[...] * sc_ref[...] + sh_ref[...], 0.0)
    y = y[:, 0] + y[:, 1]
    o_ref[...] = ((y[..., :c] + y[..., c:]) * 0.25).astype(o_ref.dtype)


def _conv1x1_kernel(x_ref, w_ref, b_ref, o_ref):
    """Classifier 1x1 conv: (TP, Cin) x (Cin, Kpad) + bias, lane-dense Kpad."""
    o_ref[...] = jnp.dot(x_ref[...], w_ref[...],
                         preferred_element_type=jnp.float32) + b_ref[...]


# --------------------------- layer wrappers ----------------------------------

def _im2col_3x3(x_nhwc):
    """(N,H,W,C) -> (N*H*W, 9*C).  Tap order (dy, dx) matches weight layout."""
    n, h, w, c = x_nhwc.shape
    xp = jnp.pad(x_nhwc, ((0, 0), (1, 1), (1, 1), (0, 0)))
    taps = [xp[:, dy:dy + h, dx:dx + w, :] for dy in range(3) for dx in range(3)]
    return jnp.concatenate(taps, axis=-1).reshape(n * h * w, 9 * c)


def conv_bn_relu(x_nhwc, w_k, gamma, beta, pool=None):
    """Fused 3x3 conv + training-mode BatchNorm2d + ReLU (+ optional 2x2 pool).

    x_nhwc : (N,H,W,Cin) bf16.   pool in {None, 'max', 'avg'}.
    Returns bf16 NHWC (pooled spatial dims if pool is not None).
    """
    n, h, w, _ = x_nhwc.shape
    k9, cout = w_k.shape
    p = n * h * w

    tile_p = min(CONV_TILE_P, p)
    n_tiles = pl.cdiv(p, tile_p)
    p_pad = n_tiles * tile_p

    # im2col in bf16 (zero-padded rows contribute 0 to the conv output and
    # therefore 0 to the batch statistics).
    cols = _pad_rows(_im2col_3x3(x_nhwc).astype(jnp.bfloat16), p_pad)

    y, stats = pl.pallas_call(
        _conv_stats_kernel,
        out_shape=(jax.ShapeDtypeStruct((p_pad, cout), jnp.float32),
                   jax.ShapeDtypeStruct((n_tiles * 8, cout), jnp.float32)),
        grid=(n_tiles,),
        in_specs=[pl.BlockSpec((tile_p, k9), lambda i: (i, 0)),
                  pl.BlockSpec((k9, cout), lambda i: (0, 0))],
        out_specs=(pl.BlockSpec((tile_p, cout), lambda i: (i, 0)),
                   pl.BlockSpec((8, cout), lambda i: (i, 0))),
        compiler_params=_cparams(),
    )(cols, w_k)

    # Finalize training-mode (biased) batch statistics; fold gamma into scale.
    st = stats.reshape(n_tiles, 8, cout)
    mean = st[:, 0, :].sum(axis=0) / p
    var = jnp.maximum(st[:, 1, :].sum(axis=0) / p - mean * mean, 0.0)
    scale = gamma * jax.lax.rsqrt(var + BN_EPS)
    shift = beta - mean * scale

    if pool is None:
        out = pl.pallas_call(
            _bn_relu_kernel,
            out_shape=jax.ShapeDtypeStruct((p_pad, cout), jnp.bfloat16),
            grid=(n_tiles,),
            in_specs=[pl.BlockSpec((tile_p, cout), lambda i: (i, 0)),
                      pl.BlockSpec((1, cout), lambda i: (0, 0)),
                      pl.BlockSpec((1, cout), lambda i: (0, 0))],
            out_specs=pl.BlockSpec((tile_p, cout), lambda i: (i, 0)),
            compiler_params=_cparams(),
        )(y, scale.reshape(1, cout), shift.reshape(1, cout))
        return out[:p].reshape(n, h, w, cout)

    # Fused BN + ReLU + 2x2/stride-2 pool epilogue.
    assert h % 2 == 0 and w % 2 == 0
    ho, wo = h // 2, w // 2
    q = n * ho
    # Free reshape: (N,H,W,C) -> (N*Ho, 2, Wo, 2*C); W-window pairs in lanes.
    y5 = y[:p].reshape(q, 2, wo, 2 * cout)
    row_bytes = 2 * wo * 2 * cout * 4
    tq = max(1, min(q, POOL_TILE_BYTES // row_bytes))
    nq = pl.cdiv(q, tq)
    y5 = _pad_rows(y5, nq * tq)
    sc2 = jnp.concatenate([scale, scale]).reshape(1, 2 * cout)
    sh2 = jnp.concatenate([shift, shift]).reshape(1, 2 * cout)
    kern = _bn_relu_maxpool_kernel if pool == 'max' else _bn_relu_avgpool_kernel
    out = pl.pallas_call(
        kern,
        out_shape=jax.ShapeDtypeStruct((nq * tq, wo, cout), jnp.bfloat16),
        grid=(nq,),
        in_specs=[pl.BlockSpec((tq, 2, wo, 2 * cout), lambda i: (i, 0, 0, 0)),
                  pl.BlockSpec((1, 2 * cout), lambda i: (0, 0)),
                  pl.BlockSpec((1, 2 * cout), lambda i: (0, 0))],
        out_specs=pl.BlockSpec((tq, wo, cout), lambda i: (i, 0, 0)),
        compiler_params=_cparams(),
    )(y5, sc2, sh2)
    return out[:q].reshape(n, ho, wo, cout)


def conv1x1_classifier(x_nhwc, w_pad, b_pad, num_classes):
    """1x1 classifier conv with lane-dense (padded) output channels."""
    n, h, w, cin = x_nhwc.shape
    kpad = w_pad.shape[1]
    p = n * h * w
    p8 = _round_up(p, 8)
    tile_p = min(512, p8)
    n_tiles = pl.cdiv(p8, tile_p)
    p_pad = n_tiles * tile_p

    x2 = _pad_rows(x_nhwc.reshape(p, cin).astype(jnp.bfloat16), p_pad)
    out = pl.pallas_call(
        _conv1x1_kernel,
        out_shape=jax.ShapeDtypeStruct((p_pad, kpad), jnp.float32),
        grid=(n_tiles,),
        in_specs=[pl.BlockSpec((tile_p, cin), lambda i: (i, 0)),
                  pl.BlockSpec((cin, kpad), lambda i: (0, 0)),
                  pl.BlockSpec((1, kpad), lambda i: (0, 0))],
        out_specs=pl.BlockSpec((tile_p, kpad), lambda i: (i, 0)),
        compiler_params=_cparams(),
    )(x2, w_pad, b_pad.reshape(1, kpad))
    return out[:p, :num_classes].reshape(n, h, w, num_classes)


# --------------------------- model --------------------------------------------

def init_params(key, cfg, in_channels=3, num_classes=1000):
    """Deterministic init matching vgg._initialize_weights distributions."""
    feats = []
    cin = in_channels
    for v in cfg:
        if v == 'M':
            continue
        key, kw = jax.random.split(key)
        std = math.sqrt(2.0 / (3 * 3 * v))            # n = kh*kw*out_channels
        w_oihw = std * jax.random.normal(kw, (v, cin, 3, 3), jnp.float32)
        # (Cout,Cin,kh,kw) -> (kh,kw,Cin,Cout) -> (9*Cin, Cout); matches im2col.
        w_k = jnp.transpose(w_oihw, (2, 3, 1, 0)).reshape(9 * cin, v)
        feats.append({'w_k': w_k.astype(jnp.bfloat16),
                      'w_oihw': w_oihw,
                      'gamma': jnp.full((v,), 0.5, jnp.float32),
                      'beta': jnp.zeros((v,), jnp.float32)})
        cin = v
    key, kc = jax.random.split(key)
    w_cls = 0.01 * jax.random.normal(kc, (num_classes, cin), jnp.float32)
    kpad = _round_up(num_classes, 128)                 # 1000 -> 1024 lane-dense
    w_pad = jnp.zeros((cin, kpad), jnp.float32).at[:, :num_classes].set(w_cls.T)
    return {'features': feats,
            'cls_w_pad': w_pad.astype(jnp.bfloat16),
            'cls_b_pad': jnp.zeros((kpad,), jnp.float32),
            'cls_w': w_cls.T,                          # (Cin, K) f32, reference
            'cls_b': jnp.zeros((num_classes,), jnp.float32)}


def vgg_forward(params, x_nchw, cfg):
    """Exactly vgg.forward: features -> AvgPool2d(2) -> conv1x1 -> flatten."""
    assert cfg[0] != 'M' and cfg[-1] != 'M'
    x = jnp.transpose(x_nchw, (0, 2, 3, 1)).astype(jnp.bfloat16)   # NCHW->NHWC
    li = 0
    for idx, v in enumerate(cfg):
        if v == 'M':
            continue                       # fused into previous conv epilogue
        if idx + 1 < len(cfg) and cfg[idx + 1] == 'M':
            pool = 'max'                   # nn.MaxPool2d(2, 2)
        elif idx == len(cfg) - 1:
            pool = 'avg'                   # forward()'s trailing nn.AvgPool2d(2)
        else:
            pool = None
        prm = params['features'][li]
        x = conv_bn_relu(x, prm['w_k'], prm['gamma'], prm['beta'], pool=pool)
        li += 1
    num_classes = params['cls_b'].shape[0]
    y = conv1x1_classifier(x, params['cls_w_pad'], params['cls_b_pad'],
                           num_classes)
    # PyTorch flattens NCHW: (N, K, Hc, Wc) -> (N, K*Hc*Wc)
    y = jnp.transpose(y, (0, 3, 1, 2))
    return y.reshape(y.shape[0], -1)


# --------------------------- pure-JAX reference -------------------------------

def _ref_conv3x3(x, w_oihw):
    w_hwio = jnp.transpose(w_oihw, (2, 3, 1, 0))
    return jax.lax.conv_general_dilated(
        x, w_hwio, window_strides=(1, 1), padding='SAME',
        dimension_numbers=('NHWC', 'HWIO', 'NHWC'))


def _ref_bn_relu(x, gamma, beta):
    mean = jnp.mean(x, axis=(0, 1, 2), keepdims=True)
    var = jnp.mean((x - mean) ** 2, axis=(0, 1, 2), keepdims=True)
    y = (x - mean) * jax.lax.rsqrt(var + BN_EPS) * gamma + beta
    return jnp.maximum(y, 0.0)


def _ref_pool(x, kind):
    if kind == 'max':
        return jax.lax.reduce_window(x, -jnp.inf, jax.lax.max,
                                     (1, 2, 2, 1), (1, 2, 2, 1), 'VALID')
    s = jax.lax.reduce_window(x, 0.0, jax.lax.add,
                              (1, 2, 2, 1), (1, 2, 2, 1), 'VALID')
    return s * 0.25


def vgg_reference(params, x_nchw, cfg):
    x = jnp.transpose(x_nchw, (0, 2, 3, 1)).astype(jnp.float32)
    li = 0
    for v in cfg:
        if v == 'M':
            x = _ref_pool(x, 'max')
        else:
            prm = params['features'][li]
            x = _ref_bn_relu(_ref_conv3x3(x, prm['w_oihw']),
                             prm['gamma'], prm['beta'])
            li += 1
    x = _ref_pool(x, 'avg')
    y = jnp.einsum('nhwc,ck->nhwk', x, params['cls_w']) + params['cls_b']
    y = jnp.transpose(y, (0, 3, 1, 2))
    return y.reshape(y.shape[0], -1)


# --------------------------- demo ----------------------------------------------

if __name__ == "__main__":
    # Scaled-down VGG (depth-11 layer layout, channels / 4) so the demo stays
    # small & fast; the code is generic over any cfg in DEFAULTCFG.
    cfg = [16, 'M', 32, 'M', 64, 64, 'M', 128, 128, 'M', 128, 128]
    num_classes = 1000                     # dataset == 'imagenet'

    key = jax.random.PRNGKey(0)
    key, kx = jax.random.split(key)
    x = jax.random.normal(kx, (2, 3, 32, 32), jnp.float32)   # NCHW like PyTorch
    params = init_params(key, cfg, in_channels=3, num_classes=num_classes)

    fwd = jax.jit(functools.partial(vgg_forward, cfg=cfg))
    y = jax.block_until_ready(fwd(params, x))

    # sanity vs. pure-JAX f32 reference (kernels use bf16 matmul inputs)
    y_ref = vgg_reference(params, x, cfg)
    assert y.shape == (2, num_classes), y.shape
    assert bool(jnp.all(jnp.isfinite(y)))
    max_diff = float(jnp.max(jnp.abs(y - y_ref)))
    assert max_diff < 3e-2, max_diff

    print("KERNEL_OK")
</pallas_src>

<mosaic_0001>
module attributes {stable_mosaic.version = 11 : i64} {
  func.func @_conv_stats_kernel(%arg0: i32, %arg1: memref<512x27xbf16, #tpu.memory_space<vmem>>, %arg2: memref<27x16xbf16, #tpu.memory_space<vmem>>, %arg3: memref<512x16xf32, #tpu.memory_space<vmem>>, %arg4: memref<8x16xf32, #tpu.memory_space<vmem>>) attributes {dimension_semantics = [#tpu.dimension_semantics<parallel>], iteration_bounds = array<i64: 4>, scalar_prefetch = 0 : i64, scratch_operands = 0 : i64, tpu.core_type = #tpu.core_type<tc>, window_params = [{transform_indices = @transform_0, window_bounds = array<i64: 512, 27>}, {pipeline_mode = #tpu.pipeline_mode<synchronous>, transform_indices = @transform_1, window_bounds = array<i64: 27, 16>}, {transform_indices = @transform_2, window_bounds = array<i64: 512, 16>}, {transform_indices = @transform_3, window_bounds = array<i64: 8, 16>}]} {
    %c0 = arith.constant 0 : index
    %c0_0 = arith.constant 0 : index
    %0 = vector.load %arg1[%c0, %c0_0] : memref<512x27xbf16, #tpu.memory_space<vmem>>, vector<512x27xbf16>
    %c0_1 = arith.constant 0 : index
    %c0_2 = arith.constant 0 : index
    %1 = vector.load %arg2[%c0_1, %c0_2] : memref<27x16xbf16, #tpu.memory_space<vmem>>, vector<27x16xbf16>
    %cst = arith.constant dense<0.000000e+00> : vector<512x16xf32>
    %2 = tpu.matmul %0, %1, %cst {dimension_numbers = #tpu.dot_dimension_numbers<[1], [0], [0], [1], [0, 0, 1, 1], [], []>} : vector<512x27xbf16>, vector<27x16xbf16>, vector<512x16xf32> -> vector<512x16xf32>
    %c0_3 = arith.constant 0 : index
    %c0_4 = arith.constant 0 : index
    %3 = vector.load %arg3[%c0_3, %c0_4] : memref<512x16xf32, #tpu.memory_space<vmem>>, vector<512x16xf32>
    tpu.vector_store %arg3[%c0_3, %c0_4], %2 {strides = array<i32>} : memref<512x16xf32, #tpu.memory_space<vmem>>, vector<512x16xf32>,
    %cst_5 = arith.constant dense<0.000000e+00> : vector<16xf32>
    %4 = vector.multi_reduction <add>, %2, %cst_5 [0] : vector<512x16xf32> to vector<16xf32>
    %5 = vector.shape_cast %4 : vector<16xf32> to vector<1x16xf32>
    %6 = arith.mulf %2, %2 : vector<512x16xf32>
    %cst_6 = arith.constant dense<0.000000e+00> : vector<16xf32>
    %7 = vector.multi_reduction <add>, %6, %cst_6 [0] : vector<512x16xf32> to vector<16xf32>
    %8 = vector.shape_cast %7 : vector<16xf32> to vector<1x16xf32>
    %cst_7 = arith.constant 0.000000e+00 : f32
    %9 = vector.broadcast %cst_7 : f32 to vector<6x16xf32>
    %10 = tpu.concatenate %5, %8, %9 in 0 : vector<1x16xf32>, vector<1x16xf32>, vector<6x16xf32> -> vector<8x16xf32>
    %c0_8 = arith.constant 0 : index
    %c0_9 = arith.constant 0 : index
    %11 = vector.load %arg4[%c0_8, %c0_9] : memref<8x16xf32, #tpu.memory_space<vmem>>, vector<8x16xf32>
    tpu.vector_store %arg4[%c0_8, %c0_9], %10 {strides = array<i32>} : memref<8x16xf32, #tpu.memory_space<vmem>>, vector<8x16xf32>,
    return
  }
  func.func @transform_0(%arg0: i32) -> (i32, i32) {
    %c0_i32 = arith.constant 0 : i32
    %c0_i32_0 = arith.constant 0 : i32
    return %arg0, %c0_i32 : i32, i32
  }
  func.func @transform_1(%arg0: i32) -> (i32, i32) {
    %c0_i32 = arith.constant 0 : i32
    %c0_i32_0 = arith.constant 0 : i32
    %c0_i32_1 = arith.constant 0 : i32
    return %c0_i32, %c0_i32_0 : i32, i32
  }
  func.func @transform_2(%arg0: i32) -> (i32, i32) {
    %c0_i32 = arith.constant 0 : i32
    %c0_i32_0 = arith.constant 0 : i32
    return %arg0, %c0_i32 : i32, i32
  }
  func.func @transform_3(%arg0: i32) -> (i32, i32) {
    %c0_i32 = arith.constant 0 : i32
    %c0_i32_0 = arith.constant 0 : i32
    return %arg0, %c0_i32 : i32, i32
  }
}

module attributes {stable_mosaic.version = 11 : i64} {
  func.func @_bn_relu_maxpool_kernel(%arg0: i32, %arg1: memref<32x2x16x32xf32, #tpu.memory_space<vmem>>, %arg2: memref<1x32xf32, #tpu.memory_space<vmem>>, %arg3: memref<1x32xf32, #tpu.memory_space<vmem>>, %arg4: memref<32x16x16xbf16, #tpu.memory_space<vmem>>) attributes {dimension_semantics = [#tpu.dimension_semantics<parallel>], iteration_bounds = array<i64: 1>, scalar_prefetch = 0 : i64, scratch_operands = 0 : i64, tpu.core_type = #tpu.core_type<tc>, window_params = [{transform_indices = @transform_0, window_bounds = array<i64: 32, 2, 16, 32>}, {pipeline_mode = #tpu.pipeline_mode<synchronous>, transform_indices = @transform_1, window_bounds = array<i64: 1, 32>}, {pipeline_mode = #tpu.pipeline_mode<synchronous>, transform_indices = @transform_2, window_bounds = array<i64: 1, 32>}, {transform_indices = @transform_3, window_bounds = array<i64: 32, 16, 16>}]} {
    %c0 = arith.constant 0 : index
    %c0_0 = arith.constant 0 : index
    %c0_1 = arith.constant 0 : index
    %c0_2 = arith.constant 0 : index
    %0 = vector.load %arg1[%c0, %c0_0, %c0_1, %c0_2] : memref<32x2x16x32xf32, #tpu.memory_space<vmem>>, vector<32x2x16x32xf32>
    %c0_3 = arith.constant 0 : index
    %c0_4 = arith.constant 0 : index
    %1 = vector.load %arg2[%c0_3, %c0_4] : memref<1x32xf32, #tpu.memory_space<vmem>>, vector<1x32xf32>
    %2 = vector.shape_cast %1 : vector<1x32xf32> to vector<1x1x1x32xf32>
    %3 = vector.broadcast %2 : vector<1x1x1x32xf32> to vector<32x2x16x32xf32>
    %4 = arith.mulf %0, %3 : vector<32x2x16x32xf32>
    %c0_5 = arith.constant 0 : index
    %c0_6 = arith.constant 0 : index
    %5 = vector.load %arg3[%c0_5, %c0_6] : memref<1x32xf32, #tpu.memory_space<vmem>>, vector<1x32xf32>
    %6 = vector.shape_cast %5 : vector<1x32xf32> to vector<1x1x1x32xf32>
    %7 = vector.broadcast %6 : vector<1x1x1x32xf32> to vector<32x2x16x32xf32>
    %8 = arith.addf %4, %7 : vector<32x2x16x32xf32>
    %cst = arith.constant 0.000000e+00 : f32
    %9 = vector.broadcast %cst : f32 to vector<32x2x16x32xf32>
    %10 = arith.maximumf %8, %9 : vector<32x2x16x32xf32>
    %11 = vector.extract_strided_slice %10 {offsets = [0, 0, 0, 0], sizes = [32, 1, 16, 32], strides = [1, 1, 1, 1]} : vector<32x2x16x32xf32> to vector<32x1x16x32xf32>
    %12 = vector.shape_cast %11 : vector<32x1x16x32xf32> to vector<32x16x32xf32>
    %13 = vector.extract_strided_slice %10 {offsets = [0, 1, 0, 0], sizes = [32, 1, 16, 32], strides = [1, 1, 1, 1]} : vector<32x2x16x32xf32> to vector<32x1x16x32xf32>
    %14 = vector.shape_cast %13 : vector<32x1x16x32xf32> to vector<32x16x32xf32>
    %15 = arith.maximumf %12, %14 : vector<32x16x32xf32>
    %16 = vector.extract_strided_slice %15 {offsets = [0, 0, 0], sizes = [32, 16, 16], strides = [1, 1, 1]} : vector<32x16x32xf32> to vector<32x16x16xf32>
    %17 = vector.extract_strided_slice %15 {offsets = [0, 0, 16], sizes = [32, 16, 16], strides = [1, 1, 1]} : vector<32x16x32xf32> to vector<32x16x16xf32>
    %18 = arith.maximumf %16, %17 : vector<32x16x16xf32>
    %19 = arith.truncf %18 : vector<32x16x16xf32> to vector<32x16x16xbf16>
    %c0_7 = arith.constant 0 : index
    %c0_8 = arith.constant 0 : index
    %c0_9 = arith.constant 0 : index
    %20 = vector.load %arg4[%c0_7, %c0_8, %c0_9] : memref<32x16x16xbf16, #tpu.memory_space<vmem>>, vector<32x16x16xbf16>
    tpu.vector_store %arg4[%c0_7, %c0_8, %c0_9], %19 {strides = array<i32>} : memref<32x16x16xbf16, #tpu.memory_space<vmem>>, vector<32x16x16xbf16>,
    return
  }
  func.func @transform_0(%arg0: i32) -> (i32, i32, i32, i32) {
    %c0_i32 = arith.constant 0 : i32
    %c0_i32_0 = arith.constant 0 : i32
    %c0_i32_1 = arith.constant 0 : i32
    %c0_i32_2 = arith.constant 0 : i32
    return %arg0, %c0_i32, %c0_i32_0, %c0_i32_1 : i32, i32, i32, i32
  }
  func.func @transform_1(%arg0: i32) -> (i32, i32) {
    %c0_i32 = arith.constant 0 : i32
    %c0_i32_0 = arith.constant 0 : i32
    %c0_i32_1 = arith.constant 0 : i32
    return %c0_i32, %c0_i32_0 : i32, i32
  }
  func.func @transform_2(%arg0: i32) -> (i32, i32) {
    %c0_i32 = arith.constant 0 : i32
    %c0_i32_0 = arith.constant 0 : i32
    %c0_i32_1 = arith.constant 0 : i32
    return %c0_i32, %c0_i32_0 : i32, i32
  }
  func.func @transform_3(%arg0: i32) -> (i32, i32, i32) {
    %c0_i32 = arith.constant 0 : i32
    %c0_i32_0 = arith.constant 0 : i32
    %c0_i32_1 = arith.constant 0 : i32
    return %arg0, %c0_i32, %c0_i32_0 : i32, i32, i32
  }
}

module attributes {stable_mosaic.version = 11 : i64} {
  func.func @_conv_stats_kernel(%arg0: i32, %arg1: memref<512x144xbf16, #tpu.memory_space<vmem>>, %arg2: memref<144x32xbf16, #tpu.memory_space<vmem>>, %arg3: memref<512x32xf32, #tpu.memory_space<vmem>>, %arg4: memref<8x32xf32, #tpu.memory_space<vmem>>) attributes {dimension_semantics = [#tpu.dimension_semantics<parallel>], iteration_bounds = array<i64: 1>, scalar_prefetch = 0 : i64, scratch_operands = 0 : i64, tpu.core_type = #tpu.core_type<tc>, window_params = [{transform_indices = @transform_0, window_bounds = array<i64: 512, 144>}, {pipeline_mode = #tpu.pipeline_mode<synchronous>, transform_indices = @transform_1, window_bounds = array<i64: 144, 32>}, {transform_indices = @transform_2, window_bounds = array<i64: 512, 32>}, {transform_indices = @transform_3, window_bounds = array<i64: 8, 32>}]} {
    %c0 = arith.constant 0 : index
    %c0_0 = arith.constant 0 : index
    %0 = vector.load %arg1[%c0, %c0_0] : memref<512x144xbf16, #tpu.memory_space<vmem>>, vector<512x144xbf16>
    %c0_1 = arith.constant 0 : index
    %c0_2 = arith.constant 0 : index
    %1 = vector.load %arg2[%c0_1, %c0_2] : memref<144x32xbf16, #tpu.memory_space<vmem>>, vector<144x32xbf16>
    %cst = arith.constant dense<0.000000e+00> : vector<512x32xf32>
    %2 = tpu.matmul %0, %1, %cst {dimension_numbers = #tpu.dot_dimension_numbers<[1], [0], [0], [1], [0, 0, 1, 1], [], []>} : vector<512x144xbf16>, vector<144x32xbf16>, vector<512x32xf32> -> vector<512x32xf32>
    %c0_3 = arith.constant 0 : index
    %c0_4 = arith.constant 0 : index
    %3 = vector.load %arg3[%c0_3, %c0_4] : memref<512x32xf32, #tpu.memory_space<vmem>>, vector<512x32xf32>
    tpu.vector_store %arg3[%c0_3, %c0_4], %2 {strides = array<i32>} : memref<512x32xf32, #tpu.memory_space<vmem>>, vector<512x32xf32>,
    %cst_5 = arith.constant dense<0.000000e+00> : vector<32xf32>
    %4 = vector.multi_reduction <add>, %2, %cst_5 [0] : vector<512x32xf32> to vector<32xf32>
    %5 = vector.shape_cast %4 : vector<32xf32> to vector<1x32xf32>
    %6 = arith.mulf %2, %2 : vector<512x32xf32>
    %cst_6 = arith.constant dense<0.000000e+00> : vector<32xf32>
    %7 = vector.multi_reduction <add>, %6, %cst_6 [0] : vector<512x32xf32> to vector<32xf32>
    %8 = vector.shape_cast %7 : vector<32xf32> to vector<1x32xf32>
    %cst_7 = arith.constant 0.000000e+00 : f32
    %9 = vector.broadcast %cst_7 : f32 to vector<6x32xf32>
    %10 = tpu.concatenate %5, %8, %9 in 0 : vector<1x32xf32>, vector<1x32xf32>, vector<6x32xf32> -> vector<8x32xf32>
    %c0_8 = arith.constant 0 : index
    %c0_9 = arith.constant 0 : index
    %11 = vector.load %arg4[%c0_8, %c0_9] : memref<8x32xf32, #tpu.memory_space<vmem>>, vector<8x32xf32>
    tpu.vector_store %arg4[%c0_8, %c0_9], %10 {strides = array<i32>} : memref<8x32xf32, #tpu.memory_space<vmem>>, vector<8x32xf32>,
    return
  }
  func.func @transform_0(%arg0: i32) -> (i32, i32) {
    %c0_i32 = arith.constant 0 : i32
    %c0_i32_0 = arith.constant 0 : i32
    return %arg0, %c0_i32 : i32, i32
  }
  func.func @transform_1(%arg0: i32) -> (i32, i32) {
    %c0_i32 = arith.constant 0 : i32
    %c0_i32_0 = arith.constant 0 : i32
    %c0_i32_1 = arith.constant 0 : i32
    return %c0_i32, %c0_i32_0 : i32, i32
  }
  func.func @transform_2(%arg0: i32) -> (i32, i32) {
    %c0_i32 = arith.constant 0 : i32
    %c0_i32_0 = arith.constant 0 : i32
    return %arg0, %c0_i32 : i32, i32
  }
  func.func @transform_3(%arg0: i32) -> (i32, i32) {
    %c0_i32 = arith.constant 0 : i32
    %c0_i32_0 = arith.constant 0 : i32
    return %arg0, %c0_i32 : i32, i32
  }
}

module attributes {stable_mosaic.version = 11 : i64} {
  func.func @_bn_relu_maxpool_kernel(%arg0: i32, %arg1: memref<16x2x8x64xf32, #tpu.memory_space<vmem>>, %arg2: memref<1x64xf32, #tpu.memory_space<vmem>>, %arg3: memref<1x64xf32, #tpu.memory_space<vmem>>, %arg4: memref<16x8x32xbf16, #tpu.memory_space<vmem>>) attributes {dimension_semantics = [#tpu.dimension_semantics<parallel>], iteration_bounds = array<i64: 1>, scalar_prefetch = 0 : i64, scratch_operands = 0 : i64, tpu.core_type = #tpu.core_type<tc>, window_params = [{transform_indices = @transform_0, window_bounds = array<i64: 16, 2, 8, 64>}, {pipeline_mode = #tpu.pipeline_mode<synchronous>, transform_indices = @transform_1, window_bounds = array<i64: 1, 64>}, {pipeline_mode = #tpu.pipeline_mode<synchronous>, transform_indices = @transform_2, window_bounds = array<i64: 1, 64>}, {transform_indices = @transform_3, window_bounds = array<i64: 16, 8, 32>}]} {
    %c0 = arith.constant 0 : index
    %c0_0 = arith.constant 0 : index
    %c0_1 = arith.constant 0 : index
    %c0_2 = arith.constant 0 : index
    %0 = vector.load %arg1[%c0, %c0_0, %c0_1, %c0_2] : memref<16x2x8x64xf32, #tpu.memory_space<vmem>>, vector<16x2x8x64xf32>
    %c0_3 = arith.constant 0 : index
    %c0_4 = arith.constant 0 : index
    %1 = vector.load %arg2[%c0_3, %c0_4] : memref<1x64xf32, #tpu.memory_space<vmem>>, vector<1x64xf32>
    %2 = vector.shape_cast %1 : vector<1x64xf32> to vector<1x1x1x64xf32>
    %3 = vector.broadcast %2 : vector<1x1x1x64xf32> to vector<16x2x8x64xf32>
    %4 = arith.mulf %0, %3 : vector<16x2x8x64xf32>
    %c0_5 = arith.constant 0 : index
    %c0_6 = arith.constant 0 : index
    %5 = vector.load %arg3[%c0_5, %c0_6] : memref<1x64xf32, #tpu.memory_space<vmem>>, vector<1x64xf32>
    %6 = vector.shape_cast %5 : vector<1x64xf32> to vector<1x1x1x64xf32>
    %7 = vector.broadcast %6 : vector<1x1x1x64xf32> to vector<16x2x8x64xf32>
    %8 = arith.addf %4, %7 : vector<16x2x8x64xf32>
    %cst = arith.constant 0.000000e+00 : f32
    %9 = vector.broadcast %cst : f32 to vector<16x2x8x64xf32>
    %10 = arith.maximumf %8, %9 : vector<16x2x8x64xf32>
    %11 = vector.extract_strided_slice %10 {offsets = [0, 0, 0, 0], sizes = [16, 1, 8, 64], strides = [1, 1, 1, 1]} : vector<16x2x8x64xf32> to vector<16x1x8x64xf32>
    %12 = vector.shape_cast %11 : vector<16x1x8x64xf32> to vector<16x8x64xf32>
    %13 = vector.extract_strided_slice %10 {offsets = [0, 1, 0, 0], sizes = [16, 1, 8, 64], strides = [1, 1, 1, 1]} : vector<16x2x8x64xf32> to vector<16x1x8x64xf32>
    %14 = vector.shape_cast %13 : vector<16x1x8x64xf32> to vector<16x8x64xf32>
    %15 = arith.maximumf %12, %14 : vector<16x8x64xf32>
    %16 = vector.extract_strided_slice %15 {offsets = [0, 0, 0], sizes = [16, 8, 32], strides = [1, 1, 1]} : vector<16x8x64xf32> to vector<16x8x32xf32>
    %17 = vector.extract_strided_slice %15 {offsets = [0, 0, 32], sizes = [16, 8, 32], strides = [1, 1, 1]} : vector<16x8x64xf32> to vector<16x8x32xf32>
    %18 = arith.maximumf %16, %17 : vector<16x8x32xf32>
    %19 = arith.truncf %18 : vector<16x8x32xf32> to vector<16x8x32xbf16>
    %c0_7 = arith.constant 0 : index
    %c0_8 = arith.constant 0 : index
    %c0_9 = arith.constant 0 : index
    %20 = vector.load %arg4[%c0_7, %c0_8, %c0_9] : memref<16x8x32xbf16, #tpu.memory_space<vmem>>, vector<16x8x32xbf16>
    tpu.vector_store %arg4[%c0_7, %c0_8, %c0_9], %19 {strides = array<i32>} : memref<16x8x32xbf16, #tpu.memory_space<vmem>>, vector<16x8x32xbf16>,
    return
  }
  func.func @transform_0(%arg0: i32) -> (i32, i32, i32, i32) {
    %c0_i32 = arith.constant 0 : i32
    %c0_i32_0 = arith.constant 0 : i32
    %c0_i32_1 = arith.constant 0 : i32
    %c0_i32_2 = arith.constant 0 : i32
    return %arg0, %c0_i32, %c0_i32_0, %c0_i32_1 : i32, i32, i32, i32
  }
  func.func @transform_1(%arg0: i32) -> (i32, i32) {
    %c0_i32 = arith.constant 0 : i32
    %c0_i32_0 = arith.constant 0 : i32
    %c0_i32_1 = arith.constant 0 : i32
    return %c0_i32, %c0_i32_0 : i32, i32
  }
  func.func @transform_2(%arg0: i32) -> (i32, i32) {
    %c0_i32 = arith.constant 0 : i32
    %c0_i32_0 = arith.constant 0 : i32
    %c0_i32_1 = arith.constant 0 : i32
    return %c0_i32, %c0_i32_0 : i32, i32
  }
  func.func @transform_3(%arg0: i32) -> (i32, i32, i32) {
    %c0_i32 = arith.constant 0 : i32
    %c0_i32_0 = arith.constant 0 : i32
    %c0_i32_1 = arith.constant 0 : i32
    return %arg0, %c0_i32, %c0_i32_0 : i32, i32, i32
  }
}

module attributes {stable_mosaic.version = 11 : i64} {
  func.func @_conv_stats_kernel(%arg0: i32, %arg1: memref<128x288xbf16, #tpu.memory_space<vmem>>, %arg2: memref<288x64xbf16, #tpu.memory_space<vmem>>, %arg3: memref<128x64xf32, #tpu.memory_space<vmem>>, %arg4: memref<8x64xf32, #tpu.memory_space<vmem>>) attributes {dimension_semantics = [#tpu.dimension_semantics<parallel>], iteration_bounds = array<i64: 1>, scalar_prefetch = 0 : i64, scratch_operands = 0 : i64, tpu.core_type = #tpu.core_type<tc>, window_params = [{transform_indices = @transform_0, window_bounds = array<i64: 128, 288>}, {pipeline_mode = #tpu.pipeline_mode<synchronous>, transform_indices = @transform_1, window_bounds = array<i64: 288, 64>}, {transform_indices = @transform_2, window_bounds = array<i64: 128, 64>}, {transform_indices = @transform_3, window_bounds = array<i64: 8, 64>}]} {
    %c0 = arith.constant 0 : index
    %c0_0 = arith.constant 0 : index
    %0 = vector.load %arg1[%c0, %c0_0] : memref<128x288xbf16, #tpu.memory_space<vmem>>, vector<128x288xbf16>
    %c0_1 = arith.constant 0 : index
    %c0_2 = arith.constant 0 : index
    %1 = vector.load %arg2[%c0_1, %c0_2] : memref<288x64xbf16, #tpu.memory_space<vmem>>, vector<288x64xbf16>
    %cst = arith.constant dense<0.000000e+00> : vector<128x64xf32>
    %2 = tpu.matmul %0, %1, %cst {dimension_numbers = #tpu.dot_dimension_numbers<[1], [0], [0], [1], [0, 0, 1, 1], [], []>} : vector<128x288xbf16>, vector<288x64xbf16>, vector<128x64xf32> -> vector<128x64xf32>
    %c0_3 = arith.constant 0 : index
    %c0_4 = arith.constant 0 : index
    %3 = vector.load %arg3[%c0_3, %c0_4] : memref<128x64xf32, #tpu.memory_space<vmem>>, vector<128x64xf32>
    tpu.vector_store %arg3[%c0_3, %c0_4], %2 {strides = array<i32>} : memref<128x64xf32, #tpu.memory_space<vmem>>, vector<128x64xf32>,
    %cst_5 = arith.constant dense<0.000000e+00> : vector<64xf32>
    %4 = vector.multi_reduction <add>, %2, %cst_5 [0] : vector<128x64xf32> to vector<64xf32>
    %5 = vector.shape_cast %4 : vector<64xf32> to vector<1x64xf32>
    %6 = arith.mulf %2, %2 : vector<128x64xf32>
    %cst_6 = arith.constant dense<0.000000e+00> : vector<64xf32>
    %7 = vector.multi_reduction <add>, %6, %cst_6 [0] : vector<128x64xf32> to vector<64xf32>
    %8 = vector.shape_cast %7 : vector<64xf32> to vector<1x64xf32>
    %cst_7 = arith.constant 0.000000e+00 : f32
    %9 = vector.broadcast %cst_7 : f32 to vector<6x64xf32>
    %10 = tpu.concatenate %5, %8, %9 in 0 : vector<1x64xf32>, vector<1x64xf32>, vector<6x64xf32> -> vector<8x64xf32>
    %c0_8 = arith.constant 0 : index
    %c0_9 = arith.constant 0 : index
    %11 = vector.load %arg4[%c0_8, %c0_9] : memref<8x64xf32, #tpu.memory_space<vmem>>, vector<8x64xf32>
    tpu.vector_store %arg4[%c0_8, %c0_9], %10 {strides = array<i32>} : memref<8x64xf32, #tpu.memory_space<vmem>>, vector<8x64xf32>,
    return
  }
  func.func @transform_0(%arg0: i32) -> (i32, i32) {
    %c0_i32 = arith.constant 0 : i32
    %c0_i32_0 = arith.constant 0 : i32
    return %arg0, %c0_i32 : i32, i32
  }
  func.func @transform_1(%arg0: i32) -> (i32, i32) {
    %c0_i32 = arith.constant 0 : i32
    %c0_i32_0 = arith.constant 0 : i32
    %c0_i32_1 = arith.constant 0 : i32
    return %c0_i32, %c0_i32_0 : i32, i32
  }
  func.func @transform_2(%arg0: i32) -> (i32, i32) {
    %c0_i32 = arith.constant 0 : i32
    %c0_i32_0 = arith.constant 0 : i32
    return %arg0, %c0_i32 : i32, i32
  }
  func.func @transform_3(%arg0: i32) -> (i32, i32) {
    %c0_i32 = arith.constant 0 : i32
    %c0_i32_0 = arith.constant 0 : i32
    return %arg0, %c0_i32 : i32, i32
  }
}

module attributes {stable_mosaic.version = 11 : i64} {
  func.func @_bn_relu_kernel(%arg0: i32, %arg1: memref<128x64xf32, #tpu.memory_space<vmem>>, %arg2: memref<1x64xf32, #tpu.memory_space<vmem>>, %arg3: memref<1x64xf32, #tpu.memory_space<vmem>>, %arg4: memref<128x64xbf16, #tpu.memory_space<vmem>>) attributes {dimension_semantics = [#tpu.dimension_semantics<parallel>], iteration_bounds = array<i64: 1>, scalar_prefetch = 0 : i64, scratch_operands = 0 : i64, tpu.core_type = #tpu.core_type<tc>, window_params = [{transform_indices = @transform_0, window_bounds = array<i64: 128, 64>}, {pipeline_mode = #tpu.pipeline_mode<synchronous>, transform_indices = @transform_1, window_bounds = array<i64: 1, 64>}, {pipeline_mode = #tpu.pipeline_mode<synchronous>, transform_indices = @transform_2, window_bounds = array<i64: 1, 64>}, {transform_indices = @transform_3, window_bounds = array<i64: 128, 64>}]} {
    %c0 = arith.constant 0 : index
    %c0_0 = arith.constant 0 : index
    %0 = vector.load %arg1[%c0, %c0_0] : memref<128x64xf32, #tpu.memory_space<vmem>>, vector<128x64xf32>
    %c0_1 = arith.constant 0 : index
    %c0_2 = arith.constant 0 : index
    %1 = vector.load %arg2[%c0_1, %c0_2] : memref<1x64xf32, #tpu.memory_space<vmem>>, vector<1x64xf32>
    %2 = vector.broadcast %1 : vector<1x64xf32> to vector<128x64xf32>
    %3 = arith.mulf %0, %2 : vector<128x64xf32>
    %c0_3 = arith.constant 0 : index
    %c0_4 = arith.constant 0 : index
    %4 = vector.load %arg3[%c0_3, %c0_4] : memref<1x64xf32, #tpu.memory_space<vmem>>, vector<1x64xf32>
    %5 = vector.broadcast %4 : vector<1x64xf32> to vector<128x64xf32>
    %6 = arith.addf %3, %5 : vector<128x64xf32>
    %cst = arith.constant 0.000000e+00 : f32
    %7 = vector.broadcast %cst : f32 to vector<128x64xf32>
    %8 = arith.maximumf %6, %7 : vector<128x64xf32>
    %9 = arith.truncf %8 : vector<128x64xf32> to vector<128x64xbf16>
    %c0_5 = arith.constant 0 : index
    %c0_6 = arith.constant 0 : index
    %10 = vector.load %arg4[%c0_5, %c0_6] : memref<128x64xbf16, #tpu.memory_space<vmem>>, vector<128x64xbf16>
    tpu.vector_store %arg4[%c0_5, %c0_6], %9 {strides = array<i32>} : memref<128x64xbf16, #tpu.memory_space<vmem>>, vector<128x64xbf16>,
    return
  }
  func.func @transform_0(%arg0: i32) -> (i32, i32) {
    %c0_i32 = arith.constant 0 : i32
    %c0_i32_0 = arith.constant 0 : i32
    return %arg0, %c0_i32 : i32, i32
  }
  func.func @transform_1(%arg0: i32) -> (i32, i32) {
    %c0_i32 = arith.constant 0 : i32
    %c0_i32_0 = arith.constant 0 : i32
    %c0_i32_1 = arith.constant 0 : i32
    return %c0_i32, %c0_i32_0 : i32, i32
  }
  func.func @transform_2(%arg0: i32) -> (i32, i32) {
    %c0_i32 = arith.constant 0 : i32
    %c0_i32_0 = arith.constant 0 : i32
    %c0_i32_1 = arith.constant 0 : i32
    return %c0_i32, %c0_i32_0 : i32, i32
  }
  func.func @transform_3(%arg0: i32) -> (i32, i32) {
    %c0_i32 = arith.constant 0 : i32
    %c0_i32_0 = arith.constant 0 : i32
    return %arg0, %c0_i32 : i32, i32
  }
}

module attributes {stable_mosaic.version = 11 : i64} {
  func.func @_conv_stats_kernel(%arg0: i32, %arg1: memref<128x576xbf16, #tpu.memory_space<vmem>>, %arg2: memref<576x64xbf16, #tpu.memory_space<vmem>>, %arg3: memref<128x64xf32, #tpu.memory_space<vmem>>, %arg4: memref<8x64xf32, #tpu.memory_space<vmem>>) attributes {dimension_semantics = [#tpu.dimension_semantics<parallel>], iteration_bounds = array<i64: 1>, scalar_prefetch = 0 : i64, scratch_operands = 0 : i64, tpu.core_type = #tpu.core_type<tc>, window_params = [{transform_indices = @transform_0, window_bounds = array<i64: 128, 576>}, {pipeline_mode = #tpu.pipeline_mode<synchronous>, transform_indices = @transform_1, window_bounds = array<i64: 576, 64>}, {transform_indices = @transform_2, window_bounds = array<i64: 128, 64>}, {transform_indices = @transform_3, window_bounds = array<i64: 8, 64>}]} {
    %c0 = arith.constant 0 : index
    %c0_0 = arith.constant 0 : index
    %0 = vector.load %arg1[%c0, %c0_0] : memref<128x576xbf16, #tpu.memory_space<vmem>>, vector<128x576xbf16>
    %c0_1 = arith.constant 0 : index
    %c0_2 = arith.constant 0 : index
    %1 = vector.load %arg2[%c0_1, %c0_2] : memref<576x64xbf16, #tpu.memory_space<vmem>>, vector<576x64xbf16>
    %cst = arith.constant dense<0.000000e+00> : vector<128x64xf32>
    %2 = tpu.matmul %0, %1, %cst {dimension_numbers = #tpu.dot_dimension_numbers<[1], [0], [0], [1], [0, 0, 1, 1], [], []>} : vector<128x576xbf16>, vector<576x64xbf16>, vector<128x64xf32> -> vector<128x64xf32>
    %c0_3 = arith.constant 0 : index
    %c0_4 = arith.constant 0 : index
    %3 = vector.load %arg3[%c0_3, %c0_4] : memref<128x64xf32, #tpu.memory_space<vmem>>, vector<128x64xf32>
    tpu.vector_store %arg3[%c0_3, %c0_4], %2 {strides = array<i32>} : memref<128x64xf32, #tpu.memory_space<vmem>>, vector<128x64xf32>,
    %cst_5 = arith.constant dense<0.000000e+00> : vector<64xf32>
    %4 = vector.multi_reduction <add>, %2, %cst_5 [0] : vector<128x64xf32> to vector<64xf32>
    %5 = vector.shape_cast %4 : vector<64xf32> to vector<1x64xf32>
    %6 = arith.mulf %2, %2 : vector<128x64xf32>
    %cst_6 = arith.constant dense<0.000000e+00> : vector<64xf32>
    %7 = vector.multi_reduction <add>, %6, %cst_6 [0] : vector<128x64xf32> to vector<64xf32>
    %8 = vector.shape_cast %7 : vector<64xf32> to vector<1x64xf32>
    %cst_7 = arith.constant 0.000000e+00 : f32
    %9 = vector.broadcast %cst_7 : f32 to vector<6x64xf32>
    %10 = tpu.concatenate %5, %8, %9 in 0 : vector<1x64xf32>, vector<1x64xf32>, vector<6x64xf32> -> vector<8x64xf32>
    %c0_8 = arith.constant 0 : index
    %c0_9 = arith.constant 0 : index
    %11 = vector.load %arg4[%c0_8, %c0_9] : memref<8x64xf32, #tpu.memory_space<vmem>>, vector<8x64xf32>
    tpu.vector_store %arg4[%c0_8, %c0_9], %10 {strides = array<i32>} : memref<8x64xf32, #tpu.memory_space<vmem>>, vector<8x64xf32>,
    return
  }
  func.func @transform_0(%arg0: i32) -> (i32, i32) {
    %c0_i32 = arith.constant 0 : i32
    %c0_i32_0 = arith.constant 0 : i32
    return %arg0, %c0_i32 : i32, i32
  }
  func.func @transform_1(%arg0: i32) -> (i32, i32) {
    %c0_i32 = arith.constant 0 : i32
    %c0_i32_0 = arith.constant 0 : i32
    %c0_i32_1 = arith.constant 0 : i32
    return %c0_i32, %c0_i32_0 : i32, i32
  }
  func.func @transform_2(%arg0: i32) -> (i32, i32) {
    %c0_i32 = arith.constant 0 : i32
    %c0_i32_0 = arith.constant 0 : i32
    return %arg0, %c0_i32 : i32, i32
  }
  func.func @transform_3(%arg0: i32) -> (i32, i32) {
    %c0_i32 = arith.constant 0 : i32
    %c0_i32_0 = arith.constant 0 : i32
    return %arg0, %c0_i32 : i32, i32
  }
}

module attributes {stable_mosaic.version = 11 : i64} {
  func.func @_bn_relu_maxpool_kernel(%arg0: i32, %arg1: memref<8x2x4x128xf32, #tpu.memory_space<vmem>>, %arg2: memref<1x128xf32, #tpu.memory_space<vmem>>, %arg3: memref<1x128xf32, #tpu.memory_space<vmem>>, %arg4: memref<8x4x64xbf16, #tpu.memory_space<vmem>>) attributes {dimension_semantics = [#tpu.dimension_semantics<parallel>], iteration_bounds = array<i64: 1>, scalar_prefetch = 0 : i64, scratch_operands = 0 : i64, tpu.core_type = #tpu.core_type<tc>, window_params = [{transform_indices = @transform_0, window_bounds = array<i64: 8, 2, 4, 128>}, {pipeline_mode = #tpu.pipeline_mode<synchronous>, transform_indices = @transform_1, window_bounds = array<i64: 1, 128>}, {pipeline_mode = #tpu.pipeline_mode<synchronous>, transform_indices = @transform_2, window_bounds = array<i64: 1, 128>}, {transform_indices = @transform_3, window_bounds = array<i64: 8, 4, 64>}]} {
    %c0 = arith.constant 0 : index
    %c0_0 = arith.constant 0 : index
    %c0_1 = arith.constant 0 : index
    %c0_2 = arith.constant 0 : index
    %0 = vector.load %arg1[%c0, %c0_0, %c0_1, %c0_2] : memref<8x2x4x128xf32, #tpu.memory_space<vmem>>, vector<8x2x4x128xf32>
    %c0_3 = arith.constant 0 : index
    %c0_4 = arith.constant 0 : index
    %1 = vector.load %arg2[%c0_3, %c0_4] : memref<1x128xf32, #tpu.memory_space<vmem>>, vector<1x128xf32>
    %2 = vector.shape_cast %1 : vector<1x128xf32> to vector<1x1x1x128xf32>
    %3 = vector.broadcast %2 : vector<1x1x1x128xf32> to vector<8x2x4x128xf32>
    %4 = arith.mulf %0, %3 : vector<8x2x4x128xf32>
    %c0_5 = arith.constant 0 : index
    %c0_6 = arith.constant 0 : index
    %5 = vector.load %arg3[%c0_5, %c0_6] : memref<1x128xf32, #tpu.memory_space<vmem>>, vector<1x128xf32>
    %6 = vector.shape_cast %5 : vector<1x128xf32> to vector<1x1x1x128xf32>
    %7 = vector.broadcast %6 : vector<1x1x1x128xf32> to vector<8x2x4x128xf32>
    %8 = arith.addf %4, %7 : vector<8x2x4x128xf32>
    %cst = arith.constant 0.000000e+00 : f32
    %9 = vector.broadcast %cst : f32 to vector<8x2x4x128xf32>
    %10 = arith.maximumf %8, %9 : vector<8x2x4x128xf32>
    %11 = vector.extract_strided_slice %10 {offsets = [0, 0, 0, 0], sizes = [8, 1, 4, 128], strides = [1, 1, 1, 1]} : vector<8x2x4x128xf32> to vector<8x1x4x128xf32>
    %12 = vector.shape_cast %11 : vector<8x1x4x128xf32> to vector<8x4x128xf32>
    %13 = vector.extract_strided_slice %10 {offsets = [0, 1, 0, 0], sizes = [8, 1, 4, 128], strides = [1, 1, 1, 1]} : vector<8x2x4x128xf32> to vector<8x1x4x128xf32>
    %14 = vector.shape_cast %13 : vector<8x1x4x128xf32> to vector<8x4x128xf32>
    %15 = arith.maximumf %12, %14 : vector<8x4x128xf32>
    %16 = vector.extract_strided_slice %15 {offsets = [0, 0, 0], sizes = [8, 4, 64], strides = [1, 1, 1]} : vector<8x4x128xf32> to vector<8x4x64xf32>
    %17 = vector.extract_strided_slice %15 {offsets = [0, 0, 64], sizes = [8, 4, 64], strides = [1, 1, 1]} : vector<8x4x128xf32> to vector<8x4x64xf32>
    %18 = arith.maximumf %16, %17 : vector<8x4x64xf32>
    %19 = arith.truncf %18 : vector<8x4x64xf32> to vector<8x4x64xbf16>
    %c0_7 = arith.constant 0 : index
    %c0_8 = arith.constant 0 : index
    %c0_9 = arith.constant 0 : index
    %20 = vector.load %arg4[%c0_7, %c0_8, %c0_9] : memref<8x4x64xbf16, #tpu.memory_space<vmem>>, vector<8x4x64xbf16>
    tpu.vector_store %arg4[%c0_7, %c0_8, %c0_9], %19 {strides = array<i32>} : memref<8x4x64xbf16, #tpu.memory_space<vmem>>, vector<8x4x64xbf16>,
    return
  }
  func.func @transform_0(%arg0: i32) -> (i32, i32, i32, i32) {
    %c0_i32 = arith.constant 0 : i32
    %c0_i32_0 = arith.constant 0 : i32
    %c0_i32_1 = arith.constant 0 : i32
    %c0_i32_2 = arith.constant 0 : i32
    return %arg0, %c0_i32, %c0_i32_0, %c0_i32_1 : i32, i32, i32, i32
  }
  func.func @transform_1(%arg0: i32) -> (i32, i32) {
    %c0_i32 = arith.constant 0 : i32
    %c0_i32_0 = arith.constant 0 : i32
    %c0_i32_1 = arith.constant 0 : i32
    return %c0_i32, %c0_i32_0 : i32, i32
  }
  func.func @transform_2(%arg0: i32) -> (i32, i32) {
    %c0_i32 = arith.constant 0 : i32
    %c0_i32_0 = arith.constant 0 : i32
    %c0_i32_1 = arith.constant 0 : i32
    return %c0_i32, %c0_i32_0 : i32, i32
  }
  func.func @transform_3(%arg0: i32) -> (i32, i32, i32) {
    %c0_i32 = arith.constant 0 : i32
    %c0_i32_0 = arith.constant 0 : i32
    %c0_i32_1 = arith.constant 0 : i32
    return %arg0, %c0_i32, %c0_i32_0 : i32, i32, i32
  }
}

module attributes {stable_mosaic.version = 11 : i64} {
  func.func @_conv_stats_kernel(%arg0: i32, %arg1: memref<32x576xbf16, #tpu.memory_space<vmem>>, %arg2: memref<576x128xbf16, #tpu.memory_space<vmem>>, %arg3: memref<32x128xf32, #tpu.memory_space<vmem>>, %arg4: memref<8x128xf32, #tpu.memory_space<vmem>>) attributes {dimension_semantics = [#tpu.dimension_semantics<parallel>], iteration_bounds = array<i64: 1>, scalar_prefetch = 0 : i64, scratch_operands = 0 : i64, tpu.core_type = #tpu.core_type<tc>, window_params = [{transform_indices = @transform_0, window_bounds = array<i64: 32, 576>}, {pipeline_mode = #tpu.pipeline_mode<synchronous>, transform_indices = @transform_1, window_bounds = array<i64: 576, 128>}, {transform_indices = @transform_2, window_bounds = array<i64: 32, 128>}, {transform_indices = @transform_3, window_bounds = array<i64: 8, 128>}]} {
    %c0 = arith.constant 0 : index
    %c0_0 = arith.constant 0 : index
    %0 = vector.load %arg1[%c0, %c0_0] : memref<32x576xbf16, #tpu.memory_space<vmem>>, vector<32x576xbf16>
    %c0_1 = arith.constant 0 : index
    %c0_2 = arith.constant 0 : index
    %1 = vector.load %arg2[%c0_1, %c0_2] : memref<576x128xbf16, #tpu.memory_space<vmem>>, vector<576x128xbf16>
    %cst = arith.constant dense<0.000000e+00> : vector<32x128xf32>
    %2 = tpu.matmul %0, %1, %cst {dimension_numbers = #tpu.dot_dimension_numbers<[1], [0], [0], [1], [0, 0, 1, 1], [], []>} : vector<32x576xbf16>, vector<576x128xbf16>, vector<32x128xf32> -> vector<32x128xf32>
    %c0_3 = arith.constant 0 : index
    %c0_4 = arith.constant 0 : index
    %3 = vector.load %arg3[%c0_3, %c0_4] : memref<32x128xf32, #tpu.memory_space<vmem>>, vector<32x128xf32>
    tpu.vector_store %arg3[%c0_3, %c0_4], %2 {strides = array<i32>} : memref<32x128xf32, #tpu.memory_space<vmem>>, vector<32x128xf32>,
    %cst_5 = arith.constant dense<0.000000e+00> : vector<128xf32>
    %4 = vector.multi_reduction <add>, %2, %cst_5 [0] : vector<32x128xf32> to vector<128xf32>
    %5 = vector.shape_cast %4 : vector<128xf32> to vector<1x128xf32>
    %6 = arith.mulf %2, %2 : vector<32x128xf32>
    %cst_6 = arith.constant dense<0.000000e+00> : vector<128xf32>
    %7 = vector.multi_reduction <add>, %6, %cst_6 [0] : vector<32x128xf32> to vector<128xf32>
    %8 = vector.shape_cast %7 : vector<128xf32> to vector<1x128xf32>
    %cst_7 = arith.constant 0.000000e+00 : f32
    %9 = vector.broadcast %cst_7 : f32 to vector<6x128xf32>
    %10 = tpu.concatenate %5, %8, %9 in 0 : vector<1x128xf32>, vector<1x128xf32>, vector<6x128xf32> -> vector<8x128xf32>
    %c0_8 = arith.constant 0 : index
    %c0_9 = arith.constant 0 : index
    %11 = vector.load %arg4[%c0_8, %c0_9] : memref<8x128xf32, #tpu.memory_space<vmem>>, vector<8x128xf32>
    tpu.vector_store %arg4[%c0_8, %c0_9], %10 {strides = array<i32>} : memref<8x128xf32, #tpu.memory_space<vmem>>, vector<8x128xf32>,
    return
  }
  func.func @transform_0(%arg0: i32) -> (i32, i32) {
    %c0_i32 = arith.constant 0 : i32
    %c0_i32_0 = arith.constant 0 : i32
    return %arg0, %c0_i32 : i32, i32
  }
  func.func @transform_1(%arg0: i32) -> (i32, i32) {
    %c0_i32 = arith.constant 0 : i32
    %c0_i32_0 = arith.constant 0 : i32
    %c0_i32_1 = arith.constant 0 : i32
    return %c0_i32, %c0_i32_0 : i32, i32
  }
  func.func @transform_2(%arg0: i32) -> (i32, i32) {
    %c0_i32 = arith.constant 0 : i32
    %c0_i32_0 = arith.constant 0 : i32
    return %arg0, %c0_i32 : i32, i32
  }
  func.func @transform_3(%arg0: i32) -> (i32, i32) {
    %c0_i32 = arith.constant 0 : i32
    %c0_i32_0 = arith.constant 0 : i32
    return %arg0, %c0_i32 : i32, i32
  }
}

module attributes {stable_mosaic.version = 11 : i64} {
  func.func @_bn_relu_kernel(%arg0: i32, %arg1: memref<32x128xf32, #tpu.memory_space<vmem>>, %arg2: memref<1x128xf32, #tpu.memory_space<vmem>>, %arg3: memref<1x128xf32, #tpu.memory_space<vmem>>, %arg4: memref<32x128xbf16, #tpu.memory_space<vmem>>) attributes {dimension_semantics = [#tpu.dimension_semantics<parallel>], iteration_bounds = array<i64: 1>, scalar_prefetch = 0 : i64, scratch_operands = 0 : i64, tpu.core_type = #tpu.core_type<tc>, window_params = [{transform_indices = @transform_0, window_bounds = array<i64: 32, 128>}, {pipeline_mode = #tpu.pipeline_mode<synchronous>, transform_indices = @transform_1, window_bounds = array<i64: 1, 128>}, {pipeline_mode = #tpu.pipeline_mode<synchronous>, transform_indices = @transform_2, window_bounds = array<i64: 1, 128>}, {transform_indices = @transform_3, window_bounds = array<i64: 32, 128>}]} {
    %c0 = arith.constant 0 : index
    %c0_0 = arith.constant 0 : index
    %0 = vector.load %arg1[%c0, %c0_0] : memref<32x128xf32, #tpu.memory_space<vmem>>, vector<32x128xf32>
    %c0_1 = arith.constant 0 : index
    %c0_2 = arith.constant 0 : index
    %1 = vector.load %arg2[%c0_1, %c0_2] : memref<1x128xf32, #tpu.memory_space<vmem>>, vector<1x128xf32>
    %2 = vector.broadcast %1 : vector<1x128xf32> to vector<32x128xf32>
    %3 = arith.mulf %0, %2 : vector<32x128xf32>
    %c0_3 = arith.constant 0 : index
    %c0_4 = arith.constant 0 : index
    %4 = vector.load %arg3[%c0_3, %c0_4] : memref<1x128xf32, #tpu.memory_space<vmem>>, vector<1x128xf32>
    %5 = vector.broadcast %4 : vector<1x128xf32> to vector<32x128xf32>
    %6 = arith.addf %3, %5 : vector<32x128xf32>
    %cst = arith.constant 0.000000e+00 : f32
    %7 = vector.broadcast %cst : f32 to vector<32x128xf32>
    %8 = arith.maximumf %6, %7 : vector<32x128xf32>
    %9 = arith.truncf %8 : vector<32x128xf32> to vector<32x128xbf16>
    %c0_5 = arith.constant 0 : index
    %c0_6 = arith.constant 0 : index
    %10 = vector.load %arg4[%c0_5, %c0_6] : memref<32x128xbf16, #tpu.memory_space<vmem>>, vector<32x128xbf16>
    tpu.vector_store %arg4[%c0_5, %c0_6], %9 {strides = array<i32>} : memref<32x128xbf16, #tpu.memory_space<vmem>>, vector<32x128xbf16>,
    return
  }
  func.func @transform_0(%arg0: i32) -> (i32, i32) {
    %c0_i32 = arith.constant 0 : i32
    %c0_i32_0 = arith.constant 0 : i32
    return %arg0, %c0_i32 : i32, i32
  }
  func.func @transform_1(%arg0: i32) -> (i32, i32) {
    %c0_i32 = arith.constant 0 : i32
    %c0_i32_0 = arith.constant 0 : i32
    %c0_i32_1 = arith.constant 0 : i32
    return %c0_i32, %c0_i32_0 : i32, i32
  }
  func.func @transform_2(%arg0: i32) -> (i32, i32) {
    %c0_i32 = arith.constant 0 : i32
    %c0_i32_0 = arith.constant 0 : i32
    %c0_i32_1 = arith.constant 0 : i32
    return %c0_i32, %c0_i32_0 : i32, i32
  }
  func.func @transform_3(%arg0: i32) -> (i32, i32) {
    %c0_i32 = arith.constant 0 : i32
    %c0_i32_0 = arith.constant 0 : i32
    return %arg0, %c0_i32 : i32, i32
  }
}

module attributes {stable_mosaic.version = 11 : i64} {
  func.func @_bn_relu_maxpool_kernel(%arg0: i32, %arg1: memref<4x2x2x256xf32, #tpu.memory_space<vmem>>, %arg2: memref<1x256xf32, #tpu.memory_space<vmem>>, %arg3: memref<1x256xf32, #tpu.memory_space<vmem>>, %arg4: memref<4x2x128xbf16, #tpu.memory_space<vmem>>) attributes {dimension_semantics = [#tpu.dimension_semantics<parallel>], iteration_bounds = array<i64: 1>, scalar_prefetch = 0 : i64, scratch_operands = 0 : i64, tpu.core_type = #tpu.core_type<tc>, window_params = [{transform_indices = @transform_0, window_bounds = array<i64: 4, 2, 2, 256>}, {pipeline_mode = #tpu.pipeline_mode<synchronous>, transform_indices = @transform_1, window_bounds = array<i64: 1, 256>}, {pipeline_mode = #tpu.pipeline_mode<synchronous>, transform_indices = @transform_2, window_bounds = array<i64: 1, 256>}, {transform_indices = @transform_3, window_bounds = array<i64: 4, 2, 128>}]} {
    %c0 = arith.constant 0 : index
    %c0_0 = arith.constant 0 : index
    %c0_1 = arith.constant 0 : index
    %c0_2 = arith.constant 0 : index
    %0 = vector.load %arg1[%c0, %c0_0, %c0_1, %c0_2] : memref<4x2x2x256xf32, #tpu.memory_space<vmem>>, vector<4x2x2x256xf32>
    %c0_3 = arith.constant 0 : index
    %c0_4 = arith.constant 0 : index
    %1 = vector.load %arg2[%c0_3, %c0_4] : memref<1x256xf32, #tpu.memory_space<vmem>>, vector<1x256xf32>
    %2 = vector.shape_cast %1 : vector<1x256xf32> to vector<1x1x1x256xf32>
    %3 = vector.broadcast %2 : vector<1x1x1x256xf32> to vector<4x2x2x256xf32>
    %4 = arith.mulf %0, %3 : vector<4x2x2x256xf32>
    %c0_5 = arith.constant 0 : index
    %c0_6 = arith.constant 0 : index
    %5 = vector.load %arg3[%c0_5, %c0_6] : memref<1x256xf32, #tpu.memory_space<vmem>>, vector<1x256xf32>
    %6 = vector.shape_cast %5 : vector<1x256xf32> to vector<1x1x1x256xf32>
    %7 = vector.broadcast %6 : vector<1x1x1x256xf32> to vector<4x2x2x256xf32>
    %8 = arith.addf %4, %7 : vector<4x2x2x256xf32>
    %cst = arith.constant 0.000000e+00 : f32
    %9 = vector.broadcast %cst : f32 to vector<4x2x2x256xf32>
    %10 = arith.maximumf %8, %9 : vector<4x2x2x256xf32>
    %11 = vector.extract_strided_slice %10 {offsets = [0, 0, 0, 0], sizes = [4, 1, 2, 256], strides = [1, 1, 1, 1]} : vector<4x2x2x256xf32> to vector<4x1x2x256xf32>
    %12 = vector.shape_cast %11 : vector<4x1x2x256xf32> to vector<4x2x256xf32>
    %13 = vector.extract_strided_slice %10 {offsets = [0, 1, 0, 0], sizes = [4, 1, 2, 256], strides = [1, 1, 1, 1]} : vector<4x2x2x256xf32> to vector<4x1x2x256xf32>
    %14 = vector.shape_cast %13 : vector<4x1x2x256xf32> to vector<4x2x256xf32>
    %15 = arith.maximumf %12, %14 : vector<4x2x256xf32>
    %16 = vector.extract_strided_slice %15 {offsets = [0, 0, 0], sizes = [4, 2, 128], strides = [1, 1, 1]} : vector<4x2x256xf32> to vector<4x2x128xf32>
    %17 = vector.extract_strided_slice %15 {offsets = [0, 0, 128], sizes = [4, 2, 128], strides = [1, 1, 1]} : vector<4x2x256xf32> to vector<4x2x128xf32>
    %18 = arith.maximumf %16, %17 : vector<4x2x128xf32>
    %19 = arith.truncf %18 : vector<4x2x128xf32> to vector<4x2x128xbf16>
    %c0_7 = arith.constant 0 : index
    %c0_8 = arith.constant 0 : index
    %c0_9 = arith.constant 0 : index
    %20 = vector.load %arg4[%c0_7, %c0_8, %c0_9] : memref<4x2x128xbf16, #tpu.memory_space<vmem>>, vector<4x2x128xbf16>
    tpu.vector_store %arg4[%c0_7, %c0_8, %c0_9], %19 {strides = array<i32>} : memref<4x2x128xbf16, #tpu.memory_space<vmem>>, vector<4x2x128xbf16>,
    return
  }
  func.func @transform_0(%arg0: i32) -> (i32, i32, i32, i32) {
    %c0_i32 = arith.constant 0 : i32
    %c0_i32_0 = arith.constant 0 : i32
    %c0_i32_1 = arith.constant 0 : i32
    %c0_i32_2 = arith.constant 0 : i32
    return %arg0, %c0_i32, %c0_i32_0, %c0_i32_1 : i32, i32, i32, i32
  }
  func.func @transform_1(%arg0: i32) -> (i32, i32) {
    %c0_i32 = arith.constant 0 : i32
    %c0_i32_0 = arith.constant 0 : i32
    %c0_i32_1 = arith.constant 0 : i32
    return %c0_i32, %c0_i32_0 : i32, i32
  }
  func.func @transform_2(%arg0: i32) -> (i32, i32) {
    %c0_i32 = arith.constant 0 : i32
    %c0_i32_0 = arith.constant 0 : i32
    %c0_i32_1 = arith.constant 0 : i32
    return %c0_i32, %c0_i32_0 : i32, i32
  }
  func.func @transform_3(%arg0: i32) -> (i32, i32, i32) {
    %c0_i32 = arith.constant 0 : i32
    %c0_i32_0 = arith.constant 0 : i32
    %c0_i32_1 = arith.constant 0 : i32
    return %arg0, %c0_i32, %c0_i32_0 : i32, i32, i32
  }
}

module attributes {stable_mosaic.version = 11 : i64} {
  func.func @_conv_stats_kernel(%arg0: i32, %arg1: memref<32x1152xbf16, #tpu.memory_space<vmem>>, %arg2: memref<1152x128xbf16, #tpu.memory_space<vmem>>, %arg3: memref<32x128xf32, #tpu.memory_space<vmem>>, %arg4: memref<8x128xf32, #tpu.memory_space<vmem>>) attributes {dimension_semantics = [#tpu.dimension_semantics<parallel>], iteration_bounds = array<i64: 1>, scalar_prefetch = 0 : i64, scratch_operands = 0 : i64, tpu.core_type = #tpu.core_type<tc>, window_params = [{transform_indices = @transform_0, window_bounds = array<i64: 32, 1152>}, {pipeline_mode = #tpu.pipeline_mode<synchronous>, transform_indices = @transform_1, window_bounds = array<i64: 1152, 128>}, {transform_indices = @transform_2, window_bounds = array<i64: 32, 128>}, {transform_indices = @transform_3, window_bounds = array<i64: 8, 128>}]} {
    %c0 = arith.constant 0 : index
    %c0_0 = arith.constant 0 : index
    %0 = vector.load %arg1[%c0, %c0_0] : memref<32x1152xbf16, #tpu.memory_space<vmem>>, vector<32x1152xbf16>
    %c0_1 = arith.constant 0 : index
    %c0_2 = arith.constant 0 : index
    %1 = vector.load %arg2[%c0_1, %c0_2] : memref<1152x128xbf16, #tpu.memory_space<vmem>>, vector<1152x128xbf16>
    %cst = arith.constant dense<0.000000e+00> : vector<32x128xf32>
    %2 = tpu.matmul %0, %1, %cst {dimension_numbers = #tpu.dot_dimension_numbers<[1], [0], [0], [1], [0, 0, 1, 1], [], []>} : vector<32x1152xbf16>, vector<1152x128xbf16>, vector<32x128xf32> -> vector<32x128xf32>
    %c0_3 = arith.constant 0 : index
    %c0_4 = arith.constant 0 : index
    %3 = vector.load %arg3[%c0_3, %c0_4] : memref<32x128xf32, #tpu.memory_space<vmem>>, vector<32x128xf32>
    tpu.vector_store %arg3[%c0_3, %c0_4], %2 {strides = array<i32>} : memref<32x128xf32, #tpu.memory_space<vmem>>, vector<32x128xf32>,
    %cst_5 = arith.constant dense<0.000000e+00> : vector<128xf32>
    %4 = vector.multi_reduction <add>, %2, %cst_5 [0] : vector<32x128xf32> to vector<128xf32>
    %5 = vector.shape_cast %4 : vector<128xf32> to vector<1x128xf32>
    %6 = arith.mulf %2, %2 : vector<32x128xf32>
    %cst_6 = arith.constant dense<0.000000e+00> : vector<128xf32>
    %7 = vector.multi_reduction <add>, %6, %cst_6 [0] : vector<32x128xf32> to vector<128xf32>
    %8 = vector.shape_cast %7 : vector<128xf32> to vector<1x128xf32>
    %cst_7 = arith.constant 0.000000e+00 : f32
    %9 = vector.broadcast %cst_7 : f32 to vector<6x128xf32>
    %10 = tpu.concatenate %5, %8, %9 in 0 : vector<1x128xf32>, vector<1x128xf32>, vector<6x128xf32> -> vector<8x128xf32>
    %c0_8 = arith.constant 0 : index
    %c0_9 = arith.constant 0 : index
    %11 = vector.load %arg4[%c0_8, %c0_9] : memref<8x128xf32, #tpu.memory_space<vmem>>, vector<8x128xf32>
    tpu.vector_store %arg4[%c0_8, %c0_9], %10 {strides = array<i32>} : memref<8x128xf32, #tpu.memory_space<vmem>>, vector<8x128xf32>,
    return
  }
  func.func @transform_0(%arg0: i32) -> (i32, i32) {
    %c0_i32 = arith.constant 0 : i32
    %c0_i32_0 = arith.constant 0 : i32
    return %arg0, %c0_i32 : i32, i32
  }
  func.func @transform_1(%arg0: i32) -> (i32, i32) {
    %c0_i32 = arith.constant 0 : i32
    %c0_i32_0 = arith.constant 0 : i32
    %c0_i32_1 = arith.constant 0 : i32
    return %c0_i32, %c0_i32_0 : i32, i32
  }
  func.func @transform_2(%arg0: i32) -> (i32, i32) {
    %c0_i32 = arith.constant 0 : i32
    %c0_i32_0 = arith.constant 0 : i32
    return %arg0, %c0_i32 : i32, i32
  }
  func.func @transform_3(%arg0: i32) -> (i32, i32) {
    %c0_i32 = arith.constant 0 : i32
    %c0_i32_0 = arith.constant 0 : i32
    return %arg0, %c0_i32 : i32, i32
  }
}

module attributes {stable_mosaic.version = 11 : i64} {
  func.func @_bn_relu_kernel(%arg0: i32, %arg1: memref<8x128xf32, #tpu.memory_space<vmem>>, %arg2: memref<1x128xf32, #tpu.memory_space<vmem>>, %arg3: memref<1x128xf32, #tpu.memory_space<vmem>>, %arg4: memref<8x128xbf16, #tpu.memory_space<vmem>>) attributes {dimension_semantics = [#tpu.dimension_semantics<parallel>], iteration_bounds = array<i64: 1>, scalar_prefetch = 0 : i64, scratch_operands = 0 : i64, tpu.core_type = #tpu.core_type<tc>, window_params = [{transform_indices = @transform_0, window_bounds = array<i64: 8, 128>}, {pipeline_mode = #tpu.pipeline_mode<synchronous>, transform_indices = @transform_1, window_bounds = array<i64: 1, 128>}, {pipeline_mode = #tpu.pipeline_mode<synchronous>, transform_indices = @transform_2, window_bounds = array<i64: 1, 128>}, {transform_indices = @transform_3, window_bounds = array<i64: 8, 128>}]} {
    %c0 = arith.constant 0 : index
    %c0_0 = arith.constant 0 : index
    %0 = vector.load %arg1[%c0, %c0_0] : memref<8x128xf32, #tpu.memory_space<vmem>>, vector<8x128xf32>
    %c0_1 = arith.constant 0 : index
    %c0_2 = arith.constant 0 : index
    %1 = vector.load %arg2[%c0_1, %c0_2] : memref<1x128xf32, #tpu.memory_space<vmem>>, vector<1x128xf32>
    %2 = vector.broadcast %1 : vector<1x128xf32> to vector<8x128xf32>
    %3 = arith.mulf %0, %2 : vector<8x128xf32>
    %c0_3 = arith.constant 0 : index
    %c0_4 = arith.constant 0 : index
    %4 = vector.load %arg3[%c0_3, %c0_4] : memref<1x128xf32, #tpu.memory_space<vmem>>, vector<1x128xf32>
    %5 = vector.broadcast %4 : vector<1x128xf32> to vector<8x128xf32>
    %6 = arith.addf %3, %5 : vector<8x128xf32>
    %cst = arith.constant 0.000000e+00 : f32
    %7 = vector.broadcast %cst : f32 to vector<8x128xf32>
    %8 = arith.maximumf %6, %7 : vector<8x128xf32>
    %9 = arith.truncf %8 : vector<8x128xf32> to vector<8x128xbf16>
    %c0_5 = arith.constant 0 : index
    %c0_6 = arith.constant 0 : index
    %10 = vector.load %arg4[%c0_5, %c0_6] : memref<8x128xbf16, #tpu.memory_space<vmem>>, vector<8x128xbf16>
    tpu.vector_store %arg4[%c0_5, %c0_6], %9 {strides = array<i32>} : memref<8x128xbf16, #tpu.memory_space<vmem>>, vector<8x128xbf16>,
    return
  }
  func.func @transform_0(%arg0: i32) -> (i32, i32) {
    %c0_i32 = arith.constant 0 : i32
    %c0_i32_0 = arith.constant 0 : i32
    return %arg0, %c0_i32 : i32, i32
  }
  func.func @transform_1(%arg0: i32) -> (i32, i32) {
    %c0_i32 = arith.constant 0 : i32
    %c0_i32_0 = arith.constant 0 : i32
    %c0_i32_1 = arith.constant 0 : i32
    return %c0_i32, %c0_i32_0 : i32, i32
  }
  func.func @transform_2(%arg0: i32) -> (i32, i32) {
    %c0_i32 = arith.constant 0 : i32
    %c0_i32_0 = arith.constant 0 : i32
    %c0_i32_1 = arith.constant 0 : i32
    return %c0_i32, %c0_i32_0 : i32, i32
  }
  func.func @transform_3(%arg0: i32) -> (i32, i32) {
    %c0_i32 = arith.constant 0 : i32
    %c0_i32_0 = arith.constant 0 : i32
    return %arg0, %c0_i32 : i32, i32
  }
}

module attributes {stable_mosaic.version = 11 : i64} {
  func.func @_conv_stats_kernel(%arg0: i32, %arg1: memref<8x1152xbf16, #tpu.memory_space<vmem>>, %arg2: memref<1152x128xbf16, #tpu.memory_space<vmem>>, %arg3: memref<8x128xf32, #tpu.memory_space<vmem>>, %arg4: memref<8x128xf32, #tpu.memory_space<vmem>>) attributes {dimension_semantics = [#tpu.dimension_semantics<parallel>], iteration_bounds = array<i64: 1>, scalar_prefetch = 0 : i64, scratch_operands = 0 : i64, tpu.core_type = #tpu.core_type<tc>, window_params = [{transform_indices = @transform_0, window_bounds = array<i64: 8, 1152>}, {pipeline_mode = #tpu.pipeline_mode<synchronous>, transform_indices = @transform_1, window_bounds = array<i64: 1152, 128>}, {transform_indices = @transform_2, window_bounds = array<i64: 8, 128>}, {transform_indices = @transform_3, window_bounds = array<i64: 8, 128>}]} {
    %c0 = arith.constant 0 : index
    %c0_0 = arith.constant 0 : index
    %0 = vector.load %arg1[%c0, %c0_0] : memref<8x1152xbf16, #tpu.memory_space<vmem>>, vector<8x1152xbf16>
    %c0_1 = arith.constant 0 : index
    %c0_2 = arith.constant 0 : index
    %1 = vector.load %arg2[%c0_1, %c0_2] : memref<1152x128xbf16, #tpu.memory_space<vmem>>, vector<1152x128xbf16>
    %cst = arith.constant dense<0.000000e+00> : vector<8x128xf32>
    %2 = tpu.matmul %0, %1, %cst {dimension_numbers = #tpu.dot_dimension_numbers<[1], [0], [0], [1], [0, 0, 1, 1], [], []>} : vector<8x1152xbf16>, vector<1152x128xbf16>, vector<8x128xf32> -> vector<8x128xf32>
    %c0_3 = arith.constant 0 : index
    %c0_4 = arith.constant 0 : index
    %3 = vector.load %arg3[%c0_3, %c0_4] : memref<8x128xf32, #tpu.memory_space<vmem>>, vector<8x128xf32>
    tpu.vector_store %arg3[%c0_3, %c0_4], %2 {strides = array<i32>} : memref<8x128xf32, #tpu.memory_space<vmem>>, vector<8x128xf32>,
    %cst_5 = arith.constant dense<0.000000e+00> : vector<128xf32>
    %4 = vector.multi_reduction <add>, %2, %cst_5 [0] : vector<8x128xf32> to vector<128xf32>
    %5 = vector.shape_cast %4 : vector<128xf32> to vector<1x128xf32>
    %6 = arith.mulf %2, %2 : vector<8x128xf32>
    %cst_6 = arith.constant dense<0.000000e+00> : vector<128xf32>
    %7 = vector.multi_reduction <add>, %6, %cst_6 [0] : vector<8x128xf32> to vector<128xf32>
    %8 = vector.shape_cast %7 : vector<128xf32> to vector<1x128xf32>
    %cst_7 = arith.constant 0.000000e+00 : f32
    %9 = vector.broadcast %cst_7 : f32 to vector<6x128xf32>
    %10 = tpu.concatenate %5, %8, %9 in 0 : vector<1x128xf32>, vector<1x128xf32>, vector<6x128xf32> -> vector<8x128xf32>
    %c0_8 = arith.constant 0 : index
    %c0_9 = arith.constant 0 : index
    %11 = vector.load %arg4[%c0_8, %c0_9] : memref<8x128xf32, #tpu.memory_space<vmem>>, vector<8x128xf32>
    tpu.vector_store %arg4[%c0_8, %c0_9], %10 {strides = array<i32>} : memref<8x128xf32, #tpu.memory_space<vmem>>, vector<8x128xf32>,
    return
  }
  func.func @transform_0(%arg0: i32) -> (i32, i32) {
    %c0_i32 = arith.constant 0 : i32
    %c0_i32_0 = arith.constant 0 : i32
    return %arg0, %c0_i32 : i32, i32
  }
  func.func @transform_1(%arg0: i32) -> (i32, i32) {
    %c0_i32 = arith.constant 0 : i32
    %c0_i32_0 = arith.constant 0 : i32
    %c0_i32_1 = arith.constant 0 : i32
    return %c0_i32, %c0_i32_0 : i32, i32
  }
  func.func @transform_2(%arg0: i32) -> (i32, i32) {
    %c0_i32 = arith.constant 0 : i32
    %c0_i32_0 = arith.constant 0 : i32
    return %arg0, %c0_i32 : i32, i32
  }
  func.func @transform_3(%arg0: i32) -> (i32, i32) {
    %c0_i32 = arith.constant 0 : i32
    %c0_i32_0 = arith.constant 0 : i32
    return %arg0, %c0_i32 : i32, i32
  }
}

module attributes {stable_mosaic.version = 11 : i64} {
  func.func @_bn_relu_avgpool_kernel(%arg0: i32, %arg1: memref<2x2x1x256xf32, #tpu.memory_space<vmem>>, %arg2: memref<1x256xf32, #tpu.memory_space<vmem>>, %arg3: memref<1x256xf32, #tpu.memory_space<vmem>>, %arg4: memref<2x1x128xbf16, #tpu.memory_space<vmem>>) attributes {dimension_semantics = [#tpu.dimension_semantics<parallel>], iteration_bounds = array<i64: 1>, scalar_prefetch = 0 : i64, scratch_operands = 0 : i64, tpu.core_type = #tpu.core_type<tc>, window_params = [{transform_indices = @transform_0, window_bounds = array<i64: 2, 2, 1, 256>}, {pipeline_mode = #tpu.pipeline_mode<synchronous>, transform_indices = @transform_1, window_bounds = array<i64: 1, 256>}, {pipeline_mode = #tpu.pipeline_mode<synchronous>, transform_indices = @transform_2, window_bounds = array<i64: 1, 256>}, {transform_indices = @transform_3, window_bounds = array<i64: 2, 1, 128>}]} {
    %c0 = arith.constant 0 : index
    %c0_0 = arith.constant 0 : index
    %c0_1 = arith.constant 0 : index
    %c0_2 = arith.constant 0 : index
    %0 = vector.load %arg1[%c0, %c0_0, %c0_1, %c0_2] : memref<2x2x1x256xf32, #tpu.memory_space<vmem>>, vector<2x2x1x256xf32>
    %c0_3 = arith.constant 0 : index
    %c0_4 = arith.constant 0 : index
    %1 = vector.load %arg2[%c0_3, %c0_4] : memref<1x256xf32, #tpu.memory_space<vmem>>, vector<1x256xf32>
    %2 = vector.shape_cast %1 : vector<1x256xf32> to vector<1x1x1x256xf32>
    %3 = vector.broadcast %2 : vector<1x1x1x256xf32> to vector<2x2x1x256xf32>
    %4 = arith.mulf %0, %3 : vector<2x2x1x256xf32>
    %c0_5 = arith.constant 0 : index
    %c0_6 = arith.constant 0 : index
    %5 = vector.load %arg3[%c0_5, %c0_6] : memref<1x256xf32, #tpu.memory_space<vmem>>, vector<1x256xf32>
    %6 = vector.shape_cast %5 : vector<1x256xf32> to vector<1x1x1x256xf32>
    %7 = vector.broadcast %6 : vector<1x1x1x256xf32> to vector<2x2x1x256xf32>
    %8 = arith.addf %4, %7 : vector<2x2x1x256xf32>
    %cst = arith.constant 0.000000e+00 : f32
    %9 = vector.broadcast %cst : f32 to vector<2x2x1x256xf32>
    %10 = arith.maximumf %8, %9 : vector<2x2x1x256xf32>
    %11 = vector.extract_strided_slice %10 {offsets = [0, 0, 0, 0], sizes = [2, 1, 1, 256], strides = [1, 1, 1, 1]} : vector<2x2x1x256xf32> to vector<2x1x1x256xf32>
    %12 = vector.shape_cast %11 : vector<2x1x1x256xf32> to vector<2x1x256xf32>
    %13 = vector.extract_strided_slice %10 {offsets = [0, 1, 0, 0], sizes = [2, 1, 1, 256], strides = [1, 1, 1, 1]} : vector<2x2x1x256xf32> to vector<2x1x1x256xf32>
    %14 = vector.shape_cast %13 : vector<2x1x1x256xf32> to vector<2x1x256xf32>
    %15 = arith.addf %12, %14 : vector<2x1x256xf32>
    %16 = vector.extract_strided_slice %15 {offsets = [0, 0, 0], sizes = [2, 1, 128], strides = [1, 1, 1]} : vector<2x1x256xf32> to vector<2x1x128xf32>
    %17 = vector.extract_strided_slice %15 {offsets = [0, 0, 128], sizes = [2, 1, 128], strides = [1, 1, 1]} : vector<2x1x256xf32> to vector<2x1x128xf32>
    %18 = arith.addf %16, %17 : vector<2x1x128xf32>
    %cst_7 = arith.constant 2.500000e-01 : f32
    %19 = vector.broadcast %cst_7 : f32 to vector<2x1x128xf32>
    %20 = arith.mulf %18, %19 : vector<2x1x128xf32>
    %21 = arith.truncf %20 : vector<2x1x128xf32> to vector<2x1x128xbf16>
    %c0_8 = arith.constant 0 : index
    %c0_9 = arith.constant 0 : index
    %c0_10 = arith.constant 0 : index
    %22 = vector.load %arg4[%c0_8, %c0_9, %c0_10] : memref<2x1x128xbf16, #tpu.memory_space<vmem>>, vector<2x1x128xbf16>
    tpu.vector_store %arg4[%c0_8, %c0_9, %c0_10], %21 {strides = array<i32>} : memref<2x1x128xbf16, #tpu.memory_space<vmem>>, vector<2x1x128xbf16>,
    return
  }
  func.func @transform_0(%arg0: i32) -> (i32, i32, i32, i32) {
    %c0_i32 = arith.constant 0 : i32
    %c0_i32_0 = arith.constant 0 : i32
    %c0_i32_1 = arith.constant 0 : i32
    %c0_i32_2 = arith.constant 0 : i32
    return %arg0, %c0_i32, %c0_i32_0, %c0_i32_1 : i32, i32, i32, i32
  }
  func.func @transform_1(%arg0: i32) -> (i32, i32) {
    %c0_i32 = arith.constant 0 : i32
    %c0_i32_0 = arith.constant 0 : i32
    %c0_i32_1 = arith.constant 0 : i32
    return %c0_i32, %c0_i32_0 : i32, i32
  }
  func.func @transform_2(%arg0: i32) -> (i32, i32) {
    %c0_i32 = arith.constant 0 : i32
    %c0_i32_0 = arith.constant 0 : i32
    %c0_i32_1 = arith.constant 0 : i32
    return %c0_i32, %c0_i32_0 : i32, i32
  }
  func.func @transform_3(%arg0: i32) -> (i32, i32, i32) {
    %c0_i32 = arith.constant 0 : i32
    %c0_i32_0 = arith.constant 0 : i32
    %c0_i32_1 = arith.constant 0 : i32
    return %arg0, %c0_i32, %c0_i32_0 : i32, i32, i32
  }
}

module attributes {stable_mosaic.version = 11 : i64} {
  func.func @_conv1x1_kernel(%arg0: i32, %arg1: memref<8x128xbf16, #tpu.memory_space<vmem>>, %arg2: memref<128x1024xbf16, #tpu.memory_space<vmem>>, %arg3: memref<1x1024xf32, #tpu.memory_space<vmem>>, %arg4: memref<8x1024xf32, #tpu.memory_space<vmem>>) attributes {dimension_semantics = [#tpu.dimension_semantics<parallel>], iteration_bounds = array<i64: 1>, scalar_prefetch = 0 : i64, scratch_operands = 0 : i64, tpu.core_type = #tpu.core_type<tc>, window_params = [{transform_indices = @transform_0, window_bounds = array<i64: 8, 128>}, {pipeline_mode = #tpu.pipeline_mode<synchronous>, transform_indices = @transform_1, window_bounds = array<i64: 128, 1024>}, {pipeline_mode = #tpu.pipeline_mode<synchronous>, transform_indices = @transform_2, window_bounds = array<i64: 1, 1024>}, {transform_indices = @transform_3, window_bounds = array<i64: 8, 1024>}]} {
    %c0 = arith.constant 0 : index
    %c0_0 = arith.constant 0 : index
    %0 = vector.load %arg1[%c0, %c0_0] : memref<8x128xbf16, #tpu.memory_space<vmem>>, vector<8x128xbf16>
    %c0_1 = arith.constant 0 : index
    %c0_2 = arith.constant 0 : index
    %1 = vector.load %arg2[%c0_1, %c0_2] : memref<128x1024xbf16, #tpu.memory_space<vmem>>, vector<128x1024xbf16>
    %cst = arith.constant dense<0.000000e+00> : vector<8x1024xf32>
    %2 = tpu.matmul %0, %1, %cst {dimension_numbers = #tpu.dot_dimension_numbers<[1], [0], [0], [1], [0, 0, 1, 1], [], []>} : vector<8x128xbf16>, vector<128x1024xbf16>, vector<8x1024xf32> -> vector<8x1024xf32>
    %c0_3 = arith.constant 0 : index
    %c0_4 = arith.constant 0 : index
    %3 = vector.load %arg3[%c0_3, %c0_4] : memref<1x1024xf32, #tpu.memory_space<vmem>>, vector<1x1024xf32>
    %4 = vector.broadcast %3 : vector<1x1024xf32> to vector<8x1024xf32>
    %5 = arith.addf %2, %4 : vector<8x1024xf32>
    %c0_5 = arith.constant 0 : index
    %c0_6 = arith.constant 0 : index
    %6 = vector.load %arg4[%c0_5, %c0_6] : memref<8x1024xf32, #tpu.memory_space<vmem>>, vector<8x1024xf32>
    tpu.vector_store %arg4[%c0_5, %c0_6], %5 {strides = array<i32>} : memref<8x1024xf32, #tpu.memory_space<vmem>>, vector<8x1024xf32>,
    return
  }
  func.func @transform_0(%arg0: i32) -> (i32, i32) {
    %c0_i32 = arith.constant 0 : i32
    %c0_i32_0 = arith.constant 0 : i32
    return %arg0, %c0_i32 : i32, i32
  }
  func.func @transform_1(%arg0: i32) -> (i32, i32) {
    %c0_i32 = arith.constant 0 : i32
    %c0_i32_0 = arith.constant 0 : i32
    %c0_i32_1 = arith.constant 0 : i32
    return %c0_i32, %c0_i32_0 : i32, i32
  }
  func.func @transform_2(%arg0: i32) -> (i32, i32) {
    %c0_i32 = arith.constant 0 : i32
    %c0_i32_0 = arith.constant 0 : i32
    %c0_i32_1 = arith.constant 0 : i32
    return %c0_i32, %c0_i32_0 : i32, i32
  }
  func.func @transform_3(%arg0: i32) -> (i32, i32) {
    %c0_i32 = arith.constant 0 : i32
    %c0_i32_0 = arith.constant 0 : i32
    return %arg0, %c0_i32 : i32, i32
  }
}

</mosaic_0001>

<llo_original>
// kernel: vgg_forward.18
$region0: #{vgg_forward.18}
  #allocation0 [shape = 'u32[]', space=smem, size = 0x4, offset = 0x4, fixed_abs, tag = 'smem constant byte address 0x4 - core index']
  #allocation1 [shape = 'u32[72,128]{1,0:T(1,128)}', space=vmem, size = 0x9000, scoped, tag = 'internal scratch']
  %s0 = inlined_call_operand.vmem [shape: f32[32,2,16,32], index: 0, kind: input, shape index: {}]
  %s1 = inlined_call_operand.vmem [shape: f32[1,32], index: 1, kind: input, shape index: {}]
  %s2 = inlined_call_operand.vmem [shape: f32[1,32], index: 2, kind: input, shape index: {}]
  %s3 = inlined_call_operand.vmem [shape: bf16[32,16,16], index: 3, kind: output, shape index: {}]
  %s4 = sld [smem:[#allocation0]]
  $region22: #{vgg_forward.18} parent=0
    _
  %s6 = ssub.s32 1, %s4
  %s7 = scalar_select 0, %s6, %s4
  // Predicated region
  $region2: #{vgg_forward.18} parent=0 // pred_check
    _
  $region3: #{vgg_forward.18} parent=0 // pred_check_branch
    %9 = sbr.rel (0) target = $region5
  $region4: #{vgg_forward.18} parent=0 // pred_region
    _
  $region5: #{vgg_forward.18} parent=0 // pred_fallthru
    _
  // Predicated region
  $region6: #{vgg_forward.18} parent=0 // pred_check
    _
  $region7: #{vgg_forward.18} parent=0 // pred_check_branch
    %11 = sbr.rel (0) target = $region9
  $region8: #{vgg_forward.18} parent=0 // pred_region
    _
  $region9: #{vgg_forward.18} parent=0 // pred_fallthru
    _
  // Predicated region
  $region10: #{vgg_forward.18} parent=0 // pred_check
    _
  $region11: #{vgg_forward.18} parent=0 // pred_check_branch
    %13 = sbr.rel (0) target = $region13
  $region12: #{vgg_forward.18} parent=0 // pred_region
    _
  $region13: #{vgg_forward.18} parent=0 // pred_fallthru
    _
  %v14 = vld [vmem:[%s0] sm:$0xff]
  %v15 = vld [vmem:[%s0 + $0x8] sm:$0xff]
  %v16 = vld [vmem:[%s0 + $0x10] sm:$0xff]
  %v17 = vld [vmem:[%s0 + $0x18] sm:$0xff]
  %v18 = vld [vmem:[%s0 + $0x20] sm:$0xff]
  %v19 = vld [vmem:[%s0 + $0x28] sm:$0xff]
  %v20 = vld [vmem:[%s0 + $0x30] sm:$0xff]
  %v21 = vld [vmem:[%s0 + $0x38] sm:$0xff]
  %v22 = vld [vmem:[%s0 + $0x40] sm:$0xff]
  %v23 = vld [vmem:[%s0 + $0x48] sm:$0xff]
  %v24 = vld [vmem:[%s0 + $0x50] sm:$0xff]
  %v25 = vld [vmem:[%s0 + $0x58] sm:$0xff]
  %v26 = vld [vmem:[%s0 + $0x60] sm:$0xff]
  %v27 = vld [vmem:[%s0 + $0x68] sm:$0xff]
  %v28 = vld [vmem:[%s0 + $0x70] sm:$0xff]
  %v29 = vld [vmem:[%s0 + $0x78] sm:$0xff]
  %v30 = vld [vmem:[%s0 + $0x80] sm:$0xff]
  %v31 = vld [vmem:[%s0 + $0x88] sm:$0xff]
  %v32 = vld [vmem:[%s0 + $0x90] sm:$0xff]
  %v33 = vld [vmem:[%s0 + $0x98] sm:$0xff]
  %v34 = vld [vmem:[%s0 + $0xa0] sm:$0xff]
  %v35 = vld [vmem:[%s0 + $0xa8] sm:$0xff]
  %v36 = vld [vmem:[%s0 + $0xb0] sm:$0xff]
  %v37 = vld [vmem:[%s0 + $0xb8] sm:$0xff]
  %v38 = vld [vmem:[%s0 + $0xc0] sm:$0xff]
  %v39 = vld [vmem:[%s0 + $0xc8] sm:$0xff]
  %v40 = vld [vmem:[%s0 + $0xd0] sm:$0xff]
  %v41 = vld [vmem:[%s0 + $0xd8] sm:$0xff]
  %v42 = vld [vmem:[%s0 + $0xe0] sm:$0xff]
  %v43 = vld [vmem:[%s0 + $0xe8] sm:$0xff]
  %v44 = vld [vmem:[%s0 + $0xf0] sm:$0xff]
  %v45 = vld [vmem:[%s0 + $0xf8] sm:$0xff]
  %v46 = vld [vmem:[%s0 + $0x100] sm:$0xff]
  %v47 = vld [vmem:[%s0 + $0x108] sm:$0xff]
  %v48 = vld [vmem:[%s0 + $0x110] sm:$0xff]
  %v49 = vld [vmem:[%s0 + $0x118] sm:$0xff]
  %v50 = vld [vmem:[%s0 + $0x120] sm:$0xff]
  %v51 = vld [vmem:[%s0 + $0x128] sm:$0xff]
  %v52 = vld [vmem:[%s0 + $0x130] sm:$0xff]
  %v53 = vld [vmem:[%s0 + $0x138] sm:$0xff]
  %v54 = vld [vmem:[%s0 + $0x140] sm:$0xff]
  %v55 = vld [vmem:[%s0 + $0x148] sm:$0xff]
  %v56 = vld [vmem:[%s0 + $0x150] sm:$0xff]
  %v57 = vld [vmem:[%s0 + $0x158] sm:$0xff]
  %v58 = vld [vmem:[%s0 + $0x160] sm:$0xff]
  %v59 = vld [vmem:[%s0 + $0x168] sm:$0xff]
  %v60 = vld [vmem:[%s0 + $0x170] sm:$0xff]
  %v61 = vld [vmem:[%s0 + $0x178] sm:$0xff]
  %v62 = vld [vmem:[%s0 + $0x180] sm:$0xff]
  %v63 = vld [vmem:[%s0 + $0x188] sm:$0xff]
  %v64 = vld [vmem:[%s0 + $0x190] sm:$0xff]
  %v65 = vld [vmem:[%s0 + $0x198] sm:$0xff]
  %v66 = vld [vmem:[%s0 + $0x1a0] sm:$0xff]
  %v67 = vld [vmem:[%s0 + $0x1a8] sm:$0xff]
  %v68 = vld [vmem:[%s0 + $0x1b0] sm:$0xff]
  %v69 = vld [vmem:[%s0 + $0x1b8] sm:$0xff]
  %v70 = vld [vmem:[%s0 + $0x1c0] sm:$0xff]
  %v71 = vld [vmem:[%s0 + $0x1c8] sm:$0xff]
  %v72 = vld [vmem:[%s0 + $0x1d0] sm:$0xff]
  %v73 = vld [vmem:[%s0 + $0x1d8] sm:$0xff]
  %v74 = vld [vmem:[%s0 + $0x1e0] sm:$0xff]
  %v75 = vld [vmem:[%s0 + $0x1e8] sm:$0xff]
  %v76 = vld [vmem:[%s0 + $0x1f0] sm:$0xff]
  %v77 = vld [vmem:[%s0 + $0x1f8] sm:$0xff]
  %v78 = vld [vmem:[%s0 + $0x200] sm:$0xff]
  %v79 = vld [vmem:[%s0 + $0x208] sm:$0xff]
  %v80 = vld [vmem:[%s0 + $0x210] sm:$0xff]
  %v81 = vld [vmem:[%s0 + $0x218] sm:$0xff]
  %v82 = vld [vmem:[%s0 + $0x220] sm:$0xff]
  %v83 = vld [vmem:[%s0 + $0x228] sm:$0xff]
  %v84 = vld [vmem:[%s0 + $0x230] sm:$0xff]
  %v85 = vld [vmem:[%s0 + $0x238] sm:$0xff]
  %v86 = vld [vmem:[%s0 + $0x240] sm:$0xff]
  %v87 = vld [vmem:[%s0 + $0x248] sm:$0xff]
  %v88 = vld [vmem:[%s0 + $0x250] sm:$0xff]
  %v89 = vld [vmem:[%s0 + $0x258] sm:$0xff]
  %v90 = vld [vmem:[%s0 + $0x260] sm:$0xff]
  %v91 = vld [vmem:[%s0 + $0x268] sm:$0xff]
  %v92 = vld [vmem:[%s0 + $0x270] sm:$0xff]
  %v93 = vld [vmem:[%s0 + $0x278] sm:$0xff]
  %v94 = vld [vmem:[%s0 + $0x280] sm:$0xff]
  %v95 = vld [vmem:[%s0 + $0x288] sm:$0xff]
  %v96 = vld [vmem:[%s0 + $0x290] sm:$0xff]
  %v97 = vld [vmem:[%s0 + $0x298] sm:$0xff]
  %v98 = vld [vmem:[%s0 + $0x2a0] sm:$0xff]
  %v99 = vld [vmem:[%s0 + $0x2a8] sm:$0xff]
  %v100 = vld [vmem:[%s0 + $0x2b0] sm:$0xff]
  %v101 = vld [vmem:[%s0 + $0x2b8] sm:$0xff]
  %v102 = vld [vmem:[%s0 + $0x2c0] sm:$0xff]
  %v103 = vld [vmem:[%s0 + $0x2c8] sm:$0xff]
  %v104 = vld [vmem:[%s0 + $0x2d0] sm:$0xff]
  %v105 = vld [vmem:[%s0 + $0x2d8] sm:$0xff]
  %v106 = vld [vmem:[%s0 + $0x2e0] sm:$0xff]
  %v107 = vld [vmem:[%s0 + $0x2e8] sm:$0xff]
  %v108 = vld [vmem:[%s0 + $0x2f0] sm:$0xff]
  %v109 = vld [vmem:[%s0 + $0x2f8] sm:$0xff]
  %v110 = vld [vmem:[%s0 + $0x300] sm:$0xff]
  %v111 = vld [vmem:[%s0 + $0x308] sm:$0xff]
  %v112 = vld [vmem:[%s0 + $0x310] sm:$0xff]
  %v113 = vld [vmem:[%s0 + $0x318] sm:$0xff]
  %v114 = vld [vmem:[%s0 + $0x320] sm:$0xff]
  %v115 = vld [vmem:[%s0 + $0x328] sm:$0xff]
  %v116 = vld [vmem:[%s0 + $0x330] sm:$0xff]
  %v117 = vld [vmem:[%s0 + $0x338] sm:$0xff]
  %v118 = vld [vmem:[%s0 + $0x340] sm:$0xff]
  %v119 = vld [vmem:[%s0 + $0x348] sm:$0xff]
  %v120 = vld [vmem:[%s0 + $0x350] sm:$0xff]
  %v121 = vld [vmem:[%s0 + $0x358] sm:$0xff]
  %v122 = vld [vmem:[%s0 + $0x360] sm:$0xff]
  %v123 = vld [vmem:[%s0 + $0x368] sm:$0xff]
  %v124 = vld [vmem:[%s0 + $0x370] sm:$0xff]
  %v125 = vld [vmem:[%s0 + $0x378] sm:$0xff]
  %v126 = vld [vmem:[%s0 + $0x380] sm:$0xff]
  %v127 = vld [vmem:[%s0 + $0x388] sm:$0xff]
  %v128 = vld [vmem:[%s0 + $0x390] sm:$0xff]
  %v129 = vld [vmem:[%s0 + $0x398] sm:$0xff]
  %v130 = vld [vmem:[%s0 + $0x3a0] sm:$0xff]
  %v131 = vld [vmem:[%s0 + $0x3a8] sm:$0xff]
  %v132 = vld [vmem:[%s0 + $0x3b0] sm:$0xff]
  %v133 = vld [vmem:[%s0 + $0x3b8] sm:$0xff]
  %v134 = vld [vmem:[%s0 + $0x3c0] sm:$0xff]
  %v135 = vld [vmem:[%s0 + $0x3c8] sm:$0xff]
  %v136 = vld [vmem:[%s0 + $0x3d0] sm:$0xff]
  %v137 = vld [vmem:[%s0 + $0x3d8] sm:$0xff]
  %v138 = vld [vmem:[%s0 + $0x3e0] sm:$0xff]
  %v139 = vld [vmem:[%s0 + $0x3e8] sm:$0xff]
  %v140 = vld [vmem:[%s0 + $0x3f0] sm:$0xff]
  %v141 = vld [vmem:[%s0 + $0x3f8] sm:$0xff]
  %v142 = vld [vmem:[%s1] sm:$0x1]
  %v144 = vperm.slane %v142, 0
  %v146 = vmul.f32 %v14, %v144
  %v147 = vmul.f32 %v15, %v144
  %v148 = vmul.f32 %v16, %v144
  %v149 = vmul.f32 %v17, %v144
  %v150 = vmul.f32 %v18, %v144
  %v151 = vmul.f32 %v19, %v144
  %v152 = vmul.f32 %v20, %v144
  %v153 = vmul.f32 %v21, %v144
  %v154 = vmul.f32 %v22, %v144
  %v155 = vmul.f32 %v23, %v144
  %v156 = vmul.f32 %v24, %v144
  %v157 = vmul.f32 %v25, %v144
  %v158 = vmul.f32 %v26, %v144
  %v159 = vmul.f32 %v27, %v144
  %v160 = vmul.f32 %v28, %v144
  %v161 = vmul.f32 %v29, %v144
  %v162 = vmul.f32 %v30, %v144
  %v163 = vmul.f32 %v31, %v144
  %v164 = vmul.f32 %v32, %v144
  %v165 = vmul.f32 %v33, %v144
  %v166 = vmul.f32 %v34, %v144
  %v167 = vmul.f32 %v35, %v144
  %v168 = vmul.f32 %v36, %v144
  %v169 = vmul.f32 %v37, %v144
  %v170 = vmul.f32 %v38, %v144
  %v171 = vmul.f32 %v39, %v144
  %v172 = vmul.f32 %v40, %v144
  %v173 = vmul.f32 %v41, %v144
  %v174 = vmul.f32 %v42, %v144
  %v175 = vmul.f32 %v43, %v144
  %v176 = vmul.f32 %v44, %v144
  %v177 = vmul.f32 %v45, %v144
  %v178 = vmul.f32 %v46, %v144
  %v179 = vmul.f32 %v47, %v144
  %v180 = vmul.f32 %v48, %v144
  %v181 = vmul.f32 %v49, %v144
  %v182 = vmul.f32 %v50, %v144
  %v183 = vmul.f32 %v51, %v144
  %v184 = vmul.f32 %v52, %v144
  %v185 = vmul.f32 %v53, %v144
  %v186 = vmul.f32 %v54, %v144
  %v187 = vmul.f32 %v55, %v144
  %v188 = vmul.f32 %v56, %v144
  %v189 = vmul.f32 %v57, %v144
  %v190 = vmul.f32 %v58, %v144
  %v191 = vmul.f32 %v59, %v144
  %v192 = vmul.f32 %v60, %v144
  %v193 = vmul.f32 %v61, %v144
  %v194 = vmul.f32 %v62, %v144
  %v195 = vmul.f32 %v63, %v144
  %v196 = vmul.f32 %v64, %v144
  %v197 = vmul.f32 %v65, %v144
  %v198 = vmul.f32 %v66, %v144
  %v199 = vmul.f32 %v67, %v144
  %v200 = vmul.f32 %v68, %v144
  %v201 = vmul.f32 %v69, %v144
  %v202 = vmul.f32 %v70, %v144
  %v203 = vmul.f32 %v71, %v144
  %v204 = vmul.f32 %v72, %v144
  %v205 = vmul.f32 %v73, %v144
  %v206 = vmul.f32 %v74, %v144
  %v207 = vmul.f32 %v75, %v144
  %v208 = vmul.f32 %v76, %v144
  %v209 = vmul.f32 %v77, %v144
  %v210 = vmul.f32 %v78, %v144
  %v211 = vmul.f32 %v79, %v144
  %v212 = vmul.f32 %v80, %v144
  %v213 = vmul.f32 %v81, %v144
  %v214 = vmul.f32 %v82, %v144
  %v215 = vmul.f32 %v83, %v144
  %v216 = vmul.f32 %v84, %v144
  %v217 = vmul.f32 %v85, %v144
  %v218 = vmul.f32 %v86, %v144
  %v219 = vmul.f32 %v87, %v144
  %v220 = vmul.f32 %v88, %v144
  %v221 = vmul.f32 %v89, %v144
  %v222 = vmul.f32 %v90, %v144
  %v223 = vmul.f32 %v91, %v144
  %v224 = vmul.f32 %v92, %v144
  %v225 = vmul.f32 %v93, %v144
  %v226 = vmul.f32 %v94, %v144
  %v227 = vmul.f32 %v95, %v144
  %v228 = vmul.f32 %v96, %v144
  %v229 = vmul.f32 %v97, %v144
  %v230 = vmul.f32 %v98, %v144
  %v231 = vmul.f32 %v99, %v144
  %v232 = vmul.f32 %v100, %v144
  %v233 = vmul.f32 %v101, %v144
  %v234 = vmul.f32 %v102, %v144
  %v235 = vmul.f32 %v103, %v144
  %v236 = vmul.f32 %v104, %v144
  %v237 = vmul.f32 %v105, %v144
  %v238 = vmul.f32 %v106, %v144
  %v239 = vmul.f32 %v107, %v144
  %v240 = vmul.f32 %v108, %v144
  %v241 = vmul.f32 %v109, %v144
  %v242 = vmul.f32 %v110, %v144
  %v243 = vmul.f32 %v111, %v144
  %v244 = vmul.f32 %v112, %v144
  %v245 = vmul.f32 %v113, %v144
  %v246 = vmul.f32 %v114, %v144
  %v247 = vmul.f32 %v115, %v144
  %v248 = vmul.f32 %v116, %v144
  %v249 = vmul.f32 %v117, %v144
  %v250 = vmul.f32 %v118, %v144
  %v251 = vmul.f32 %v119, %v144
  %v252 = vmul.f32 %v120, %v144
  %v253 = vmul.f32 %v121, %v144
  %v254 = vmul.f32 %v122, %v144
  %v255 = vmul.f32 %v123, %v144
  %v256 = vmul.f32 %v124, %v144
  %v257 = vmul.f32 %v125, %v144
  %v258 = vmul.f32 %v126, %v144
  %v259 = vmul.f32 %v127, %v144
  %v260 = vmul.f32 %v128, %v144
  %v261 = vmul.f32 %v129, %v144
  %v262 = vmul.f32 %v130, %v144
  %v263 = vmul.f32 %v131, %v144
  %v264 = vmul.f32 %v132, %v144
  %v265 = vmul.f32 %v133, %v144
  %v266 = vmul.f32 %v134, %v144
  %v267 = vmul.f32 %v135, %v144
  %v268 = vmul.f32 %v136, %v144
  %v269 = vmul.f32 %v137, %v144
  %v270 = vmul.f32 %v138, %v144
  %v271 = vmul.f32 %v139, %v144
  %v272 = vmul.f32 %v140, %v144
  %v273 = vmul.f32 %v141, %v144
  %v274 = vld [vmem:[%s2] sm:$0x1]
  %v276 = vperm.slane %v274, 0
  %v278 = vadd.f32 %v146, %v276
  %v279 = vadd.f32 %v147, %v276
  %v280 = vadd.f32 %v148, %v276
  %v281 = vadd.f32 %v149, %v276
  %v282 = vadd.f32 %v150, %v276
  %v283 = vadd.f32 %v151, %v276
  %v284 = vadd.f32 %v152, %v276
  %v285 = vadd.f32 %v153, %v276
  %v286 = vadd.f32 %v154, %v276
  %v287 = vadd.f32 %v155, %v276
  %v288 = vadd.f32 %v156, %v276
  %v289 = vadd.f32 %v157, %v276
  %v290 = vadd.f32 %v158, %v276
  %v291 = vadd.f32 %v159, %v276
  %v292 = vadd.f32 %v160, %v276
  %v293 = vadd.f32 %v161, %v276
  %v294 = vadd.f32 %v162, %v276
  %v295 = vadd.f32 %v163, %v276
  %v296 = vadd.f32 %v164, %v276
  %v297 = vadd.f32 %v165, %v276
  %v298 = vadd.f32 %v166, %v276
  %v299 = vadd.f32 %v167, %v276
  %v300 = vadd.f32 %v168, %v276
  %v301 = vadd.f32 %v169, %v276
  %v302 = vadd.f32 %v170, %v276
  %v303 = vadd.f32 %v171, %v276
  %v304 = vadd.f32 %v172, %v276
  %v305 = vadd.f32 %v173, %v276
  %v306 = vadd.f32 %v174, %v276
  %v307 = vadd.f32 %v175, %v276
  %v308 = vadd.f32 %v176, %v276
  %v309 = vadd.f32 %v177, %v276
  %v310 = vadd.f32 %v178, %v276
  %v311 = vadd.f32 %v179, %v276
  %v312 = vadd.f32 %v180, %v276
  %v313 = vadd.f32 %v181, %v276
  %v314 = vadd.f32 %v182, %v276
  %v315 = vadd.f32 %v183, %v276
  %v316 = vadd.f32 %v184, %v276
  %v317 = vadd.f32 %v185, %v276
  %v318 = vadd.f32 %v186, %v276
  %v319 = vadd.f32 %v187, %v276
  %v320 = vadd.f32 %v188, %v276
  %v321 = vadd.f32 %v189, %v276
  %v322 = vadd.f32 %v190, %v276
  %v323 = vadd.f32 %v191, %v276
  %v324 = vadd.f32 %v192, %v276
  %v325 = vadd.f32 %v193, %v276
  %v326 = vadd.f32 %v194, %v276
  %v327 = vadd.f32 %v195, %v276
  %v328 = vadd.f32 %v196, %v276
  %v329 = vadd.f32 %v197, %v276
  %v330 = vadd.f32 %v198, %v276
  %v331 = vadd.f32 %v199, %v276
  %v332 = vadd.f32 %v200, %v276
  %v333 = vadd.f32 %v201, %v276
  %v334 = vadd.f32 %v202, %v276
  %v335 = vadd.f32 %v203, %v276
  %v336 = vadd.f32 %v204, %v276
  %v337 = vadd.f32 %v205, %v276
  %v338 = vadd.f32 %v206, %v276
  %v339 = vadd.f32 %v207, %v276
  %v340 = vadd.f32 %v208, %v276
  %v341 = vadd.f32 %v209, %v276
  %v342 = vadd.f32 %v210, %v276
  %v343 = vadd.f32 %v211, %v276
  %v344 = vadd.f32 %v212, %v276
  %v345 = vadd.f32 %v213, %v276
  %v346 = vadd.f32 %v214, %v276
  %v347 = vadd.f32 %v215, %v276
  %v348 = vadd.f32 %v216, %v276
  %v349 = vadd.f32 %v217, %v276
  %v350 = vadd.f32 %v218, %v276
  %v351 = vadd.f32 %v219, %v276
  %v352 = vadd.f32 %v220, %v276
  %v353 = vadd.f32 %v221, %v276
  %v354 = vadd.f32 %v222, %v276
  %v355 = vadd.f32 %v223, %v276
  %v356 = vadd.f32 %v224, %v276
  %v357 = vadd.f32 %v225, %v276
  %v358 = vadd.f32 %v226, %v276
  %v359 = vadd.f32 %v227, %v276
  %v360 = vadd.f32 %v228, %v276
  %v361 = vadd.f32 %v229, %v276
  %v362 = vadd.f32 %v230, %v276
  %v363 = vadd.f32 %v231, %v276
  %v364 = vadd.f32 %v232, %v276
  %v365 = vadd.f32 %v233, %v276
  %v366 = vadd.f32 %v234, %v276
  %v367 = vadd.f32 %v235, %v276
  %v368 = vadd.f32 %v236, %v276
  %v369 = vadd.f32 %v237, %v276
  %v370 = vadd.f32 %v238, %v276
  %v371 = vadd.f32 %v239, %v276
  %v372 = vadd.f32 %v240, %v276
  %v373 = vadd.f32 %v241, %v276
  %v374 = vadd.f32 %v242, %v276
  %v375 = vadd.f32 %v243, %v276
  %v376 = vadd.f32 %v244, %v276
  %v377 = vadd.f32 %v245, %v276
  %v378 = vadd.f32 %v246, %v276
  %v379 = vadd.f32 %v247, %v276
  %v380 = vadd.f32 %v248, %v276
  %v381 = vadd.f32 %v249, %v276
  %v382 = vadd.f32 %v250, %v276
  %v383 = vadd.f32 %v251, %v276
  %v384 = vadd.f32 %v252, %v276
  %v385 = vadd.f32 %v253, %v276
  %v386 = vadd.f32 %v254, %v276
  %v387 = vadd.f32 %v255, %v276
  %v388 = vadd.f32 %v256, %v276
  %v389 = vadd.f32 %v257, %v276
  %v390 = vadd.f32 %v258, %v276
  %v391 = vadd.f32 %v259, %v276
  %v392 = vadd.f32 %v260, %v276
  %v393 = vadd.f32 %v261, %v276
  %v394 = vadd.f32 %v262, %v276
  %v395 = vadd.f32 %v263, %v276
  %v396 = vadd.f32 %v264, %v276
  %v397 = vadd.f32 %v265, %v276
  %v398 = vadd.f32 %v266, %v276
  %v399 = vadd.f32 %v267, %v276
  %v400 = vadd.f32 %v268, %v276
  %v401 = vadd.f32 %v269, %v276
  %v402 = vadd.f32 %v270, %v276
  %v403 = vadd.f32 %v271, %v276
  %v404 = vadd.f32 %v272, %v276
  %v405 = vadd.f32 %v273, %v276
  %v406 = vmax.f32 %v278, 0.0
  %v407 = vmax.f32 %v279, 0.0
  %v408 = vmax.f32 %v280, 0.0
  %v409 = vmax.f32 %v281, 0.0
  %v410 = vmax.f32 %v282, 0.0
  %v411 = vmax.f32 %v283, 0.0
  %v412 = vmax.f32 %v284, 0.0
  %v413 = vmax.f32 %v285, 0.0
  %v414 = vmax.f32 %v286, 0.0
  %v415 = vmax.f32 %v287, 0.0
  %v416 = vmax.f32 %v288, 0.0
  %v417 = vmax.f32 %v289, 0.0
  %v418 = vmax.f32 %v290, 0.0
  %v419 = vmax.f32 %v291, 0.0
  %v420 = vmax.f32 %v292, 0.0
  %v421 = vmax.f32 %v293, 0.0
  %v422 = vmax.f32 %v294, 0.0
  %v423 = vmax.f32 %v295, 0.0
  %v424 = vmax.f32 %v296, 0.0
  %v425 = vmax.f32 %v297, 0.0
  %v426 = vmax.f32 %v298, 0.0
  %v427 = vmax.f32 %v299, 0.0
  %v428 = vmax.f32 %v300, 0.0
  %v429 = vmax.f32 %v301, 0.0
  %v430 = vmax.f32 %v302, 0.0
  %v431 = vmax.f32 %v303, 0.0
  %v432 = vmax.f32 %v304, 0.0
  %v433 = vmax.f32 %v305, 0.0
  %v434 = vmax.f32 %v306, 0.0
  %v435 = vmax.f32 %v307, 0.0
  %v436 = vmax.f32 %v308, 0.0
  %v437 = vmax.f32 %v309, 0.0
  %v438 = vmax.f32 %v310, 0.0
  %v439 = vmax.f32 %v311, 0.0
  %v440 = vmax.f32 %v312, 0.0
  %v441 = vmax.f32 %v313, 0.0
  %v442 = vmax.f32 %v314, 0.0
  %v443 = vmax.f32 %v315, 0.0
  %v444 = vmax.f32 %v316, 0.0
  %v445 = vmax.f32 %v317, 0.0
  %v446 = vmax.f32 %v318, 0.0
  %v447 = vmax.f32 %v319, 0.0
  %v448 = vmax.f32 %v320, 0.0
  %v449 = vmax.f32 %v321, 0.0
  %v450 = vmax.f32 %v322, 0.0
  %v451 = vmax.f32 %v323, 0.0
  %v452 = vmax.f32 %v324, 0.0
  %v453 = vmax.f32 %v325, 0.0
  %v454 = vmax.f32 %v326, 0.0
  %v455 = vmax.f32 %v327, 0.0
  %v456 = vmax.f32 %v328, 0.0
  %v457 = vmax.f32 %v329, 0.0
  %v458 = vmax.f32 %v330, 0.0
  %v459 = vmax.f32 %v331, 0.0
  %v460 = vmax.f32 %v332, 0.0
  %v461 = vmax.f32 %v333, 0.0
  %v462 = vmax.f32 %v334, 0.0
  %v463 = vmax.f32 %v335, 0.0
  %v464 = vmax.f32 %v336, 0.0
  %v465 = vmax.f32 %v337, 0.0
  %v466 = vmax.f32 %v338, 0.0
  %v467 = vmax.f32 %v339, 0.0
  %v468 = vmax.f32 %v340, 0.0
  %v469 = vmax.f32 %v341, 0.0
  %v470 = vmax.f32 %v342, 0.0
  %v471 = vmax.f32 %v343, 0.0
  %v472 = vmax.f32 %v344, 0.0
  %v473 = vmax.f32 %v345, 0.0
  %v474 = vmax.f32 %v346, 0.0
  %v475 = vmax.f32 %v347, 0.0
  %v476 = vmax.f32 %v348, 0.0
  %v477 = vmax.f32 %v349, 0.0
  %v478 = vmax.f32 %v350, 0.0
  %v479 = vmax.f32 %v351, 0.0
  %v480 = vmax.f32 %v352, 0.0
  %v481 = vmax.f32 %v353, 0.0
  %v482 = vmax.f32 %v354, 0.0
  %v483 = vmax.f32 %v355, 0.0
  %v484 = vmax.f32 %v356, 0.0
  %v485 = vmax.f32 %v357, 0.0
  %v486 = vmax.f32 %v358, 0.0
  %v487 = vmax.f32 %v359, 0.0
  %v488 = vmax.f32 %v360, 0.0
  %v489 = vmax.f32 %v361, 0.0
  %v490 = vmax.f32 %v362, 0.0
  %v491 = vmax.f32 %v363, 0.0
  %v492 = vmax.f32 %v364, 0.0
  %v493 = vmax.f32 %v365, 0.0
  %v494 = vmax.f32 %v366, 0.0
  %v495 = vmax.f32 %v367, 0.0
  %v496 = vmax.f32 %v368, 0.0
  %v497 = vmax.f32 %v369, 0.0
  %v498 = vmax.f32 %v370, 0.0
  %v499 = vmax.f32 %v371, 0.0
  %v500 = vmax.f32 %v372, 0.0
  %v501 = vmax.f32 %v373, 0.0
  %v502 = vmax.f32 %v374, 0.0
  %v503 = vmax.f32 %v375, 0.0
  %v504 = vmax.f32 %v376, 0.0
  %v505 = vmax.f32 %v377, 0.0
  %v506 = vmax.f32 %v378, 0.0
  %v507 = vmax.f32 %v379, 0.0
  %v508 = vmax.f32 %v380, 0.0
  %v509 = vmax.f32 %v381, 0.0
  %v510 = vmax.f32 %v382, 0.0
  %v511 = vmax.f32 %v383, 0.0
  %v512 = vmax.f32 %v384, 0.0
  %v513 = vmax.f32 %v385, 0.0
  %v514 = vmax.f32 %v386, 0.0
  %v515 = vmax.f32 %v387, 0.0
  %v516 = vmax.f32 %v388, 0.0
  %v517 = vmax.f32 %v389, 0.0
  %v518 = vmax.f32 %v390, 0.0
  %v519 = vmax.f32 %v391, 0.0
  %v520 = vmax.f32 %v392, 0.0
  %v521 = vmax.f32 %v393, 0.0
  %v522 = vmax.f32 %v394, 0.0
  %v523 = vmax.f32 %v395, 0.0
  %v524 = vmax.f32 %v396, 0.0
  %v525 = vmax.f32 %v397, 0.0
  %v526 = vmax.f32 %v398, 0.0
  %v527 = vmax.f32 %v399, 0.0
  %v528 = vmax.f32 %v400, 0.0
  %v529 = vmax.f32 %v401, 0.0
  %v530 = vmax.f32 %v402, 0.0
  %v531 = vmax.f32 %v403, 0.0
  %v532 = vmax.f32 %v404, 0.0
  %v533 = vmax.f32 %v405, 0.0
  %v534 = vmax.f32 %v406, %v408
  %v535 = vmax.f32 %v407, %v409
  %v536 = vmax.f32 %v410, %v412
  %v537 = vmax.f32 %v411, %v413
  %v538 = vmax.f32 %v414, %v416
  %v539 = vmax.f32 %v415, %v417
  %v540 = vmax.f32 %v418, %v420
  %v541 = vmax.f32 %v419, %v421
  %v542 = vmax.f32 %v422, %v424
  %v543 = vmax.f32 %v423, %v425
  %v544 = vmax.f32 %v426, %v428
  %v545 = vmax.f32 %v427, %v429
  %v546 = vmax.f32 %v430, %v432
  %v547 = vmax.f32 %v431, %v433
  %v548 = vmax.f32 %v434, %v436
  %v549 = vmax.f32 %v435, %v437
  %v550 = vmax.f32 %v438, %v440
  %v551 = vmax.f32 %v439, %v441
  %v552 = vmax.f32 %v442, %v444
  %v553 = vmax.f32 %v443, %v445
  %v554 = vmax.f32 %v446, %v448
  %v555 = vmax.f32 %v447, %v449
  %v556 = vmax.f32 %v450, %v452
  %v557 = vmax.f32 %v451, %v453
  %v558 = vmax.f32 %v454, %v456
  %v559 = vmax.f32 %v455, %v457
  %v560 = vmax.f32 %v458, %v460
  %v561 = vmax.f32 %v459, %v461
  %v562 = vmax.f32 %v462, %v464
  %v563 = vmax.f32 %v463, %v465
  %v564 = vmax.f32 %v466, %v468
  %v565 = vmax.f32 %v467, %v469
  %v566 = vmax.f32 %v470, %v472
  %v567 = vmax.f32 %v471, %v473
  %v568 = vmax.f32 %v474, %v476
  %v569 = vmax.f32 %v475, %v477
  %v570 = vmax.f32 %v478, %v480
  %v571 = vmax.f32 %v479, %v481
  %v572 = vmax.f32 %v482, %v484
  %v573 = vmax.f32 %v483, %v485
  %v574 = vmax.f32 %v486, %v488
  %v575 = vmax.f32 %v487, %v489
  %v576 = vmax.f32 %v490, %v492
  %v577 = vmax.f32 %v491, %v493
  %v578 = vmax.f32 %v494, %v496
  %v579 = vmax.f32 %v495, %v497
  %v580 = vmax.f32 %v498, %v500
  %v581 = vmax.f32 %v499, %v501
  %v582 = vmax.f32 %v502, %v504
  %v583 = vmax.f32 %v503, %v505
  %v584 = vmax.f32 %v506, %v508
  %v585 = vmax.f32 %v507, %v509
  %v586 = vmax.f32 %v510, %v512
  %v587 = vmax.f32 %v511, %v513
  %v588 = vmax.f32 %v514, %v516
  %v589 = vmax.f32 %v515, %v517
  %v590 = vmax.f32 %v518, %v520
  %v591 = vmax.f32 %v519, %v521
  %v592 = vmax.f32 %v522, %v524
  %v593 = vmax.f32 %v523, %v525
  %v594 = vmax.f32 %v526, %v528
  %v595 = vmax.f32 %v527, %v529
  %v596 = vmax.f32 %v530, %v532
  %v597 = vmax.f32 %v531, %v533
  %662 = vrot.lane.b32.xlu0 %v534, 112
  %v663 = vpop.permute.xlu0 %662
  %664 = vrot.lane.b32.xlu0 %v535, 112
  %v665 = vpop.permute.xlu0 %664
  %666 = vrot.lane.b32.xlu0 %v536, 112
  %v667 = vpop.permute.xlu0 %666
  %668 = vrot.lane.b32.xlu0 %v537, 112
  %v669 = vpop.permute.xlu0 %668
  %670 = vrot.lane.b32.xlu0 %v538, 112
  %v671 = vpop.permute.xlu0 %670
  %672 = vrot.lane.b32.xlu0 %v539, 112
  %v673 = vpop.permute.xlu0 %672
  %674 = vrot.lane.b32.xlu0 %v540, 112
  %v675 = vpop.permute.xlu0 %674
  %676 = vrot.lane.b32.xlu0 %v541, 112
  %v677 = vpop.permute.xlu0 %676
  %678 = vrot.lane.b32.xlu0 %v542, 112
  %v679 = vpop.permute.xlu0 %678
  %680 = vrot.lane.b32.xlu0 %v543, 112
  %v681 = vpop.permute.xlu0 %680
  %682 = vrot.lane.b32.xlu0 %v544, 112
  %v683 = vpop.permute.xlu0 %682
  %684 = vrot.lane.b32.xlu0 %v545, 112
  %v685 = vpop.permute.xlu0 %684
  %686 = vrot.lane.b32.xlu0 %v546, 112
  %v687 = vpop.permute.xlu0 %686
  %688 = vrot.lane.b32.xlu0 %v547, 112
  %v689 = vpop.permute.xlu0 %688
  %690 = vrot.lane.b32.xlu0 %v548, 112
  %v691 = vpop.permute.xlu0 %690
  %692 = vrot.lane.b32.xlu0 %v549, 112
  %v693 = vpop.permute.xlu0 %692
  %694 = vrot.lane.b32.xlu0 %v550, 112
  %v695 = vpop.permute.xlu0 %694
  %696 = vrot.lane.b32.xlu0 %v551, 112
  %v697 = vpop.permute.xlu0 %696
  %698 = vrot.lane.b32.xlu0 %v552, 112
  %v699 = vpop.permute.xlu0 %698
  %700 = vrot.lane.b32.xlu0 %v553, 112
  %v701 = vpop.permute.xlu0 %700
  %702 = vrot.lane.b32.xlu0 %v554, 112
  %v703 = vpop.permute.xlu0 %702
  %704 = vrot.lane.b32.xlu0 %v555, 112
  %v705 = vpop.permute.xlu0 %704
  %706 = vrot.lane.b32.xlu0 %v556, 112
  %v707 = vpop.permute.xlu0 %706
  %708 = vrot.lane.b32.xlu0 %v557, 112
  %v709 = vpop.permute.xlu0 %708
  %710 = vrot.lane.b32.xlu0 %v558, 112
  %v711 = vpop.permute.xlu0 %710
  %712 = vrot.lane.b32.xlu0 %v559, 112
  %v713 = vpop.permute.xlu0 %712
  %714 = vrot.lane.b32.xlu0 %v560, 112
  %v715 = vpop.permute.xlu0 %714
  %716 = vrot.lane.b32.xlu0 %v561, 112
  %v717 = vpop.permute.xlu0 %716
  %718 = vrot.lane.b32.xlu0 %v562, 112
  %v719 = vpop.permute.xlu0 %718
  %720 = vrot.lane.b32.xlu0 %v563, 112
  %v721 = vpop.permute.xlu0 %720
  %722 = vrot.lane.b32.xlu0 %v564, 112
  %v723 = vpop.permute.xlu0 %722
  %724 = vrot.lane.b32.xlu0 %v565, 112
  %v725 = vpop.permute.xlu0 %724
  %726 = vrot.lane.b32.xlu0 %v566, 112
  %v727 = vpop.permute.xlu0 %726
  %728 = vrot.lane.b32.xlu0 %v567, 112
  %v729 = vpop.permute.xlu0 %728
  %730 = vrot.lane.b32.xlu0 %v568, 112
  %v731 = vpop.permute.xlu0 %730
  %732 = vrot.lane.b32.xlu0 %v569, 112
  %v733 = vpop.permute.xlu0 %732
  %734 = vrot.lane.b32.xlu0 %v570, 112
  %v735 = vpop.permute.xlu0 %734
  %736 = vrot.lane.b32.xlu0 %v571, 112
  %v737 = vpop.permute.xlu0 %736
  %738 = vrot.lane.b32.xlu0 %v572, 112
  %v739 = vpop.permute.xlu0 %738
  %740 = vrot.lane.b32.xlu0 %v573, 112
  %v741 = vpop.permute.xlu0 %740
  %742 = vrot.lane.b32.xlu0 %v574, 112
  %v743 = vpop.permute.xlu0 %742
  %744 = vrot.lane.b32.xlu0 %v575, 112
  %v745 = vpop.permute.xlu0 %744
  %746 = vrot.lane.b32.xlu0 %v576, 112
  %v747 = vpop.permute.xlu0 %746
  %748 = vrot.lane.b32.xlu0 %v577, 112
  %v749 = vpop.permute.xlu0 %748
  %750 = vrot.lane.b32.xlu0 %v578, 112
  %v751 = vpop.permute.xlu0 %750
  %752 = vrot.lane.b32.xlu0 %v579, 112
  %v753 = vpop.permute.xlu0 %752
  %754 = vrot.lane.b32.xlu0 %v580, 112
  %v755 = vpop.permute.xlu0 %754
  %756 = vrot.lane.b32.xlu0 %v581, 112
  %v757 = vpop.permute.xlu0 %756
  %758 = vrot.lane.b32.xlu0 %v582, 112
  %v759 = vpop.permute.xlu0 %758
  %760 = vrot.lane.b32.xlu0 %v583, 112
  %v761 = vpop.permute.xlu0 %760
  %762 = vrot.lane.b32.xlu0 %v584, 112
  %v763 = vpop.permute.xlu0 %762
  %764 = vrot.lane.b32.xlu0 %v585, 112
  %v765 = vpop.permute.xlu0 %764
  %766 = vrot.lane.b32.xlu0 %v586, 112
  %v767 = vpop.permute.xlu0 %766
  %768 = vrot.lane.b32.xlu0 %v587, 112
  %v769 = vpop.permute.xlu0 %768
  %770 = vrot.lane.b32.xlu0 %v588, 112
  %v771 = vpop.permute.xlu0 %770
  %772 = vrot.lane.b32.xlu0 %v589, 112
  %v773 = vpop.permute.xlu0 %772
  %774 = vrot.lane.b32.xlu0 %v590, 112
  %v775 = vpop.permute.xlu0 %774
  %776 = vrot.lane.b32.xlu0 %v591, 112
  %v777 = vpop.permute.xlu0 %776
  %778 = vrot.lane.b32.xlu0 %v592, 112
  %v779 = vpop.permute.xlu0 %778
  %780 = vrot.lane.b32.xlu0 %v593, 112
  %v781 = vpop.permute.xlu0 %780
  %782 = vrot.lane.b32.xlu0 %v594, 112
  %v783 = vpop.permute.xlu0 %782
  %784 = vrot.lane.b32.xlu0 %v595, 112
  %v785 = vpop.permute.xlu0 %784
  %786 = vrot.lane.b32.xlu0 %v596, 112
  %v787 = vpop.permute.xlu0 %786
  %788 = vrot.lane.b32.xlu0 %v597, 112
  %v789 = vpop.permute.xlu0 %788
  %v854 = vmax.f32 %v534, %v663
  %v855 = vmax.f32 %v535, %v665
  %v856 = vmax.f32 %v536, %v667
  %v857 = vmax.f32 %v537, %v669
  %v858 = vmax.f32 %v538, %v671
  %v859 = vmax.f32 %v539, %v673
  %v860 = vmax.f32 %v540, %v675
  %v861 = vmax.f32 %v541, %v677
  %v862 = vmax.f32 %v542, %v679
  %v863 = vmax.f32 %v543, %v681
  %v864 = vmax.f32 %v544, %v683
  %v865 = vmax.f32 %v545, %v685
  %v866 = vmax.f32 %v546, %v687
  %v867 = vmax.f32 %v547, %v689
  %v868 = vmax.f32 %v548, %v691
  %v869 = vmax.f32 %v549, %v693
  %v870 = vmax.f32 %v550, %v695
  %v871 = vmax.f32 %v551, %v697
  %v872 = vmax.f32 %v552, %v699
  %v873 = vmax.f32 %v553, %v701
  %v874 = vmax.f32 %v554, %v703
  %v875 = vmax.f32 %v555, %v705
  %v876 = vmax.f32 %v556, %v707
  %v877 = vmax.f32 %v557, %v709
  %v878 = vmax.f32 %v558, %v711
  %v879 = vmax.f32 %v559, %v713
  %v880 = vmax.f32 %v560, %v715
  %v881 = vmax.f32 %v561, %v717
  %v882 = vmax.f32 %v562, %v719
  %v883 = vmax.f32 %v563, %v721
  %v884 = vmax.f32 %v564, %v723
  %v885 = vmax.f32 %v565, %v725
  %v886 = vmax.f32 %v566, %v727
  %v887 = vmax.f32 %v567, %v729
  %v888 = vmax.f32 %v568, %v731
  %v889 = vmax.f32 %v569, %v733
  %v890 = vmax.f32 %v570, %v735
  %v891 = vmax.f32 %v571, %v737
  %v892 = vmax.f32 %v572, %v739
  %v893 = vmax.f32 %v573, %v741
  %v894 = vmax.f32 %v574, %v743
  %v895 = vmax.f32 %v575, %v745
  %v896 = vmax.f32 %v576, %v747
  %v897 = vmax.f32 %v577, %v749
  %v898 = vmax.f32 %v578, %v751
  %v899 = vmax.f32 %v579, %v753
  %v900 = vmax.f32 %v580, %v755
  %v901 = vmax.f32 %v581, %v757
  %v902 = vmax.f32 %v582, %v759
  %v903 = vmax.f32 %v583, %v761
  %v904 = vmax.f32 %v584, %v763
  %v905 = vmax.f32 %v585, %v765
  %v906 = vmax.f32 %v586, %v767
  %v907 = vmax.f32 %v587, %v769
  %v908 = vmax.f32 %v588, %v771
  %v909 = vmax.f32 %v589, %v773
  %v910 = vmax.f32 %v590, %v775
  %v911 = vmax.f32 %v591, %v777
  %v912 = vmax.f32 %v592, %v779
  %v913 = vmax.f32 %v593, %v781
  %v914 = vmax.f32 %v594, %v783
  %v915 = vmax.f32 %v595, %v785
  %v916 = vmax.f32 %v596, %v787
  %v917 = vmax.f32 %v597, %v789
  %v918 = vpack.c.bf16 %v854, %v854
  %v919 = vpack.c.bf16 %v855, %v855
  %v920 = vpack.c.bf16 %v856, %v856
  %v921 = vpack.c.bf16 %v857, %v857
  %v922 = vpack.c.bf16 %v858, %v858
  %v923 = vpack.c.bf16 %v859, %v859
  %v924 = vpack.c.bf16 %v860, %v860
  %v925 = vpack.c.bf16 %v861, %v861
  %v926 = vpack.c.bf16 %v862, %v862
  %v927 = vpack.c.bf16 %v863, %v863
  %v928 = vpack.c.bf16 %v864, %v864
  %v929 = vpack.c.bf16 %v865, %v865
  %v930 = vpack.c.bf16 %v866, %v866
  %v931 = vpack.c.bf16 %v867, %v867
  %v932 = vpack.c.bf16 %v868, %v868
  %v933 = vpack.c.bf16 %v869, %v869
  %v934 = vpack.c.bf16 %v870, %v870
  %v935 = vpack.c.bf16 %v871, %v871
  %v936 = vpack.c.bf16 %v872, %v872
  %v937 = vpack.c.bf16 %v873, %v873
  %v938 = vpack.c.bf16 %v874, %v874
  %v939 = vpack.c.bf16 %v875, %v875
  %v940 = vpack.c.bf16 %v876, %v876
  %v941 = vpack.c.bf16 %v877, %v877
  %v942 = vpack.c.bf16 %v878, %v878
  %v943 = vpack.c.bf16 %v879, %v879
  %v944 = vpack.c.bf16 %v880, %v880
  %v945 = vpack.c.bf16 %v881, %v881
  %v946 = vpack.c.bf16 %v882, %v882
  %v947 = vpack.c.bf16 %v883, %v883
  %v948 = vpack.c.bf16 %v884, %v884
  %v949 = vpack.c.bf16 %v885, %v885
  %v950 = vpack.c.bf16 %v886, %v886
  %v951 = vpack.c.bf16 %v887, %v887
  %v952 = vpack.c.bf16 %v888, %v888
  %v953 = vpack.c.bf16 %v889, %v889
  %v954 = vpack.c.bf16 %v890, %v890
  %v955 = vpack.c.bf16 %v891, %v891
  %v956 = vpack.c.bf16 %v892, %v892
  %v957 = vpack.c.bf16 %v893, %v893
  %v958 = vpack.c.bf16 %v894, %v894
  %v959 = vpack.c.bf16 %v895, %v895
  %v960 = vpack.c.bf16 %v896, %v896
  %v961 = vpack.c.bf16 %v897, %v897
  %v962 = vpack.c.bf16 %v898, %v898
  %v963 = vpack.c.bf16 %v899, %v899
  %v964 = vpack.c.bf16 %v900, %v900
  %v965 = vpack.c.bf16 %v901, %v901
  %v966 = vpack.c.bf16 %v902, %v902
  %v967 = vpack.c.bf16 %v903, %v903
  %v968 = vpack.c.bf16 %v904, %v904
  %v969 = vpack.c.bf16 %v905, %v905
  %v970 = vpack.c.bf16 %v906, %v906
  %v971 = vpack.c.bf16 %v907, %v907
  %v972 = vpack.c.bf16 %v908, %v908
  %v973 = vpack.c.bf16 %v909, %v909
  %v974 = vpack.c.bf16 %v910, %v910
  %v975 = vpack.c.bf16 %v911, %v911
  %v976 = vpack.c.bf16 %v912, %v912
  %v977 = vpack.c.bf16 %v913, %v913
  %v978 = vpack.c.bf16 %v914, %v914
  %v979 = vpack.c.bf16 %v915, %v915
  %v980 = vpack.c.bf16 %v916, %v916
  %v981 = vpack.c.bf16 %v917, %v917
  %vm982 = vcmask 125952
  %983 = vst.msk [vmem:[%s3] sm:$0xf] %vm982, %v918
  %984 = vst.msk [vmem:[%s3 + $0x4] sm:$0xf] %vm982, %v919
  %985 = vst.msk [vmem:[%s3 + $0x8] sm:$0xf] %vm982, %v920
  %986 = vst.msk [vmem:[%s3 + $0xc] sm:$0xf] %vm982, %v921
  %987 = vst.msk [vmem:[%s3 + $0x10] sm:$0xf] %vm982, %v922
  %988 = vst.msk [vmem:[%s3 + $0x14] sm:$0xf] %vm982, %v923
  %989 = vst.msk [vmem:[%s3 + $0x18] sm:$0xf] %vm982, %v924
  %990 = vst.msk [vmem:[%s3 + $0x1c] sm:$0xf] %vm982, %v925
  %991 = vst.msk [vmem:[%s3 + $0x20] sm:$0xf] %vm982, %v926
  %992 = vst.msk [vmem:[%s3 + $0x24] sm:$0xf] %vm982, %v927
  %993 = vst.msk [vmem:[%s3 + $0x28] sm:$0xf] %vm982, %v928
  %994 = vst.msk [vmem:[%s3 + $0x2c] sm:$0xf] %vm982, %v929
  %995 = vst.msk [vmem:[%s3 + $0x30] sm:$0xf] %vm982, %v930
  %996 = vst.msk [vmem:[%s3 + $0x34] sm:$0xf] %vm982, %v931
  %997 = vst.msk [vmem:[%s3 + $0x38] sm:$0xf] %vm982, %v932
  %998 = vst.msk [vmem:[%s3 + $0x3c] sm:$0xf] %vm982, %v933
  %999 = vst.msk [vmem:[%s3 + $0x40] sm:$0xf] %vm982, %v934
  %1000 = vst.msk [vmem:[%s3 + $0x44] sm:$0xf] %vm982, %v935
  %1001 = vst.msk [vmem:[%s3 + $0x48] sm:$0xf] %vm982, %v936
  %1002 = vst.msk [vmem:[%s3 + $0x4c] sm:$0xf] %vm982, %v937
  %1003 = vst.msk [vmem:[%s3 + $0x50] sm:$0xf] %vm982, %v938
  %1004 = vst.msk [vmem:[%s3 + $0x54] sm:$0xf] %vm982, %v939
  %1005 = vst.msk [vmem:[%s3 + $0x58] sm:$0xf] %vm982, %v940
  %1006 = vst.msk [vmem:[%s3 + $0x5c] sm:$0xf] %vm982, %v941
  %1007 = vst.msk [vmem:[%s3 + $0x60] sm:$0xf] %vm982, %v942
  %1008 = vst.msk [vmem:[%s3 + $0x64] sm:$0xf] %vm982, %v943
  %1009 = vst.msk [vmem:[%s3 + $0x68] sm:$0xf] %vm982, %v944
  %1010 = vst.msk [vmem:[%s3 + $0x6c] sm:$0xf] %vm982, %v945
  %1011 = vst.msk [vmem:[%s3 + $0x70] sm:$0xf] %vm982, %v946
  %1012 = vst.msk [vmem:[%s3 + $0x74] sm:$0xf] %vm982, %v947
  %1013 = vst.msk [vmem:[%s3 + $0x78] sm:$0xf] %vm982, %v948
  %1014 = vst.msk [vmem:[%s3 + $0x7c] sm:$0xf] %vm982, %v949
  %1015 = vst.msk [vmem:[%s3 + $0x80] sm:$0xf] %vm982, %v950
  %1016 = vst.msk [vmem:[%s3 + $0x84] sm:$0xf] %vm982, %v951
  %1017 = vst.msk [vmem:[%s3 + $0x88] sm:$0xf] %vm982, %v952
  %1018 = vst.msk [vmem:[%s3 + $0x8c] sm:$0xf] %vm982, %v953
  %1019 = vst.msk [vmem:[%s3 + $0x90] sm:$0xf] %vm982, %v954
  %1020 = vst.msk [vmem:[%s3 + $0x94] sm:$0xf] %vm982, %v955
  %1021 = vst.msk [vmem:[%s3 + $0x98] sm:$0xf] %vm982, %v956
  %1022 = vst.msk [vmem:[%s3 + $0x9c] sm:$0xf] %vm982, %v957
  %1023 = vst.msk [vmem:[%s3 + $0xa0] sm:$0xf] %vm982, %v958
  %1024 = vst.msk [vmem:[%s3 + $0xa4] sm:$0xf] %vm982, %v959
  %1025 = vst.msk [vmem:[%s3 + $0xa8] sm:$0xf] %vm982, %v960
  %1026 = vst.msk [vmem:[%s3 + $0xac] sm:$0xf] %vm982, %v961
  %1027 = vst.msk [vmem:[%s3 + $0xb0] sm:$0xf] %vm982, %v962
  %1028 = vst.msk [vmem:[%s3 + $0xb4] sm:$0xf] %vm982, %v963
  %1029 = vst.msk [vmem:[%s3 + $0xb8] sm:$0xf] %vm982, %v964
  %1030 = vst.msk [vmem:[%s3 + $0xbc] sm:$0xf] %vm982, %v965
  %1031 = vst.msk [vmem:[%s3 + $0xc0] sm:$0xf] %vm982, %v966
  %1032 = vst.msk [vmem:[%s3 + $0xc4] sm:$0xf] %vm982, %v967
  %1033 = vst.msk [vmem:[%s3 + $0xc8] sm:$0xf] %vm982, %v968
  %1034 = vst.msk [vmem:[%s3 + $0xcc] sm:$0xf] %vm982, %v969
  %1035 = vst.msk [vmem:[%s3 + $0xd0] sm:$0xf] %vm982, %v970
  %1036 = vst.msk [vmem:[%s3 + $0xd4] sm:$0xf] %vm982, %v971
  %1037 = vst.msk [vmem:[%s3 + $0xd8] sm:$0xf] %vm982, %v972
  %1038 = vst.msk [vmem:[%s3 + $0xdc] sm:$0xf] %vm982, %v973
  %1039 = vst.msk [vmem:[%s3 + $0xe0] sm:$0xf] %vm982, %v974
  %1040 = vst.msk [vmem:[%s3 + $0xe4] sm:$0xf] %vm982, %v975
  %1041 = vst.msk [vmem:[%s3 + $0xe8] sm:$0xf] %vm982, %v976
  %1042 = vst.msk [vmem:[%s3 + $0xec] sm:$0xf] %vm982, %v977
  %1043 = vst.msk [vmem:[%s3 + $0xf0] sm:$0xf] %vm982, %v978
  %1044 = vst.msk [vmem:[%s3 + $0xf4] sm:$0xf] %vm982, %v979
  %1045 = vst.msk [vmem:[%s3 + $0xf8] sm:$0xf] %vm982, %v980
  %1046 = vst.msk [vmem:[%s3 + $0xfc] sm:$0xf] %vm982, %v981
  // Predicated region
  $region14: #{vgg_forward.18} parent=0 // pred_check
    _
  $region15: #{vgg_forward.18} parent=0 // pred_check_branch
    %1048 = sbr.rel (0) target = $region17
  $region16: #{vgg_forward.18} parent=0 // pred_region
    _
  $region17: #{vgg_forward.18} parent=0 // pred_fallthru
    _
  // Predicated region
  $region18: #{vgg_forward.18} parent=0 // pred_check
    _
  $region19: #{vgg_forward.18} parent=0 // pred_check_branch
    %1050 = sbr.rel (0) target = $region21
  $region20: #{vgg_forward.18} parent=0 // pred_region
    _
  $region21: #{vgg_forward.18} parent=0 // pred_fallthru
    _

// kernel: vgg_forward.17
$region0: #{vgg_forward.17}
  #allocation0 [shape = 'u32[]', space=smem, size = 0x4, offset = 0x4, fixed_abs, tag = 'smem constant byte address 0x4 - core index']
  #allocation1 [shape = 'u32[72,128]{1,0:T(1,128)}', space=vmem, size = 0x9000, scoped, tag = 'internal scratch']
  %s0 = inlined_call_operand.vmem [shape: bf16[2048,27], index: 0, kind: input, shape index: {}]
  %s1 = inlined_call_operand.vmem [shape: bf16[27,16], index: 1, kind: input, shape index: {}]
  %s2 = inlined_call_operand.vmem [shape: f32[2048,16], index: 2, kind: output, shape index: {0}]
  %s3 = inlined_call_operand.vmem [shape: f32[32,16], index: 3, kind: output, shape index: {1}]
  %4 = xla_tuple %s2, %s3
  %s5 = sld [smem:[#allocation0]]
  $region49: #{vgg_forward.17} parent=0
    _
  %s7 = ssub.s32 1, %s5
  %s8 = scalar_select 0, %s7, %s5
  loop: start=0, step=1, limit=6
  $region2: #{vgg_forward.17} parent=0 // loop_pre_header
    _
  $region3: #{vgg_forward.17} parent=0 // loop_header
    %s10 = sphi 0, %s14
    %p11 = scmp.ge.s32.totalorder %s10, 6
    %s20 = sphi 0, %s22
    %s23 = sphi 0, %s20
    %s24 = sphi 0, %s23
    %s40 = sphi 0, %s24
    %s44 = sphi 0, %s44
    %s46 = sphi 0, %s44
    %s47 = sphi 0, %s46
    %s61 = sphi 0, %s47
    %s67 = sphi 0, %s69
    %s70 = sphi 0, %s67
    %s71 = sphi 0, %s70
    %s87 = sphi 0, %s71
    %s93 = sphi 0, %s95
    %s96 = sphi 0, %s93
    %s97 = sphi 0, %s96
    %s113 = sphi 0, %s97
  $region4: #{vgg_forward.17} parent=0 // loop_header_branch
    %13 = sbr.rel (%p11) target = $region8
  $region5: #{vgg_forward.17} parent=0 // loop_body
    %s15 = ssub.s32 %s10, 1
    %s16 = ssub.s32 %s10, 2
    %s17 = sadd.s32 %s10, 1
    %s18 = ssub.s32 %s10, %s17
    %p19 = scmp.eq.s32.totalorder %s18, 0
    %s21 = sadd.s32 %s20, 1
    %s22 = scalar_select %p19, %s20, %s21
    %p25 = pneg %p19
    %p26 = scmp.eq.s32.totalorder %s10, 3
    %p27 = por %p25, %p26
    %p28 = scmp.ne.s32.totalorder %s20, %s23
    %p29 = scmp.eq.s32.totalorder %s10, 0
    %p30 = por %p28, %p29
    %p31 = scmp.ne.s32.totalorder %s20, %s23
    %p32 = scmp.eq.s32.totalorder %s15, 3
    %p33 = por %p31, %p32
    %p34 = scmp.ne.s32.totalorder %s23, %s24
    %p35 = scmp.eq.s32.totalorder %s15, 0
    %p36 = por %p34, %p35
    %p37 = scmp.ne.s32.totalorder %s23, %s24
    %p38 = scmp.eq.s32.totalorder %s16, 3
    %p39 = por %p37, %p38
    %p41 = scmp.ne.s32.totalorder %s24, %s40
    %p42 = scmp.eq.s32.totalorder %s16, 0
    %p43 = por %p41, %p42
    %s45 = sadd.s32 %s44, 1
    %p48 = scmp.eq.s32.totalorder %s10, 3
    %p49 = scmp.ne.s32.totalorder %s44, %s46
    %p50 = scmp.eq.s32.totalorder %s10, 0
    %p51 = por %p49, %p50
    %p52 = scmp.ne.s32.totalorder %s44, %s46
    %p53 = scmp.eq.s32.totalorder %s15, 3
    %p54 = por %p52, %p53
    %p55 = scmp.ne.s32.totalorder %s46, %s47
    %p56 = scmp.eq.s32.totalorder %s15, 0
    %p57 = por %p55, %p56
    %p58 = scmp.ne.s32.totalorder %s46, %s47
    %p59 = scmp.eq.s32.totalorder %s16, 3
    %p60 = por %p58, %p59
    %p62 = scmp.ne.s32.totalorder %s47, %s61
    %p63 = scmp.eq.s32.totalorder %s16, 0
    %p64 = por %p62, %p63
    %s65 = ssub.s32 %s10, %s17
    %p66 = scmp.eq.s32.totalorder %s65, 0
    %s68 = sadd.s32 %s67, 1
    %s69 = scalar_select %p66, %s67, %s68
    %p72 = pneg %p66
    %p73 = scmp.eq.s32.totalorder %s10, 3
    %p74 = por %p72, %p73
    %p75 = scmp.ne.s32.totalorder %s67, %s70
    %p76 = scmp.eq.s32.totalorder %s10, 0
    %p77 = por %p75, %p76
    %p78 = scmp.ne.s32.totalorder %s67, %s70
    %p79 = scmp.eq.s32.totalorder %s15, 3
    %p80 = por %p78, %p79
    %p81 = scmp.ne.s32.totalorder %s70, %s71
    %p82 = scmp.eq.s32.totalorder %s15, 0
    %p83 = por %p81, %p82
    %p84 = scmp.ne.s32.totalorder %s70, %s71
    %p85 = scmp.eq.s32.totalorder %s16, 3
    %p86 = por %p84, %p85
    %p88 = scmp.ne.s32.totalorder %s71, %s87
    %p89 = scmp.eq.s32.totalorder %s16, 0
    %p90 = por %p88, %p89
    %s91 = ssub.s32 %s10, %s17
    %p92 = scmp.eq.s32.totalorder %s91, 0
    %s94 = sadd.s32 %s93, 1
    %s95 = scalar_select %p92, %s93, %s94
    %p98 = pneg %p92
    %p99 = scmp.eq.s32.totalorder %s10, 3
    %p100 = por %p98, %p99
    %p101 = scmp.ne.s32.totalorder %s93, %s96
    %p102 = scmp.eq.s32.totalorder %s10, 0
    %p103 = por %p101, %p102
    %p104 = scmp.ne.s32.totalorder %s93, %s96
    %p105 = scmp.eq.s32.totalorder %s15, 3
    %p106 = por %p104, %p105
    %p107 = scmp.ne.s32.totalorder %s96, %s97
    %p108 = scmp.eq.s32.totalorder %s15, 0
    %p109 = por %p107, %p108
    %p110 = scmp.ne.s32.totalorder %s96, %s97
    %p111 = scmp.eq.s32.totalorder %s16, 3
    %p112 = por %p110, %p111
    %p114 = scmp.ne.s32.totalorder %s97, %s113
    %p115 = scmp.eq.s32.totalorder %s16, 0
    %p116 = por %p114, %p115
    %p117 = scmp.le.s32.totalorder 1, %s10
    %p118 = scmp.lt.s32.totalorder %s10, 5
    %p119 = pnand %p117, %p118
    %p120 = pneg %p119
    // Predicated region
    $region9: #{vgg_forward.17} parent=5 // pred_check
      _
    $region10: #{vgg_forward.17} parent=5 // pred_check_branch
      %122 = sbr.rel (%p119) target = $region12
    $region11: #{vgg_forward.17} parent=5 // pred_region
      %s123 = ssub.s32 %s10, 1
      // Predicated region
      $region13: #{vgg_forward.17} parent=11 // pred_check
        %p124 = pneg %p57
      $region14: #{vgg_forward.17} parent=11 // pred_check_branch
        %126 = sbr.rel (%p124) target = $region16
      $region15: #{vgg_forward.17} parent=11 // pred_region
        _
      $region16: #{vgg_forward.17} parent=11 // pred_fallthru
        _
    $region12: #{vgg_forward.17} parent=5 // pred_fallthru
      _
    %p127 = scmp.lt.s32.totalorder %s10, 4
    // Predicated region
    $region17: #{vgg_forward.17} parent=5 // pred_check
      %p128 = pneg %p127
    $region18: #{vgg_forward.17} parent=5 // pred_check_branch
      %130 = sbr.rel (%p128) target = $region20
    $region19: #{vgg_forward.17} parent=5 // pred_region
      // Predicated region
      $region21: #{vgg_forward.17} parent=19 // pred_check
        %p131 = pneg %p30
      $region22: #{vgg_forward.17} parent=19 // pred_check_branch
        %133 = sbr.rel (%p131) target = $region24
      $region23: #{vgg_forward.17} parent=19 // pred_region
        %s134 = smul.u32 64, %s10
        %p135 = scmp.lt.s32.totalorder %s134, 255
        %s136 = scalar_select %p135, %s134, 255
        %s137 = smul.addr %s136, 4
        %s138 = scalar_lea.vmem %s0, %s137
        %s139 = smul.u32 64, %s10
      $region24: #{vgg_forward.17} parent=19 // pred_fallthru
        _
    $region20: #{vgg_forward.17} parent=5 // pred_fallthru
      _
    %p140 = scmp.le.s32.totalorder 1, %s10
    %p141 = scmp.lt.s32.totalorder %s10, 5
    %p142 = pnand %p140, %p141
    %p143 = pneg %p142
    // Predicated region
    $region25: #{vgg_forward.17} parent=5 // pred_check
      _
    $region26: #{vgg_forward.17} parent=5 // pred_check_branch
      %145 = sbr.rel (%p142) target = $region28
    $region27: #{vgg_forward.17} parent=5 // pred_region
      %s146 = ssub.s32 %s10, 1
      %s147 = smul.u32 64, %s15
      %p148 = scmp.lt.s32.totalorder %s147, 255
      %s149 = scalar_select %p148, %s147, 255
      %s150 = smul.addr %s149, 4
      %s151 = scalar_lea.vmem %s0, %s150
      %p152 = pneg %p36
      %p153 = pneg %p33
      %p154 = pneg %p57
      %p155 = pneg %p54
      %p156 = pneg %p83
      %p157 = pneg %p80
      %s158 = smul.u32 64, %s15
      %p159 = scmp.lt.s32.totalorder %s158, 255
      %s160 = scalar_select %p159, %s158, 255
      %s161 = smul.addr %s160, 8
      %s162 = scalar_lea.vmem %s2, %s161
      %p163 = pneg %p109
      %p164 = pneg %p106
      %p165 = scmp.lt.s32.totalorder %s15, 3
      %s166 = scalar_select %p165, %s15, 3
      %s167 = smul.addr %s166, 8
      %s168 = scalar_lea.vmem %s3, %s167
      %s169 = smul.u32 64, %s15
      %p170 = scmp.lt.s32.totalorder %s169, 255
      %s171 = scalar_select %p170, %s169, 255
      %s172 = smul.addr %s171, 4
      %s173 = scalar_lea.vmem %s0, %s172
      %s174 = smul.u32 64, %s15
      %s175 = smul.u32 64, %s15
      %p176 = scmp.lt.s32.totalorder %s175, 255
      %s177 = scalar_select %p176, %s175, 255
      %s178 = smul.addr %s177, 8
      %s179 = scalar_lea.vmem %s2, %s178
      %s180 = smul.u32 64, %s15
      %p181 = scmp.lt.s32.totalorder %s15, 3
      %s182 = scalar_select %p181, %s15, 3
      %s183 = smul.addr %s182, 8
      %s184 = scalar_lea.vmem %s3, %s183
      %v186 = vld [vmem:[%s173] sm:$0xf]
      %v187 = vld [vmem:[%s173 + $0x4] sm:$0xf]
      %v188 = vld [vmem:[%s173 + $0x8] sm:$0xf]
      %v189 = vld [vmem:[%s173 + $0xc] sm:$0xf]
      %v190 = vld [vmem:[%s173 + $0x10] sm:$0xf]
      %v191 = vld [vmem:[%s173 + $0x14] sm:$0xf]
      %v192 = vld [vmem:[%s173 + $0x18] sm:$0xf]
      %v193 = vld [vmem:[%s173 + $0x1c] sm:$0xf]
      %v194 = vld [vmem:[%s173 + $0x20] sm:$0xf]
      %v195 = vld [vmem:[%s173 + $0x24] sm:$0xf]
      %v196 = vld [vmem:[%s173 + $0x28] sm:$0xf]
      %v197 = vld [vmem:[%s173 + $0x2c] sm:$0xf]
      %v198 = vld [vmem:[%s173 + $0x30] sm:$0xf]
      %v199 = vld [vmem:[%s173 + $0x34] sm:$0xf]
      %v200 = vld [vmem:[%s173 + $0x38] sm:$0xf]
      %v201 = vld [vmem:[%s173 + $0x3c] sm:$0xf]
      %v202 = vld [vmem:[%s173 + $0x40] sm:$0xf]
      %v203 = vld [vmem:[%s173 + $0x44] sm:$0xf]
      %v204 = vld [vmem:[%s173 + $0x48] sm:$0xf]
      %v205 = vld [vmem:[%s173 + $0x4c] sm:$0xf]
      %v206 = vld [vmem:[%s173 + $0x50] sm:$0xf]
      %v207 = vld [vmem:[%s173 + $0x54] sm:$0xf]
      %v208 = vld [vmem:[%s173 + $0x58] sm:$0xf]
      %v209 = vld [vmem:[%s173 + $0x5c] sm:$0xf]
      %v210 = vld [vmem:[%s173 + $0x60] sm:$0xf]
      %v211 = vld [vmem:[%s173 + $0x64] sm:$0xf]
      %v212 = vld [vmem:[%s173 + $0x68] sm:$0xf]
      %v213 = vld [vmem:[%s173 + $0x6c] sm:$0xf]
      %v214 = vld [vmem:[%s173 + $0x70] sm:$0xf]
      %v215 = vld [vmem:[%s173 + $0x74] sm:$0xf]
      %v216 = vld [vmem:[%s173 + $0x78] sm:$0xf]
      %v217 = vld [vmem:[%s173 + $0x7c] sm:$0xf]
      %v218 = vld [vmem:[%s173 + $0x80] sm:$0xf]
      %v219 = vld [vmem:[%s173 + $0x84] sm:$0xf]
      %v220 = vld [vmem:[%s173 + $0x88] sm:$0xf]
      %v221 = vld [vmem:[%s173 + $0x8c] sm:$0xf]
      %v222 = vld [vmem:[%s173 + $0x90] sm:$0xf]
      %v223 = vld [vmem:[%s173 + $0x94] sm:$0xf]
      %v224 = vld [vmem:[%s173 + $0x98] sm:$0xf]
      %v225 = vld [vmem:[%s173 + $0x9c] sm:$0xf]
      %v226 = vld [vmem:[%s173 + $0xa0] sm:$0xf]
      %v227 = vld [vmem:[%s173 + $0xa4] sm:$0xf]
      %v228 = vld [vmem:[%s173 + $0xa8] sm:$0xf]
      %v229 = vld [vmem:[%s173 + $0xac] sm:$0xf]
      %v230 = vld [vmem:[%s173 + $0xb0] sm:$0xf]
      %v231 = vld [vmem:[%s173 + $0xb4] sm:$0xf]
      %v232 = vld [vmem:[%s173 + $0xb8] sm:$0xf]
      %v233 = vld [vmem:[%s173 + $0xbc] sm:$0xf]
      %v234 = vld [vmem:[%s173 + $0xc0] sm:$0xf]
      %v235 = vld [vmem:[%s173 + $0xc4] sm:$0xf]
      %v236 = vld [vmem:[%s173 + $0xc8] sm:$0xf]
      %v237 = vld [vmem:[%s173 + $0xcc] sm:$0xf]
      %v238 = vld [vmem:[%s173 + $0xd0] sm:$0xf]
      %v239 = vld [vmem:[%s173 + $0xd4] sm:$0xf]
      %v240 = vld [vmem:[%s173 + $0xd8] sm:$0xf]
      %v241 = vld [vmem:[%s173 + $0xdc] sm:$0xf]
      %v242 = vld [vmem:[%s173 + $0xe0] sm:$0xf]
      %v243 = vld [vmem:[%s173 + $0xe4] sm:$0xf]
      %v244 = vld [vmem:[%s173 + $0xe8] sm:$0xf]
      %v245 = vld [vmem:[%s173 + $0xec] sm:$0xf]
      %v246 = vld [vmem:[%s173 + $0xf0] sm:$0xf]
      %v247 = vld [vmem:[%s173 + $0xf4] sm:$0xf]
      %v248 = vld [vmem:[%s173 + $0xf8] sm:$0xf]
      %v249 = vld [vmem:[%s173 + $0xfc] sm:$0xf]
      %v250 = vld [vmem:[%s1] sm:$0xf]
      %v251 = vld [vmem:[%s1 + $0x4] sm:$0xf]
      %v252 = vld [vmem:[%s1 + $0x8] sm:$0xf]
      %v253 = vld [vmem:[%s1 + $0xc] sm:$0x3]
      %v318 = vunpack.c.l.b16 %v186
      %v319 = vunpack.c.l.b16 %v187
      %v320 = vunpack.c.l.b16 %v188
      %v321 = vunpack.c.l.b16 %v189
      %v322 = vunpack.c.l.b16 %v190
      %v323 = vunpack.c.l.b16 %v191
      %v324 = vunpack.c.l.b16 %v192
      %v325 = vunpack.c.l.b16 %v193
      %v326 = vunpack.c.l.b16 %v194
      %v327 = vunpack.c.l.b16 %v195
      %v328 = vunpack.c.l.b16 %v196
      %v329 = vunpack.c.l.b16 %v197
      %v330 = vunpack.c.l.b16 %v198
      %v331 = vunpack.c.l.b16 %v199
      %v332 = vunpack.c.l.b16 %v200
      %v333 = vunpack.c.l.b16 %v201
      %v334 = vunpack.c.l.b16 %v202
      %v335 = vunpack.c.l.b16 %v203
      %v336 = vunpack.c.l.b16 %v204
      %v337 = vunpack.c.l.b16 %v205
      %v338 = vunpack.c.l.b16 %v206
      %v339 = vunpack.c.l.b16 %v207
      %v340 = vunpack.c.l.b16 %v208
      %v341 = vunpack.c.l.b16 %v209
      %v342 = vunpack.c.l.b16 %v210
      %v343 = vunpack.c.l.b16 %v211
      %v344 = vunpack.c.l.b16 %v212
      %v345 = vunpack.c.l.b16 %v213
      %v346 = vunpack.c.l.b16 %v214
      %v347 = vunpack.c.l.b16 %v215
      %v348 = vunpack.c.l.b16 %v216
      %v349 = vunpack.c.l.b16 %v217
      %v350 = vunpack.c.l.b16 %v218
      %v351 = vunpack.c.l.b16 %v219
      %v352 = vunpack.c.l.b16 %v220
      %v353 = vunpack.c.l.b16 %v221
      %v354 = vunpack.c.l.b16 %v222
      %v355 = vunpack.c.l.b16 %v223
      %v356 = vunpack.c.l.b16 %v224
      %v357 = vunpack.c.l.b16 %v225
      %v358 = vunpack.c.l.b16 %v226
      %v359 = vunpack.c.l.b16 %v227
      %v360 = vunpack.c.l.b16 %v228
      %v361 = vunpack.c.l.b16 %v229
      %v362 = vunpack.c.l.b16 %v230
      %v363 = vunpack.c.l.b16 %v231
      %v364 = vunpack.c.l.b16 %v232
      %v365 = vunpack.c.l.b16 %v233
      %v366 = vunpack.c.l.b16 %v234
      %v367 = vunpack.c.l.b16 %v235
      %v368 = vunpack.c.l.b16 %v236
      %v369 = vunpack.c.l.b16 %v237
      %v370 = vunpack.c.l.b16 %v238
      %v371 = vunpack.c.l.b16 %v239
      %v372 = vunpack.c.l.b16 %v240
      %v373 = vunpack.c.l.b16 %v241
      %v374 = vunpack.c.l.b16 %v242
      %v375 = vunpack.c.l.b16 %v243
      %v376 = vunpack.c.l.b16 %v244
      %v377 = vunpack.c.l.b16 %v245
      %v378 = vunpack.c.l.b16 %v246
      %v379 = vunpack.c.l.b16 %v247
      %v380 = vunpack.c.l.b16 %v248
      %v381 = vunpack.c.l.b16 %v249
      %v382 = vpack.c.b16 %v319, %v318
      %v383 = vpack.c.b16 %v321, %v320
      %v384 = vpack.c.b16 %v323, %v322
      %v385 = vpack.c.b16 %v325, %v324
      %v386 = vpack.c.b16 %v327, %v326
      %v387 = vpack.c.b16 %v329, %v328
      %v388 = vpack.c.b16 %v331, %v330
      %v389 = vpack.c.b16 %v333, %v332
      %v390 = vpack.c.b16 %v335, %v334
      %v391 = vpack.c.b16 %v337, %v336
      %v392 = vpack.c.b16 %v339, %v338
      %v393 = vpack.c.b16 %v341, %v340
      %v394 = vpack.c.b16 %v343, %v342
      %v395 = vpack.c.b16 %v345, %v344
      %v396 = vpack.c.b16 %v347, %v346
      %v397 = vpack.c.b16 %v349, %v348
      %v398 = vpack.c.b16 %v351, %v350
      %v399 = vpack.c.b16 %v353, %v352
      %v400 = vpack.c.b16 %v355, %v354
      %v401 = vpack.c.b16 %v357, %v356
      %v402 = vpack.c.b16 %v359, %v358
      %v403 = vpack.c.b16 %v361, %v360
      %v404 = vpack.c.b16 %v363, %v362
      %v405 = vpack.c.b16 %v365, %v364
      %v406 = vpack.c.b16 %v367, %v366
      %v407 = vpack.c.b16 %v369, %v368
      %v408 = vpack.c.b16 %v371, %v370
      %v409 = vpack.c.b16 %v373, %v372
      %v410 = vpack.c.b16 %v375, %v374
      %v411 = vpack.c.b16 %v377, %v376
      %v412 = vpack.c.b16 %v379, %v378
      %v413 = vpack.c.b16 %v381, %v380
      %v418 = vunpack.c.l.b16 %v250
      %v419 = vunpack.c.l.b16 %v251
      %v420 = vunpack.c.l.b16 %v252
      %v421 = vunpack.c.l.b16 %v253
      %v422 = vpack.c.b16 %v419, %v418
      %v423 = vpack.c.b16 %v421, %v420
      %vm425 = vcmask 220160
      %v427 = vsel %vm425, %v382, 0
      %v430 = vsel %vm425, %v383, 0
      %v433 = vsel %vm425, %v384, 0
      %v436 = vsel %vm425, %v385, 0
      %v439 = vsel %vm425, %v386, 0
      %v442 = vsel %vm425, %v387, 0
      %v445 = vsel %vm425, %v388, 0
      %v448 = vsel %vm425, %v389, 0
      %v451 = vsel %vm425, %v390, 0
      %v454 = vsel %vm425, %v391, 0
      %v457 = vsel %vm425, %v392, 0
      %v460 = vsel %vm425, %v393, 0
      %v463 = vsel %vm425, %v394, 0
      %v466 = vsel %vm425, %v395, 0
      %v469 = vsel %vm425, %v396, 0
      %v472 = vsel %vm425, %v397, 0
      %v475 = vsel %vm425, %v398, 0
      %v478 = vsel %vm425, %v399, 0
      %v481 = vsel %vm425, %v400, 0
      %v484 = vsel %vm425, %v401, 0
      %v487 = vsel %vm425, %v402, 0
      %v490 = vsel %vm425, %v403, 0
      %v493 = vsel %vm425, %v404, 0
      %v496 = vsel %vm425, %v405, 0
      %v499 = vsel %vm425, %v406, 0
      %v502 = vsel %vm425, %v407, 0
      %v505 = vsel %vm425, %v408, 0
      %v508 = vsel %vm425, %v409, 0
      %v511 = vsel %vm425, %v410, 0
      %v514 = vsel %vm425, %v411, 0
      %v517 = vsel %vm425, %v412, 0
      %v520 = vsel %vm425, %v413, 0
      %vm522 = vcmask 1044480
      %vm523 = vcmask 1045504
      %v524 = vsel %vm522, 4294967295, 65535
      %v525 = vsel %vm523, %v524, 0
      %v527 = vand.u32 %v423, %v525
      %529 = vmatpush.bf16.msra.mxu0 0
      %530 = vmatpush.bf16.msra.mxu0 0
      %531 = vmatpush.bf16.msra.mxu0 0
      %532 = vmatpush.bf16.msra.mxu0 0
      %533 = vmatpush.bf16.msra.mxu0 0
      %534 = vmatpush.bf16.msra.mxu0 0
      %535 = vmatpush.bf16.msra.mxu0 %v527
      %536 = vmatpush.bf16.msra.mxu0 %v422
      %537 = vmatmul.bf16.gmra.mxu0 %v427
      %v538 = vpop.f32.mrf.mxu0
      %v539 = vadd.f32 0.0, %v538
      %v540 = vpop.f32.mrf.mxu0
      %v541 = vadd.f32 0.0, %v540
      %542 = vmatmul.bf16.gmra.mxu0 %v430
      %v543 = vpop.f32.mrf.mxu0
      %v544 = vadd.f32 0.0, %v543
      %v545 = vpop.f32.mrf.mxu0
      %v546 = vadd.f32 0.0, %v545
      %547 = vmatmul.bf16.gmra.mxu0 %v433
      %v548 = vpop.f32.mrf.mxu0
      %v549 = vadd.f32 0.0, %v548
      %v550 = vpop.f32.mrf.mxu0
      %v551 = vadd.f32 0.0, %v550
      %552 = vmatmul.bf16.gmra.mxu0 %v436
      %v553 = vpop.f32.mrf.mxu0
      %v554 = vadd.f32 0.0, %v553
      %v555 = vpop.f32.mrf.mxu0
      %v556 = vadd.f32 0.0, %v555
      %557 = vmatmul.bf16.gmra.mxu0 %v439
      %v558 = vpop.f32.mrf.mxu0
      %v559 = vadd.f32 0.0, %v558
      %v560 = vpop.f32.mrf.mxu0
      %v561 = vadd.f32 0.0, %v560
      %562 = vmatmul.bf16.gmra.mxu0 %v442
      %v563 = vpop.f32.mrf.mxu0
      %v564 = vadd.f32 0.0, %v563
      %v565 = vpop.f32.mrf.mxu0
      %v566 = vadd.f32 0.0, %v565
      %567 = vmatmul.bf16.gmra.mxu0 %v445
      %v568 = vpop.f32.mrf.mxu0
      %v569 = vadd.f32 0.0, %v568
      %v570 = vpop.f32.mrf.mxu0
      %v571 = vadd.f32 0.0, %v570
      %572 = vmatmul.bf16.gmra.mxu0 %v448
      %v573 = vpop.f32.mrf.mxu0
      %v574 = vadd.f32 0.0, %v573
      %v575 = vpop.f32.mrf.mxu0
      %v576 = vadd.f32 0.0, %v575
      %577 = vmatmul.bf16.gmra.mxu0 %v451
      %v578 = vpop.f32.mrf.mxu0
      %v579 = vadd.f32 0.0, %v578
      %v580 = vpop.f32.mrf.mxu0
      %v581 = vadd.f32 0.0, %v580
      %582 = vmatmul.bf16.gmra.mxu0 %v454
      %v583 = vpop.f32.mrf.mxu0
      %v584 = vadd.f32 0.0, %v583
      %v585 = vpop.f32.mrf.mxu0
      %v586 = vadd.f32 0.0, %v585
      %587 = vmatmul.bf16.gmra.mxu0 %v457
      %v588 = vpop.f32.mrf.mxu0
      %v589 = vadd.f32 0.0, %v588
      %v590 = vpop.f32.mrf.mxu0
      %v591 = vadd.f32 0.0, %v590
      %592 = vmatmul.bf16.gmra.mxu0 %v460
      %v593 = vpop.f32.mrf.mxu0
      %v594 = vadd.f32 0.0, %v593
      %v595 = vpop.f32.mrf.mxu0
      %v596 = vadd.f32 0.0, %v595
      %597 = vmatmul.bf16.gmra.mxu0 %v463
      %v598 = vpop.f32.mrf.mxu0
      %v599 = vadd.f32 0.0, %v598
      %v600 = vpop.f32.mrf.mxu0
      %v601 = vadd.f32 0.0, %v600
      %602 = vmatmul.bf16.gmra.mxu0 %v466
      %v603 = vpop.f32.mrf.mxu0
      %v604 = vadd.f32 0.0, %v603
      %v605 = vpop.f32.mrf.mxu0
      %v606 = vadd.f32 0.0, %v605
      %607 = vmatmul.bf16.gmra.mxu0 %v469
      %v608 = vpop.f32.mrf.mxu0
      %v609 = vadd.f32 0.0, %v608
      %v610 = vpop.f32.mrf.mxu0
      %v611 = vadd.f32 0.0, %v610
      %612 = vmatmul.bf16.gmra.mxu0 %v472
      %v613 = vpop.f32.mrf.mxu0
      %v614 = vadd.f32 0.0, %v613
      %v615 = vpop.f32.mrf.mxu0
      %v616 = vadd.f32 0.0, %v615
      %617 = vmatmul.bf16.gmra.mxu0 %v475
      %v618 = vpop.f32.mrf.mxu0
      %v619 = vadd.f32 0.0, %v618
      %v620 = vpop.f32.mrf.mxu0
      %v621 = vadd.f32 0.0, %v620
      %622 = vmatmul.bf16.gmra.mxu0 %v478
      %v623 = vpop.f32.mrf.mxu0
      %v624 = vadd.f32 0.0, %v623
      %v625 = vpop.f32.mrf.mxu0
      %v626 = vadd.f32 0.0, %v625
      %627 = vmatmul.bf16.gmra.mxu0 %v481
      %v628 = vpop.f32.mrf.mxu0
      %v629 = vadd.f32 0.0, %v628
      %v630 = vpop.f32.mrf.mxu0
      %v631 = vadd.f32 0.0, %v630
      %632 = vmatmul.bf16.gmra.mxu0 %v484
      %v633 = vpop.f32.mrf.mxu0
      %v634 = vadd.f32 0.0, %v633
      %v635 = vpop.f32.mrf.mxu0
      %v636 = vadd.f32 0.0, %v635
      %637 = vmatmul.bf16.gmra.mxu0 %v487
      %v638 = vpop.f32.mrf.mxu0
      %v639 = vadd.f32 0.0, %v638
      %v640 = vpop.f32.mrf.mxu0
      %v641 = vadd.f32 0.0, %v640
      %642 = vmatmul.bf16.gmra.mxu0 %v490
      %v643 = vpop.f32.mrf.mxu0
      %v644 = vadd.f32 0.0, %v643
      %v645 = vpop.f32.mrf.mxu0
      %v646 = vadd.f32 0.0, %v645
      %647 = vmatmul.bf16.gmra.mxu0 %v493
      %v648 = vpop.f32.mrf.mxu0
      %v649 = vadd.f32 0.0, %v648
      %v650 = vpop.f32.mrf.mxu0
      %v651 = vadd.f32 0.0, %v650
      %652 = vmatmul.bf16.gmra.mxu0 %v496
      %v653 = vpop.f32.mrf.mxu0
      %v654 = vadd.f32 0.0, %v653
      %v655 = vpop.f32.mrf.mxu0
      %v656 = vadd.f32 0.0, %v655
      %657 = vmatmul.bf16.gmra.mxu0 %v499
      %v658 = vpop.f32.mrf.mxu0
      %v659 = vadd.f32 0.0, %v658
      %v660 = vpop.f32.mrf.mxu0
      %v661 = vadd.f32 0.0, %v660
      %662 = vmatmul.bf16.gmra.mxu0 %v502
      %v663 = vpop.f32.mrf.mxu0
      %v664 = vadd.f32 0.0, %v663
      %v665 = vpop.f32.mrf.mxu0
      %v666 = vadd.f32 0.0, %v665
      %667 = vmatmul.bf16.gmra.mxu0 %v505
      %v668 = vpop.f32.mrf.mxu0
      %v669 = vadd.f32 0.0, %v668
      %v670 = vpop.f32.mrf.mxu0
      %v671 = vadd.f32 0.0, %v670
      %672 = vmatmul.bf16.gmra.mxu0 %v508
      %v673 = vpop.f32.mrf.mxu0
      %v674 = vadd.f32 0.0, %v673
      %v675 = vpop.f32.mrf.mxu0
      %v676 = vadd.f32 0.0, %v675
      %677 = vmatmul.bf16.gmra.mxu0 %v511
      %v678 = vpop.f32.mrf.mxu0
      %v679 = vadd.f32 0.0, %v678
      %v680 = vpop.f32.mrf.mxu0
      %v681 = vadd.f32 0.0, %v680
      %682 = vmatmul.bf16.gmra.mxu0 %v514
      %v683 = vpop.f32.mrf.mxu0
      %v684 = vadd.f32 0.0, %v683
      %v685 = vpop.f32.mrf.mxu0
      %v686 = vadd.f32 0.0, %v685
      %687 = vmatmul.bf16.gmra.mxu0 %v517
      %v688 = vpop.f32.mrf.mxu0
      %v689 = vadd.f32 0.0, %v688
      %v690 = vpop.f32.mrf.mxu0
      %v691 = vadd.f32 0.0, %v690
      %692 = vmatmul.bf16.gmra.mxu0 %v520
      %v693 = vpop.f32.mrf.mxu0
      %v694 = vadd.f32 0.0, %v693
      %v695 = vpop.f32.mrf.mxu0
      %v696 = vadd.f32 0.0, %v695
      %697 = vdwg.mxu0
      %vm698 = vcmask 130048
      %699 = vst.msk [vmem:[%s179] sm:$0xff] %vm698, %v539
      %700 = vst.msk [vmem:[%s179 + $0x8] sm:$0xff] %vm698, %v541
      %701 = vst.msk [vmem:[%s179 + $0x10] sm:$0xff] %vm698, %v544
      %702 = vst.msk [vmem:[%s179 + $0x18] sm:$0xff] %vm698, %v546
      %703 = vst.msk [vmem:[%s179 + $0x20] sm:$0xff] %vm698, %v549
      %704 = vst.msk [vmem:[%s179 + $0x28] sm:$0xff] %vm698, %v551
      %705 = vst.msk [vmem:[%s179 + $0x30] sm:$0xff] %vm698, %v554
      %706 = vst.msk [vmem:[%s179 + $0x38] sm:$0xff] %vm698, %v556
      %707 = vst.msk [vmem:[%s179 + $0x40] sm:$0xff] %vm698, %v559
      %708 = vst.msk [vmem:[%s179 + $0x48] sm:$0xff] %vm698, %v561
      %709 = vst.msk [vmem:[%s179 + $0x50] sm:$0xff] %vm698, %v564
      %710 = vst.msk [vmem:[%s179 + $0x58] sm:$0xff] %vm698, %v566
      %711 = vst.msk [vmem:[%s179 + $0x60] sm:$0xff] %vm698, %v569
      %712 = vst.msk [vmem:[%s179 + $0x68] sm:$0xff] %vm698, %v571
      %713 = vst.msk [vmem:[%s179 + $0x70] sm:$0xff] %vm698, %v574
      %714 = vst.msk [vmem:[%s179 + $0x78] sm:$0xff] %vm698, %v576
      %715 = vst.msk [vmem:[%s179 + $0x80] sm:$0xff] %vm698, %v579
      %716 = vst.msk [vmem:[%s179 + $0x88] sm:$0xff] %vm698, %v581
      %717 = vst.msk [vmem:[%s179 + $0x90] sm:$0xff] %vm698, %v584
      %718 = vst.msk [vmem:[%s179 + $0x98] sm:$0xff] %vm698, %v586
      %719 = vst.msk [vmem:[%s179 + $0xa0] sm:$0xff] %vm698, %v589
      %720 = vst.msk [vmem:[%s179 + $0xa8] sm:$0xff] %vm698, %v591
      %721 = vst.msk [vmem:[%s179 + $0xb0] sm:$0xff] %vm698, %v594
      %722 = vst.msk [vmem:[%s179 + $0xb8] sm:$0xff] %vm698, %v596
      %723 = vst.msk [vmem:[%s179 + $0xc0] sm:$0xff] %vm698, %v599
      %724 = vst.msk [vmem:[%s179 + $0xc8] sm:$0xff] %vm698, %v601
      %725 = vst.msk [vmem:[%s179 + $0xd0] sm:$0xff] %vm698, %v604
      %726 = vst.msk [vmem:[%s179 + $0xd8] sm:$0xff] %vm698, %v606
      %727 = vst.msk [vmem:[%s179 + $0xe0] sm:$0xff] %vm698, %v609
      %728 = vst.msk [vmem:[%s179 + $0xe8] sm:$0xff] %vm698, %v611
      %729 = vst.msk [vmem:[%s179 + $0xf0] sm:$0xff] %vm698, %v614
      %730 = vst.msk [vmem:[%s179 + $0xf8] sm:$0xff] %vm698, %v616
      %731 = vst.msk [vmem:[%s179 + $0x100] sm:$0xff] %vm698, %v619
      %732 = vst.msk [vmem:[%s179 + $0x108] sm:$0xff] %vm698, %v621
      %733 = vst.msk [vmem:[%s179 + $0x110] sm:$0xff] %vm698, %v624
      %734 = vst.msk [vmem:[%s179 + $0x118] sm:$0xff] %vm698, %v626
      %735 = vst.msk [vmem:[%s179 + $0x120] sm:$0xff] %vm698, %v629
      %736 = vst.msk [vmem:[%s179 + $0x128] sm:$0xff] %vm698, %v631
      %737 = vst.msk [vmem:[%s179 + $0x130] sm:$0xff] %vm698, %v634
      %738 = vst.msk [vmem:[%s179 + $0x138] sm:$0xff] %vm698, %v636
      %739 = vst.msk [vmem:[%s179 + $0x140] sm:$0xff] %vm698, %v639
      %740 = vst.msk [vmem:[%s179 + $0x148] sm:$0xff] %vm698, %v641
      %741 = vst.msk [vmem:[%s179 + $0x150] sm:$0xff] %vm698, %v644
      %742 = vst.msk [vmem:[%s179 + $0x158] sm:$0xff] %vm698, %v646
      %743 = vst.msk [vmem:[%s179 + $0x160] sm:$0xff] %vm698, %v649
      %744 = vst.msk [vmem:[%s179 + $0x168] sm:$0xff] %vm698, %v651
      %745 = vst.msk [vmem:[%s179 + $0x170] sm:$0xff] %vm698, %v654
      %746 = vst.msk [vmem:[%s179 + $0x178] sm:$0xff] %vm698, %v656
      %747 = vst.msk [vmem:[%s179 + $0x180] sm:$0xff] %vm698, %v659
      %748 = vst.msk [vmem:[%s179 + $0x188] sm:$0xff] %vm698, %v661
      %749 = vst.msk [vmem:[%s179 + $0x190] sm:$0xff] %vm698, %v664
      %750 = vst.msk [vmem:[%s179 + $0x198] sm:$0xff] %vm698, %v666
      %751 = vst.msk [vmem:[%s179 + $0x1a0] sm:$0xff] %vm698, %v669
      %752 = vst.msk [vmem:[%s179 + $0x1a8] sm:$0xff] %vm698, %v671
      %753 = vst.msk [vmem:[%s179 + $0x1b0] sm:$0xff] %vm698, %v674
      %754 = vst.msk [vmem:[%s179 + $0x1b8] sm:$0xff] %vm698, %v676
      %755 = vst.msk [vmem:[%s179 + $0x1c0] sm:$0xff] %vm698, %v679
      %756 = vst.msk [vmem:[%s179 + $0x1c8] sm:$0xff] %vm698, %v681
      %757 = vst.msk [vmem:[%s179 + $0x1d0] sm:$0xff] %vm698, %v684
      %758 = vst.msk [vmem:[%s179 + $0x1d8] sm:$0xff] %vm698, %v686
      %759 = vst.msk [vmem:[%s179 + $0x1e0] sm:$0xff] %vm698, %v689
      %760 = vst.msk [vmem:[%s179 + $0x1e8] sm:$0xff] %vm698, %v691
      %761 = vst.msk [vmem:[%s179 + $0x1f0] sm:$0xff] %vm698, %v694
      %762 = vst.msk [vmem:[%s179 + $0x1f8] sm:$0xff] %vm698, %v696
      %v763 = vsel %vm698, %v539, 0.0
      %v764 = vsel %vm698, %v541, 0.0
      %v765 = vadd.f32 %v763, %v764
      %v766 = vsel %vm698, %v544, 0.0
      %v767 = vadd.f32 %v765, %v766
      %v768 = vsel %vm698, %v546, 0.0
      %v769 = vadd.f32 %v767, %v768
      %v770 = vsel %vm698, %v549, 0.0
      %v771 = vadd.f32 %v769, %v770
      %v772 = vsel %vm698, %v551, 0.0
      %v773 = vadd.f32 %v771, %v772
      %v774 = vsel %vm698, %v554, 0.0
      %v775 = vadd.f32 %v773, %v774
      %v776 = vsel %vm698, %v556, 0.0
      %v777 = vadd.f32 %v775, %v776
      %v778 = vsel %vm698, %v559, 0.0
      %v779 = vadd.f32 %v777, %v778
      %v780 = vsel %vm698, %v561, 0.0
      %v781 = vadd.f32 %v779, %v780
      %v782 = vsel %vm698, %v564, 0.0
      %v783 = vadd.f32 %v781, %v782
      %v784 = vsel %vm698, %v566, 0.0
      %v785 = vadd.f32 %v783, %v784
      %v786 = vsel %vm698, %v569, 0.0
      %v787 = vadd.f32 %v785, %v786
      %v788 = vsel %vm698, %v571, 0.0
      %v789 = vadd.f32 %v787, %v788
      %v790 = vsel %vm698, %v574, 0.0
      %v791 = vadd.f32 %v789, %v790
      %v792 = vsel %vm698, %v576, 0.0
      %v793 = vadd.f32 %v791, %v792
      %v794 = vsel %vm698, %v579, 0.0
      %v795 = vadd.f32 %v793, %v794
      %v796 = vsel %vm698, %v581, 0.0
      %v797 = vadd.f32 %v795, %v796
      %v798 = vsel %vm698, %v584, 0.0
      %v799 = vadd.f32 %v797, %v798
      %v800 = vsel %vm698, %v586, 0.0
      %v801 = vadd.f32 %v799, %v800
      %v802 = vsel %vm698, %v589, 0.0
      %v803 = vadd.f32 %v801, %v802
      %v804 = vsel %vm698, %v591, 0.0
      %v805 = vadd.f32 %v803, %v804
      %v806 = vsel %vm698, %v594, 0.0
      %v807 = vadd.f32 %v805, %v806
      %v808 = vsel %vm698, %v596, 0.0
      %v809 = vadd.f32 %v807, %v808
      %v810 = vsel %vm698, %v599, 0.0
      %v811 = vadd.f32 %v809, %v810
      %v812 = vsel %vm698, %v601, 0.0
      %v813 = vadd.f32 %v811, %v812
      %v814 = vsel %vm698, %v604, 0.0
      %v815 = vadd.f32 %v813, %v814
      %v816 = vsel %vm698, %v606, 0.0
      %v817 = vadd.f32 %v815, %v816
      %v818 = vsel %vm698, %v609, 0.0
      %v819 = vadd.f32 %v817, %v818
      %v820 = vsel %vm698, %v611, 0.0
      %v821 = vadd.f32 %v819, %v820
      %v822 = vsel %vm698, %v614, 0.0
      %v823 = vadd.f32 %v821, %v822
      %v824 = vsel %vm698, %v616, 0.0
      %v825 = vadd.f32 %v823, %v824
      %v826 = vsel %vm698, %v619, 0.0
      %v827 = vadd.f32 %v825, %v826
      %v828 = vsel %vm698, %v621, 0.0
      %v829 = vadd.f32 %v827, %v828
      %v830 = vsel %vm698, %v624, 0.0
      %v831 = vadd.f32 %v829, %v830
      %v832 = vsel %vm698, %v626, 0.0
      %v833 = vadd.f32 %v831, %v832
      %v834 = vsel %vm698, %v629, 0.0
      %v835 = vadd.f32 %v833, %v834
      %v836 = vsel %vm698, %v631, 0.0
      %v837 = vadd.f32 %v835, %v836
      %v838 = vsel %vm698, %v634, 0.0
      %v839 = vadd.f32 %v837, %v838
      %v840 = vsel %vm698, %v636, 0.0
      %v841 = vadd.f32 %v839, %v840
      %v842 = vsel %vm698, %v639, 0.0
      %v843 = vadd.f32 %v841, %v842
      %v844 = vsel %vm698, %v641, 0.0
      %v845 = vadd.f32 %v843, %v844
      %v846 = vsel %vm698, %v644, 0.0
      %v847 = vadd.f32 %v845, %v846
      %v848 = vsel %vm698, %v646, 0.0
      %v849 = vadd.f32 %v847, %v848
      %v850 = vsel %vm698, %v649, 0.0
      %v851 = vadd.f32 %v849, %v850
      %v852 = vsel %vm698, %v651, 0.0
      %v853 = vadd.f32 %v851, %v852
      %v854 = vsel %vm698, %v654, 0.0
      %v855 = vadd.f32 %v853, %v854
      %v856 = vsel %vm698, %v656, 0.0
      %v857 = vadd.f32 %v855, %v856
      %v858 = vsel %vm698, %v659, 0.0
      %v859 = vadd.f32 %v857, %v858
      %v860 = vsel %vm698, %v661, 0.0
      %v861 = vadd.f32 %v859, %v860
      %v862 = vsel %vm698, %v664, 0.0
      %v863 = vadd.f32 %v861, %v862
      %v864 = vsel %vm698, %v666, 0.0
      %v865 = vadd.f32 %v863, %v864
      %v866 = vsel %vm698, %v669, 0.0
      %v867 = vadd.f32 %v865, %v866
      %v868 = vsel %vm698, %v671, 0.0
      %v869 = vadd.f32 %v867, %v868
      %v870 = vsel %vm698, %v674, 0.0
      %v871 = vadd.f32 %v869, %v870
      %v872 = vsel %vm698, %v676, 0.0
      %v873 = vadd.f32 %v871, %v872
      %v874 = vsel %vm698, %v679, 0.0
      %v875 = vadd.f32 %v873, %v874
      %v876 = vsel %vm698, %v681, 0.0
      %v877 = vadd.f32 %v875, %v876
      %v878 = vsel %vm698, %v684, 0.0
      %v879 = vadd.f32 %v877, %v878
      %v880 = vsel %vm698, %v686, 0.0
      %v881 = vadd.f32 %v879, %v880
      %v882 = vsel %vm698, %v689, 0.0
      %v883 = vadd.f32 %v881, %v882
      %v884 = vsel %vm698, %v691, 0.0
      %v885 = vadd.f32 %v883, %v884
      %v886 = vsel %vm698, %v694, 0.0
      %v887 = vadd.f32 %v885, %v886
      %v888 = vsel %vm698, %v696, 0.0
      %v889 = vadd.f32 %v887, %v888
      %v890 = vrot.slane %v889, 4
      %v891 = vadd.f32 %v889, %v890
      %v892 = vrot.slane %v891, 2
      %v893 = vadd.f32 %v891, %v892
      %v894 = vrot.slane %v893, 1
      %v895 = vadd.f32 %v893, %v894
      %v896 = vmul.f32 %v539, %v539
      %v897 = vmul.f32 %v541, %v541
      %v898 = vmul.f32 %v544, %v544
      %v899 = vmul.f32 %v546, %v546
      %v900 = vmul.f32 %v549, %v549
      %v901 = vmul.f32 %v551, %v551
      %v902 = vmul.f32 %v554, %v554
      %v903 = vmul.f32 %v556, %v556
      %v904 = vmul.f32 %v559, %v559
      %v905 = vmul.f32 %v561, %v561
      %v906 = vmul.f32 %v564, %v564
      %v907 = vmul.f32 %v566, %v566
      %v908 = vmul.f32 %v569, %v569
      %v909 = vmul.f32 %v571, %v571
      %v910 = vmul.f32 %v574, %v574
      %v911 = vmul.f32 %v576, %v576
      %v912 = vmul.f32 %v579, %v579
      %v913 = vmul.f32 %v581, %v581
      %v914 = vmul.f32 %v584, %v584
      %v915 = vmul.f32 %v586, %v586
      %v916 = vmul.f32 %v589, %v589
      %v917 = vmul.f32 %v591, %v591
      %v918 = vmul.f32 %v594, %v594
      %v919 = vmul.f32 %v596, %v596
      %v920 = vmul.f32 %v599, %v599
      %v921 = vmul.f32 %v601, %v601
      %v922 = vmul.f32 %v604, %v604
      %v923 = vmul.f32 %v606, %v606
      %v924 = vmul.f32 %v609, %v609
      %v925 = vmul.f32 %v611, %v611
      %v926 = vmul.f32 %v614, %v614
      %v927 = vmul.f32 %v616, %v616
      %v928 = vmul.f32 %v619, %v619
      %v929 = vmul.f32 %v621, %v621
      %v930 = vmul.f32 %v624, %v624
      %v931 = vmul.f32 %v626, %v626
      %v932 = vmul.f32 %v629, %v629
      %v933 = vmul.f32 %v631, %v631
      %v934 = vmul.f32 %v634, %v634
      %v935 = vmul.f32 %v636, %v636
      %v936 = vmul.f32 %v639, %v639
      %v937 = vmul.f32 %v641, %v641
      %v938 = vmul.f32 %v644, %v644
      %v939 = vmul.f32 %v646, %v646
      %v940 = vmul.f32 %v649, %v649
      %v941 = vmul.f32 %v651, %v651
      %v942 = vmul.f32 %v654, %v654
      %v943 = vmul.f32 %v656, %v656
      %v944 = vmul.f32 %v659, %v659
      %v945 = vmul.f32 %v661, %v661
      %v946 = vmul.f32 %v664, %v664
      %v947 = vmul.f32 %v666, %v666
      %v948 = vmul.f32 %v669, %v669
      %v949 = vmul.f32 %v671, %v671
      %v950 = vmul.f32 %v674, %v674
      %v951 = vmul.f32 %v676, %v676
      %v952 = vmul.f32 %v679, %v679
      %v953 = vmul.f32 %v681, %v681
      %v954 = vmul.f32 %v684, %v684
      %v955 = vmul.f32 %v686, %v686
      %v956 = vmul.f32 %v689, %v689
      %v957 = vmul.f32 %v691, %v691
      %v958 = vmul.f32 %v694, %v694
      %v959 = vmul.f32 %v696, %v696
      %v960 = vsel %vm698, %v896, 0.0
      %v961 = vsel %vm698, %v897, 0.0
      %v962 = vadd.f32 %v960, %v961
      %v963 = vsel %vm698, %v898, 0.0
      %v964 = vadd.f32 %v962, %v963
      %v965 = vsel %vm698, %v899, 0.0
      %v966 = vadd.f32 %v964, %v965
      %v967 = vsel %vm698, %v900, 0.0
      %v968 = vadd.f32 %v966, %v967
      %v969 = vsel %vm698, %v901, 0.0
      %v970 = vadd.f32 %v968, %v969
      %v971 = vsel %vm698, %v902, 0.0
      %v972 = vadd.f32 %v970, %v971
      %v973 = vsel %vm698, %v903, 0.0
      %v974 = vadd.f32 %v972, %v973
      %v975 = vsel %vm698, %v904, 0.0
      %v976 = vadd.f32 %v974, %v975
      %v977 = vsel %vm698, %v905, 0.0
      %v978 = vadd.f32 %v976, %v977
      %v979 = vsel %vm698, %v906, 0.0
      %v980 = vadd.f32 %v978, %v979
      %v981 = vsel %vm698, %v907, 0.0
      %v982 = vadd.f32 %v980, %v981
      %v983 = vsel %vm698, %v908, 0.0
      %v984 = vadd.f32 %v982, %v983
      %v985 = vsel %vm698, %v909, 0.0
      %v986 = vadd.f32 %v984, %v985
      %v987 = vsel %vm698, %v910, 0.0
      %v988 = vadd.f32 %v986, %v987
      %v989 = vsel %vm698, %v911, 0.0
      %v990 = vadd.f32 %v988, %v989
      %v991 = vsel %vm698, %v912, 0.0
      %v992 = vadd.f32 %v990, %v991
      %v993 = vsel %vm698, %v913, 0.0
      %v994 = vadd.f32 %v992, %v993
      %v995 = vsel %vm698, %v914, 0.0
      %v996 = vadd.f32 %v994, %v995
      %v997 = vsel %vm698, %v915, 0.0
      %v998 = vadd.f32 %v996, %v997
      %v999 = vsel %vm698, %v916, 0.0
      %v1000 = vadd.f32 %v998, %v999
      %v1001 = vsel %vm698, %v917, 0.0
      %v1002 = vadd.f32 %v1000, %v1001
      %v1003 = vsel %vm698, %v918, 0.0
      %v1004 = vadd.f32 %v1002, %v1003
      %v1005 = vsel %vm698, %v919, 0.0
      %v1006 = vadd.f32 %v1004, %v1005
      %v1007 = vsel %vm698, %v920, 0.0
      %v1008 = vadd.f32 %v1006, %v1007
      %v1009 = vsel %vm698, %v921, 0.0
      %v1010 = vadd.f32 %v1008, %v1009
      %v1011 = vsel %vm698, %v922, 0.0
      %v1012 = vadd.f32 %v1010, %v1011
      %v1013 = vsel %vm698, %v923, 0.0
      %v1014 = vadd.f32 %v1012, %v1013
      %v1015 = vsel %vm698, %v924, 0.0
      %v1016 = vadd.f32 %v1014, %v1015
      %v1017 = vsel %vm698, %v925, 0.0
      %v1018 = vadd.f32 %v1016, %v1017
      %v1019 = vsel %vm698, %v926, 0.0
      %v1020 = vadd.f32 %v1018, %v1019
      %v1021 = vsel %vm698, %v927, 0.0
      %v1022 = vadd.f32 %v1020, %v1021
      %v1023 = vsel %vm698, %v928, 0.0
      %v1024 = vadd.f32 %v1022, %v1023
      %v1025 = vsel %vm698, %v929, 0.0
      %v1026 = vadd.f32 %v1024, %v1025
      %v1027 = vsel %vm698, %v930, 0.0
      %v1028 = vadd.f32 %v1026, %v1027
      %v1029 = vsel %vm698, %v931, 0.0
      %v1030 = vadd.f32 %v1028, %v1029
      %v1031 = vsel %vm698, %v932, 0.0
      %v1032 = vadd.f32 %v1030, %v1031
      %v1033 = vsel %vm698, %v933, 0.0
      %v1034 = vadd.f32 %v1032, %v1033
      %v1035 = vsel %vm698, %v934, 0.0
      %v1036 = vadd.f32 %v1034, %v1035
      %v1037 = vsel %vm698, %v935, 0.0
      %v1038 = vadd.f32 %v1036, %v1037
      %v1039 = vsel %vm698, %v936, 0.0
      %v1040 = vadd.f32 %v1038, %v1039
      %v1041 = vsel %vm698, %v937, 0.0
      %v1042 = vadd.f32 %v1040, %v1041
      %v1043 = vsel %vm698, %v938, 0.0
      %v1044 = vadd.f32 %v1042, %v1043
      %v1045 = vsel %vm698, %v939, 0.0
      %v1046 = vadd.f32 %v1044, %v1045
      %v1047 = vsel %vm698, %v940, 0.0
      %v1048 = vadd.f32 %v1046, %v1047
      %v1049 = vsel %vm698, %v941, 0.0
      %v1050 = vadd.f32 %v1048, %v1049
      %v1051 = vsel %vm698, %v942, 0.0
      %v1052 = vadd.f32 %v1050, %v1051
      %v1053 = vsel %vm698, %v943, 0.0
      %v1054 = vadd.f32 %v1052, %v1053
      %v1055 = vsel %vm698, %v944, 0.0
      %v1056 = vadd.f32 %v1054, %v1055
      %v1057 = vsel %vm698, %v945, 0.0
      %v1058 = vadd.f32 %v1056, %v1057
      %v1059 = vsel %vm698, %v946, 0.0
      %v1060 = vadd.f32 %v1058, %v1059
      %v1061 = vsel %vm698, %v947, 0.0
      %v1062 = vadd.f32 %v1060, %v1061
      %v1063 = vsel %vm698, %v948, 0.0
      %v1064 = vadd.f32 %v1062, %v1063
      %v1065 = vsel %vm698, %v949, 0.0
      %v1066 = vadd.f32 %v1064, %v1065
      %v1067 = vsel %vm698, %v950, 0.0
      %v1068 = vadd.f32 %v1066, %v1067
      %v1069 = vsel %vm698, %v951, 0.0
      %v1070 = vadd.f32 %v1068, %v1069
      %v1071 = vsel %vm698, %v952, 0.0
      %v1072 = vadd.f32 %v1070, %v1071
      %v1073 = vsel %vm698, %v953, 0.0
      %v1074 = vadd.f32 %v1072, %v1073
      %v1075 = vsel %vm698, %v954, 0.0
      %v1076 = vadd.f32 %v1074, %v1075
      %v1077 = vsel %vm698, %v955, 0.0
      %v1078 = vadd.f32 %v1076, %v1077
      %v1079 = vsel %vm698, %v956, 0.0
      %v1080 = vadd.f32 %v1078, %v1079
      %v1081 = vsel %vm698, %v957, 0.0
      %v1082 = vadd.f32 %v1080, %v1081
      %v1083 = vsel %vm698, %v958, 0.0
      %v1084 = vadd.f32 %v1082, %v1083
      %v1085 = vsel %vm698, %v959, 0.0
      %v1086 = vadd.f32 %v1084, %v1085
      %v1087 = vrot.slane %v1086, 4
      %v1088 = vadd.f32 %v1086, %v1087
      %v1089 = vrot.slane %v1088, 2
      %v1090 = vadd.f32 %v1088, %v1089
      %v1091 = vrot.slane %v1090, 1
      %v1092 = vadd.f32 %v1090, %v1091
      %vm1093 = vcmask 1040384
      %v1094 = vsel %vm1093, %v895, %v1092
      %vm1095 = vcmask 1041408
      %v1096 = vsel %vm1095, %v1094, 0.0
      %1097 = vst.msk [vmem:[%s184] sm:$0xff] %vm698, %v1096
      %s1098 = smul.u32 64, %s15
      %p1099 = scmp.lt.s32.totalorder %s1098, 255
      %s1100 = scalar_select %p1099, %s1098, 255
      %s1101 = smul.addr %s1100, 8
      %s1102 = scalar_lea.vmem %s2, %s1101
      %p1103 = scmp.lt.s32.totalorder %s15, 3
      %s1104 = scalar_select %p1103, %s15, 3
      %s1105 = smul.addr %s1104, 8
      %s1106 = scalar_lea.vmem %s3, %s1105
      // Predicated region
      $region29: #{vgg_forward.17} parent=27 // pred_check
        %p1107 = pneg %p80
      $region30: #{vgg_forward.17} parent=27 // pred_check_branch
        %1109 = sbr.rel (%p1107) target = $region32
      $region31: #{vgg_forward.17} parent=27 // pred_region
        %s1110 = smul.u32 64, %s15
      $region32: #{vgg_forward.17} parent=27 // pred_fallthru
        _
      // Predicated region
      $region33: #{vgg_forward.17} parent=27 // pred_check
        %p1111 = pneg %p106
      $region34: #{vgg_forward.17} parent=27 // pred_check_branch
        %1113 = sbr.rel (%p1111) target = $region36
      $region35: #{vgg_forward.17} parent=27 // pred_region
        _
      $region36: #{vgg_forward.17} parent=27 // pred_fallthru
        _
    $region28: #{vgg_forward.17} parent=5 // pred_fallthru
      _
    %p1114 = scmp.le.s32.totalorder 2, %s10
    // Predicated region
    $region37: #{vgg_forward.17} parent=5 // pred_check
      %p1115 = pneg %p1114
    $region38: #{vgg_forward.17} parent=5 // pred_check_branch
      %1117 = sbr.rel (%p1115) target = $region40
    $region39: #{vgg_forward.17} parent=5 // pred_region
      %s1118 = ssub.s32 %s10, 2
      // Predicated region
      $region41: #{vgg_forward.17} parent=39 // pred_check
        %p1119 = pneg %p86
      $region42: #{vgg_forward.17} parent=39 // pred_check_branch
        %1121 = sbr.rel (%p1119) target = $region44
      $region43: #{vgg_forward.17} parent=39 // pred_region
        %s1122 = smul.u32 64, %s16
        %p1123 = scmp.lt.s32.totalorder %s1122, 255
        %s1124 = scalar_select %p1123, %s1122, 255
        %s1125 = smul.addr %s1124, 8
        %s1126 = scalar_lea.vmem %s2, %s1125
      $region44: #{vgg_forward.17} parent=39 // pred_fallthru
        _
      // Predicated region
      $region45: #{vgg_forward.17} parent=39 // pred_check
        %p1127 = pneg %p112
      $region46: #{vgg_forward.17} parent=39 // pred_check_branch
        %1129 = sbr.rel (%p1127) target = $region48
      $region47: #{vgg_forward.17} parent=39 // pred_region
        %p1130 = scmp.lt.s32.totalorder %s16, 3
        %s1131 = scalar_select %p1130, %s16, 3
        %s1132 = smul.addr %s1131, 8
        %s1133 = scalar_lea.vmem %s3, %s1132
      $region48: #{vgg_forward.17} parent=39 // pred_fallthru
        _
    $region40: #{vgg_forward.17} parent=5 // pred_fallthru
      _
  $region6: #{vgg_forward.17} parent=0 // loop_footer
    %s14 = sadd.s32 1, %s10
  $region7: #{vgg_forward.17} parent=0 // loop_footer_branch
    %9 = sbr.rel target = $region3
  $region8: #{vgg_forward.17} parent=0 // loop_exit
    _

// kernel: vgg_forward.19
$region0: #{vgg_forward.19}
  #allocation0 [shape = 'u32[]', space=smem, size = 0x4, offset = 0x4, fixed_abs, tag = 'smem constant byte address 0x4 - core index']
  #allocation1 [shape = 'u32[72,128]{1,0:T(1,128)}', space=vmem, size = 0x9000, scoped, tag = 'internal scratch']
  %s0 = inlined_call_operand.vmem [shape: bf16[512,144], index: 0, kind: input, shape index: {}]
  %s1 = inlined_call_operand.vmem [shape: bf16[144,32], index: 1, kind: input, shape index: {}]
  %s2 = inlined_call_operand.vmem [shape: f32[512,32], index: 2, kind: output, shape index: {0}]
  %s3 = inlined_call_operand.vmem [shape: f32[8,32], index: 3, kind: output, shape index: {1}]
  %4 = xla_tuple %s2, %s3
  %s5 = sld [smem:[#allocation0]]
  $region26: #{vgg_forward.19} parent=0
    _
  %s7 = ssub.s32 1, %s5
  %s8 = scalar_select 0, %s7, %s5
  // Predicated region
  $region2: #{vgg_forward.19} parent=0 // pred_check
    _
  $region3: #{vgg_forward.19} parent=0 // pred_check_branch
    %10 = sbr.rel (0) target = $region5
  $region4: #{vgg_forward.19} parent=0 // pred_region
    _
  $region5: #{vgg_forward.19} parent=0 // pred_fallthru
    _
  // Predicated region
  $region6: #{vgg_forward.19} parent=0 // pred_check
    _
  $region7: #{vgg_forward.19} parent=0 // pred_check_branch
    %12 = sbr.rel (0) target = $region9
  $region8: #{vgg_forward.19} parent=0 // pred_region
    _
  $region9: #{vgg_forward.19} parent=0 // pred_fallthru
    _
  %v14 = vld [vmem:[%s0] sm:$0xff]
  %v15 = vld [vmem:[%s0 + $0x8] sm:$0xff]
  %v16 = vld [vmem:[%s0 + $0x10] sm:$0xff]
  %v17 = vld [vmem:[%s0 + $0x18] sm:$0xff]
  %v18 = vld [vmem:[%s0 + $0x20] sm:$0xff]
  %v19 = vld [vmem:[%s0 + $0x28] sm:$0xff]
  %v20 = vld [vmem:[%s0 + $0x30] sm:$0xff]
  %v21 = vld [vmem:[%s0 + $0x38] sm:$0xff]
  %v22 = vld [vmem:[%s0 + $0x40] sm:$0xff]
  %v23 = vld [vmem:[%s0 + $0x48] sm:$0xff]
  %v24 = vld [vmem:[%s0 + $0x50] sm:$0xff]
  %v25 = vld [vmem:[%s0 + $0x58] sm:$0xff]
  %v26 = vld [vmem:[%s0 + $0x60] sm:$0xff]
  %v27 = vld [vmem:[%s0 + $0x68] sm:$0xff]
  %v28 = vld [vmem:[%s0 + $0x70] sm:$0xff]
  %v29 = vld [vmem:[%s0 + $0x78] sm:$0xff]
  %v30 = vld [vmem:[%s0 + $0x80] sm:$0xff]
  %v31 = vld [vmem:[%s0 + $0x88] sm:$0xff]
  %v32 = vld [vmem:[%s0 + $0x90] sm:$0xff]
  %v33 = vld [vmem:[%s0 + $0x98] sm:$0xff]
  %v34 = vld [vmem:[%s0 + $0xa0] sm:$0xff]
  %v35 = vld [vmem:[%s0 + $0xa8] sm:$0xff]
  %v36 = vld [vmem:[%s0 + $0xb0] sm:$0xff]
  %v37 = vld [vmem:[%s0 + $0xb8] sm:$0xff]
  %v38 = vld [vmem:[%s0 + $0xc0] sm:$0xff]
  %v39 = vld [vmem:[%s0 + $0xc8] sm:$0xff]
  %v40 = vld [vmem:[%s0 + $0xd0] sm:$0xff]
  %v41 = vld [vmem:[%s0 + $0xd8] sm:$0xff]
  %v42 = vld [vmem:[%s0 + $0xe0] sm:$0xff]
  %v43 = vld [vmem:[%s0 + $0xe8] sm:$0xff]
  %v44 = vld [vmem:[%s0 + $0xf0] sm:$0xff]
  %v45 = vld [vmem:[%s0 + $0xf8] sm:$0xff]
  %v46 = vld [vmem:[%s0 + $0x100] sm:$0xff]
  %v47 = vld [vmem:[%s0 + $0x108] sm:$0xff]
  %v48 = vld [vmem:[%s0 + $0x110] sm:$0xff]
  %v49 = vld [vmem:[%s0 + $0x118] sm:$0xff]
  %v50 = vld [vmem:[%s0 + $0x120] sm:$0xff]
  %v51 = vld [vmem:[%s0 + $0x128] sm:$0xff]
  %v52 = vld [vmem:[%s0 + $0x130] sm:$0xff]
  %v53 = vld [vmem:[%s0 + $0x138] sm:$0xff]
  %v54 = vld [vmem:[%s0 + $0x140] sm:$0xff]
  %v55 = vld [vmem:[%s0 + $0x148] sm:$0xff]
  %v56 = vld [vmem:[%s0 + $0x150] sm:$0xff]
  %v57 = vld [vmem:[%s0 + $0x158] sm:$0xff]
  %v58 = vld [vmem:[%s0 + $0x160] sm:$0xff]
  %v59 = vld [vmem:[%s0 + $0x168] sm:$0xff]
  %v60 = vld [vmem:[%s0 + $0x170] sm:$0xff]
  %v61 = vld [vmem:[%s0 + $0x178] sm:$0xff]
  %v62 = vld [vmem:[%s0 + $0x180] sm:$0xff]
  %v63 = vld [vmem:[%s0 + $0x188] sm:$0xff]
  %v64 = vld [vmem:[%s0 + $0x190] sm:$0xff]
  %v65 = vld [vmem:[%s0 + $0x198] sm:$0xff]
  %v66 = vld [vmem:[%s0 + $0x1a0] sm:$0xff]
  %v67 = vld [vmem:[%s0 + $0x1a8] sm:$0xff]
  %v68 = vld [vmem:[%s0 + $0x1b0] sm:$0xff]
  %v69 = vld [vmem:[%s0 + $0x1b8] sm:$0xff]
  %v70 = vld [vmem:[%s0 + $0x1c0] sm:$0xff]
  %v71 = vld [vmem:[%s0 + $0x1c8] sm:$0xff]
  %v72 = vld [vmem:[%s0 + $0x1d0] sm:$0xff]
  %v73 = vld [vmem:[%s0 + $0x1d8] sm:$0xff]
  %v74 = vld [vmem:[%s0 + $0x1e0] sm:$0xff]
  %v75 = vld [vmem:[%s0 + $0x1e8] sm:$0xff]
  %v76 = vld [vmem:[%s0 + $0x1f0] sm:$0xff]
  %v77 = vld [vmem:[%s0 + $0x1f8] sm:$0xff]
  %v78 = vld [vmem:[%s1] sm:$0xf]
  %v79 = vld [vmem:[%s1 + $0x4] sm:$0xf]
  %v80 = vld [vmem:[%s1 + $0x8] sm:$0xf]
  %v81 = vld [vmem:[%s1 + $0xc] sm:$0xf]
  %v82 = vld [vmem:[%s1 + $0x10] sm:$0xf]
  %v83 = vld [vmem:[%s1 + $0x14] sm:$0xf]
  %v84 = vld [vmem:[%s1 + $0x18] sm:$0xf]
  %v85 = vld [vmem:[%s1 + $0x1c] sm:$0xf]
  %v86 = vld [vmem:[%s1 + $0x20] sm:$0xf]
  %v87 = vld [vmem:[%s1 + $0x24] sm:$0xf]
  %v88 = vld [vmem:[%s1 + $0x28] sm:$0xf]
  %v89 = vld [vmem:[%s1 + $0x2c] sm:$0xf]
  %v90 = vld [vmem:[%s1 + $0x30] sm:$0xf]
  %v91 = vld [vmem:[%s1 + $0x34] sm:$0xf]
  %v92 = vld [vmem:[%s1 + $0x38] sm:$0xf]
  %v93 = vld [vmem:[%s1 + $0x3c] sm:$0xf]
  %v94 = vld [vmem:[%s1 + $0x40] sm:$0xf]
  %v95 = vld [vmem:[%s1 + $0x44] sm:$0xf]
  %v160 = vunpack.c.l.b16 %v14
  %v161 = vunpack.c.h.b16 %v14
  %v162 = vunpack.c.l.b16 %v15
  %v163 = vunpack.c.h.b16 %v15
  %v164 = vunpack.c.l.b16 %v16
  %v165 = vunpack.c.h.b16 %v16
  %v166 = vunpack.c.l.b16 %v17
  %v167 = vunpack.c.h.b16 %v17
  %v168 = vunpack.c.l.b16 %v18
  %v169 = vunpack.c.h.b16 %v18
  %v170 = vunpack.c.l.b16 %v19
  %v171 = vunpack.c.h.b16 %v19
  %v172 = vunpack.c.l.b16 %v20
  %v173 = vunpack.c.h.b16 %v20
  %v174 = vunpack.c.l.b16 %v21
  %v175 = vunpack.c.h.b16 %v21
  %v176 = vunpack.c.l.b16 %v22
  %v177 = vunpack.c.h.b16 %v22
  %v178 = vunpack.c.l.b16 %v23
  %v179 = vunpack.c.h.b16 %v23
  %v180 = vunpack.c.l.b16 %v24
  %v181 = vunpack.c.h.b16 %v24
  %v182 = vunpack.c.l.b16 %v25
  %v183 = vunpack.c.h.b16 %v25
  %v184 = vunpack.c.l.b16 %v26
  %v185 = vunpack.c.h.b16 %v26
  %v186 = vunpack.c.l.b16 %v27
  %v187 = vunpack.c.h.b16 %v27
  %v188 = vunpack.c.l.b16 %v28
  %v189 = vunpack.c.h.b16 %v28
  %v190 = vunpack.c.l.b16 %v29
  %v191 = vunpack.c.h.b16 %v29
  %v192 = vunpack.c.l.b16 %v30
  %v193 = vunpack.c.h.b16 %v30
  %v194 = vunpack.c.l.b16 %v31
  %v195 = vunpack.c.h.b16 %v31
  %v196 = vunpack.c.l.b16 %v32
  %v197 = vunpack.c.h.b16 %v32
  %v198 = vunpack.c.l.b16 %v33
  %v199 = vunpack.c.h.b16 %v33
  %v200 = vunpack.c.l.b16 %v34
  %v201 = vunpack.c.h.b16 %v34
  %v202 = vunpack.c.l.b16 %v35
  %v203 = vunpack.c.h.b16 %v35
  %v204 = vunpack.c.l.b16 %v36
  %v205 = vunpack.c.h.b16 %v36
  %v206 = vunpack.c.l.b16 %v37
  %v207 = vunpack.c.h.b16 %v37
  %v208 = vunpack.c.l.b16 %v38
  %v209 = vunpack.c.h.b16 %v38
  %v210 = vunpack.c.l.b16 %v39
  %v211 = vunpack.c.h.b16 %v39
  %v212 = vunpack.c.l.b16 %v40
  %v213 = vunpack.c.h.b16 %v40
  %v214 = vunpack.c.l.b16 %v41
  %v215 = vunpack.c.h.b16 %v41
  %v216 = vunpack.c.l.b16 %v42
  %v217 = vunpack.c.h.b16 %v42
  %v218 = vunpack.c.l.b16 %v43
  %v219 = vunpack.c.h.b16 %v43
  %v220 = vunpack.c.l.b16 %v44
  %v221 = vunpack.c.h.b16 %v44
  %v222 = vunpack.c.l.b16 %v45
  %v223 = vunpack.c.h.b16 %v45
  %v224 = vunpack.c.l.b16 %v46
  %v225 = vunpack.c.h.b16 %v46
  %v226 = vunpack.c.l.b16 %v47
  %v227 = vunpack.c.h.b16 %v47
  %v228 = vunpack.c.l.b16 %v48
  %v229 = vunpack.c.h.b16 %v48
  %v230 = vunpack.c.l.b16 %v49
  %v231 = vunpack.c.h.b16 %v49
  %v232 = vunpack.c.l.b16 %v50
  %v233 = vunpack.c.h.b16 %v50
  %v234 = vunpack.c.l.b16 %v51
  %v235 = vunpack.c.h.b16 %v51
  %v236 = vunpack.c.l.b16 %v52
  %v237 = vunpack.c.h.b16 %v52
  %v238 = vunpack.c.l.b16 %v53
  %v239 = vunpack.c.h.b16 %v53
  %v240 = vunpack.c.l.b16 %v54
  %v241 = vunpack.c.h.b16 %v54
  %v242 = vunpack.c.l.b16 %v55
  %v243 = vunpack.c.h.b16 %v55
  %v244 = vunpack.c.l.b16 %v56
  %v245 = vunpack.c.h.b16 %v56
  %v246 = vunpack.c.l.b16 %v57
  %v247 = vunpack.c.h.b16 %v57
  %v248 = vunpack.c.l.b16 %v58
  %v249 = vunpack.c.h.b16 %v58
  %v250 = vunpack.c.l.b16 %v59
  %v251 = vunpack.c.h.b16 %v59
  %v252 = vunpack.c.l.b16 %v60
  %v253 = vunpack.c.h.b16 %v60
  %v254 = vunpack.c.l.b16 %v61
  %v255 = vunpack.c.h.b16 %v61
  %v256 = vunpack.c.l.b16 %v62
  %v257 = vunpack.c.h.b16 %v62
  %v258 = vunpack.c.l.b16 %v63
  %v259 = vunpack.c.h.b16 %v63
  %v260 = vunpack.c.l.b16 %v64
  %v261 = vunpack.c.h.b16 %v64
  %v262 = vunpack.c.l.b16 %v65
  %v263 = vunpack.c.h.b16 %v65
  %v264 = vunpack.c.l.b16 %v66
  %v265 = vunpack.c.h.b16 %v66
  %v266 = vunpack.c.l.b16 %v67
  %v267 = vunpack.c.h.b16 %v67
  %v268 = vunpack.c.l.b16 %v68
  %v269 = vunpack.c.h.b16 %v68
  %v270 = vunpack.c.l.b16 %v69
  %v271 = vunpack.c.h.b16 %v69
  %v272 = vunpack.c.l.b16 %v70
  %v273 = vunpack.c.h.b16 %v70
  %v274 = vunpack.c.l.b16 %v71
  %v275 = vunpack.c.h.b16 %v71
  %v276 = vunpack.c.l.b16 %v72
  %v277 = vunpack.c.h.b16 %v72
  %v278 = vunpack.c.l.b16 %v73
  %v279 = vunpack.c.h.b16 %v73
  %v280 = vunpack.c.l.b16 %v74
  %v281 = vunpack.c.h.b16 %v74
  %v282 = vunpack.c.l.b16 %v75
  %v283 = vunpack.c.h.b16 %v75
  %v284 = vunpack.c.l.b16 %v76
  %v285 = vunpack.c.h.b16 %v76
  %v286 = vunpack.c.l.b16 %v77
  %v287 = vunpack.c.h.b16 %v77
  %v288 = vpack.c.b16 %v162, %v160
  %v289 = vpack.c.b16 %v163, %v161
  %v290 = vpack.c.b16 %v166, %v164
  %v291 = vpack.c.b16 %v167, %v165
  %v292 = vpack.c.b16 %v170, %v168
  %v293 = vpack.c.b16 %v171, %v169
  %v294 = vpack.c.b16 %v174, %v172
  %v295 = vpack.c.b16 %v175, %v173
  %v296 = vpack.c.b16 %v178, %v176
  %v297 = vpack.c.b16 %v179, %v177
  %v298 = vpack.c.b16 %v182, %v180
  %v299 = vpack.c.b16 %v183, %v181
  %v300 = vpack.c.b16 %v186, %v184
  %v301 = vpack.c.b16 %v187, %v185
  %v302 = vpack.c.b16 %v190, %v188
  %v303 = vpack.c.b16 %v191, %v189
  %v304 = vpack.c.b16 %v194, %v192
  %v305 = vpack.c.b16 %v195, %v193
  %v306 = vpack.c.b16 %v198, %v196
  %v307 = vpack.c.b16 %v199, %v197
  %v308 = vpack.c.b16 %v202, %v200
  %v309 = vpack.c.b16 %v203, %v201
  %v310 = vpack.c.b16 %v206, %v204
  %v311 = vpack.c.b16 %v207, %v205
  %v312 = vpack.c.b16 %v210, %v208
  %v313 = vpack.c.b16 %v211, %v209
  %v314 = vpack.c.b16 %v214, %v212
  %v315 = vpack.c.b16 %v215, %v213
  %v316 = vpack.c.b16 %v218, %v216
  %v317 = vpack.c.b16 %v219, %v217
  %v318 = vpack.c.b16 %v222, %v220
  %v319 = vpack.c.b16 %v223, %v221
  %v320 = vpack.c.b16 %v226, %v224
  %v321 = vpack.c.b16 %v227, %v225
  %v322 = vpack.c.b16 %v230, %v228
  %v323 = vpack.c.b16 %v231, %v229
  %v324 = vpack.c.b16 %v234, %v232
  %v325 = vpack.c.b16 %v235, %v233
  %v326 = vpack.c.b16 %v238, %v236
  %v327 = vpack.c.b16 %v239, %v237
  %v328 = vpack.c.b16 %v242, %v240
  %v329 = vpack.c.b16 %v243, %v241
  %v330 = vpack.c.b16 %v246, %v244
  %v331 = vpack.c.b16 %v247, %v245
  %v332 = vpack.c.b16 %v250, %v248
  %v333 = vpack.c.b16 %v251, %v249
  %v334 = vpack.c.b16 %v254, %v252
  %v335 = vpack.c.b16 %v255, %v253
  %v336 = vpack.c.b16 %v258, %v256
  %v337 = vpack.c.b16 %v259, %v257
  %v338 = vpack.c.b16 %v262, %v260
  %v339 = vpack.c.b16 %v263, %v261
  %v340 = vpack.c.b16 %v266, %v264
  %v341 = vpack.c.b16 %v267, %v265
  %v342 = vpack.c.b16 %v270, %v268
  %v343 = vpack.c.b16 %v271, %v269
  %v344 = vpack.c.b16 %v274, %v272
  %v345 = vpack.c.b16 %v275, %v273
  %v346 = vpack.c.b16 %v278, %v276
  %v347 = vpack.c.b16 %v279, %v277
  %v348 = vpack.c.b16 %v282, %v280
  %v349 = vpack.c.b16 %v283, %v281
  %v350 = vpack.c.b16 %v286, %v284
  %v351 = vpack.c.b16 %v287, %v285
  %v402 = vunpack.c.l.b16 %v78
  %v403 = vunpack.c.l.b16 %v79
  %v404 = vunpack.c.l.b16 %v80
  %v405 = vunpack.c.l.b16 %v81
  %v406 = vunpack.c.l.b16 %v82
  %v407 = vunpack.c.l.b16 %v83
  %v408 = vunpack.c.l.b16 %v84
  %v409 = vunpack.c.l.b16 %v85
  %v410 = vunpack.c.l.b16 %v86
  %v411 = vunpack.c.l.b16 %v87
  %v412 = vunpack.c.l.b16 %v88
  %v413 = vunpack.c.l.b16 %v89
  %v414 = vunpack.c.l.b16 %v90
  %v415 = vunpack.c.l.b16 %v91
  %v416 = vunpack.c.l.b16 %v92
  %v417 = vunpack.c.l.b16 %v93
  %v418 = vunpack.c.l.b16 %v94
  %v419 = vunpack.c.l.b16 %v95
  %v420 = vpack.c.b16 %v403, %v402
  %v421 = vpack.c.b16 %v405, %v404
  %v422 = vpack.c.b16 %v407, %v406
  %v423 = vpack.c.b16 %v409, %v408
  %v424 = vpack.c.b16 %v411, %v410
  %v425 = vpack.c.b16 %v413, %v412
  %v426 = vpack.c.b16 %v415, %v414
  %v427 = vpack.c.b16 %v417, %v416
  %v428 = vpack.c.b16 %v419, %v418
  %vm438 = vcmask 130048
  %v440 = vsel %vm438, %v289, 0
  %v443 = vsel %vm438, %v291, 0
  %v446 = vsel %vm438, %v293, 0
  %v449 = vsel %vm438, %v295, 0
  %v452 = vsel %vm438, %v297, 0
  %v455 = vsel %vm438, %v299, 0
  %v458 = vsel %vm438, %v301, 0
  %v461 = vsel %vm438, %v303, 0
  %v464 = vsel %vm438, %v305, 0
  %v467 = vsel %vm438, %v307, 0
  %v470 = vsel %vm438, %v309, 0
  %v473 = vsel %vm438, %v311, 0
  %v476 = vsel %vm438, %v313, 0
  %v479 = vsel %vm438, %v315, 0
  %v482 = vsel %vm438, %v317, 0
  %v485 = vsel %vm438, %v319, 0
  %v488 = vsel %vm438, %v321, 0
  %v491 = vsel %vm438, %v323, 0
  %v494 = vsel %vm438, %v325, 0
  %v497 = vsel %vm438, %v327, 0
  %v500 = vsel %vm438, %v329, 0
  %v503 = vsel %vm438, %v331, 0
  %v506 = vsel %vm438, %v333, 0
  %v509 = vsel %vm438, %v335, 0
  %v512 = vsel %vm438, %v337, 0
  %v515 = vsel %vm438, %v339, 0
  %v518 = vsel %vm438, %v341, 0
  %v521 = vsel %vm438, %v343, 0
  %v524 = vsel %vm438, %v345, 0
  %v527 = vsel %vm438, %v347, 0
  %v530 = vsel %vm438, %v349, 0
  %v533 = vsel %vm438, %v351, 0
  %535 = vmatpush.bf16.msra.mxu0 %v427
  %536 = vmatpush.bf16.msra.mxu0 %v426
  %537 = vmatpush.bf16.msra.mxu0 %v425
  %538 = vmatpush.bf16.msra.mxu0 %v424
  %539 = vmatpush.bf16.msra.mxu0 %v423
  %540 = vmatpush.bf16.msra.mxu0 %v422
  %541 = vmatpush.bf16.msra.mxu0 %v421
  %542 = vmatpush.bf16.msra.mxu0 %v420
  %543 = vmatmul.bf16.gmra.mxu0 %v288
  %v544 = vpop.f32.mrf.mxu0
  %v545 = vadd.f32 0.0, %v544
  %v546 = vpop.f32.mrf.mxu0
  %v547 = vadd.f32 0.0, %v546
  %548 = vmatmul.bf16.gmra.mxu0 %v290
  %v549 = vpop.f32.mrf.mxu0
  %v550 = vadd.f32 0.0, %v549
  %v551 = vpop.f32.mrf.mxu0
  %v552 = vadd.f32 0.0, %v551
  %553 = vmatmul.bf16.gmra.mxu0 %v292
  %v554 = vpop.f32.mrf.mxu0
  %v555 = vadd.f32 0.0, %v554
  %v556 = vpop.f32.mrf.mxu0
  %v557 = vadd.f32 0.0, %v556
  %558 = vmatmul.bf16.gmra.mxu0 %v294
  %v559 = vpop.f32.mrf.mxu0
  %v560 = vadd.f32 0.0, %v559
  %v561 = vpop.f32.mrf.mxu0
  %v562 = vadd.f32 0.0, %v561
  %563 = vmatmul.bf16.gmra.mxu0 %v296
  %v564 = vpop.f32.mrf.mxu0
  %v565 = vadd.f32 0.0, %v564
  %v566 = vpop.f32.mrf.mxu0
  %v567 = vadd.f32 0.0, %v566
  %568 = vmatmul.bf16.gmra.mxu0 %v298
  %v569 = vpop.f32.mrf.mxu0
  %v570 = vadd.f32 0.0, %v569
  %v571 = vpop.f32.mrf.mxu0
  %v572 = vadd.f32 0.0, %v571
  %573 = vmatmul.bf16.gmra.mxu0 %v300
  %v574 = vpop.f32.mrf.mxu0
  %v575 = vadd.f32 0.0, %v574
  %v576 = vpop.f32.mrf.mxu0
  %v577 = vadd.f32 0.0, %v576
  %578 = vmatmul.bf16.gmra.mxu0 %v302
  %v579 = vpop.f32.mrf.mxu0
  %v580 = vadd.f32 0.0, %v579
  %v581 = vpop.f32.mrf.mxu0
  %v582 = vadd.f32 0.0, %v581
  %583 = vmatmul.bf16.gmra.mxu0 %v304
  %v584 = vpop.f32.mrf.mxu0
  %v585 = vadd.f32 0.0, %v584
  %v586 = vpop.f32.mrf.mxu0
  %v587 = vadd.f32 0.0, %v586
  %588 = vmatmul.bf16.gmra.mxu0 %v306
  %v589 = vpop.f32.mrf.mxu0
  %v590 = vadd.f32 0.0, %v589
  %v591 = vpop.f32.mrf.mxu0
  %v592 = vadd.f32 0.0, %v591
  %593 = vmatmul.bf16.gmra.mxu0 %v308
  %v594 = vpop.f32.mrf.mxu0
  %v595 = vadd.f32 0.0, %v594
  %v596 = vpop.f32.mrf.mxu0
  %v597 = vadd.f32 0.0, %v596
  %598 = vmatmul.bf16.gmra.mxu0 %v310
  %v599 = vpop.f32.mrf.mxu0
  %v600 = vadd.f32 0.0, %v599
  %v601 = vpop.f32.mrf.mxu0
  %v602 = vadd.f32 0.0, %v601
  %603 = vmatmul.bf16.gmra.mxu0 %v312
  %v604 = vpop.f32.mrf.mxu0
  %v605 = vadd.f32 0.0, %v604
  %v606 = vpop.f32.mrf.mxu0
  %v607 = vadd.f32 0.0, %v606
  %608 = vmatmul.bf16.gmra.mxu0 %v314
  %v609 = vpop.f32.mrf.mxu0
  %v610 = vadd.f32 0.0, %v609
  %v611 = vpop.f32.mrf.mxu0
  %v612 = vadd.f32 0.0, %v611
  %613 = vmatmul.bf16.gmra.mxu0 %v316
  %v614 = vpop.f32.mrf.mxu0
  %v615 = vadd.f32 0.0, %v614
  %v616 = vpop.f32.mrf.mxu0
  %v617 = vadd.f32 0.0, %v616
  %618 = vmatmul.bf16.gmra.mxu0 %v318
  %v619 = vpop.f32.mrf.mxu0
  %v620 = vadd.f32 0.0, %v619
  %v621 = vpop.f32.mrf.mxu0
  %v622 = vadd.f32 0.0, %v621
  %623 = vmatmul.bf16.gmra.mxu0 %v320
  %v624 = vpop.f32.mrf.mxu0
  %v625 = vadd.f32 0.0, %v624
  %v626 = vpop.f32.mrf.mxu0
  %v627 = vadd.f32 0.0, %v626
  %628 = vmatmul.bf16.gmra.mxu0 %v322
  %v629 = vpop.f32.mrf.mxu0
  %v630 = vadd.f32 0.0, %v629
  %v631 = vpop.f32.mrf.mxu0
  %v632 = vadd.f32 0.0, %v631
  %633 = vmatmul.bf16.gmra.mxu0 %v324
  %v634 = vpop.f32.mrf.mxu0
  %v635 = vadd.f32 0.0, %v634
  %v636 = vpop.f32.mrf.mxu0
  %v637 = vadd.f32 0.0, %v636
  %638 = vmatmul.bf16.gmra.mxu0 %v326
  %v639 = vpop.f32.mrf.mxu0
  %v640 = vadd.f32 0.0, %v639
  %v641 = vpop.f32.mrf.mxu0
  %v642 = vadd.f32 0.0, %v641
  %643 = vmatmul.bf16.gmra.mxu0 %v328
  %v644 = vpop.f32.mrf.mxu0
  %v645 = vadd.f32 0.0, %v644
  %v646 = vpop.f32.mrf.mxu0
  %v647 = vadd.f32 0.0, %v646
  %648 = vmatmul.bf16.gmra.mxu0 %v330
  %v649 = vpop.f32.mrf.mxu0
  %v650 = vadd.f32 0.0, %v649
  %v651 = vpop.f32.mrf.mxu0
  %v652 = vadd.f32 0.0, %v651
  %653 = vmatmul.bf16.gmra.mxu0 %v332
  %v654 = vpop.f32.mrf.mxu0
  %v655 = vadd.f32 0.0, %v654
  %v656 = vpop.f32.mrf.mxu0
  %v657 = vadd.f32 0.0, %v656
  %658 = vmatmul.bf16.gmra.mxu0 %v334
  %v659 = vpop.f32.mrf.mxu0
  %v660 = vadd.f32 0.0, %v659
  %v661 = vpop.f32.mrf.mxu0
  %v662 = vadd.f32 0.0, %v661
  %663 = vmatmul.bf16.gmra.mxu0 %v336
  %v664 = vpop.f32.mrf.mxu0
  %v665 = vadd.f32 0.0, %v664
  %v666 = vpop.f32.mrf.mxu0
  %v667 = vadd.f32 0.0, %v666
  %668 = vmatmul.bf16.gmra.mxu0 %v338
  %v669 = vpop.f32.mrf.mxu0
  %v670 = vadd.f32 0.0, %v669
  %v671 = vpop.f32.mrf.mxu0
  %v672 = vadd.f32 0.0, %v671
  %673 = vmatmul.bf16.gmra.mxu0 %v340
  %v674 = vpop.f32.mrf.mxu0
  %v675 = vadd.f32 0.0, %v674
  %v676 = vpop.f32.mrf.mxu0
  %v677 = vadd.f32 0.0, %v676
  %678 = vmatmul.bf16.gmra.mxu0 %v342
  %v679 = vpop.f32.mrf.mxu0
  %v680 = vadd.f32 0.0, %v679
  %v681 = vpop.f32.mrf.mxu0
  %v682 = vadd.f32 0.0, %v681
  %683 = vmatmul.bf16.gmra.mxu0 %v344
  %v684 = vpop.f32.mrf.mxu0
  %v685 = vadd.f32 0.0, %v684
  %v686 = vpop.f32.mrf.mxu0
  %v687 = vadd.f32 0.0, %v686
  %688 = vmatmul.bf16.gmra.mxu0 %v346
  %v689 = vpop.f32.mrf.mxu0
  %v690 = vadd.f32 0.0, %v689
  %v691 = vpop.f32.mrf.mxu0
  %v692 = vadd.f32 0.0, %v691
  %693 = vmatmul.bf16.gmra.mxu0 %v348
  %v694 = vpop.f32.mrf.mxu0
  %v695 = vadd.f32 0.0, %v694
  %v696 = vpop.f32.mrf.mxu0
  %v697 = vadd.f32 0.0, %v696
  %698 = vmatmul.bf16.gmra.mxu0 %v350
  %v699 = vpop.f32.mrf.mxu0
  %v700 = vadd.f32 0.0, %v699
  %v701 = vpop.f32.mrf.mxu0
  %v702 = vadd.f32 0.0, %v701
  %703 = vdwg.mxu0
  %704 = vmatpush.bf16.msra.mxu0 0
  %705 = vmatpush.bf16.msra.mxu0 0
  %706 = vmatpush.bf16.msra.mxu0 0
  %707 = vmatpush.bf16.msra.mxu0 0
  %708 = vmatpush.bf16.msra.mxu0 0
  %709 = vmatpush.bf16.msra.mxu0 0
  %710 = vmatpush.bf16.msra.mxu0 0
  %711 = vmatpush.bf16.msra.mxu0 %v428
  %712 = vmatmul.bf16.gmra.mxu0 %v440
  %v713 = vpop.f32.mrf.mxu0
  %v714 = vadd.f32 %v545, %v713
  %v715 = vpop.f32.mrf.mxu0
  %v716 = vadd.f32 %v547, %v715
  %717 = vmatmul.bf16.gmra.mxu0 %v443
  %v718 = vpop.f32.mrf.mxu0
  %v719 = vadd.f32 %v550, %v718
  %v720 = vpop.f32.mrf.mxu0
  %v721 = vadd.f32 %v552, %v720
  %722 = vmatmul.bf16.gmra.mxu0 %v446
  %v723 = vpop.f32.mrf.mxu0
  %v724 = vadd.f32 %v555, %v723
  %v725 = vpop.f32.mrf.mxu0
  %v726 = vadd.f32 %v557, %v725
  %727 = vmatmul.bf16.gmra.mxu0 %v449
  %v728 = vpop.f32.mrf.mxu0
  %v729 = vadd.f32 %v560, %v728
  %v730 = vpop.f32.mrf.mxu0
  %v731 = vadd.f32 %v562, %v730
  %732 = vmatmul.bf16.gmra.mxu0 %v452
  %v733 = vpop.f32.mrf.mxu0
  %v734 = vadd.f32 %v565, %v733
  %v735 = vpop.f32.mrf.mxu0
  %v736 = vadd.f32 %v567, %v735
  %737 = vmatmul.bf16.gmra.mxu0 %v455
  %v738 = vpop.f32.mrf.mxu0
  %v739 = vadd.f32 %v570, %v738
  %v740 = vpop.f32.mrf.mxu0
  %v741 = vadd.f32 %v572, %v740
  %742 = vmatmul.bf16.gmra.mxu0 %v458
  %v743 = vpop.f32.mrf.mxu0
  %v744 = vadd.f32 %v575, %v743
  %v745 = vpop.f32.mrf.mxu0
  %v746 = vadd.f32 %v577, %v745
  %747 = vmatmul.bf16.gmra.mxu0 %v461
  %v748 = vpop.f32.mrf.mxu0
  %v749 = vadd.f32 %v580, %v748
  %v750 = vpop.f32.mrf.mxu0
  %v751 = vadd.f32 %v582, %v750
  %752 = vmatmul.bf16.gmra.mxu0 %v464
  %v753 = vpop.f32.mrf.mxu0
  %v754 = vadd.f32 %v585, %v753
  %v755 = vpop.f32.mrf.mxu0
  %v756 = vadd.f32 %v587, %v755
  %757 = vmatmul.bf16.gmra.mxu0 %v467
  %v758 = vpop.f32.mrf.mxu0
  %v759 = vadd.f32 %v590, %v758
  %v760 = vpop.f32.mrf.mxu0
  %v761 = vadd.f32 %v592, %v760
  %762 = vmatmul.bf16.gmra.mxu0 %v470
  %v763 = vpop.f32.mrf.mxu0
  %v764 = vadd.f32 %v595, %v763
  %v765 = vpop.f32.mrf.mxu0
  %v766 = vadd.f32 %v597, %v765
  %767 = vmatmul.bf16.gmra.mxu0 %v473
  %v768 = vpop.f32.mrf.mxu0
  %v769 = vadd.f32 %v600, %v768
  %v770 = vpop.f32.mrf.mxu0
  %v771 = vadd.f32 %v602, %v770
  %772 = vmatmul.bf16.gmra.mxu0 %v476
  %v773 = vpop.f32.mrf.mxu0
  %v774 = vadd.f32 %v605, %v773
  %v775 = vpop.f32.mrf.mxu0
  %v776 = vadd.f32 %v607, %v775
  %777 = vmatmul.bf16.gmra.mxu0 %v479
  %v778 = vpop.f32.mrf.mxu0
  %v779 = vadd.f32 %v610, %v778
  %v780 = vpop.f32.mrf.mxu0
  %v781 = vadd.f32 %v612, %v780
  %782 = vmatmul.bf16.gmra.mxu0 %v482
  %v783 = vpop.f32.mrf.mxu0
  %v784 = vadd.f32 %v615, %v783
  %v785 = vpop.f32.mrf.mxu0
  %v786 = vadd.f32 %v617, %v785
  %787 = vmatmul.bf16.gmra.mxu0 %v485
  %v788 = vpop.f32.mrf.mxu0
  %v789 = vadd.f32 %v620, %v788
  %v790 = vpop.f32.mrf.mxu0
  %v791 = vadd.f32 %v622, %v790
  %792 = vmatmul.bf16.gmra.mxu0 %v488
  %v793 = vpop.f32.mrf.mxu0
  %v794 = vadd.f32 %v625, %v793
  %v795 = vpop.f32.mrf.mxu0
  %v796 = vadd.f32 %v627, %v795
  %797 = vmatmul.bf16.gmra.mxu0 %v491
  %v798 = vpop.f32.mrf.mxu0
  %v799 = vadd.f32 %v630, %v798
  %v800 = vpop.f32.mrf.mxu0
  %v801 = vadd.f32 %v632, %v800
  %802 = vmatmul.bf16.gmra.mxu0 %v494
  %v803 = vpop.f32.mrf.mxu0
  %v804 = vadd.f32 %v635, %v803
  %v805 = vpop.f32.mrf.mxu0
  %v806 = vadd.f32 %v637, %v805
  %807 = vmatmul.bf16.gmra.mxu0 %v497
  %v808 = vpop.f32.mrf.mxu0
  %v809 = vadd.f32 %v640, %v808
  %v810 = vpop.f32.mrf.mxu0
  %v811 = vadd.f32 %v642, %v810
  %812 = vmatmul.bf16.gmra.mxu0 %v500
  %v813 = vpop.f32.mrf.mxu0
  %v814 = vadd.f32 %v645, %v813
  %v815 = vpop.f32.mrf.mxu0
  %v816 = vadd.f32 %v647, %v815
  %817 = vmatmul.bf16.gmra.mxu0 %v503
  %v818 = vpop.f32.mrf.mxu0
  %v819 = vadd.f32 %v650, %v818
  %v820 = vpop.f32.mrf.mxu0
  %v821 = vadd.f32 %v652, %v820
  %822 = vmatmul.bf16.gmra.mxu0 %v506
  %v823 = vpop.f32.mrf.mxu0
  %v824 = vadd.f32 %v655, %v823
  %v825 = vpop.f32.mrf.mxu0
  %v826 = vadd.f32 %v657, %v825
  %827 = vmatmul.bf16.gmra.mxu0 %v509
  %v828 = vpop.f32.mrf.mxu0
  %v829 = vadd.f32 %v660, %v828
  %v830 = vpop.f32.mrf.mxu0
  %v831 = vadd.f32 %v662, %v830
  %832 = vmatmul.bf16.gmra.mxu0 %v512
  %v833 = vpop.f32.mrf.mxu0
  %v834 = vadd.f32 %v665, %v833
  %v835 = vpop.f32.mrf.mxu0
  %v836 = vadd.f32 %v667, %v835
  %837 = vmatmul.bf16.gmra.mxu0 %v515
  %v838 = vpop.f32.mrf.mxu0
  %v839 = vadd.f32 %v670, %v838
  %v840 = vpop.f32.mrf.mxu0
  %v841 = vadd.f32 %v672, %v840
  %842 = vmatmul.bf16.gmra.mxu0 %v518
  %v843 = vpop.f32.mrf.mxu0
  %v844 = vadd.f32 %v675, %v843
  %v845 = vpop.f32.mrf.mxu0
  %v846 = vadd.f32 %v677, %v845
  %847 = vmatmul.bf16.gmra.mxu0 %v521
  %v848 = vpop.f32.mrf.mxu0
  %v849 = vadd.f32 %v680, %v848
  %v850 = vpop.f32.mrf.mxu0
  %v851 = vadd.f32 %v682, %v850
  %852 = vmatmul.bf16.gmra.mxu0 %v524
  %v853 = vpop.f32.mrf.mxu0
  %v854 = vadd.f32 %v685, %v853
  %v855 = vpop.f32.mrf.mxu0
  %v856 = vadd.f32 %v687, %v855
  %857 = vmatmul.bf16.gmra.mxu0 %v527
  %v858 = vpop.f32.mrf.mxu0
  %v859 = vadd.f32 %v690, %v858
  %v860 = vpop.f32.mrf.mxu0
  %v861 = vadd.f32 %v692, %v860
  %862 = vmatmul.bf16.gmra.mxu0 %v530
  %v863 = vpop.f32.mrf.mxu0
  %v864 = vadd.f32 %v695, %v863
  %v865 = vpop.f32.mrf.mxu0
  %v866 = vadd.f32 %v697, %v865
  %867 = vmatmul.bf16.gmra.mxu0 %v533
  %v868 = vpop.f32.mrf.mxu0
  %v869 = vadd.f32 %v700, %v868
  %v870 = vpop.f32.mrf.mxu0
  %v871 = vadd.f32 %v702, %v870
  %872 = vdwg.mxu0
  %vm873 = vcmask 261120
  %874 = vst.msk [vmem:[%s2] sm:$0xff] %vm873, %v714
  %875 = vst.msk [vmem:[%s2 + $0x8] sm:$0xff] %vm873, %v716
  %876 = vst.msk [vmem:[%s2 + $0x10] sm:$0xff] %vm873, %v719
  %877 = vst.msk [vmem:[%s2 + $0x18] sm:$0xff] %vm873, %v721
  %878 = vst.msk [vmem:[%s2 + $0x20] sm:$0xff] %vm873, %v724
  %879 = vst.msk [vmem:[%s2 + $0x28] sm:$0xff] %vm873, %v726
  %880 = vst.msk [vmem:[%s2 + $0x30] sm:$0xff] %vm873, %v729
  %881 = vst.msk [vmem:[%s2 + $0x38] sm:$0xff] %vm873, %v731
  %882 = vst.msk [vmem:[%s2 + $0x40] sm:$0xff] %vm873, %v734
  %883 = vst.msk [vmem:[%s2 + $0x48] sm:$0xff] %vm873, %v736
  %884 = vst.msk [vmem:[%s2 + $0x50] sm:$0xff] %vm873, %v739
  %885 = vst.msk [vmem:[%s2 + $0x58] sm:$0xff] %vm873, %v741
  %886 = vst.msk [vmem:[%s2 + $0x60] sm:$0xff] %vm873, %v744
  %887 = vst.msk [vmem:[%s2 + $0x68] sm:$0xff] %vm873, %v746
  %888 = vst.msk [vmem:[%s2 + $0x70] sm:$0xff] %vm873, %v749
  %889 = vst.msk [vmem:[%s2 + $0x78] sm:$0xff] %vm873, %v751
  %890 = vst.msk [vmem:[%s2 + $0x80] sm:$0xff] %vm873, %v754
  %891 = vst.msk [vmem:[%s2 + $0x88] sm:$0xff] %vm873, %v756
  %892 = vst.msk [vmem:[%s2 + $0x90] sm:$0xff] %vm873, %v759
  %893 = vst.msk [vmem:[%s2 + $0x98] sm:$0xff] %vm873, %v761
  %894 = vst.msk [vmem:[%s2 + $0xa0] sm:$0xff] %vm873, %v764
  %895 = vst.msk [vmem:[%s2 + $0xa8] sm:$0xff] %vm873, %v766
  %896 = vst.msk [vmem:[%s2 + $0xb0] sm:$0xff] %vm873, %v769
  %897 = vst.msk [vmem:[%s2 + $0xb8] sm:$0xff] %vm873, %v771
  %898 = vst.msk [vmem:[%s2 + $0xc0] sm:$0xff] %vm873, %v774
  %899 = vst.msk [vmem:[%s2 + $0xc8] sm:$0xff] %vm873, %v776
  %900 = vst.msk [vmem:[%s2 + $0xd0] sm:$0xff] %vm873, %v779
  %901 = vst.msk [vmem:[%s2 + $0xd8] sm:$0xff] %vm873, %v781
  %902 = vst.msk [vmem:[%s2 + $0xe0] sm:$0xff] %vm873, %v784
  %903 = vst.msk [vmem:[%s2 + $0xe8] sm:$0xff] %vm873, %v786
  %904 = vst.msk [vmem:[%s2 + $0xf0] sm:$0xff] %vm873, %v789
  %905 = vst.msk [vmem:[%s2 + $0xf8] sm:$0xff] %vm873, %v791
  %906 = vst.msk [vmem:[%s2 + $0x100] sm:$0xff] %vm873, %v794
  %907 = vst.msk [vmem:[%s2 + $0x108] sm:$0xff] %vm873, %v796
  %908 = vst.msk [vmem:[%s2 + $0x110] sm:$0xff] %vm873, %v799
  %909 = vst.msk [vmem:[%s2 + $0x118] sm:$0xff] %vm873, %v801
  %910 = vst.msk [vmem:[%s2 + $0x120] sm:$0xff] %vm873, %v804
  %911 = vst.msk [vmem:[%s2 + $0x128] sm:$0xff] %vm873, %v806
  %912 = vst.msk [vmem:[%s2 + $0x130] sm:$0xff] %vm873, %v809
  %913 = vst.msk [vmem:[%s2 + $0x138] sm:$0xff] %vm873, %v811
  %914 = vst.msk [vmem:[%s2 + $0x140] sm:$0xff] %vm873, %v814
  %915 = vst.msk [vmem:[%s2 + $0x148] sm:$0xff] %vm873, %v816
  %916 = vst.msk [vmem:[%s2 + $0x150] sm:$0xff] %vm873, %v819
  %917 = vst.msk [vmem:[%s2 + $0x158] sm:$0xff] %vm873, %v821
  %918 = vst.msk [vmem:[%s2 + $0x160] sm:$0xff] %vm873, %v824
  %919 = vst.msk [vmem:[%s2 + $0x168] sm:$0xff] %vm873, %v826
  %920 = vst.msk [vmem:[%s2 + $0x170] sm:$0xff] %vm873, %v829
  %921 = vst.msk [vmem:[%s2 + $0x178] sm:$0xff] %vm873, %v831
  %922 = vst.msk [vmem:[%s2 + $0x180] sm:$0xff] %vm873, %v834
  %923 = vst.msk [vmem:[%s2 + $0x188] sm:$0xff] %vm873, %v836
  %924 = vst.msk [vmem:[%s2 + $0x190] sm:$0xff] %vm873, %v839
  %925 = vst.msk [vmem:[%s2 + $0x198] sm:$0xff] %vm873, %v841
  %926 = vst.msk [vmem:[%s2 + $0x1a0] sm:$0xff] %vm873, %v844
  %927 = vst.msk [vmem:[%s2 + $0x1a8] sm:$0xff] %vm873, %v846
  %928 = vst.msk [vmem:[%s2 + $0x1b0] sm:$0xff] %vm873, %v849
  %929 = vst.msk [vmem:[%s2 + $0x1b8] sm:$0xff] %vm873, %v851
  %930 = vst.msk [vmem:[%s2 + $0x1c0] sm:$0xff] %vm873, %v854
  %931 = vst.msk [vmem:[%s2 + $0x1c8] sm:$0xff] %vm873, %v856
  %932 = vst.msk [vmem:[%s2 + $0x1d0] sm:$0xff] %vm873, %v859
  %933 = vst.msk [vmem:[%s2 + $0x1d8] sm:$0xff] %vm873, %v861
  %934 = vst.msk [vmem:[%s2 + $0x1e0] sm:$0xff] %vm873, %v864
  %935 = vst.msk [vmem:[%s2 + $0x1e8] sm:$0xff] %vm873, %v866
  %936 = vst.msk [vmem:[%s2 + $0x1f0] sm:$0xff] %vm873, %v869
  %937 = vst.msk [vmem:[%s2 + $0x1f8] sm:$0xff] %vm873, %v871
  %v938 = vsel %vm873, %v714, 0.0
  %v939 = vsel %vm873, %v716, 0.0
  %v940 = vadd.f32 %v938, %v939
  %v941 = vsel %vm873, %v719, 0.0
  %v942 = vadd.f32 %v940, %v941
  %v943 = vsel %vm873, %v721, 0.0
  %v944 = vadd.f32 %v942, %v943
  %v945 = vsel %vm873, %v724, 0.0
  %v946 = vadd.f32 %v944, %v945
  %v947 = vsel %vm873, %v726, 0.0
  %v948 = vadd.f32 %v946, %v947
  %v949 = vsel %vm873, %v729, 0.0
  %v950 = vadd.f32 %v948, %v949
  %v951 = vsel %vm873, %v731, 0.0
  %v952 = vadd.f32 %v950, %v951
  %v953 = vsel %vm873, %v734, 0.0
  %v954 = vadd.f32 %v952, %v953
  %v955 = vsel %vm873, %v736, 0.0
  %v956 = vadd.f32 %v954, %v955
  %v957 = vsel %vm873, %v739, 0.0
  %v958 = vadd.f32 %v956, %v957
  %v959 = vsel %vm873, %v741, 0.0
  %v960 = vadd.f32 %v958, %v959
  %v961 = vsel %vm873, %v744, 0.0
  %v962 = vadd.f32 %v960, %v961
  %v963 = vsel %vm873, %v746, 0.0
  %v964 = vadd.f32 %v962, %v963
  %v965 = vsel %vm873, %v749, 0.0
  %v966 = vadd.f32 %v964, %v965
  %v967 = vsel %vm873, %v751, 0.0
  %v968 = vadd.f32 %v966, %v967
  %v969 = vsel %vm873, %v754, 0.0
  %v970 = vadd.f32 %v968, %v969
  %v971 = vsel %vm873, %v756, 0.0
  %v972 = vadd.f32 %v970, %v971
  %v973 = vsel %vm873, %v759, 0.0
  %v974 = vadd.f32 %v972, %v973
  %v975 = vsel %vm873, %v761, 0.0
  %v976 = vadd.f32 %v974, %v975
  %v977 = vsel %vm873, %v764, 0.0
  %v978 = vadd.f32 %v976, %v977
  %v979 = vsel %vm873, %v766, 0.0
  %v980 = vadd.f32 %v978, %v979
  %v981 = vsel %vm873, %v769, 0.0
  %v982 = vadd.f32 %v980, %v981
  %v983 = vsel %vm873, %v771, 0.0
  %v984 = vadd.f32 %v982, %v983
  %v985 = vsel %vm873, %v774, 0.0
  %v986 = vadd.f32 %v984, %v985
  %v987 = vsel %vm873, %v776, 0.0
  %v988 = vadd.f32 %v986, %v987
  %v989 = vsel %vm873, %v779, 0.0
  %v990 = vadd.f32 %v988, %v989
  %v991 = vsel %vm873, %v781, 0.0
  %v992 = vadd.f32 %v990, %v991
  %v993 = vsel %vm873, %v784, 0.0
  %v994 = vadd.f32 %v992, %v993
  %v995 = vsel %vm873, %v786, 0.0
  %v996 = vadd.f32 %v994, %v995
  %v997 = vsel %vm873, %v789, 0.0
  %v998 = vadd.f32 %v996, %v997
  %v999 = vsel %vm873, %v791, 0.0
  %v1000 = vadd.f32 %v998, %v999
  %v1001 = vsel %vm873, %v794, 0.0
  %v1002 = vadd.f32 %v1000, %v1001
  %v1003 = vsel %vm873, %v796, 0.0
  %v1004 = vadd.f32 %v1002, %v1003
  %v1005 = vsel %vm873, %v799, 0.0
  %v1006 = vadd.f32 %v1004, %v1005
  %v1007 = vsel %vm873, %v801, 0.0
  %v1008 = vadd.f32 %v1006, %v1007
  %v1009 = vsel %vm873, %v804, 0.0
  %v1010 = vadd.f32 %v1008, %v1009
  %v1011 = vsel %vm873, %v806, 0.0
  %v1012 = vadd.f32 %v1010, %v1011
  %v1013 = vsel %vm873, %v809, 0.0
  %v1014 = vadd.f32 %v1012, %v1013
  %v1015 = vsel %vm873, %v811, 0.0
  %v1016 = vadd.f32 %v1014, %v1015
  %v1017 = vsel %vm873, %v814, 0.0
  %v1018 = vadd.f32 %v1016, %v1017
  %v1019 = vsel %vm873, %v816, 0.0
  %v1020 = vadd.f32 %v1018, %v1019
  %v1021 = vsel %vm873, %v819, 0.0
  %v1022 = vadd.f32 %v1020, %v1021
  %v1023 = vsel %vm873, %v821, 0.0
  %v1024 = vadd.f32 %v1022, %v1023
  %v1025 = vsel %vm873, %v824, 0.0
  %v1026 = vadd.f32 %v1024, %v1025
  %v1027 = vsel %vm873, %v826, 0.0
  %v1028 = vadd.f32 %v1026, %v1027
  %v1029 = vsel %vm873, %v829, 0.0
  %v1030 = vadd.f32 %v1028, %v1029
  %v1031 = vsel %vm873, %v831, 0.0
  %v1032 = vadd.f32 %v1030, %v1031
  %v1033 = vsel %vm873, %v834, 0.0
  %v1034 = vadd.f32 %v1032, %v1033
  %v1035 = vsel %vm873, %v836, 0.0
  %v1036 = vadd.f32 %v1034, %v1035
  %v1037 = vsel %vm873, %v839, 0.0
  %v1038 = vadd.f32 %v1036, %v1037
  %v1039 = vsel %vm873, %v841, 0.0
  %v1040 = vadd.f32 %v1038, %v1039
  %v1041 = vsel %vm873, %v844, 0.0
  %v1042 = vadd.f32 %v1040, %v1041
  %v1043 = vsel %vm873, %v846, 0.0
  %v1044 = vadd.f32 %v1042, %v1043
  %v1045 = vsel %vm873, %v849, 0.0
  %v1046 = vadd.f32 %v1044, %v1045
  %v1047 = vsel %vm873, %v851, 0.0
  %v1048 = vadd.f32 %v1046, %v1047
  %v1049 = vsel %vm873, %v854, 0.0
  %v1050 = vadd.f32 %v1048, %v1049
  %v1051 = vsel %vm873, %v856, 0.0
  %v1052 = vadd.f32 %v1050, %v1051
  %v1053 = vsel %vm873, %v859, 0.0
  %v1054 = vadd.f32 %v1052, %v1053
  %v1055 = vsel %vm873, %v861, 0.0
  %v1056 = vadd.f32 %v1054, %v1055
  %v1057 = vsel %vm873, %v864, 0.0
  %v1058 = vadd.f32 %v1056, %v1057
  %v1059 = vsel %vm873, %v866, 0.0
  %v1060 = vadd.f32 %v1058, %v1059
  %v1061 = vsel %vm873, %v869, 0.0
  %v1062 = vadd.f32 %v1060, %v1061
  %v1063 = vsel %vm873, %v871, 0.0
  %v1064 = vadd.f32 %v1062, %v1063
  %v1065 = vrot.slane %v1064, 4
  %v1066 = vadd.f32 %v1064, %v1065
  %v1067 = vrot.slane %v1066, 2
  %v1068 = vadd.f32 %v1066, %v1067
  %v1069 = vrot.slane %v1068, 1
  %v1070 = vadd.f32 %v1068, %v1069
  %v1071 = vmul.f32 %v714, %v714
  %v1072 = vmul.f32 %v716, %v716
  %v1073 = vmul.f32 %v719, %v719
  %v1074 = vmul.f32 %v721, %v721
  %v1075 = vmul.f32 %v724, %v724
  %v1076 = vmul.f32 %v726, %v726
  %v1077 = vmul.f32 %v729, %v729
  %v1078 = vmul.f32 %v731, %v731
  %v1079 = vmul.f32 %v734, %v734
  %v1080 = vmul.f32 %v736, %v736
  %v1081 = vmul.f32 %v739, %v739
  %v1082 = vmul.f32 %v741, %v741
  %v1083 = vmul.f32 %v744, %v744
  %v1084 = vmul.f32 %v746, %v746
  %v1085 = vmul.f32 %v749, %v749
  %v1086 = vmul.f32 %v751, %v751
  %v1087 = vmul.f32 %v754, %v754
  %v1088 = vmul.f32 %v756, %v756
  %v1089 = vmul.f32 %v759, %v759
  %v1090 = vmul.f32 %v761, %v761
  %v1091 = vmul.f32 %v764, %v764
  %v1092 = vmul.f32 %v766, %v766
  %v1093 = vmul.f32 %v769, %v769
  %v1094 = vmul.f32 %v771, %v771
  %v1095 = vmul.f32 %v774, %v774
  %v1096 = vmul.f32 %v776, %v776
  %v1097 = vmul.f32 %v779, %v779
  %v1098 = vmul.f32 %v781, %v781
  %v1099 = vmul.f32 %v784, %v784
  %v1100 = vmul.f32 %v786, %v786
  %v1101 = vmul.f32 %v789, %v789
  %v1102 = vmul.f32 %v791, %v791
  %v1103 = vmul.f32 %v794, %v794
  %v1104 = vmul.f32 %v796, %v796
  %v1105 = vmul.f32 %v799, %v799
  %v1106 = vmul.f32 %v801, %v801
  %v1107 = vmul.f32 %v804, %v804
  %v1108 = vmul.f32 %v806, %v806
  %v1109 = vmul.f32 %v809, %v809
  %v1110 = vmul.f32 %v811, %v811
  %v1111 = vmul.f32 %v814, %v814
  %v1112 = vmul.f32 %v816, %v816
  %v1113 = vmul.f32 %v819, %v819
  %v1114 = vmul.f32 %v821, %v821
  %v1115 = vmul.f32 %v824, %v824
  %v1116 = vmul.f32 %v826, %v826
  %v1117 = vmul.f32 %v829, %v829
  %v1118 = vmul.f32 %v831, %v831
  %v1119 = vmul.f32 %v834, %v834
  %v1120 = vmul.f32 %v836, %v836
  %v1121 = vmul.f32 %v839, %v839
  %v1122 = vmul.f32 %v841, %v841
  %v1123 = vmul.f32 %v844, %v844
  %v1124 = vmul.f32 %v846, %v846
  %v1125 = vmul.f32 %v849, %v849
  %v1126 = vmul.f32 %v851, %v851
  %v1127 = vmul.f32 %v854, %v854
  %v1128 = vmul.f32 %v856, %v856
  %v1129 = vmul.f32 %v859, %v859
  %v1130 = vmul.f32 %v861, %v861
  %v1131 = vmul.f32 %v864, %v864
  %v1132 = vmul.f32 %v866, %v866
  %v1133 = vmul.f32 %v869, %v869
  %v1134 = vmul.f32 %v871, %v871
  %v1135 = vsel %vm873, %v1071, 0.0
  %v1136 = vsel %vm873, %v1072, 0.0
  %v1137 = vadd.f32 %v1135, %v1136
  %v1138 = vsel %vm873, %v1073, 0.0
  %v1139 = vadd.f32 %v1137, %v1138
  %v1140 = vsel %vm873, %v1074, 0.0
  %v1141 = vadd.f32 %v1139, %v1140
  %v1142 = vsel %vm873, %v1075, 0.0
  %v1143 = vadd.f32 %v1141, %v1142
  %v1144 = vsel %vm873, %v1076, 0.0
  %v1145 = vadd.f32 %v1143, %v1144
  %v1146 = vsel %vm873, %v1077, 0.0
  %v1147 = vadd.f32 %v1145, %v1146
  %v1148 = vsel %vm873, %v1078, 0.0
  %v1149 = vadd.f32 %v1147, %v1148
  %v1150 = vsel %vm873, %v1079, 0.0
  %v1151 = vadd.f32 %v1149, %v1150
  %v1152 = vsel %vm873, %v1080, 0.0
  %v1153 = vadd.f32 %v1151, %v1152
  %v1154 = vsel %vm873, %v1081, 0.0
  %v1155 = vadd.f32 %v1153, %v1154
  %v1156 = vsel %vm873, %v1082, 0.0
  %v1157 = vadd.f32 %v1155, %v1156
  %v1158 = vsel %vm873, %v1083, 0.0
  %v1159 = vadd.f32 %v1157, %v1158
  %v1160 = vsel %vm873, %v1084, 0.0
  %v1161 = vadd.f32 %v1159, %v1160
  %v1162 = vsel %vm873, %v1085, 0.0
  %v1163 = vadd.f32 %v1161, %v1162
  %v1164 = vsel %vm873, %v1086, 0.0
  %v1165 = vadd.f32 %v1163, %v1164
  %v1166 = vsel %vm873, %v1087, 0.0
  %v1167 = vadd.f32 %v1165, %v1166
  %v1168 = vsel %vm873, %v1088, 0.0
  %v1169 = vadd.f32 %v1167, %v1168
  %v1170 = vsel %vm873, %v1089, 0.0
  %v1171 = vadd.f32 %v1169, %v1170
  %v1172 = vsel %vm873, %v1090, 0.0
  %v1173 = vadd.f32 %v1171, %v1172
  %v1174 = vsel %vm873, %v1091, 0.0
  %v1175 = vadd.f32 %v1173, %v1174
  %v1176 = vsel %vm873, %v1092, 0.0
  %v1177 = vadd.f32 %v1175, %v1176
  %v1178 = vsel %vm873, %v1093, 0.0
  %v1179 = vadd.f32 %v1177, %v1178
  %v1180 = vsel %vm873, %v1094, 0.0
  %v1181 = vadd.f32 %v1179, %v1180
  %v1182 = vsel %vm873, %v1095, 0.0
  %v1183 = vadd.f32 %v1181, %v1182
  %v1184 = vsel %vm873, %v1096, 0.0
  %v1185 = vadd.f32 %v1183, %v1184
  %v1186 = vsel %vm873, %v1097, 0.0
  %v1187 = vadd.f32 %v1185, %v1186
  %v1188 = vsel %vm873, %v1098, 0.0
  %v1189 = vadd.f32 %v1187, %v1188
  %v1190 = vsel %vm873, %v1099, 0.0
  %v1191 = vadd.f32 %v1189, %v1190
  %v1192 = vsel %vm873, %v1100, 0.0
  %v1193 = vadd.f32 %v1191, %v1192
  %v1194 = vsel %vm873, %v1101, 0.0
  %v1195 = vadd.f32 %v1193, %v1194
  %v1196 = vsel %vm873, %v1102, 0.0
  %v1197 = vadd.f32 %v1195, %v1196
  %v1198 = vsel %vm873, %v1103, 0.0
  %v1199 = vadd.f32 %v1197, %v1198
  %v1200 = vsel %vm873, %v1104, 0.0
  %v1201 = vadd.f32 %v1199, %v1200
  %v1202 = vsel %vm873, %v1105, 0.0
  %v1203 = vadd.f32 %v1201, %v1202
  %v1204 = vsel %vm873, %v1106, 0.0
  %v1205 = vadd.f32 %v1203, %v1204
  %v1206 = vsel %vm873, %v1107, 0.0
  %v1207 = vadd.f32 %v1205, %v1206
  %v1208 = vsel %vm873, %v1108, 0.0
  %v1209 = vadd.f32 %v1207, %v1208
  %v1210 = vsel %vm873, %v1109, 0.0
  %v1211 = vadd.f32 %v1209, %v1210
  %v1212 = vsel %vm873, %v1110, 0.0
  %v1213 = vadd.f32 %v1211, %v1212
  %v1214 = vsel %vm873, %v1111, 0.0
  %v1215 = vadd.f32 %v1213, %v1214
  %v1216 = vsel %vm873, %v1112, 0.0
  %v1217 = vadd.f32 %v1215, %v1216
  %v1218 = vsel %vm873, %v1113, 0.0
  %v1219 = vadd.f32 %v1217, %v1218
  %v1220 = vsel %vm873, %v1114, 0.0
  %v1221 = vadd.f32 %v1219, %v1220
  %v1222 = vsel %vm873, %v1115, 0.0
  %v1223 = vadd.f32 %v1221, %v1222
  %v1224 = vsel %vm873, %v1116, 0.0
  %v1225 = vadd.f32 %v1223, %v1224
  %v1226 = vsel %vm873, %v1117, 0.0
  %v1227 = vadd.f32 %v1225, %v1226
  %v1228 = vsel %vm873, %v1118, 0.0
  %v1229 = vadd.f32 %v1227, %v1228
  %v1230 = vsel %vm873, %v1119, 0.0
  %v1231 = vadd.f32 %v1229, %v1230
  %v1232 = vsel %vm873, %v1120, 0.0
  %v1233 = vadd.f32 %v1231, %v1232
  %v1234 = vsel %vm873, %v1121, 0.0
  %v1235 = vadd.f32 %v1233, %v1234
  %v1236 = vsel %vm873, %v1122, 0.0
  %v1237 = vadd.f32 %v1235, %v1236
  %v1238 = vsel %vm873, %v1123, 0.0
  %v1239 = vadd.f32 %v1237, %v1238
  %v1240 = vsel %vm873, %v1124, 0.0
  %v1241 = vadd.f32 %v1239, %v1240
  %v1242 = vsel %vm873, %v1125, 0.0
  %v1243 = vadd.f32 %v1241, %v1242
  %v1244 = vsel %vm873, %v1126, 0.0
  %v1245 = vadd.f32 %v1243, %v1244
  %v1246 = vsel %vm873, %v1127, 0.0
  %v1247 = vadd.f32 %v1245, %v1246
  %v1248 = vsel %vm873, %v1128, 0.0
  %v1249 = vadd.f32 %v1247, %v1248
  %v1250 = vsel %vm873, %v1129, 0.0
  %v1251 = vadd.f32 %v1249, %v1250
  %v1252 = vsel %vm873, %v1130, 0.0
  %v1253 = vadd.f32 %v1251, %v1252
  %v1254 = vsel %vm873, %v1131, 0.0
  %v1255 = vadd.f32 %v1253, %v1254
  %v1256 = vsel %vm873, %v1132, 0.0
  %v1257 = vadd.f32 %v1255, %v1256
  %v1258 = vsel %vm873, %v1133, 0.0
  %v1259 = vadd.f32 %v1257, %v1258
  %v1260 = vsel %vm873, %v1134, 0.0
  %v1261 = vadd.f32 %v1259, %v1260
  %v1262 = vrot.slane %v1261, 4
  %v1263 = vadd.f32 %v1261, %v1262
  %v1264 = vrot.slane %v1263, 2
  %v1265 = vadd.f32 %v1263, %v1264
  %v1266 = vrot.slane %v1265, 1
  %v1267 = vadd.f32 %v1265, %v1266
  %vm1268 = vcmask 1040384
  %v1269 = vsel %vm1268, %v1070, %v1267
  %vm1270 = vcmask 1041408
  %v1271 = vsel %vm1270, %v1269, 0.0
  %1272 = vst.msk [vmem:[%s3] sm:$0xff] %vm873, %v1271
  // Predicated region
  $region10: #{vgg_forward.19} parent=0 // pred_check
    _
  $region11: #{vgg_forward.19} parent=0 // pred_check_branch
    %1274 = sbr.rel (0) target = $region13
  $region12: #{vgg_forward.19} parent=0 // pred_region
    _
  $region13: #{vgg_forward.19} parent=0 // pred_fallthru
    _
  // Predicated region
  $region14: #{vgg_forward.19} parent=0 // pred_check
    _
  $region15: #{vgg_forward.19} parent=0 // pred_check_branch
    %1276 = sbr.rel (0) target = $region17
  $region16: #{vgg_forward.19} parent=0 // pred_region
    _
  $region17: #{vgg_forward.19} parent=0 // pred_fallthru
    _
  // Predicated region
  $region18: #{vgg_forward.19} parent=0 // pred_check
    _
  $region19: #{vgg_forward.19} parent=0 // pred_check_branch
    %1278 = sbr.rel (0) target = $region21
  $region20: #{vgg_forward.19} parent=0 // pred_region
    _
  $region21: #{vgg_forward.19} parent=0 // pred_fallthru
    _
  // Predicated region
  $region22: #{vgg_forward.19} parent=0 // pred_check
    _
  $region23: #{vgg_forward.19} parent=0 // pred_check_branch
    %1280 = sbr.rel (0) target = $region25
  $region24: #{vgg_forward.19} parent=0 // pred_region
    _
  $region25: #{vgg_forward.19} parent=0 // pred_fallthru
    _

// kernel: vgg_forward.20
$region0: #{vgg_forward.20}
  #allocation0 [shape = 'u32[]', space=smem, size = 0x4, offset = 0x4, fixed_abs, tag = 'smem constant byte address 0x4 - core index']
  #allocation1 [shape = 'u32[72,128]{1,0:T(1,128)}', space=vmem, size = 0x9000, scoped, tag = 'internal scratch']
  %s0 = inlined_call_operand.vmem [shape: f32[16,2,8,64], index: 0, kind: input, shape index: {}]
  %s1 = inlined_call_operand.vmem [shape: f32[1,64], index: 1, kind: input, shape index: {}]
  %s2 = inlined_call_operand.vmem [shape: f32[1,64], index: 2, kind: input, shape index: {}]
  %s3 = inlined_call_operand.vmem [shape: bf16[16,8,32], index: 3, kind: output, shape index: {}]
  %s4 = sld [smem:[#allocation0]]
  $region22: #{vgg_forward.20} parent=0
    _
  %s6 = ssub.s32 1, %s4
  %s7 = scalar_select 0, %s6, %s4
  // Predicated region
  $region2: #{vgg_forward.20} parent=0 // pred_check
    _
  $region3: #{vgg_forward.20} parent=0 // pred_check_branch
    %9 = sbr.rel (0) target = $region5
  $region4: #{vgg_forward.20} parent=0 // pred_region
    _
  $region5: #{vgg_forward.20} parent=0 // pred_fallthru
    _
  // Predicated region
  $region6: #{vgg_forward.20} parent=0 // pred_check
    _
  $region7: #{vgg_forward.20} parent=0 // pred_check_branch
    %11 = sbr.rel (0) target = $region9
  $region8: #{vgg_forward.20} parent=0 // pred_region
    _
  $region9: #{vgg_forward.20} parent=0 // pred_fallthru
    _
  // Predicated region
  $region10: #{vgg_forward.20} parent=0 // pred_check
    _
  $region11: #{vgg_forward.20} parent=0 // pred_check_branch
    %13 = sbr.rel (0) target = $region13
  $region12: #{vgg_forward.20} parent=0 // pred_region
    _
  $region13: #{vgg_forward.20} parent=0 // pred_fallthru
    _
  %v14 = vld [vmem:[%s0] sm:$0xff]
  %v15 = vld [vmem:[%s0 + $0x8] sm:$0xff]
  %v16 = vld [vmem:[%s0 + $0x10] sm:$0xff]
  %v17 = vld [vmem:[%s0 + $0x18] sm:$0xff]
  %v18 = vld [vmem:[%s0 + $0x20] sm:$0xff]
  %v19 = vld [vmem:[%s0 + $0x28] sm:$0xff]
  %v20 = vld [vmem:[%s0 + $0x30] sm:$0xff]
  %v21 = vld [vmem:[%s0 + $0x38] sm:$0xff]
  %v22 = vld [vmem:[%s0 + $0x40] sm:$0xff]
  %v23 = vld [vmem:[%s0 + $0x48] sm:$0xff]
  %v24 = vld [vmem:[%s0 + $0x50] sm:$0xff]
  %v25 = vld [vmem:[%s0 + $0x58] sm:$0xff]
  %v26 = vld [vmem:[%s0 + $0x60] sm:$0xff]
  %v27 = vld [vmem:[%s0 + $0x68] sm:$0xff]
  %v28 = vld [vmem:[%s0 + $0x70] sm:$0xff]
  %v29 = vld [vmem:[%s0 + $0x78] sm:$0xff]
  %v30 = vld [vmem:[%s0 + $0x80] sm:$0xff]
  %v31 = vld [vmem:[%s0 + $0x88] sm:$0xff]
  %v32 = vld [vmem:[%s0 + $0x90] sm:$0xff]
  %v33 = vld [vmem:[%s0 + $0x98] sm:$0xff]
  %v34 = vld [vmem:[%s0 + $0xa0] sm:$0xff]
  %v35 = vld [vmem:[%s0 + $0xa8] sm:$0xff]
  %v36 = vld [vmem:[%s0 + $0xb0] sm:$0xff]
  %v37 = vld [vmem:[%s0 + $0xb8] sm:$0xff]
  %v38 = vld [vmem:[%s0 + $0xc0] sm:$0xff]
  %v39 = vld [vmem:[%s0 + $0xc8] sm:$0xff]
  %v40 = vld [vmem:[%s0 + $0xd0] sm:$0xff]
  %v41 = vld [vmem:[%s0 + $0xd8] sm:$0xff]
  %v42 = vld [vmem:[%s0 + $0xe0] sm:$0xff]
  %v43 = vld [vmem:[%s0 + $0xe8] sm:$0xff]
  %v44 = vld [vmem:[%s0 + $0xf0] sm:$0xff]
  %v45 = vld [vmem:[%s0 + $0xf8] sm:$0xff]
  %v46 = vld [vmem:[%s1] sm:$0x1]
  %v48 = vperm.slane %v46, 0
  %v50 = vmul.f32 %v14, %v48
  %v51 = vmul.f32 %v15, %v48
  %v52 = vmul.f32 %v16, %v48
  %v53 = vmul.f32 %v17, %v48
  %v54 = vmul.f32 %v18, %v48
  %v55 = vmul.f32 %v19, %v48
  %v56 = vmul.f32 %v20, %v48
  %v57 = vmul.f32 %v21, %v48
  %v58 = vmul.f32 %v22, %v48
  %v59 = vmul.f32 %v23, %v48
  %v60 = vmul.f32 %v24, %v48
  %v61 = vmul.f32 %v25, %v48
  %v62 = vmul.f32 %v26, %v48
  %v63 = vmul.f32 %v27, %v48
  %v64 = vmul.f32 %v28, %v48
  %v65 = vmul.f32 %v29, %v48
  %v66 = vmul.f32 %v30, %v48
  %v67 = vmul.f32 %v31, %v48
  %v68 = vmul.f32 %v32, %v48
  %v69 = vmul.f32 %v33, %v48
  %v70 = vmul.f32 %v34, %v48
  %v71 = vmul.f32 %v35, %v48
  %v72 = vmul.f32 %v36, %v48
  %v73 = vmul.f32 %v37, %v48
  %v74 = vmul.f32 %v38, %v48
  %v75 = vmul.f32 %v39, %v48
  %v76 = vmul.f32 %v40, %v48
  %v77 = vmul.f32 %v41, %v48
  %v78 = vmul.f32 %v42, %v48
  %v79 = vmul.f32 %v43, %v48
  %v80 = vmul.f32 %v44, %v48
  %v81 = vmul.f32 %v45, %v48
  %v82 = vld [vmem:[%s2] sm:$0x1]
  %v84 = vperm.slane %v82, 0
  %v86 = vadd.f32 %v50, %v84
  %v87 = vadd.f32 %v51, %v84
  %v88 = vadd.f32 %v52, %v84
  %v89 = vadd.f32 %v53, %v84
  %v90 = vadd.f32 %v54, %v84
  %v91 = vadd.f32 %v55, %v84
  %v92 = vadd.f32 %v56, %v84
  %v93 = vadd.f32 %v57, %v84
  %v94 = vadd.f32 %v58, %v84
  %v95 = vadd.f32 %v59, %v84
  %v96 = vadd.f32 %v60, %v84
  %v97 = vadd.f32 %v61, %v84
  %v98 = vadd.f32 %v62, %v84
  %v99 = vadd.f32 %v63, %v84
  %v100 = vadd.f32 %v64, %v84
  %v101 = vadd.f32 %v65, %v84
  %v102 = vadd.f32 %v66, %v84
  %v103 = vadd.f32 %v67, %v84
  %v104 = vadd.f32 %v68, %v84
  %v105 = vadd.f32 %v69, %v84
  %v106 = vadd.f32 %v70, %v84
  %v107 = vadd.f32 %v71, %v84
  %v108 = vadd.f32 %v72, %v84
  %v109 = vadd.f32 %v73, %v84
  %v110 = vadd.f32 %v74, %v84
  %v111 = vadd.f32 %v75, %v84
  %v112 = vadd.f32 %v76, %v84
  %v113 = vadd.f32 %v77, %v84
  %v114 = vadd.f32 %v78, %v84
  %v115 = vadd.f32 %v79, %v84
  %v116 = vadd.f32 %v80, %v84
  %v117 = vadd.f32 %v81, %v84
  %v118 = vmax.f32 %v86, 0.0
  %v119 = vmax.f32 %v87, 0.0
  %v120 = vmax.f32 %v88, 0.0
  %v121 = vmax.f32 %v89, 0.0
  %v122 = vmax.f32 %v90, 0.0
  %v123 = vmax.f32 %v91, 0.0
  %v124 = vmax.f32 %v92, 0.0
  %v125 = vmax.f32 %v93, 0.0
  %v126 = vmax.f32 %v94, 0.0
  %v127 = vmax.f32 %v95, 0.0
  %v128 = vmax.f32 %v96, 0.0
  %v129 = vmax.f32 %v97, 0.0
  %v130 = vmax.f32 %v98, 0.0
  %v131 = vmax.f32 %v99, 0.0
  %v132 = vmax.f32 %v100, 0.0
  %v133 = vmax.f32 %v101, 0.0
  %v134 = vmax.f32 %v102, 0.0
  %v135 = vmax.f32 %v103, 0.0
  %v136 = vmax.f32 %v104, 0.0
  %v137 = vmax.f32 %v105, 0.0
  %v138 = vmax.f32 %v106, 0.0
  %v139 = vmax.f32 %v107, 0.0
  %v140 = vmax.f32 %v108, 0.0
  %v141 = vmax.f32 %v109, 0.0
  %v142 = vmax.f32 %v110, 0.0
  %v143 = vmax.f32 %v111, 0.0
  %v144 = vmax.f32 %v112, 0.0
  %v145 = vmax.f32 %v113, 0.0
  %v146 = vmax.f32 %v114, 0.0
  %v147 = vmax.f32 %v115, 0.0
  %v148 = vmax.f32 %v116, 0.0
  %v149 = vmax.f32 %v117, 0.0
  %v150 = vmax.f32 %v118, %v119
  %v151 = vmax.f32 %v120, %v121
  %v152 = vmax.f32 %v122, %v123
  %v153 = vmax.f32 %v124, %v125
  %v154 = vmax.f32 %v126, %v127
  %v155 = vmax.f32 %v128, %v129
  %v156 = vmax.f32 %v130, %v131
  %v157 = vmax.f32 %v132, %v133
  %v158 = vmax.f32 %v134, %v135
  %v159 = vmax.f32 %v136, %v137
  %v160 = vmax.f32 %v138, %v139
  %v161 = vmax.f32 %v140, %v141
  %v162 = vmax.f32 %v142, %v143
  %v163 = vmax.f32 %v144, %v145
  %v164 = vmax.f32 %v146, %v147
  %v165 = vmax.f32 %v148, %v149
  %182 = vrot.lane.b32.xlu0 %v150, 96
  %v183 = vpop.permute.xlu0 %182
  %184 = vrot.lane.b32.xlu0 %v151, 96
  %v185 = vpop.permute.xlu0 %184
  %186 = vrot.lane.b32.xlu0 %v152, 96
  %v187 = vpop.permute.xlu0 %186
  %188 = vrot.lane.b32.xlu0 %v153, 96
  %v189 = vpop.permute.xlu0 %188
  %190 = vrot.lane.b32.xlu0 %v154, 96
  %v191 = vpop.permute.xlu0 %190
  %192 = vrot.lane.b32.xlu0 %v155, 96
  %v193 = vpop.permute.xlu0 %192
  %194 = vrot.lane.b32.xlu0 %v156, 96
  %v195 = vpop.permute.xlu0 %194
  %196 = vrot.lane.b32.xlu0 %v157, 96
  %v197 = vpop.permute.xlu0 %196
  %198 = vrot.lane.b32.xlu0 %v158, 96
  %v199 = vpop.permute.xlu0 %198
  %200 = vrot.lane.b32.xlu0 %v159, 96
  %v201 = vpop.permute.xlu0 %200
  %202 = vrot.lane.b32.xlu0 %v160, 96
  %v203 = vpop.permute.xlu0 %202
  %204 = vrot.lane.b32.xlu0 %v161, 96
  %v205 = vpop.permute.xlu0 %204
  %206 = vrot.lane.b32.xlu0 %v162, 96
  %v207 = vpop.permute.xlu0 %206
  %208 = vrot.lane.b32.xlu0 %v163, 96
  %v209 = vpop.permute.xlu0 %208
  %210 = vrot.lane.b32.xlu0 %v164, 96
  %v211 = vpop.permute.xlu0 %210
  %212 = vrot.lane.b32.xlu0 %v165, 96
  %v213 = vpop.permute.xlu0 %212
  %v230 = vmax.f32 %v150, %v183
  %v231 = vmax.f32 %v151, %v185
  %v232 = vmax.f32 %v152, %v187
  %v233 = vmax.f32 %v153, %v189
  %v234 = vmax.f32 %v154, %v191
  %v235 = vmax.f32 %v155, %v193
  %v236 = vmax.f32 %v156, %v195
  %v237 = vmax.f32 %v157, %v197
  %v238 = vmax.f32 %v158, %v199
  %v239 = vmax.f32 %v159, %v201
  %v240 = vmax.f32 %v160, %v203
  %v241 = vmax.f32 %v161, %v205
  %v242 = vmax.f32 %v162, %v207
  %v243 = vmax.f32 %v163, %v209
  %v244 = vmax.f32 %v164, %v211
  %v245 = vmax.f32 %v165, %v213
  %v246 = vpack.c.bf16 %v230, %v230
  %v247 = vpack.c.bf16 %v231, %v231
  %v248 = vpack.c.bf16 %v232, %v232
  %v249 = vpack.c.bf16 %v233, %v233
  %v250 = vpack.c.bf16 %v234, %v234
  %v251 = vpack.c.bf16 %v235, %v235
  %v252 = vpack.c.bf16 %v236, %v236
  %v253 = vpack.c.bf16 %v237, %v237
  %v254 = vpack.c.bf16 %v238, %v238
  %v255 = vpack.c.bf16 %v239, %v239
  %v256 = vpack.c.bf16 %v240, %v240
  %v257 = vpack.c.bf16 %v241, %v241
  %v258 = vpack.c.bf16 %v242, %v242
  %v259 = vpack.c.bf16 %v243, %v243
  %v260 = vpack.c.bf16 %v244, %v244
  %v261 = vpack.c.bf16 %v245, %v245
  %vm262 = vcmask 257024
  %263 = vst.msk [vmem:[%s3] sm:$0xf] %vm262, %v246
  %264 = vst.msk [vmem:[%s3 + $0x4] sm:$0xf] %vm262, %v247
  %265 = vst.msk [vmem:[%s3 + $0x8] sm:$0xf] %vm262, %v248
  %266 = vst.msk [vmem:[%s3 + $0xc] sm:$0xf] %vm262, %v249
  %267 = vst.msk [vmem:[%s3 + $0x10] sm:$0xf] %vm262, %v250
  %268 = vst.msk [vmem:[%s3 + $0x14] sm:$0xf] %vm262, %v251
  %269 = vst.msk [vmem:[%s3 + $0x18] sm:$0xf] %vm262, %v252
  %270 = vst.msk [vmem:[%s3 + $0x1c] sm:$0xf] %vm262, %v253
  %271 = vst.msk [vmem:[%s3 + $0x20] sm:$0xf] %vm262, %v254
  %272 = vst.msk [vmem:[%s3 + $0x24] sm:$0xf] %vm262, %v255
  %273 = vst.msk [vmem:[%s3 + $0x28] sm:$0xf] %vm262, %v256
  %274 = vst.msk [vmem:[%s3 + $0x2c] sm:$0xf] %vm262, %v257
  %275 = vst.msk [vmem:[%s3 + $0x30] sm:$0xf] %vm262, %v258
  %276 = vst.msk [vmem:[%s3 + $0x34] sm:$0xf] %vm262, %v259
  %277 = vst.msk [vmem:[%s3 + $0x38] sm:$0xf] %vm262, %v260
  %278 = vst.msk [vmem:[%s3 + $0x3c] sm:$0xf] %vm262, %v261
  // Predicated region
  $region14: #{vgg_forward.20} parent=0 // pred_check
    _
  $region15: #{vgg_forward.20} parent=0 // pred_check_branch
    %280 = sbr.rel (0) target = $region17
  $region16: #{vgg_forward.20} parent=0 // pred_region
    _
  $region17: #{vgg_forward.20} parent=0 // pred_fallthru
    _
  // Predicated region
  $region18: #{vgg_forward.20} parent=0 // pred_check
    _
  $region19: #{vgg_forward.20} parent=0 // pred_check_branch
    %282 = sbr.rel (0) target = $region21
  $region20: #{vgg_forward.20} parent=0 // pred_region
    _
  $region21: #{vgg_forward.20} parent=0 // pred_fallthru
    _

// kernel: vgg_forward.22
$region0: #{vgg_forward.22}
  #allocation0 [shape = 'u32[]', space=smem, size = 0x4, offset = 0x4, fixed_abs, tag = 'smem constant byte address 0x4 - core index']
  #allocation1 [shape = 'u32[72,128]{1,0:T(1,128)}', space=vmem, size = 0x9000, scoped, tag = 'internal scratch']
  %s0 = inlined_call_operand.vmem [shape: f32[128,64], index: 0, kind: input, shape index: {}]
  %s1 = inlined_call_operand.vmem [shape: f32[1,64], index: 1, kind: input, shape index: {}]
  %s2 = inlined_call_operand.vmem [shape: f32[1,64], index: 2, kind: input, shape index: {}]
  %s3 = inlined_call_operand.vmem [shape: bf16[128,64], index: 3, kind: output, shape index: {}]
  %s4 = sld [smem:[#allocation0]]
  $region22: #{vgg_forward.22} parent=0
    _
  %s6 = ssub.s32 1, %s4
  %s7 = scalar_select 0, %s6, %s4
  // Predicated region
  $region2: #{vgg_forward.22} parent=0 // pred_check
    _
  $region3: #{vgg_forward.22} parent=0 // pred_check_branch
    %9 = sbr.rel (0) target = $region5
  $region4: #{vgg_forward.22} parent=0 // pred_region
    _
  $region5: #{vgg_forward.22} parent=0 // pred_fallthru
    _
  // Predicated region
  $region6: #{vgg_forward.22} parent=0 // pred_check
    _
  $region7: #{vgg_forward.22} parent=0 // pred_check_branch
    %11 = sbr.rel (0) target = $region9
  $region8: #{vgg_forward.22} parent=0 // pred_region
    _
  $region9: #{vgg_forward.22} parent=0 // pred_fallthru
    _
  // Predicated region
  $region10: #{vgg_forward.22} parent=0 // pred_check
    _
  $region11: #{vgg_forward.22} parent=0 // pred_check_branch
    %13 = sbr.rel (0) target = $region13
  $region12: #{vgg_forward.22} parent=0 // pred_region
    _
  $region13: #{vgg_forward.22} parent=0 // pred_fallthru
    _
  %v14 = vld [vmem:[%s0] sm:$0xff]
  %v15 = vld [vmem:[%s0 + $0x8] sm:$0xff]
  %v16 = vld [vmem:[%s0 + $0x10] sm:$0xff]
  %v17 = vld [vmem:[%s0 + $0x18] sm:$0xff]
  %v18 = vld [vmem:[%s0 + $0x20] sm:$0xff]
  %v19 = vld [vmem:[%s0 + $0x28] sm:$0xff]
  %v20 = vld [vmem:[%s0 + $0x30] sm:$0xff]
  %v21 = vld [vmem:[%s0 + $0x38] sm:$0xff]
  %v22 = vld [vmem:[%s0 + $0x40] sm:$0xff]
  %v23 = vld [vmem:[%s0 + $0x48] sm:$0xff]
  %v24 = vld [vmem:[%s0 + $0x50] sm:$0xff]
  %v25 = vld [vmem:[%s0 + $0x58] sm:$0xff]
  %v26 = vld [vmem:[%s0 + $0x60] sm:$0xff]
  %v27 = vld [vmem:[%s0 + $0x68] sm:$0xff]
  %v28 = vld [vmem:[%s0 + $0x70] sm:$0xff]
  %v29 = vld [vmem:[%s0 + $0x78] sm:$0xff]
  %v30 = vld [vmem:[%s1] sm:$0x1]
  %v32 = vperm.slane %v30, 0
  %v34 = vmul.f32 %v14, %v32
  %v35 = vmul.f32 %v15, %v32
  %v36 = vmul.f32 %v16, %v32
  %v37 = vmul.f32 %v17, %v32
  %v38 = vmul.f32 %v18, %v32
  %v39 = vmul.f32 %v19, %v32
  %v40 = vmul.f32 %v20, %v32
  %v41 = vmul.f32 %v21, %v32
  %v42 = vmul.f32 %v22, %v32
  %v43 = vmul.f32 %v23, %v32
  %v44 = vmul.f32 %v24, %v32
  %v45 = vmul.f32 %v25, %v32
  %v46 = vmul.f32 %v26, %v32
  %v47 = vmul.f32 %v27, %v32
  %v48 = vmul.f32 %v28, %v32
  %v49 = vmul.f32 %v29, %v32
  %v50 = vld [vmem:[%s2] sm:$0x1]
  %v52 = vperm.slane %v50, 0
  %v54 = vadd.f32 %v34, %v52
  %v55 = vadd.f32 %v35, %v52
  %v56 = vadd.f32 %v36, %v52
  %v57 = vadd.f32 %v37, %v52
  %v58 = vadd.f32 %v38, %v52
  %v59 = vadd.f32 %v39, %v52
  %v60 = vadd.f32 %v40, %v52
  %v61 = vadd.f32 %v41, %v52
  %v62 = vadd.f32 %v42, %v52
  %v63 = vadd.f32 %v43, %v52
  %v64 = vadd.f32 %v44, %v52
  %v65 = vadd.f32 %v45, %v52
  %v66 = vadd.f32 %v46, %v52
  %v67 = vadd.f32 %v47, %v52
  %v68 = vadd.f32 %v48, %v52
  %v69 = vadd.f32 %v49, %v52
  %v70 = vmax.f32 %v54, 0.0
  %v71 = vmax.f32 %v55, 0.0
  %v72 = vmax.f32 %v56, 0.0
  %v73 = vmax.f32 %v57, 0.0
  %v74 = vmax.f32 %v58, 0.0
  %v75 = vmax.f32 %v59, 0.0
  %v76 = vmax.f32 %v60, 0.0
  %v77 = vmax.f32 %v61, 0.0
  %v78 = vmax.f32 %v62, 0.0
  %v79 = vmax.f32 %v63, 0.0
  %v80 = vmax.f32 %v64, 0.0
  %v81 = vmax.f32 %v65, 0.0
  %v82 = vmax.f32 %v66, 0.0
  %v83 = vmax.f32 %v67, 0.0
  %v84 = vmax.f32 %v68, 0.0
  %v85 = vmax.f32 %v69, 0.0
  %v86 = vpack.c.bf16 %v70, %v70
  %v87 = vpack.c.bf16 %v71, %v71
  %v88 = vpack.c.bf16 %v72, %v72
  %v89 = vpack.c.bf16 %v73, %v73
  %v90 = vpack.c.bf16 %v74, %v74
  %v91 = vpack.c.bf16 %v75, %v75
  %v92 = vpack.c.bf16 %v76, %v76
  %v93 = vpack.c.bf16 %v77, %v77
  %v94 = vpack.c.bf16 %v78, %v78
  %v95 = vpack.c.bf16 %v79, %v79
  %v96 = vpack.c.bf16 %v80, %v80
  %v97 = vpack.c.bf16 %v81, %v81
  %v98 = vpack.c.bf16 %v82, %v82
  %v99 = vpack.c.bf16 %v83, %v83
  %v100 = vpack.c.bf16 %v84, %v84
  %v101 = vpack.c.bf16 %v85, %v85
  %vm102 = vcmask 519168
  %103 = vst.msk [vmem:[%s3] sm:$0xf] %vm102, %v86
  %104 = vst.msk [vmem:[%s3 + $0x4] sm:$0xf] %vm102, %v87
  %105 = vst.msk [vmem:[%s3 + $0x8] sm:$0xf] %vm102, %v88
  %106 = vst.msk [vmem:[%s3 + $0xc] sm:$0xf] %vm102, %v89
  %107 = vst.msk [vmem:[%s3 + $0x10] sm:$0xf] %vm102, %v90
  %108 = vst.msk [vmem:[%s3 + $0x14] sm:$0xf] %vm102, %v91
  %109 = vst.msk [vmem:[%s3 + $0x18] sm:$0xf] %vm102, %v92
  %110 = vst.msk [vmem:[%s3 + $0x1c] sm:$0xf] %vm102, %v93
  %111 = vst.msk [vmem:[%s3 + $0x20] sm:$0xf] %vm102, %v94
  %112 = vst.msk [vmem:[%s3 + $0x24] sm:$0xf] %vm102, %v95
  %113 = vst.msk [vmem:[%s3 + $0x28] sm:$0xf] %vm102, %v96
  %114 = vst.msk [vmem:[%s3 + $0x2c] sm:$0xf] %vm102, %v97
  %115 = vst.msk [vmem:[%s3 + $0x30] sm:$0xf] %vm102, %v98
  %116 = vst.msk [vmem:[%s3 + $0x34] sm:$0xf] %vm102, %v99
  %117 = vst.msk [vmem:[%s3 + $0x38] sm:$0xf] %vm102, %v100
  %118 = vst.msk [vmem:[%s3 + $0x3c] sm:$0xf] %vm102, %v101
  // Predicated region
  $region14: #{vgg_forward.22} parent=0 // pred_check
    _
  $region15: #{vgg_forward.22} parent=0 // pred_check_branch
    %120 = sbr.rel (0) target = $region17
  $region16: #{vgg_forward.22} parent=0 // pred_region
    _
  $region17: #{vgg_forward.22} parent=0 // pred_fallthru
    _
  // Predicated region
  $region18: #{vgg_forward.22} parent=0 // pred_check
    _
  $region19: #{vgg_forward.22} parent=0 // pred_check_branch
    %122 = sbr.rel (0) target = $region21
  $region20: #{vgg_forward.22} parent=0 // pred_region
    _
  $region21: #{vgg_forward.22} parent=0 // pred_fallthru
    _

// kernel: vgg_forward.21
$region0: #{vgg_forward.21}
  #allocation0 [shape = 'u32[]', space=smem, size = 0x4, offset = 0x4, fixed_abs, tag = 'smem constant byte address 0x4 - core index']
  #allocation1 [shape = 'u32[72,128]{1,0:T(1,128)}', space=vmem, size = 0x9000, scoped, tag = 'internal scratch']
  %s0 = inlined_call_operand.vmem [shape: bf16[128,288], index: 0, kind: input, shape index: {}]
  %s1 = inlined_call_operand.vmem [shape: bf16[288,64], index: 1, kind: input, shape index: {}]
  %s2 = inlined_call_operand.vmem [shape: f32[128,64], index: 2, kind: output, shape index: {0}]
  %s3 = inlined_call_operand.vmem [shape: f32[8,64], index: 3, kind: output, shape index: {1}]
  %4 = xla_tuple %s2, %s3
  %s5 = sld [smem:[#allocation0]]
  $region26: #{vgg_forward.21} parent=0
    _
  %s7 = ssub.s32 1, %s5
  %s8 = scalar_select 0, %s7, %s5
  // Predicated region
  $region2: #{vgg_forward.21} parent=0 // pred_check
    _
  $region3: #{vgg_forward.21} parent=0 // pred_check_branch
    %10 = sbr.rel (0) target = $region5
  $region4: #{vgg_forward.21} parent=0 // pred_region
    _
  $region5: #{vgg_forward.21} parent=0 // pred_fallthru
    _
  // Predicated region
  $region6: #{vgg_forward.21} parent=0 // pred_check
    _
  $region7: #{vgg_forward.21} parent=0 // pred_check_branch
    %12 = sbr.rel (0) target = $region9
  $region8: #{vgg_forward.21} parent=0 // pred_region
    _
  $region9: #{vgg_forward.21} parent=0 // pred_fallthru
    _
  %v14 = vld [vmem:[%s0] sm:$0xff]
  %v15 = vld [vmem:[%s0 + $0x8] sm:$0xf]
  %v16 = vld [vmem:[%s0 + $0xc] sm:$0xff]
  %v17 = vld [vmem:[%s0 + $0x14] sm:$0xf]
  %v18 = vld [vmem:[%s0 + $0x18] sm:$0xff]
  %v19 = vld [vmem:[%s0 + $0x20] sm:$0xf]
  %v20 = vld [vmem:[%s0 + $0x24] sm:$0xff]
  %v21 = vld [vmem:[%s0 + $0x2c] sm:$0xf]
  %v22 = vld [vmem:[%s0 + $0x30] sm:$0xff]
  %v23 = vld [vmem:[%s0 + $0x38] sm:$0xf]
  %v24 = vld [vmem:[%s0 + $0x3c] sm:$0xff]
  %v25 = vld [vmem:[%s0 + $0x44] sm:$0xf]
  %v26 = vld [vmem:[%s0 + $0x48] sm:$0xff]
  %v27 = vld [vmem:[%s0 + $0x50] sm:$0xf]
  %v28 = vld [vmem:[%s0 + $0x54] sm:$0xff]
  %v29 = vld [vmem:[%s0 + $0x5c] sm:$0xf]
  %v30 = vld [vmem:[%s0 + $0x60] sm:$0xff]
  %v31 = vld [vmem:[%s0 + $0x68] sm:$0xf]
  %v32 = vld [vmem:[%s0 + $0x6c] sm:$0xff]
  %v33 = vld [vmem:[%s0 + $0x74] sm:$0xf]
  %v34 = vld [vmem:[%s0 + $0x78] sm:$0xff]
  %v35 = vld [vmem:[%s0 + $0x80] sm:$0xf]
  %v36 = vld [vmem:[%s0 + $0x84] sm:$0xff]
  %v37 = vld [vmem:[%s0 + $0x8c] sm:$0xf]
  %v38 = vld [vmem:[%s0 + $0x90] sm:$0xff]
  %v39 = vld [vmem:[%s0 + $0x98] sm:$0xf]
  %v40 = vld [vmem:[%s0 + $0x9c] sm:$0xff]
  %v41 = vld [vmem:[%s0 + $0xa4] sm:$0xf]
  %v42 = vld [vmem:[%s0 + $0xa8] sm:$0xff]
  %v43 = vld [vmem:[%s0 + $0xb0] sm:$0xf]
  %v44 = vld [vmem:[%s0 + $0xb4] sm:$0xff]
  %v45 = vld [vmem:[%s0 + $0xbc] sm:$0xf]
  %v46 = vld [vmem:[%s1] sm:$0xf]
  %v47 = vld [vmem:[%s1 + $0x4] sm:$0xf]
  %v48 = vld [vmem:[%s1 + $0x8] sm:$0xf]
  %v49 = vld [vmem:[%s1 + $0xc] sm:$0xf]
  %v50 = vld [vmem:[%s1 + $0x10] sm:$0xf]
  %v51 = vld [vmem:[%s1 + $0x14] sm:$0xf]
  %v52 = vld [vmem:[%s1 + $0x18] sm:$0xf]
  %v53 = vld [vmem:[%s1 + $0x1c] sm:$0xf]
  %v54 = vld [vmem:[%s1 + $0x20] sm:$0xf]
  %v55 = vld [vmem:[%s1 + $0x24] sm:$0xf]
  %v56 = vld [vmem:[%s1 + $0x28] sm:$0xf]
  %v57 = vld [vmem:[%s1 + $0x2c] sm:$0xf]
  %v58 = vld [vmem:[%s1 + $0x30] sm:$0xf]
  %v59 = vld [vmem:[%s1 + $0x34] sm:$0xf]
  %v60 = vld [vmem:[%s1 + $0x38] sm:$0xf]
  %v61 = vld [vmem:[%s1 + $0x3c] sm:$0xf]
  %v62 = vld [vmem:[%s1 + $0x40] sm:$0xf]
  %v63 = vld [vmem:[%s1 + $0x44] sm:$0xf]
  %v64 = vld [vmem:[%s1 + $0x48] sm:$0xf]
  %v65 = vld [vmem:[%s1 + $0x4c] sm:$0xf]
  %v66 = vld [vmem:[%s1 + $0x50] sm:$0xf]
  %v67 = vld [vmem:[%s1 + $0x54] sm:$0xf]
  %v68 = vld [vmem:[%s1 + $0x58] sm:$0xf]
  %v69 = vld [vmem:[%s1 + $0x5c] sm:$0xf]
  %v70 = vld [vmem:[%s1 + $0x60] sm:$0xf]
  %v71 = vld [vmem:[%s1 + $0x64] sm:$0xf]
  %v72 = vld [vmem:[%s1 + $0x68] sm:$0xf]
  %v73 = vld [vmem:[%s1 + $0x6c] sm:$0xf]
  %v74 = vld [vmem:[%s1 + $0x70] sm:$0xf]
  %v75 = vld [vmem:[%s1 + $0x74] sm:$0xf]
  %v76 = vld [vmem:[%s1 + $0x78] sm:$0xf]
  %v77 = vld [vmem:[%s1 + $0x7c] sm:$0xf]
  %v78 = vld [vmem:[%s1 + $0x80] sm:$0xf]
  %v79 = vld [vmem:[%s1 + $0x84] sm:$0xf]
  %v80 = vld [vmem:[%s1 + $0x88] sm:$0xf]
  %v81 = vld [vmem:[%s1 + $0x8c] sm:$0xf]
  %v114 = vunpack.c.l.b16 %v14
  %v115 = vunpack.c.h.b16 %v14
  %v116 = vunpack.c.l.b16 %v15
  %v117 = vunpack.c.l.b16 %v16
  %v118 = vunpack.c.h.b16 %v16
  %v119 = vunpack.c.l.b16 %v17
  %v120 = vunpack.c.l.b16 %v18
  %v121 = vunpack.c.h.b16 %v18
  %v122 = vunpack.c.l.b16 %v19
  %v123 = vunpack.c.l.b16 %v20
  %v124 = vunpack.c.h.b16 %v20
  %v125 = vunpack.c.l.b16 %v21
  %v126 = vunpack.c.l.b16 %v22
  %v127 = vunpack.c.h.b16 %v22
  %v128 = vunpack.c.l.b16 %v23
  %v129 = vunpack.c.l.b16 %v24
  %v130 = vunpack.c.h.b16 %v24
  %v131 = vunpack.c.l.b16 %v25
  %v132 = vunpack.c.l.b16 %v26
  %v133 = vunpack.c.h.b16 %v26
  %v134 = vunpack.c.l.b16 %v27
  %v135 = vunpack.c.l.b16 %v28
  %v136 = vunpack.c.h.b16 %v28
  %v137 = vunpack.c.l.b16 %v29
  %v138 = vunpack.c.l.b16 %v30
  %v139 = vunpack.c.h.b16 %v30
  %v140 = vunpack.c.l.b16 %v31
  %v141 = vunpack.c.l.b16 %v32
  %v142 = vunpack.c.h.b16 %v32
  %v143 = vunpack.c.l.b16 %v33
  %v144 = vunpack.c.l.b16 %v34
  %v145 = vunpack.c.h.b16 %v34
  %v146 = vunpack.c.l.b16 %v35
  %v147 = vunpack.c.l.b16 %v36
  %v148 = vunpack.c.h.b16 %v36
  %v149 = vunpack.c.l.b16 %v37
  %v150 = vunpack.c.l.b16 %v38
  %v151 = vunpack.c.h.b16 %v38
  %v152 = vunpack.c.l.b16 %v39
  %v153 = vunpack.c.l.b16 %v40
  %v154 = vunpack.c.h.b16 %v40
  %v155 = vunpack.c.l.b16 %v41
  %v156 = vunpack.c.l.b16 %v42
  %v157 = vunpack.c.h.b16 %v42
  %v158 = vunpack.c.l.b16 %v43
  %v159 = vunpack.c.l.b16 %v44
  %v160 = vunpack.c.h.b16 %v44
  %v161 = vunpack.c.l.b16 %v45
  %v162 = vpack.c.b16 %v117, %v114
  %v163 = vpack.c.b16 %v118, %v115
  %v164 = vpack.c.b16 %v119, %v116
  %v165 = vpack.c.b16 %v123, %v120
  %v166 = vpack.c.b16 %v124, %v121
  %v167 = vpack.c.b16 %v125, %v122
  %v168 = vpack.c.b16 %v129, %v126
  %v169 = vpack.c.b16 %v130, %v127
  %v170 = vpack.c.b16 %v131, %v128
  %v171 = vpack.c.b16 %v135, %v132
  %v172 = vpack.c.b16 %v136, %v133
  %v173 = vpack.c.b16 %v137, %v134
  %v174 = vpack.c.b16 %v141, %v138
  %v175 = vpack.c.b16 %v142, %v139
  %v176 = vpack.c.b16 %v143, %v140
  %v177 = vpack.c.b16 %v147, %v144
  %v178 = vpack.c.b16 %v148, %v145
  %v179 = vpack.c.b16 %v149, %v146
  %v180 = vpack.c.b16 %v153, %v150
  %v181 = vpack.c.b16 %v154, %v151
  %v182 = vpack.c.b16 %v155, %v152
  %v183 = vpack.c.b16 %v159, %v156
  %v184 = vpack.c.b16 %v160, %v157
  %v185 = vpack.c.b16 %v161, %v158
  %v238 = vunpack.c.l.b16 %v46
  %v239 = vunpack.c.l.b16 %v47
  %v240 = vunpack.c.l.b16 %v48
  %v241 = vunpack.c.l.b16 %v49
  %v242 = vunpack.c.l.b16 %v50
  %v243 = vunpack.c.l.b16 %v51
  %v244 = vunpack.c.l.b16 %v52
  %v245 = vunpack.c.l.b16 %v53
  %v246 = vunpack.c.l.b16 %v54
  %v247 = vunpack.c.l.b16 %v55
  %v248 = vunpack.c.l.b16 %v56
  %v249 = vunpack.c.l.b16 %v57
  %v250 = vunpack.c.l.b16 %v58
  %v251 = vunpack.c.l.b16 %v59
  %v252 = vunpack.c.l.b16 %v60
  %v253 = vunpack.c.l.b16 %v61
  %v254 = vunpack.c.l.b16 %v62
  %v255 = vunpack.c.l.b16 %v63
  %v256 = vunpack.c.l.b16 %v64
  %v257 = vunpack.c.l.b16 %v65
  %v258 = vunpack.c.l.b16 %v66
  %v259 = vunpack.c.l.b16 %v67
  %v260 = vunpack.c.l.b16 %v68
  %v261 = vunpack.c.l.b16 %v69
  %v262 = vunpack.c.l.b16 %v70
  %v263 = vunpack.c.l.b16 %v71
  %v264 = vunpack.c.l.b16 %v72
  %v265 = vunpack.c.l.b16 %v73
  %v266 = vunpack.c.l.b16 %v74
  %v267 = vunpack.c.l.b16 %v75
  %v268 = vunpack.c.l.b16 %v76
  %v269 = vunpack.c.l.b16 %v77
  %v270 = vunpack.c.l.b16 %v78
  %v271 = vunpack.c.l.b16 %v79
  %v272 = vunpack.c.l.b16 %v80
  %v273 = vunpack.c.l.b16 %v81
  %v274 = vpack.c.b16 %v239, %v238
  %v275 = vpack.c.b16 %v241, %v240
  %v276 = vpack.c.b16 %v243, %v242
  %v277 = vpack.c.b16 %v245, %v244
  %v278 = vpack.c.b16 %v247, %v246
  %v279 = vpack.c.b16 %v249, %v248
  %v280 = vpack.c.b16 %v251, %v250
  %v281 = vpack.c.b16 %v253, %v252
  %v282 = vpack.c.b16 %v255, %v254
  %v283 = vpack.c.b16 %v257, %v256
  %v284 = vpack.c.b16 %v259, %v258
  %v285 = vpack.c.b16 %v261, %v260
  %v286 = vpack.c.b16 %v263, %v262
  %v287 = vpack.c.b16 %v265, %v264
  %v288 = vpack.c.b16 %v267, %v266
  %v289 = vpack.c.b16 %v269, %v268
  %v290 = vpack.c.b16 %v271, %v270
  %v291 = vpack.c.b16 %v273, %v272
  %vm310 = vcmask 261120
  %v312 = vsel %vm310, %v164, 0
  %v315 = vsel %vm310, %v167, 0
  %v318 = vsel %vm310, %v170, 0
  %v321 = vsel %vm310, %v173, 0
  %v324 = vsel %vm310, %v176, 0
  %v327 = vsel %vm310, %v179, 0
  %v330 = vsel %vm310, %v182, 0
  %v333 = vsel %vm310, %v185, 0
  %335 = vmatpush.bf16.msra.mxu0 %v281
  %336 = vmatpush.bf16.msra.mxu0 %v280
  %337 = vmatpush.bf16.msra.mxu0 %v279
  %338 = vmatpush.bf16.msra.mxu0 %v278
  %339 = vmatpush.bf16.msra.mxu0 %v277
  %340 = vmatpush.bf16.msra.mxu0 %v276
  %341 = vmatpush.bf16.msra.mxu0 %v275
  %342 = vmatpush.bf16.msra.mxu0 %v274
  %343 = vmatmul.bf16.gmra.mxu0 %v162
  %v344 = vpop.f32.mrf.mxu0
  %v345 = vadd.f32 0.0, %v344
  %v346 = vpop.f32.mrf.mxu0
  %v347 = vadd.f32 0.0, %v346
  %348 = vmatmul.bf16.gmra.mxu0 %v165
  %v349 = vpop.f32.mrf.mxu0
  %v350 = vadd.f32 0.0, %v349
  %v351 = vpop.f32.mrf.mxu0
  %v352 = vadd.f32 0.0, %v351
  %353 = vmatmul.bf16.gmra.mxu0 %v168
  %v354 = vpop.f32.mrf.mxu0
  %v355 = vadd.f32 0.0, %v354
  %v356 = vpop.f32.mrf.mxu0
  %v357 = vadd.f32 0.0, %v356
  %358 = vmatmul.bf16.gmra.mxu0 %v171
  %v359 = vpop.f32.mrf.mxu0
  %v360 = vadd.f32 0.0, %v359
  %v361 = vpop.f32.mrf.mxu0
  %v362 = vadd.f32 0.0, %v361
  %363 = vmatmul.bf16.gmra.mxu0 %v174
  %v364 = vpop.f32.mrf.mxu0
  %v365 = vadd.f32 0.0, %v364
  %v366 = vpop.f32.mrf.mxu0
  %v367 = vadd.f32 0.0, %v366
  %368 = vmatmul.bf16.gmra.mxu0 %v177
  %v369 = vpop.f32.mrf.mxu0
  %v370 = vadd.f32 0.0, %v369
  %v371 = vpop.f32.mrf.mxu0
  %v372 = vadd.f32 0.0, %v371
  %373 = vmatmul.bf16.gmra.mxu0 %v180
  %v374 = vpop.f32.mrf.mxu0
  %v375 = vadd.f32 0.0, %v374
  %v376 = vpop.f32.mrf.mxu0
  %v377 = vadd.f32 0.0, %v376
  %378 = vmatmul.bf16.gmra.mxu0 %v183
  %v379 = vpop.f32.mrf.mxu0
  %v380 = vadd.f32 0.0, %v379
  %v381 = vpop.f32.mrf.mxu0
  %v382 = vadd.f32 0.0, %v381
  %383 = vdwg.mxu0
  %384 = vmatpush.bf16.msra.mxu0 %v289
  %385 = vmatpush.bf16.msra.mxu0 %v288
  %386 = vmatpush.bf16.msra.mxu0 %v287
  %387 = vmatpush.bf16.msra.mxu0 %v286
  %388 = vmatpush.bf16.msra.mxu0 %v285
  %389 = vmatpush.bf16.msra.mxu0 %v284
  %390 = vmatpush.bf16.msra.mxu0 %v283
  %391 = vmatpush.bf16.msra.mxu0 %v282
  %392 = vmatmul.bf16.gmra.mxu0 %v163
  %v393 = vpop.f32.mrf.mxu0
  %v394 = vadd.f32 %v345, %v393
  %v395 = vpop.f32.mrf.mxu0
  %v396 = vadd.f32 %v347, %v395
  %397 = vmatmul.bf16.gmra.mxu0 %v166
  %v398 = vpop.f32.mrf.mxu0
  %v399 = vadd.f32 %v350, %v398
  %v400 = vpop.f32.mrf.mxu0
  %v401 = vadd.f32 %v352, %v400
  %402 = vmatmul.bf16.gmra.mxu0 %v169
  %v403 = vpop.f32.mrf.mxu0
  %v404 = vadd.f32 %v355, %v403
  %v405 = vpop.f32.mrf.mxu0
  %v406 = vadd.f32 %v357, %v405
  %407 = vmatmul.bf16.gmra.mxu0 %v172
  %v408 = vpop.f32.mrf.mxu0
  %v409 = vadd.f32 %v360, %v408
  %v410 = vpop.f32.mrf.mxu0
  %v411 = vadd.f32 %v362, %v410
  %412 = vmatmul.bf16.gmra.mxu0 %v175
  %v413 = vpop.f32.mrf.mxu0
  %v414 = vadd.f32 %v365, %v413
  %v415 = vpop.f32.mrf.mxu0
  %v416 = vadd.f32 %v367, %v415
  %417 = vmatmul.bf16.gmra.mxu0 %v178
  %v418 = vpop.f32.mrf.mxu0
  %v419 = vadd.f32 %v370, %v418
  %v420 = vpop.f32.mrf.mxu0
  %v421 = vadd.f32 %v372, %v420
  %422 = vmatmul.bf16.gmra.mxu0 %v181
  %v423 = vpop.f32.mrf.mxu0
  %v424 = vadd.f32 %v375, %v423
  %v425 = vpop.f32.mrf.mxu0
  %v426 = vadd.f32 %v377, %v425
  %427 = vmatmul.bf16.gmra.mxu0 %v184
  %v428 = vpop.f32.mrf.mxu0
  %v429 = vadd.f32 %v380, %v428
  %v430 = vpop.f32.mrf.mxu0
  %v431 = vadd.f32 %v382, %v430
  %432 = vdwg.mxu0
  %433 = vmatpush.bf16.msra.mxu0 0
  %434 = vmatpush.bf16.msra.mxu0 0
  %435 = vmatpush.bf16.msra.mxu0 0
  %436 = vmatpush.bf16.msra.mxu0 0
  %437 = vmatpush.bf16.msra.mxu0 0
  %438 = vmatpush.bf16.msra.mxu0 0
  %439 = vmatpush.bf16.msra.mxu0 %v291
  %440 = vmatpush.bf16.msra.mxu0 %v290
  %441 = vmatmul.bf16.gmra.mxu0 %v312
  %v442 = vpop.f32.mrf.mxu0
  %v443 = vadd.f32 %v394, %v442
  %v444 = vpop.f32.mrf.mxu0
  %v445 = vadd.f32 %v396, %v444
  %446 = vmatmul.bf16.gmra.mxu0 %v315
  %v447 = vpop.f32.mrf.mxu0
  %v448 = vadd.f32 %v399, %v447
  %v449 = vpop.f32.mrf.mxu0
  %v450 = vadd.f32 %v401, %v449
  %451 = vmatmul.bf16.gmra.mxu0 %v318
  %v452 = vpop.f32.mrf.mxu0
  %v453 = vadd.f32 %v404, %v452
  %v454 = vpop.f32.mrf.mxu0
  %v455 = vadd.f32 %v406, %v454
  %456 = vmatmul.bf16.gmra.mxu0 %v321
  %v457 = vpop.f32.mrf.mxu0
  %v458 = vadd.f32 %v409, %v457
  %v459 = vpop.f32.mrf.mxu0
  %v460 = vadd.f32 %v411, %v459
  %461 = vmatmul.bf16.gmra.mxu0 %v324
  %v462 = vpop.f32.mrf.mxu0
  %v463 = vadd.f32 %v414, %v462
  %v464 = vpop.f32.mrf.mxu0
  %v465 = vadd.f32 %v416, %v464
  %466 = vmatmul.bf16.gmra.mxu0 %v327
  %v467 = vpop.f32.mrf.mxu0
  %v468 = vadd.f32 %v419, %v467
  %v469 = vpop.f32.mrf.mxu0
  %v470 = vadd.f32 %v421, %v469
  %471 = vmatmul.bf16.gmra.mxu0 %v330
  %v472 = vpop.f32.mrf.mxu0
  %v473 = vadd.f32 %v424, %v472
  %v474 = vpop.f32.mrf.mxu0
  %v475 = vadd.f32 %v426, %v474
  %476 = vmatmul.bf16.gmra.mxu0 %v333
  %v477 = vpop.f32.mrf.mxu0
  %v478 = vadd.f32 %v429, %v477
  %v479 = vpop.f32.mrf.mxu0
  %v480 = vadd.f32 %v431, %v479
  %481 = vdwg.mxu0
  %vm482 = vcmask 523264
  %483 = vst.msk [vmem:[%s2] sm:$0xff] %vm482, %v443
  %484 = vst.msk [vmem:[%s2 + $0x8] sm:$0xff] %vm482, %v445
  %485 = vst.msk [vmem:[%s2 + $0x10] sm:$0xff] %vm482, %v448
  %486 = vst.msk [vmem:[%s2 + $0x18] sm:$0xff] %vm482, %v450
  %487 = vst.msk [vmem:[%s2 + $0x20] sm:$0xff] %vm482, %v453
  %488 = vst.msk [vmem:[%s2 + $0x28] sm:$0xff] %vm482, %v455
  %489 = vst.msk [vmem:[%s2 + $0x30] sm:$0xff] %vm482, %v458
  %490 = vst.msk [vmem:[%s2 + $0x38] sm:$0xff] %vm482, %v460
  %491 = vst.msk [vmem:[%s2 + $0x40] sm:$0xff] %vm482, %v463
  %492 = vst.msk [vmem:[%s2 + $0x48] sm:$0xff] %vm482, %v465
  %493 = vst.msk [vmem:[%s2 + $0x50] sm:$0xff] %vm482, %v468
  %494 = vst.msk [vmem:[%s2 + $0x58] sm:$0xff] %vm482, %v470
  %495 = vst.msk [vmem:[%s2 + $0x60] sm:$0xff] %vm482, %v473
  %496 = vst.msk [vmem:[%s2 + $0x68] sm:$0xff] %vm482, %v475
  %497 = vst.msk [vmem:[%s2 + $0x70] sm:$0xff] %vm482, %v478
  %498 = vst.msk [vmem:[%s2 + $0x78] sm:$0xff] %vm482, %v480
  %v499 = vsel %vm482, %v443, 0.0
  %v500 = vsel %vm482, %v445, 0.0
  %v501 = vadd.f32 %v499, %v500
  %v502 = vsel %vm482, %v448, 0.0
  %v503 = vadd.f32 %v501, %v502
  %v504 = vsel %vm482, %v450, 0.0
  %v505 = vadd.f32 %v503, %v504
  %v506 = vsel %vm482, %v453, 0.0
  %v507 = vadd.f32 %v505, %v506
  %v508 = vsel %vm482, %v455, 0.0
  %v509 = vadd.f32 %v507, %v508
  %v510 = vsel %vm482, %v458, 0.0
  %v511 = vadd.f32 %v509, %v510
  %v512 = vsel %vm482, %v460, 0.0
  %v513 = vadd.f32 %v511, %v512
  %v514 = vsel %vm482, %v463, 0.0
  %v515 = vadd.f32 %v513, %v514
  %v516 = vsel %vm482, %v465, 0.0
  %v517 = vadd.f32 %v515, %v516
  %v518 = vsel %vm482, %v468, 0.0
  %v519 = vadd.f32 %v517, %v518
  %v520 = vsel %vm482, %v470, 0.0
  %v521 = vadd.f32 %v519, %v520
  %v522 = vsel %vm482, %v473, 0.0
  %v523 = vadd.f32 %v521, %v522
  %v524 = vsel %vm482, %v475, 0.0
  %v525 = vadd.f32 %v523, %v524
  %v526 = vsel %vm482, %v478, 0.0
  %v527 = vadd.f32 %v525, %v526
  %v528 = vsel %vm482, %v480, 0.0
  %v529 = vadd.f32 %v527, %v528
  %v530 = vrot.slane %v529, 4
  %v531 = vadd.f32 %v529, %v530
  %v532 = vrot.slane %v531, 2
  %v533 = vadd.f32 %v531, %v532
  %v534 = vrot.slane %v533, 1
  %v535 = vadd.f32 %v533, %v534
  %v536 = vmul.f32 %v443, %v443
  %v537 = vmul.f32 %v445, %v445
  %v538 = vmul.f32 %v448, %v448
  %v539 = vmul.f32 %v450, %v450
  %v540 = vmul.f32 %v453, %v453
  %v541 = vmul.f32 %v455, %v455
  %v542 = vmul.f32 %v458, %v458
  %v543 = vmul.f32 %v460, %v460
  %v544 = vmul.f32 %v463, %v463
  %v545 = vmul.f32 %v465, %v465
  %v546 = vmul.f32 %v468, %v468
  %v547 = vmul.f32 %v470, %v470
  %v548 = vmul.f32 %v473, %v473
  %v549 = vmul.f32 %v475, %v475
  %v550 = vmul.f32 %v478, %v478
  %v551 = vmul.f32 %v480, %v480
  %v552 = vsel %vm482, %v536, 0.0
  %v553 = vsel %vm482, %v537, 0.0
  %v554 = vadd.f32 %v552, %v553
  %v555 = vsel %vm482, %v538, 0.0
  %v556 = vadd.f32 %v554, %v555
  %v557 = vsel %vm482, %v539, 0.0
  %v558 = vadd.f32 %v556, %v557
  %v559 = vsel %vm482, %v540, 0.0
  %v560 = vadd.f32 %v558, %v559
  %v561 = vsel %vm482, %v541, 0.0
  %v562 = vadd.f32 %v560, %v561
  %v563 = vsel %vm482, %v542, 0.0
  %v564 = vadd.f32 %v562, %v563
  %v565 = vsel %vm482, %v543, 0.0
  %v566 = vadd.f32 %v564, %v565
  %v567 = vsel %vm482, %v544, 0.0
  %v568 = vadd.f32 %v566, %v567
  %v569 = vsel %vm482, %v545, 0.0
  %v570 = vadd.f32 %v568, %v569
  %v571 = vsel %vm482, %v546, 0.0
  %v572 = vadd.f32 %v570, %v571
  %v573 = vsel %vm482, %v547, 0.0
  %v574 = vadd.f32 %v572, %v573
  %v575 = vsel %vm482, %v548, 0.0
  %v576 = vadd.f32 %v574, %v575
  %v577 = vsel %vm482, %v549, 0.0
  %v578 = vadd.f32 %v576, %v577
  %v579 = vsel %vm482, %v550, 0.0
  %v580 = vadd.f32 %v578, %v579
  %v581 = vsel %vm482, %v551, 0.0
  %v582 = vadd.f32 %v580, %v581
  %v583 = vrot.slane %v582, 4
  %v584 = vadd.f32 %v582, %v583
  %v585 = vrot.slane %v584, 2
  %v586 = vadd.f32 %v584, %v585
  %v587 = vrot.slane %v586, 1
  %v588 = vadd.f32 %v586, %v587
  %vm589 = vcmask 1040384
  %v590 = vsel %vm589, %v535, %v588
  %vm591 = vcmask 1041408
  %v592 = vsel %vm591, %v590, 0.0
  %593 = vst.msk [vmem:[%s3] sm:$0xff] %vm482, %v592
  // Predicated region
  $region10: #{vgg_forward.21} parent=0 // pred_check
    _
  $region11: #{vgg_forward.21} parent=0 // pred_check_branch
    %595 = sbr.rel (0) target = $region13
  $region12: #{vgg_forward.21} parent=0 // pred_region
    _
  $region13: #{vgg_forward.21} parent=0 // pred_fallthru
    _
  // Predicated region
  $region14: #{vgg_forward.21} parent=0 // pred_check
    _
  $region15: #{vgg_forward.21} parent=0 // pred_check_branch
    %597 = sbr.rel (0) target = $region17
  $region16: #{vgg_forward.21} parent=0 // pred_region
    _
  $region17: #{vgg_forward.21} parent=0 // pred_fallthru
    _
  // Predicated region
  $region18: #{vgg_forward.21} parent=0 // pred_check
    _
  $region19: #{vgg_forward.21} parent=0 // pred_check_branch
    %599 = sbr.rel (0) target = $region21
  $region20: #{vgg_forward.21} parent=0 // pred_region
    _
  $region21: #{vgg_forward.21} parent=0 // pred_fallthru
    _
  // Predicated region
  $region22: #{vgg_forward.21} parent=0 // pred_check
    _
  $region23: #{vgg_forward.21} parent=0 // pred_check_branch
    %601 = sbr.rel (0) target = $region25
  $region24: #{vgg_forward.21} parent=0 // pred_region
    _
  $region25: #{vgg_forward.21} parent=0 // pred_fallthru
    _

// kernel: vgg_forward.24
$region0: #{vgg_forward.24}
  #allocation0 [shape = 'u32[]', space=smem, size = 0x4, offset = 0x4, fixed_abs, tag = 'smem constant byte address 0x4 - core index']
  #allocation1 [shape = 'u32[72,128]{1,0:T(1,128)}', space=vmem, size = 0x9000, scoped, tag = 'internal scratch']
  %s0 = inlined_call_operand.vmem [shape: f32[8,2,4,128], index: 0, kind: input, shape index: {}]
  %s1 = inlined_call_operand.vmem [shape: f32[1,128], index: 1, kind: input, shape index: {}]
  %s2 = inlined_call_operand.vmem [shape: f32[1,128], index: 2, kind: input, shape index: {}]
  %s3 = inlined_call_operand.vmem [shape: bf16[8,4,64], index: 3, kind: output, shape index: {}]
  %s4 = sld [smem:[#allocation0]]
  $region22: #{vgg_forward.24} parent=0
    _
  %s6 = ssub.s32 1, %s4
  %s7 = scalar_select 0, %s6, %s4
  // Predicated region
  $region2: #{vgg_forward.24} parent=0 // pred_check
    _
  $region3: #{vgg_forward.24} parent=0 // pred_check_branch
    %9 = sbr.rel (0) target = $region5
  $region4: #{vgg_forward.24} parent=0 // pred_region
    _
  $region5: #{vgg_forward.24} parent=0 // pred_fallthru
    _
  // Predicated region
  $region6: #{vgg_forward.24} parent=0 // pred_check
    _
  $region7: #{vgg_forward.24} parent=0 // pred_check_branch
    %11 = sbr.rel (0) target = $region9
  $region8: #{vgg_forward.24} parent=0 // pred_region
    _
  $region9: #{vgg_forward.24} parent=0 // pred_fallthru
    _
  // Predicated region
  $region10: #{vgg_forward.24} parent=0 // pred_check
    _
  $region11: #{vgg_forward.24} parent=0 // pred_check_branch
    %13 = sbr.rel (0) target = $region13
  $region12: #{vgg_forward.24} parent=0 // pred_region
    _
  $region13: #{vgg_forward.24} parent=0 // pred_fallthru
    _
  %v14 = vld [vmem:[%s0] sm:$0xf]
  %v15 = vld [vmem:[%s0 + $0x4] sm:$0xf]
  %v16 = vld [vmem:[%s0 + $0x8] sm:$0xf]
  %v17 = vld [vmem:[%s0 + $0xc] sm:$0xf]
  %v18 = vld [vmem:[%s0 + $0x10] sm:$0xf]
  %v19 = vld [vmem:[%s0 + $0x14] sm:$0xf]
  %v20 = vld [vmem:[%s0 + $0x18] sm:$0xf]
  %v21 = vld [vmem:[%s0 + $0x1c] sm:$0xf]
  %v22 = vld [vmem:[%s0 + $0x20] sm:$0xf]
  %v23 = vld [vmem:[%s0 + $0x24] sm:$0xf]
  %v24 = vld [vmem:[%s0 + $0x28] sm:$0xf]
  %v25 = vld [vmem:[%s0 + $0x2c] sm:$0xf]
  %v26 = vld [vmem:[%s0 + $0x30] sm:$0xf]
  %v27 = vld [vmem:[%s0 + $0x34] sm:$0xf]
  %v28 = vld [vmem:[%s0 + $0x38] sm:$0xf]
  %v29 = vld [vmem:[%s0 + $0x3c] sm:$0xf]
  %v30 = vld [vmem:[%s1] sm:$0x1]
  %v32 = vperm.slane %v30, 0
  %v34 = vmul.f32 %v14, %v32
  %v35 = vmul.f32 %v15, %v32
  %v36 = vmul.f32 %v16, %v32
  %v37 = vmul.f32 %v17, %v32
  %v38 = vmul.f32 %v18, %v32
  %v39 = vmul.f32 %v19, %v32
  %v40 = vmul.f32 %v20, %v32
  %v41 = vmul.f32 %v21, %v32
  %v42 = vmul.f32 %v22, %v32
  %v43 = vmul.f32 %v23, %v32
  %v44 = vmul.f32 %v24, %v32
  %v45 = vmul.f32 %v25, %v32
  %v46 = vmul.f32 %v26, %v32
  %v47 = vmul.f32 %v27, %v32
  %v48 = vmul.f32 %v28, %v32
  %v49 = vmul.f32 %v29, %v32
  %v50 = vld [vmem:[%s2] sm:$0x1]
  %v52 = vperm.slane %v50, 0
  %v54 = vadd.f32 %v34, %v52
  %v55 = vadd.f32 %v35, %v52
  %v56 = vadd.f32 %v36, %v52
  %v57 = vadd.f32 %v37, %v52
  %v58 = vadd.f32 %v38, %v52
  %v59 = vadd.f32 %v39, %v52
  %v60 = vadd.f32 %v40, %v52
  %v61 = vadd.f32 %v41, %v52
  %v62 = vadd.f32 %v42, %v52
  %v63 = vadd.f32 %v43, %v52
  %v64 = vadd.f32 %v44, %v52
  %v65 = vadd.f32 %v45, %v52
  %v66 = vadd.f32 %v46, %v52
  %v67 = vadd.f32 %v47, %v52
  %v68 = vadd.f32 %v48, %v52
  %v69 = vadd.f32 %v49, %v52
  %v70 = vmax.f32 %v54, 0.0
  %v71 = vmax.f32 %v55, 0.0
  %v72 = vmax.f32 %v56, 0.0
  %v73 = vmax.f32 %v57, 0.0
  %v74 = vmax.f32 %v58, 0.0
  %v75 = vmax.f32 %v59, 0.0
  %v76 = vmax.f32 %v60, 0.0
  %v77 = vmax.f32 %v61, 0.0
  %v78 = vmax.f32 %v62, 0.0
  %v79 = vmax.f32 %v63, 0.0
  %v80 = vmax.f32 %v64, 0.0
  %v81 = vmax.f32 %v65, 0.0
  %v82 = vmax.f32 %v66, 0.0
  %v83 = vmax.f32 %v67, 0.0
  %v84 = vmax.f32 %v68, 0.0
  %v85 = vmax.f32 %v69, 0.0
  %v86 = vmax.f32 %v70, %v71
  %v87 = vmax.f32 %v72, %v73
  %v88 = vmax.f32 %v74, %v75
  %v89 = vmax.f32 %v76, %v77
  %v90 = vmax.f32 %v78, %v79
  %v91 = vmax.f32 %v80, %v81
  %v92 = vmax.f32 %v82, %v83
  %v93 = vmax.f32 %v84, %v85
  %102 = vrot.lane.b32.xlu0 %v86, 64
  %v103 = vpop.permute.xlu0 %102
  %104 = vrot.lane.b32.xlu0 %v87, 64
  %v105 = vpop.permute.xlu0 %104
  %106 = vrot.lane.b32.xlu0 %v88, 64
  %v107 = vpop.permute.xlu0 %106
  %108 = vrot.lane.b32.xlu0 %v89, 64
  %v109 = vpop.permute.xlu0 %108
  %110 = vrot.lane.b32.xlu0 %v90, 64
  %v111 = vpop.permute.xlu0 %110
  %112 = vrot.lane.b32.xlu0 %v91, 64
  %v113 = vpop.permute.xlu0 %112
  %114 = vrot.lane.b32.xlu0 %v92, 64
  %v115 = vpop.permute.xlu0 %114
  %116 = vrot.lane.b32.xlu0 %v93, 64
  %v117 = vpop.permute.xlu0 %116
  %v126 = vmax.f32 %v86, %v103
  %v127 = vmax.f32 %v87, %v105
  %v128 = vmax.f32 %v88, %v107
  %v129 = vmax.f32 %v89, %v109
  %v130 = vmax.f32 %v90, %v111
  %v131 = vmax.f32 %v91, %v113
  %v132 = vmax.f32 %v92, %v115
  %v133 = vmax.f32 %v93, %v117
  %v134 = vpack.c.bf16 %v126, %v126
  %v135 = vpack.c.bf16 %v127, %v127
  %v136 = vpack.c.bf16 %v128, %v128
  %v137 = vpack.c.bf16 %v129, %v129
  %v138 = vpack.c.bf16 %v130, %v130
  %v139 = vpack.c.bf16 %v131, %v131
  %v140 = vpack.c.bf16 %v132, %v132
  %v141 = vpack.c.bf16 %v133, %v133
  %vm142 = vcmask 517120
  %143 = vst.msk [vmem:[%s3] sm:$0x3] %vm142, %v134
  %144 = vst.msk [vmem:[%s3 + $0x2] sm:$0x3] %vm142, %v135
  %145 = vst.msk [vmem:[%s3 + $0x4] sm:$0x3] %vm142, %v136
  %146 = vst.msk [vmem:[%s3 + $0x6] sm:$0x3] %vm142, %v137
  %147 = vst.msk [vmem:[%s3 + $0x8] sm:$0x3] %vm142, %v138
  %148 = vst.msk [vmem:[%s3 + $0xa] sm:$0x3] %vm142, %v139
  %149 = vst.msk [vmem:[%s3 + $0xc] sm:$0x3] %vm142, %v140
  %150 = vst.msk [vmem:[%s3 + $0xe] sm:$0x3] %vm142, %v141
  // Predicated region
  $region14: #{vgg_forward.24} parent=0 // pred_check
    _
  $region15: #{vgg_forward.24} parent=0 // pred_check_branch
    %152 = sbr.rel (0) target = $region17
  $region16: #{vgg_forward.24} parent=0 // pred_region
    _
  $region17: #{vgg_forward.24} parent=0 // pred_fallthru
    _
  // Predicated region
  $region18: #{vgg_forward.24} parent=0 // pred_check
    _
  $region19: #{vgg_forward.24} parent=0 // pred_check_branch
    %154 = sbr.rel (0) target = $region21
  $region20: #{vgg_forward.24} parent=0 // pred_region
    _
  $region21: #{vgg_forward.24} parent=0 // pred_fallthru
    _

// kernel: vgg_forward.26
$region0: #{vgg_forward.26}
  #allocation0 [shape = 'u32[]', space=smem, size = 0x4, offset = 0x4, fixed_abs, tag = 'smem constant byte address 0x4 - core index']
  #allocation1 [shape = 'u32[72,128]{1,0:T(1,128)}', space=vmem, size = 0x9000, scoped, tag = 'internal scratch']
  %s0 = inlined_call_operand.vmem [shape: f32[32,128], index: 0, kind: input, shape index: {}]
  %s1 = inlined_call_operand.vmem [shape: f32[1,128], index: 1, kind: input, shape index: {}]
  %s2 = inlined_call_operand.vmem [shape: f32[1,128], index: 2, kind: input, shape index: {}]
  %s3 = inlined_call_operand.vmem [shape: bf16[32,128], index: 3, kind: output, shape index: {}]
  %s4 = sld [smem:[#allocation0]]
  $region22: #{vgg_forward.26} parent=0
    _
  %s6 = ssub.s32 1, %s4
  %s7 = scalar_select 0, %s6, %s4
  // Predicated region
  $region2: #{vgg_forward.26} parent=0 // pred_check
    _
  $region3: #{vgg_forward.26} parent=0 // pred_check_branch
    %9 = sbr.rel (0) target = $region5
  $region4: #{vgg_forward.26} parent=0 // pred_region
    _
  $region5: #{vgg_forward.26} parent=0 // pred_fallthru
    _
  // Predicated region
  $region6: #{vgg_forward.26} parent=0 // pred_check
    _
  $region7: #{vgg_forward.26} parent=0 // pred_check_branch
    %11 = sbr.rel (0) target = $region9
  $region8: #{vgg_forward.26} parent=0 // pred_region
    _
  $region9: #{vgg_forward.26} parent=0 // pred_fallthru
    _
  // Predicated region
  $region10: #{vgg_forward.26} parent=0 // pred_check
    _
  $region11: #{vgg_forward.26} parent=0 // pred_check_branch
    %13 = sbr.rel (0) target = $region13
  $region12: #{vgg_forward.26} parent=0 // pred_region
    _
  $region13: #{vgg_forward.26} parent=0 // pred_fallthru
    _
  %v14 = vld [vmem:[%s0] sm:$0xff]
  %v15 = vld [vmem:[%s0 + $0x8] sm:$0xff]
  %v16 = vld [vmem:[%s0 + $0x10] sm:$0xff]
  %v17 = vld [vmem:[%s0 + $0x18] sm:$0xff]
  %v18 = vld [vmem:[%s1] sm:$0x1]
  %v20 = vperm.slane %v18, 0
  %v22 = vmul.f32 %v14, %v20
  %v23 = vmul.f32 %v15, %v20
  %v24 = vmul.f32 %v16, %v20
  %v25 = vmul.f32 %v17, %v20
  %v26 = vld [vmem:[%s2] sm:$0x1]
  %v28 = vperm.slane %v26, 0
  %v30 = vadd.f32 %v22, %v28
  %v31 = vadd.f32 %v23, %v28
  %v32 = vadd.f32 %v24, %v28
  %v33 = vadd.f32 %v25, %v28
  %v34 = vmax.f32 %v30, 0.0
  %v35 = vmax.f32 %v31, 0.0
  %v36 = vmax.f32 %v32, 0.0
  %v37 = vmax.f32 %v33, 0.0
  %v38 = vpack.c.bf16 %v34, %v34
  %v39 = vpack.c.bf16 %v35, %v35
  %v40 = vpack.c.bf16 %v36, %v36
  %v41 = vpack.c.bf16 %v37, %v37
  %42 = vst [vmem:[%s3] sm:$0xf] %v38
  %43 = vst [vmem:[%s3 + $0x4] sm:$0xf] %v39
  %44 = vst [vmem:[%s3 + $0x8] sm:$0xf] %v40
  %45 = vst [vmem:[%s3 + $0xc] sm:$0xf] %v41
  // Predicated region
  $region14: #{vgg_forward.26} parent=0 // pred_check
    _
  $region15: #{vgg_forward.26} parent=0 // pred_check_branch
    %47 = sbr.rel (0) target = $region17
  $region16: #{vgg_forward.26} parent=0 // pred_region
    _
  $region17: #{vgg_forward.26} parent=0 // pred_fallthru
    _
  // Predicated region
  $region18: #{vgg_forward.26} parent=0 // pred_check
    _
  $region19: #{vgg_forward.26} parent=0 // pred_check_branch
    %49 = sbr.rel (0) target = $region21
  $region20: #{vgg_forward.26} parent=0 // pred_region
    _
  $region21: #{vgg_forward.26} parent=0 // pred_fallthru
    _

// kernel: vgg_forward.23
$region0: #{vgg_forward.23}
  #allocation0 [shape = 'u32[]', space=smem, size = 0x4, offset = 0x4, fixed_abs, tag = 'smem constant byte address 0x4 - core index']
  #allocation1 [shape = 'u32[72,128]{1,0:T(1,128)}', space=vmem, size = 0x9000, scoped, tag = 'internal scratch']
  %s0 = inlined_call_operand.vmem [shape: bf16[128,576], index: 0, kind: input, shape index: {}]
  %s1 = inlined_call_operand.vmem [shape: bf16[576,64], index: 1, kind: input, shape index: {}]
  %s2 = inlined_call_operand.vmem [shape: f32[128,64], index: 2, kind: output, shape index: {0}]
  %s3 = inlined_call_operand.vmem [shape: f32[8,64], index: 3, kind: output, shape index: {1}]
  %4 = xla_tuple %s2, %s3
  %s5 = sld [smem:[#allocation0]]
  $region26: #{vgg_forward.23} parent=0
    _
  %s7 = ssub.s32 1, %s5
  %s8 = scalar_select 0, %s7, %s5
  // Predicated region
  $region2: #{vgg_forward.23} parent=0 // pred_check
    _
  $region3: #{vgg_forward.23} parent=0 // pred_check_branch
    %10 = sbr.rel (0) target = $region5
  $region4: #{vgg_forward.23} parent=0 // pred_region
    _
  $region5: #{vgg_forward.23} parent=0 // pred_fallthru
    _
  // Predicated region
  $region6: #{vgg_forward.23} parent=0 // pred_check
    _
  $region7: #{vgg_forward.23} parent=0 // pred_check_branch
    %12 = sbr.rel (0) target = $region9
  $region8: #{vgg_forward.23} parent=0 // pred_region
    _
  $region9: #{vgg_forward.23} parent=0 // pred_fallthru
    _
  %v14 = vld [vmem:[%s0] sm:$0xff]
  %v15 = vld [vmem:[%s0 + $0x8] sm:$0xff]
  %v16 = vld [vmem:[%s0 + $0x10] sm:$0xf]
  %v17 = vld [vmem:[%s0 + $0x14] sm:$0xff]
  %v18 = vld [vmem:[%s0 + $0x1c] sm:$0xff]
  %v19 = vld [vmem:[%s0 + $0x24] sm:$0xf]
  %v20 = vld [vmem:[%s0 + $0x28] sm:$0xff]
  %v21 = vld [vmem:[%s0 + $0x30] sm:$0xff]
  %v22 = vld [vmem:[%s0 + $0x38] sm:$0xf]
  %v23 = vld [vmem:[%s0 + $0x3c] sm:$0xff]
  %v24 = vld [vmem:[%s0 + $0x44] sm:$0xff]
  %v25 = vld [vmem:[%s0 + $0x4c] sm:$0xf]
  %v26 = vld [vmem:[%s0 + $0x50] sm:$0xff]
  %v27 = vld [vmem:[%s0 + $0x58] sm:$0xff]
  %v28 = vld [vmem:[%s0 + $0x60] sm:$0xf]
  %v29 = vld [vmem:[%s0 + $0x64] sm:$0xff]
  %v30 = vld [vmem:[%s0 + $0x6c] sm:$0xff]
  %v31 = vld [vmem:[%s0 + $0x74] sm:$0xf]
  %v32 = vld [vmem:[%s0 + $0x78] sm:$0xff]
  %v33 = vld [vmem:[%s0 + $0x80] sm:$0xff]
  %v34 = vld [vmem:[%s0 + $0x88] sm:$0xf]
  %v35 = vld [vmem:[%s0 + $0x8c] sm:$0xff]
  %v36 = vld [vmem:[%s0 + $0x94] sm:$0xff]
  %v37 = vld [vmem:[%s0 + $0x9c] sm:$0xf]
  %v38 = vld [vmem:[%s0 + $0xa0] sm:$0xff]
  %v39 = vld [vmem:[%s0 + $0xa8] sm:$0xff]
  %v40 = vld [vmem:[%s0 + $0xb0] sm:$0xf]
  %v41 = vld [vmem:[%s0 + $0xb4] sm:$0xff]
  %v42 = vld [vmem:[%s0 + $0xbc] sm:$0xff]
  %v43 = vld [vmem:[%s0 + $0xc4] sm:$0xf]
  %v44 = vld [vmem:[%s0 + $0xc8] sm:$0xff]
  %v45 = vld [vmem:[%s0 + $0xd0] sm:$0xff]
  %v46 = vld [vmem:[%s0 + $0xd8] sm:$0xf]
  %v47 = vld [vmem:[%s0 + $0xdc] sm:$0xff]
  %v48 = vld [vmem:[%s0 + $0xe4] sm:$0xff]
  %v49 = vld [vmem:[%s0 + $0xec] sm:$0xf]
  %v50 = vld [vmem:[%s0 + $0xf0] sm:$0xff]
  %v51 = vld [vmem:[%s0 + $0xf8] sm:$0xff]
  %v52 = vld [vmem:[%s0 + $0x100] sm:$0xf]
  %v53 = vld [vmem:[%s0 + $0x104] sm:$0xff]
  %v54 = vld [vmem:[%s0 + $0x10c] sm:$0xff]
  %v55 = vld [vmem:[%s0 + $0x114] sm:$0xf]
  %v56 = vld [vmem:[%s0 + $0x118] sm:$0xff]
  %v57 = vld [vmem:[%s0 + $0x120] sm:$0xff]
  %v58 = vld [vmem:[%s0 + $0x128] sm:$0xf]
  %v59 = vld [vmem:[%s0 + $0x12c] sm:$0xff]
  %v60 = vld [vmem:[%s0 + $0x134] sm:$0xff]
  %v61 = vld [vmem:[%s0 + $0x13c] sm:$0xf]
  %v62 = vld [vmem:[%s1] sm:$0xf]
  %v63 = vld [vmem:[%s1 + $0x4] sm:$0xf]
  %v64 = vld [vmem:[%s1 + $0x8] sm:$0xf]
  %v65 = vld [vmem:[%s1 + $0xc] sm:$0xf]
  %v66 = vld [vmem:[%s1 + $0x10] sm:$0xf]
  %v67 = vld [vmem:[%s1 + $0x14] sm:$0xf]
  %v68 = vld [vmem:[%s1 + $0x18] sm:$0xf]
  %v69 = vld [vmem:[%s1 + $0x1c] sm:$0xf]
  %v70 = vld [vmem:[%s1 + $0x20] sm:$0xf]
  %v71 = vld [vmem:[%s1 + $0x24] sm:$0xf]
  %v72 = vld [vmem:[%s1 + $0x28] sm:$0xf]
  %v73 = vld [vmem:[%s1 + $0x2c] sm:$0xf]
  %v74 = vld [vmem:[%s1 + $0x30] sm:$0xf]
  %v75 = vld [vmem:[%s1 + $0x34] sm:$0xf]
  %v76 = vld [vmem:[%s1 + $0x38] sm:$0xf]
  %v77 = vld [vmem:[%s1 + $0x3c] sm:$0xf]
  %v78 = vld [vmem:[%s1 + $0x40] sm:$0xf]
  %v79 = vld [vmem:[%s1 + $0x44] sm:$0xf]
  %v80 = vld [vmem:[%s1 + $0x48] sm:$0xf]
  %v81 = vld [vmem:[%s1 + $0x4c] sm:$0xf]
  %v82 = vld [vmem:[%s1 + $0x50] sm:$0xf]
  %v83 = vld [vmem:[%s1 + $0x54] sm:$0xf]
  %v84 = vld [vmem:[%s1 + $0x58] sm:$0xf]
  %v85 = vld [vmem:[%s1 + $0x5c] sm:$0xf]
  %v86 = vld [vmem:[%s1 + $0x60] sm:$0xf]
  %v87 = vld [vmem:[%s1 + $0x64] sm:$0xf]
  %v88 = vld [vmem:[%s1 + $0x68] sm:$0xf]
  %v89 = vld [vmem:[%s1 + $0x6c] sm:$0xf]
  %v90 = vld [vmem:[%s1 + $0x70] sm:$0xf]
  %v91 = vld [vmem:[%s1 + $0x74] sm:$0xf]
  %v92 = vld [vmem:[%s1 + $0x78] sm:$0xf]
  %v93 = vld [vmem:[%s1 + $0x7c] sm:$0xf]
  %v94 = vld [vmem:[%s1 + $0x80] sm:$0xf]
  %v95 = vld [vmem:[%s1 + $0x84] sm:$0xf]
  %v96 = vld [vmem:[%s1 + $0x88] sm:$0xf]
  %v97 = vld [vmem:[%s1 + $0x8c] sm:$0xf]
  %v98 = vld [vmem:[%s1 + $0x90] sm:$0xf]
  %v99 = vld [vmem:[%s1 + $0x94] sm:$0xf]
  %v100 = vld [vmem:[%s1 + $0x98] sm:$0xf]
  %v101 = vld [vmem:[%s1 + $0x9c] sm:$0xf]
  %v102 = vld [vmem:[%s1 + $0xa0] sm:$0xf]
  %v103 = vld [vmem:[%s1 + $0xa4] sm:$0xf]
  %v104 = vld [vmem:[%s1 + $0xa8] sm:$0xf]
  %v105 = vld [vmem:[%s1 + $0xac] sm:$0xf]
  %v106 = vld [vmem:[%s1 + $0xb0] sm:$0xf]
  %v107 = vld [vmem:[%s1 + $0xb4] sm:$0xf]
  %v108 = vld [vmem:[%s1 + $0xb8] sm:$0xf]
  %v109 = vld [vmem:[%s1 + $0xbc] sm:$0xf]
  %v110 = vld [vmem:[%s1 + $0xc0] sm:$0xf]
  %v111 = vld [vmem:[%s1 + $0xc4] sm:$0xf]
  %v112 = vld [vmem:[%s1 + $0xc8] sm:$0xf]
  %v113 = vld [vmem:[%s1 + $0xcc] sm:$0xf]
  %v114 = vld [vmem:[%s1 + $0xd0] sm:$0xf]
  %v115 = vld [vmem:[%s1 + $0xd4] sm:$0xf]
  %v116 = vld [vmem:[%s1 + $0xd8] sm:$0xf]
  %v117 = vld [vmem:[%s1 + $0xdc] sm:$0xf]
  %v118 = vld [vmem:[%s1 + $0xe0] sm:$0xf]
  %v119 = vld [vmem:[%s1 + $0xe4] sm:$0xf]
  %v120 = vld [vmem:[%s1 + $0xe8] sm:$0xf]
  %v121 = vld [vmem:[%s1 + $0xec] sm:$0xf]
  %v122 = vld [vmem:[%s1 + $0xf0] sm:$0xf]
  %v123 = vld [vmem:[%s1 + $0xf4] sm:$0xf]
  %v124 = vld [vmem:[%s1 + $0xf8] sm:$0xf]
  %v125 = vld [vmem:[%s1 + $0xfc] sm:$0xf]
  %v126 = vld [vmem:[%s1 + $0x100] sm:$0xf]
  %v127 = vld [vmem:[%s1 + $0x104] sm:$0xf]
  %v128 = vld [vmem:[%s1 + $0x108] sm:$0xf]
  %v129 = vld [vmem:[%s1 + $0x10c] sm:$0xf]
  %v130 = vld [vmem:[%s1 + $0x110] sm:$0xf]
  %v131 = vld [vmem:[%s1 + $0x114] sm:$0xf]
  %v132 = vld [vmem:[%s1 + $0x118] sm:$0xf]
  %v133 = vld [vmem:[%s1 + $0x11c] sm:$0xf]
  %v182 = vunpack.c.l.b16 %v14
  %v183 = vunpack.c.h.b16 %v14
  %v184 = vunpack.c.l.b16 %v15
  %v185 = vunpack.c.h.b16 %v15
  %v186 = vunpack.c.l.b16 %v16
  %v187 = vunpack.c.l.b16 %v17
  %v188 = vunpack.c.h.b16 %v17
  %v189 = vunpack.c.l.b16 %v18
  %v190 = vunpack.c.h.b16 %v18
  %v191 = vunpack.c.l.b16 %v19
  %v192 = vunpack.c.l.b16 %v20
  %v193 = vunpack.c.h.b16 %v20
  %v194 = vunpack.c.l.b16 %v21
  %v195 = vunpack.c.h.b16 %v21
  %v196 = vunpack.c.l.b16 %v22
  %v197 = vunpack.c.l.b16 %v23
  %v198 = vunpack.c.h.b16 %v23
  %v199 = vunpack.c.l.b16 %v24
  %v200 = vunpack.c.h.b16 %v24
  %v201 = vunpack.c.l.b16 %v25
  %v202 = vunpack.c.l.b16 %v26
  %v203 = vunpack.c.h.b16 %v26
  %v204 = vunpack.c.l.b16 %v27
  %v205 = vunpack.c.h.b16 %v27
  %v206 = vunpack.c.l.b16 %v28
  %v207 = vunpack.c.l.b16 %v29
  %v208 = vunpack.c.h.b16 %v29
  %v209 = vunpack.c.l.b16 %v30
  %v210 = vunpack.c.h.b16 %v30
  %v211 = vunpack.c.l.b16 %v31
  %v212 = vunpack.c.l.b16 %v32
  %v213 = vunpack.c.h.b16 %v32
  %v214 = vunpack.c.l.b16 %v33
  %v215 = vunpack.c.h.b16 %v33
  %v216 = vunpack.c.l.b16 %v34
  %v217 = vunpack.c.l.b16 %v35
  %v218 = vunpack.c.h.b16 %v35
  %v219 = vunpack.c.l.b16 %v36
  %v220 = vunpack.c.h.b16 %v36
  %v221 = vunpack.c.l.b16 %v37
  %v222 = vunpack.c.l.b16 %v38
  %v223 = vunpack.c.h.b16 %v38
  %v224 = vunpack.c.l.b16 %v39
  %v225 = vunpack.c.h.b16 %v39
  %v226 = vunpack.c.l.b16 %v40
  %v227 = vunpack.c.l.b16 %v41
  %v228 = vunpack.c.h.b16 %v41
  %v229 = vunpack.c.l.b16 %v42
  %v230 = vunpack.c.h.b16 %v42
  %v231 = vunpack.c.l.b16 %v43
  %v232 = vunpack.c.l.b16 %v44
  %v233 = vunpack.c.h.b16 %v44
  %v234 = vunpack.c.l.b16 %v45
  %v235 = vunpack.c.h.b16 %v45
  %v236 = vunpack.c.l.b16 %v46
  %v237 = vunpack.c.l.b16 %v47
  %v238 = vunpack.c.h.b16 %v47
  %v239 = vunpack.c.l.b16 %v48
  %v240 = vunpack.c.h.b16 %v48
  %v241 = vunpack.c.l.b16 %v49
  %v242 = vunpack.c.l.b16 %v50
  %v243 = vunpack.c.h.b16 %v50
  %v244 = vunpack.c.l.b16 %v51
  %v245 = vunpack.c.h.b16 %v51
  %v246 = vunpack.c.l.b16 %v52
  %v247 = vunpack.c.l.b16 %v53
  %v248 = vunpack.c.h.b16 %v53
  %v249 = vunpack.c.l.b16 %v54
  %v250 = vunpack.c.h.b16 %v54
  %v251 = vunpack.c.l.b16 %v55
  %v252 = vunpack.c.l.b16 %v56
  %v253 = vunpack.c.h.b16 %v56
  %v254 = vunpack.c.l.b16 %v57
  %v255 = vunpack.c.h.b16 %v57
  %v256 = vunpack.c.l.b16 %v58
  %v257 = vunpack.c.l.b16 %v59
  %v258 = vunpack.c.h.b16 %v59
  %v259 = vunpack.c.l.b16 %v60
  %v260 = vunpack.c.h.b16 %v60
  %v261 = vunpack.c.l.b16 %v61
  %v262 = vpack.c.b16 %v187, %v182
  %v263 = vpack.c.b16 %v188, %v183
  %v264 = vpack.c.b16 %v189, %v184
  %v265 = vpack.c.b16 %v190, %v185
  %v266 = vpack.c.b16 %v191, %v186
  %v267 = vpack.c.b16 %v197, %v192
  %v268 = vpack.c.b16 %v198, %v193
  %v269 = vpack.c.b16 %v199, %v194
  %v270 = vpack.c.b16 %v200, %v195
  %v271 = vpack.c.b16 %v201, %v196
  %v272 = vpack.c.b16 %v207, %v202
  %v273 = vpack.c.b16 %v208, %v203
  %v274 = vpack.c.b16 %v209, %v204
  %v275 = vpack.c.b16 %v210, %v205
  %v276 = vpack.c.b16 %v211, %v206
  %v277 = vpack.c.b16 %v217, %v212
  %v278 = vpack.c.b16 %v218, %v213
  %v279 = vpack.c.b16 %v219, %v214
  %v280 = vpack.c.b16 %v220, %v215
  %v281 = vpack.c.b16 %v221, %v216
  %v282 = vpack.c.b16 %v227, %v222
  %v283 = vpack.c.b16 %v228, %v223
  %v284 = vpack.c.b16 %v229, %v224
  %v285 = vpack.c.b16 %v230, %v225
  %v286 = vpack.c.b16 %v231, %v226
  %v287 = vpack.c.b16 %v237, %v232
  %v288 = vpack.c.b16 %v238, %v233
  %v289 = vpack.c.b16 %v239, %v234
  %v290 = vpack.c.b16 %v240, %v235
  %v291 = vpack.c.b16 %v241, %v236
  %v292 = vpack.c.b16 %v247, %v242
  %v293 = vpack.c.b16 %v248, %v243
  %v294 = vpack.c.b16 %v249, %v244
  %v295 = vpack.c.b16 %v250, %v245
  %v296 = vpack.c.b16 %v251, %v246
  %v297 = vpack.c.b16 %v257, %v252
  %v298 = vpack.c.b16 %v258, %v253
  %v299 = vpack.c.b16 %v259, %v254
  %v300 = vpack.c.b16 %v260, %v255
  %v301 = vpack.c.b16 %v261, %v256
  %v406 = vunpack.c.l.b16 %v62
  %v407 = vunpack.c.l.b16 %v63
  %v408 = vunpack.c.l.b16 %v64
  %v409 = vunpack.c.l.b16 %v65
  %v410 = vunpack.c.l.b16 %v66
  %v411 = vunpack.c.l.b16 %v67
  %v412 = vunpack.c.l.b16 %v68
  %v413 = vunpack.c.l.b16 %v69
  %v414 = vunpack.c.l.b16 %v70
  %v415 = vunpack.c.l.b16 %v71
  %v416 = vunpack.c.l.b16 %v72
  %v417 = vunpack.c.l.b16 %v73
  %v418 = vunpack.c.l.b16 %v74
  %v419 = vunpack.c.l.b16 %v75
  %v420 = vunpack.c.l.b16 %v76
  %v421 = vunpack.c.l.b16 %v77
  %v422 = vunpack.c.l.b16 %v78
  %v423 = vunpack.c.l.b16 %v79
  %v424 = vunpack.c.l.b16 %v80
  %v425 = vunpack.c.l.b16 %v81
  %v426 = vunpack.c.l.b16 %v82
  %v427 = vunpack.c.l.b16 %v83
  %v428 = vunpack.c.l.b16 %v84
  %v429 = vunpack.c.l.b16 %v85
  %v430 = vunpack.c.l.b16 %v86
  %v431 = vunpack.c.l.b16 %v87
  %v432 = vunpack.c.l.b16 %v88
  %v433 = vunpack.c.l.b16 %v89
  %v434 = vunpack.c.l.b16 %v90
  %v435 = vunpack.c.l.b16 %v91
  %v436 = vunpack.c.l.b16 %v92
  %v437 = vunpack.c.l.b16 %v93
  %v438 = vunpack.c.l.b16 %v94
  %v439 = vunpack.c.l.b16 %v95
  %v440 = vunpack.c.l.b16 %v96
  %v441 = vunpack.c.l.b16 %v97
  %v442 = vunpack.c.l.b16 %v98
  %v443 = vunpack.c.l.b16 %v99
  %v444 = vunpack.c.l.b16 %v100
  %v445 = vunpack.c.l.b16 %v101
  %v446 = vunpack.c.l.b16 %v102
  %v447 = vunpack.c.l.b16 %v103
  %v448 = vunpack.c.l.b16 %v104
  %v449 = vunpack.c.l.b16 %v105
  %v450 = vunpack.c.l.b16 %v106
  %v451 = vunpack.c.l.b16 %v107
  %v452 = vunpack.c.l.b16 %v108
  %v453 = vunpack.c.l.b16 %v109
  %v454 = vunpack.c.l.b16 %v110
  %v455 = vunpack.c.l.b16 %v111
  %v456 = vunpack.c.l.b16 %v112
  %v457 = vunpack.c.l.b16 %v113
  %v458 = vunpack.c.l.b16 %v114
  %v459 = vunpack.c.l.b16 %v115
  %v460 = vunpack.c.l.b16 %v116
  %v461 = vunpack.c.l.b16 %v117
  %v462 = vunpack.c.l.b16 %v118
  %v463 = vunpack.c.l.b16 %v119
  %v464 = vunpack.c.l.b16 %v120
  %v465 = vunpack.c.l.b16 %v121
  %v466 = vunpack.c.l.b16 %v122
  %v467 = vunpack.c.l.b16 %v123
  %v468 = vunpack.c.l.b16 %v124
  %v469 = vunpack.c.l.b16 %v125
  %v470 = vunpack.c.l.b16 %v126
  %v471 = vunpack.c.l.b16 %v127
  %v472 = vunpack.c.l.b16 %v128
  %v473 = vunpack.c.l.b16 %v129
  %v474 = vunpack.c.l.b16 %v130
  %v475 = vunpack.c.l.b16 %v131
  %v476 = vunpack.c.l.b16 %v132
  %v477 = vunpack.c.l.b16 %v133
  %v478 = vpack.c.b16 %v407, %v406
  %v479 = vpack.c.b16 %v409, %v408
  %v480 = vpack.c.b16 %v411, %v410
  %v481 = vpack.c.b16 %v413, %v412
  %v482 = vpack.c.b16 %v415, %v414
  %v483 = vpack.c.b16 %v417, %v416
  %v484 = vpack.c.b16 %v419, %v418
  %v485 = vpack.c.b16 %v421, %v420
  %v486 = vpack.c.b16 %v423, %v422
  %v487 = vpack.c.b16 %v425, %v424
  %v488 = vpack.c.b16 %v427, %v426
  %v489 = vpack.c.b16 %v429, %v428
  %v490 = vpack.c.b16 %v431, %v430
  %v491 = vpack.c.b16 %v433, %v432
  %v492 = vpack.c.b16 %v435, %v434
  %v493 = vpack.c.b16 %v437, %v436
  %v494 = vpack.c.b16 %v439, %v438
  %v495 = vpack.c.b16 %v441, %v440
  %v496 = vpack.c.b16 %v443, %v442
  %v497 = vpack.c.b16 %v445, %v444
  %v498 = vpack.c.b16 %v447, %v446
  %v499 = vpack.c.b16 %v449, %v448
  %v500 = vpack.c.b16 %v451, %v450
  %v501 = vpack.c.b16 %v453, %v452
  %v502 = vpack.c.b16 %v455, %v454
  %v503 = vpack.c.b16 %v457, %v456
  %v504 = vpack.c.b16 %v459, %v458
  %v505 = vpack.c.b16 %v461, %v460
  %v506 = vpack.c.b16 %v463, %v462
  %v507 = vpack.c.b16 %v465, %v464
  %v508 = vpack.c.b16 %v467, %v466
  %v509 = vpack.c.b16 %v469, %v468
  %v510 = vpack.c.b16 %v471, %v470
  %v511 = vpack.c.b16 %v473, %v472
  %v512 = vpack.c.b16 %v475, %v474
  %v513 = vpack.c.b16 %v477, %v476
  %vm550 = vcmask 523264
  %v552 = vsel %vm550, %v266, 0
  %v555 = vsel %vm550, %v271, 0
  %v558 = vsel %vm550, %v276, 0
  %v561 = vsel %vm550, %v281, 0
  %v564 = vsel %vm550, %v286, 0
  %v567 = vsel %vm550, %v291, 0
  %v570 = vsel %vm550, %v296, 0
  %v573 = vsel %vm550, %v301, 0
  %575 = vmatpush.bf16.msra.mxu0 %v485
  %576 = vmatpush.bf16.msra.mxu0 %v484
  %577 = vmatpush.bf16.msra.mxu0 %v483
  %578 = vmatpush.bf16.msra.mxu0 %v482
  %579 = vmatpush.bf16.msra.mxu0 %v481
  %580 = vmatpush.bf16.msra.mxu0 %v480
  %581 = vmatpush.bf16.msra.mxu0 %v479
  %582 = vmatpush.bf16.msra.mxu0 %v478
  %583 = vmatmul.bf16.gmra.mxu0 %v262
  %v584 = vpop.f32.mrf.mxu0
  %v585 = vadd.f32 0.0, %v584
  %v586 = vpop.f32.mrf.mxu0
  %v587 = vadd.f32 0.0, %v586
  %588 = vmatmul.bf16.gmra.mxu0 %v267
  %v589 = vpop.f32.mrf.mxu0
  %v590 = vadd.f32 0.0, %v589
  %v591 = vpop.f32.mrf.mxu0
  %v592 = vadd.f32 0.0, %v591
  %593 = vmatmul.bf16.gmra.mxu0 %v272
  %v594 = vpop.f32.mrf.mxu0
  %v595 = vadd.f32 0.0, %v594
  %v596 = vpop.f32.mrf.mxu0
  %v597 = vadd.f32 0.0, %v596
  %598 = vmatmul.bf16.gmra.mxu0 %v277
  %v599 = vpop.f32.mrf.mxu0
  %v600 = vadd.f32 0.0, %v599
  %v601 = vpop.f32.mrf.mxu0
  %v602 = vadd.f32 0.0, %v601
  %603 = vmatmul.bf16.gmra.mxu0 %v282
  %v604 = vpop.f32.mrf.mxu0
  %v605 = vadd.f32 0.0, %v604
  %v606 = vpop.f32.mrf.mxu0
  %v607 = vadd.f32 0.0, %v606
  %608 = vmatmul.bf16.gmra.mxu0 %v287
  %v609 = vpop.f32.mrf.mxu0
  %v610 = vadd.f32 0.0, %v609
  %v611 = vpop.f32.mrf.mxu0
  %v612 = vadd.f32 0.0, %v611
  %613 = vmatmul.bf16.gmra.mxu0 %v292
  %v614 = vpop.f32.mrf.mxu0
  %v615 = vadd.f32 0.0, %v614
  %v616 = vpop.f32.mrf.mxu0
  %v617 = vadd.f32 0.0, %v616
  %618 = vmatmul.bf16.gmra.mxu0 %v297
  %v619 = vpop.f32.mrf.mxu0
  %v620 = vadd.f32 0.0, %v619
  %v621 = vpop.f32.mrf.mxu0
  %v622 = vadd.f32 0.0, %v621
  %623 = vdwg.mxu0
  %624 = vmatpush.bf16.msra.mxu0 %v493
  %625 = vmatpush.bf16.msra.mxu0 %v492
  %626 = vmatpush.bf16.msra.mxu0 %v491
  %627 = vmatpush.bf16.msra.mxu0 %v490
  %628 = vmatpush.bf16.msra.mxu0 %v489
  %629 = vmatpush.bf16.msra.mxu0 %v488
  %630 = vmatpush.bf16.msra.mxu0 %v487
  %631 = vmatpush.bf16.msra.mxu0 %v486
  %632 = vmatmul.bf16.gmra.mxu0 %v263
  %v633 = vpop.f32.mrf.mxu0
  %v634 = vadd.f32 %v585, %v633
  %v635 = vpop.f32.mrf.mxu0
  %v636 = vadd.f32 %v587, %v635
  %637 = vmatmul.bf16.gmra.mxu0 %v268
  %v638 = vpop.f32.mrf.mxu0
  %v639 = vadd.f32 %v590, %v638
  %v640 = vpop.f32.mrf.mxu0
  %v641 = vadd.f32 %v592, %v640
  %642 = vmatmul.bf16.gmra.mxu0 %v273
  %v643 = vpop.f32.mrf.mxu0
  %v644 = vadd.f32 %v595, %v643
  %v645 = vpop.f32.mrf.mxu0
  %v646 = vadd.f32 %v597, %v645
  %647 = vmatmul.bf16.gmra.mxu0 %v278
  %v648 = vpop.f32.mrf.mxu0
  %v649 = vadd.f32 %v600, %v648
  %v650 = vpop.f32.mrf.mxu0
  %v651 = vadd.f32 %v602, %v650
  %652 = vmatmul.bf16.gmra.mxu0 %v283
  %v653 = vpop.f32.mrf.mxu0
  %v654 = vadd.f32 %v605, %v653
  %v655 = vpop.f32.mrf.mxu0
  %v656 = vadd.f32 %v607, %v655
  %657 = vmatmul.bf16.gmra.mxu0 %v288
  %v658 = vpop.f32.mrf.mxu0
  %v659 = vadd.f32 %v610, %v658
  %v660 = vpop.f32.mrf.mxu0
  %v661 = vadd.f32 %v612, %v660
  %662 = vmatmul.bf16.gmra.mxu0 %v293
  %v663 = vpop.f32.mrf.mxu0
  %v664 = vadd.f32 %v615, %v663
  %v665 = vpop.f32.mrf.mxu0
  %v666 = vadd.f32 %v617, %v665
  %667 = vmatmul.bf16.gmra.mxu0 %v298
  %v668 = vpop.f32.mrf.mxu0
  %v669 = vadd.f32 %v620, %v668
  %v670 = vpop.f32.mrf.mxu0
  %v671 = vadd.f32 %v622, %v670
  %672 = vdwg.mxu0
  %673 = vmatpush.bf16.msra.mxu0 %v501
  %674 = vmatpush.bf16.msra.mxu0 %v500
  %675 = vmatpush.bf16.msra.mxu0 %v499
  %676 = vmatpush.bf16.msra.mxu0 %v498
  %677 = vmatpush.bf16.msra.mxu0 %v497
  %678 = vmatpush.bf16.msra.mxu0 %v496
  %679 = vmatpush.bf16.msra.mxu0 %v495
  %680 = vmatpush.bf16.msra.mxu0 %v494
  %681 = vmatmul.bf16.gmra.mxu0 %v264
  %v682 = vpop.f32.mrf.mxu0
  %v683 = vadd.f32 %v634, %v682
  %v684 = vpop.f32.mrf.mxu0
  %v685 = vadd.f32 %v636, %v684
  %686 = vmatmul.bf16.gmra.mxu0 %v269
  %v687 = vpop.f32.mrf.mxu0
  %v688 = vadd.f32 %v639, %v687
  %v689 = vpop.f32.mrf.mxu0
  %v690 = vadd.f32 %v641, %v689
  %691 = vmatmul.bf16.gmra.mxu0 %v274
  %v692 = vpop.f32.mrf.mxu0
  %v693 = vadd.f32 %v644, %v692
  %v694 = vpop.f32.mrf.mxu0
  %v695 = vadd.f32 %v646, %v694
  %696 = vmatmul.bf16.gmra.mxu0 %v279
  %v697 = vpop.f32.mrf.mxu0
  %v698 = vadd.f32 %v649, %v697
  %v699 = vpop.f32.mrf.mxu0
  %v700 = vadd.f32 %v651, %v699
  %701 = vmatmul.bf16.gmra.mxu0 %v284
  %v702 = vpop.f32.mrf.mxu0
  %v703 = vadd.f32 %v654, %v702
  %v704 = vpop.f32.mrf.mxu0
  %v705 = vadd.f32 %v656, %v704
  %706 = vmatmul.bf16.gmra.mxu0 %v289
  %v707 = vpop.f32.mrf.mxu0
  %v708 = vadd.f32 %v659, %v707
  %v709 = vpop.f32.mrf.mxu0
  %v710 = vadd.f32 %v661, %v709
  %711 = vmatmul.bf16.gmra.mxu0 %v294
  %v712 = vpop.f32.mrf.mxu0
  %v713 = vadd.f32 %v664, %v712
  %v714 = vpop.f32.mrf.mxu0
  %v715 = vadd.f32 %v666, %v714
  %716 = vmatmul.bf16.gmra.mxu0 %v299
  %v717 = vpop.f32.mrf.mxu0
  %v718 = vadd.f32 %v669, %v717
  %v719 = vpop.f32.mrf.mxu0
  %v720 = vadd.f32 %v671, %v719
  %721 = vdwg.mxu0
  %722 = vmatpush.bf16.msra.mxu0 %v509
  %723 = vmatpush.bf16.msra.mxu0 %v508
  %724 = vmatpush.bf16.msra.mxu0 %v507
  %725 = vmatpush.bf16.msra.mxu0 %v506
  %726 = vmatpush.bf16.msra.mxu0 %v505
  %727 = vmatpush.bf16.msra.mxu0 %v504
  %728 = vmatpush.bf16.msra.mxu0 %v503
  %729 = vmatpush.bf16.msra.mxu0 %v502
  %730 = vmatmul.bf16.gmra.mxu0 %v265
  %v731 = vpop.f32.mrf.mxu0
  %v732 = vadd.f32 %v683, %v731
  %v733 = vpop.f32.mrf.mxu0
  %v734 = vadd.f32 %v685, %v733
  %735 = vmatmul.bf16.gmra.mxu0 %v270
  %v736 = vpop.f32.mrf.mxu0
  %v737 = vadd.f32 %v688, %v736
  %v738 = vpop.f32.mrf.mxu0
  %v739 = vadd.f32 %v690, %v738
  %740 = vmatmul.bf16.gmra.mxu0 %v275
  %v741 = vpop.f32.mrf.mxu0
  %v742 = vadd.f32 %v693, %v741
  %v743 = vpop.f32.mrf.mxu0
  %v744 = vadd.f32 %v695, %v743
  %745 = vmatmul.bf16.gmra.mxu0 %v280
  %v746 = vpop.f32.mrf.mxu0
  %v747 = vadd.f32 %v698, %v746
  %v748 = vpop.f32.mrf.mxu0
  %v749 = vadd.f32 %v700, %v748
  %750 = vmatmul.bf16.gmra.mxu0 %v285
  %v751 = vpop.f32.mrf.mxu0
  %v752 = vadd.f32 %v703, %v751
  %v753 = vpop.f32.mrf.mxu0
  %v754 = vadd.f32 %v705, %v753
  %755 = vmatmul.bf16.gmra.mxu0 %v290
  %v756 = vpop.f32.mrf.mxu0
  %v757 = vadd.f32 %v708, %v756
  %v758 = vpop.f32.mrf.mxu0
  %v759 = vadd.f32 %v710, %v758
  %760 = vmatmul.bf16.gmra.mxu0 %v295
  %v761 = vpop.f32.mrf.mxu0
  %v762 = vadd.f32 %v713, %v761
  %v763 = vpop.f32.mrf.mxu0
  %v764 = vadd.f32 %v715, %v763
  %765 = vmatmul.bf16.gmra.mxu0 %v300
  %v766 = vpop.f32.mrf.mxu0
  %v767 = vadd.f32 %v718, %v766
  %v768 = vpop.f32.mrf.mxu0
  %v769 = vadd.f32 %v720, %v768
  %770 = vdwg.mxu0
  %771 = vmatpush.bf16.msra.mxu0 0
  %772 = vmatpush.bf16.msra.mxu0 0
  %773 = vmatpush.bf16.msra.mxu0 0
  %774 = vmatpush.bf16.msra.mxu0 0
  %775 = vmatpush.bf16.msra.mxu0 %v513
  %776 = vmatpush.bf16.msra.mxu0 %v512
  %777 = vmatpush.bf16.msra.mxu0 %v511
  %778 = vmatpush.bf16.msra.mxu0 %v510
  %779 = vmatmul.bf16.gmra.mxu0 %v552
  %v780 = vpop.f32.mrf.mxu0
  %v781 = vadd.f32 %v732, %v780
  %v782 = vpop.f32.mrf.mxu0
  %v783 = vadd.f32 %v734, %v782
  %784 = vmatmul.bf16.gmra.mxu0 %v555
  %v785 = vpop.f32.mrf.mxu0
  %v786 = vadd.f32 %v737, %v785
  %v787 = vpop.f32.mrf.mxu0
  %v788 = vadd.f32 %v739, %v787
  %789 = vmatmul.bf16.gmra.mxu0 %v558
  %v790 = vpop.f32.mrf.mxu0
  %v791 = vadd.f32 %v742, %v790
  %v792 = vpop.f32.mrf.mxu0
  %v793 = vadd.f32 %v744, %v792
  %794 = vmatmul.bf16.gmra.mxu0 %v561
  %v795 = vpop.f32.mrf.mxu0
  %v796 = vadd.f32 %v747, %v795
  %v797 = vpop.f32.mrf.mxu0
  %v798 = vadd.f32 %v749, %v797
  %799 = vmatmul.bf16.gmra.mxu0 %v564
  %v800 = vpop.f32.mrf.mxu0
  %v801 = vadd.f32 %v752, %v800
  %v802 = vpop.f32.mrf.mxu0
  %v803 = vadd.f32 %v754, %v802
  %804 = vmatmul.bf16.gmra.mxu0 %v567
  %v805 = vpop.f32.mrf.mxu0
  %v806 = vadd.f32 %v757, %v805
  %v807 = vpop.f32.mrf.mxu0
  %v808 = vadd.f32 %v759, %v807
  %809 = vmatmul.bf16.gmra.mxu0 %v570
  %v810 = vpop.f32.mrf.mxu0
  %v811 = vadd.f32 %v762, %v810
  %v812 = vpop.f32.mrf.mxu0
  %v813 = vadd.f32 %v764, %v812
  %814 = vmatmul.bf16.gmra.mxu0 %v573
  %v815 = vpop.f32.mrf.mxu0
  %v816 = vadd.f32 %v767, %v815
  %v817 = vpop.f32.mrf.mxu0
  %v818 = vadd.f32 %v769, %v817
  %819 = vdwg.mxu0
  %820 = vst.msk [vmem:[%s2] sm:$0xff] %vm550, %v781
  %821 = vst.msk [vmem:[%s2 + $0x8] sm:$0xff] %vm550, %v783
  %822 = vst.msk [vmem:[%s2 + $0x10] sm:$0xff] %vm550, %v786
  %823 = vst.msk [vmem:[%s2 + $0x18] sm:$0xff] %vm550, %v788
  %824 = vst.msk [vmem:[%s2 + $0x20] sm:$0xff] %vm550, %v791
  %825 = vst.msk [vmem:[%s2 + $0x28] sm:$0xff] %vm550, %v793
  %826 = vst.msk [vmem:[%s2 + $0x30] sm:$0xff] %vm550, %v796
  %827 = vst.msk [vmem:[%s2 + $0x38] sm:$0xff] %vm550, %v798
  %828 = vst.msk [vmem:[%s2 + $0x40] sm:$0xff] %vm550, %v801
  %829 = vst.msk [vmem:[%s2 + $0x48] sm:$0xff] %vm550, %v803
  %830 = vst.msk [vmem:[%s2 + $0x50] sm:$0xff] %vm550, %v806
  %831 = vst.msk [vmem:[%s2 + $0x58] sm:$0xff] %vm550, %v808
  %832 = vst.msk [vmem:[%s2 + $0x60] sm:$0xff] %vm550, %v811
  %833 = vst.msk [vmem:[%s2 + $0x68] sm:$0xff] %vm550, %v813
  %834 = vst.msk [vmem:[%s2 + $0x70] sm:$0xff] %vm550, %v816
  %835 = vst.msk [vmem:[%s2 + $0x78] sm:$0xff] %vm550, %v818
  %v836 = vsel %vm550, %v781, 0.0
  %v837 = vsel %vm550, %v783, 0.0
  %v838 = vadd.f32 %v836, %v837
  %v839 = vsel %vm550, %v786, 0.0
  %v840 = vadd.f32 %v838, %v839
  %v841 = vsel %vm550, %v788, 0.0
  %v842 = vadd.f32 %v840, %v841
  %v843 = vsel %vm550, %v791, 0.0
  %v844 = vadd.f32 %v842, %v843
  %v845 = vsel %vm550, %v793, 0.0
  %v846 = vadd.f32 %v844, %v845
  %v847 = vsel %vm550, %v796, 0.0
  %v848 = vadd.f32 %v846, %v847
  %v849 = vsel %vm550, %v798, 0.0
  %v850 = vadd.f32 %v848, %v849
  %v851 = vsel %vm550, %v801, 0.0
  %v852 = vadd.f32 %v850, %v851
  %v853 = vsel %vm550, %v803, 0.0
  %v854 = vadd.f32 %v852, %v853
  %v855 = vsel %vm550, %v806, 0.0
  %v856 = vadd.f32 %v854, %v855
  %v857 = vsel %vm550, %v808, 0.0
  %v858 = vadd.f32 %v856, %v857
  %v859 = vsel %vm550, %v811, 0.0
  %v860 = vadd.f32 %v858, %v859
  %v861 = vsel %vm550, %v813, 0.0
  %v862 = vadd.f32 %v860, %v861
  %v863 = vsel %vm550, %v816, 0.0
  %v864 = vadd.f32 %v862, %v863
  %v865 = vsel %vm550, %v818, 0.0
  %v866 = vadd.f32 %v864, %v865
  %v867 = vrot.slane %v866, 4
  %v868 = vadd.f32 %v866, %v867
  %v869 = vrot.slane %v868, 2
  %v870 = vadd.f32 %v868, %v869
  %v871 = vrot.slane %v870, 1
  %v872 = vadd.f32 %v870, %v871
  %v873 = vmul.f32 %v781, %v781
  %v874 = vmul.f32 %v783, %v783
  %v875 = vmul.f32 %v786, %v786
  %v876 = vmul.f32 %v788, %v788
  %v877 = vmul.f32 %v791, %v791
  %v878 = vmul.f32 %v793, %v793
  %v879 = vmul.f32 %v796, %v796
  %v880 = vmul.f32 %v798, %v798
  %v881 = vmul.f32 %v801, %v801
  %v882 = vmul.f32 %v803, %v803
  %v883 = vmul.f32 %v806, %v806
  %v884 = vmul.f32 %v808, %v808
  %v885 = vmul.f32 %v811, %v811
  %v886 = vmul.f32 %v813, %v813
  %v887 = vmul.f32 %v816, %v816
  %v888 = vmul.f32 %v818, %v818
  %v889 = vsel %vm550, %v873, 0.0
  %v890 = vsel %vm550, %v874, 0.0
  %v891 = vadd.f32 %v889, %v890
  %v892 = vsel %vm550, %v875, 0.0
  %v893 = vadd.f32 %v891, %v892
  %v894 = vsel %vm550, %v876, 0.0
  %v895 = vadd.f32 %v893, %v894
  %v896 = vsel %vm550, %v877, 0.0
  %v897 = vadd.f32 %v895, %v896
  %v898 = vsel %vm550, %v878, 0.0
  %v899 = vadd.f32 %v897, %v898
  %v900 = vsel %vm550, %v879, 0.0
  %v901 = vadd.f32 %v899, %v900
  %v902 = vsel %vm550, %v880, 0.0
  %v903 = vadd.f32 %v901, %v902
  %v904 = vsel %vm550, %v881, 0.0
  %v905 = vadd.f32 %v903, %v904
  %v906 = vsel %vm550, %v882, 0.0
  %v907 = vadd.f32 %v905, %v906
  %v908 = vsel %vm550, %v883, 0.0
  %v909 = vadd.f32 %v907, %v908
  %v910 = vsel %vm550, %v884, 0.0
  %v911 = vadd.f32 %v909, %v910
  %v912 = vsel %vm550, %v885, 0.0
  %v913 = vadd.f32 %v911, %v912
  %v914 = vsel %vm550, %v886, 0.0
  %v915 = vadd.f32 %v913, %v914
  %v916 = vsel %vm550, %v887, 0.0
  %v917 = vadd.f32 %v915, %v916
  %v918 = vsel %vm550, %v888, 0.0
  %v919 = vadd.f32 %v917, %v918
  %v920 = vrot.slane %v919, 4
  %v921 = vadd.f32 %v919, %v920
  %v922 = vrot.slane %v921, 2
  %v923 = vadd.f32 %v921, %v922
  %v924 = vrot.slane %v923, 1
  %v925 = vadd.f32 %v923, %v924
  %vm926 = vcmask 1040384
  %v927 = vsel %vm926, %v872, %v925
  %vm928 = vcmask 1041408
  %v929 = vsel %vm928, %v927, 0.0
  %930 = vst.msk [vmem:[%s3] sm:$0xff] %vm550, %v929
  // Predicated region
  $region10: #{vgg_forward.23} parent=0 // pred_check
    _
  $region11: #{vgg_forward.23} parent=0 // pred_check_branch
    %932 = sbr.rel (0) target = $region13
  $region12: #{vgg_forward.23} parent=0 // pred_region
    _
  $region13: #{vgg_forward.23} parent=0 // pred_fallthru
    _
  // Predicated region
  $region14: #{vgg_forward.23} parent=0 // pred_check
    _
  $region15: #{vgg_forward.23} parent=0 // pred_check_branch
    %934 = sbr.rel (0) target = $region17
  $region16: #{vgg_forward.23} parent=0 // pred_region
    _
  $region17: #{vgg_forward.23} parent=0 // pred_fallthru
    _
  // Predicated region
  $region18: #{vgg_forward.23} parent=0 // pred_check
    _
  $region19: #{vgg_forward.23} parent=0 // pred_check_branch
    %936 = sbr.rel (0) target = $region21
  $region20: #{vgg_forward.23} parent=0 // pred_region
    _
  $region21: #{vgg_forward.23} parent=0 // pred_fallthru
    _
  // Predicated region
  $region22: #{vgg_forward.23} parent=0 // pred_check
    _
  $region23: #{vgg_forward.23} parent=0 // pred_check_branch
    %938 = sbr.rel (0) target = $region25
  $region24: #{vgg_forward.23} parent=0 // pred_region
    _
  $region25: #{vgg_forward.23} parent=0 // pred_fallthru
    _

// kernel: vgg_forward.25
$region0: #{vgg_forward.25}
  #allocation0 [shape = 'u32[]', space=smem, size = 0x4, offset = 0x4, fixed_abs, tag = 'smem constant byte address 0x4 - core index']
  #allocation1 [shape = 'u32[72,128]{1,0:T(1,128)}', space=vmem, size = 0x9000, scoped, tag = 'internal scratch']
  %s0 = inlined_call_operand.vmem [shape: bf16[32,576], index: 0, kind: input, shape index: {}]
  %s1 = inlined_call_operand.vmem [shape: bf16[576,128], index: 1, kind: input, shape index: {}]
  %s2 = inlined_call_operand.vmem [shape: f32[32,128], index: 2, kind: output, shape index: {0}]
  %s3 = inlined_call_operand.vmem [shape: f32[8,128], index: 3, kind: output, shape index: {1}]
  %4 = xla_tuple %s2, %s3
  %s5 = sld [smem:[#allocation0]]
  $region26: #{vgg_forward.25} parent=0
    _
  %s7 = ssub.s32 1, %s5
  %s8 = scalar_select 0, %s7, %s5
  // Predicated region
  $region2: #{vgg_forward.25} parent=0 // pred_check
    _
  $region3: #{vgg_forward.25} parent=0 // pred_check_branch
    %10 = sbr.rel (0) target = $region5
  $region4: #{vgg_forward.25} parent=0 // pred_region
    _
  $region5: #{vgg_forward.25} parent=0 // pred_fallthru
    _
  // Predicated region
  $region6: #{vgg_forward.25} parent=0 // pred_check
    _
  $region7: #{vgg_forward.25} parent=0 // pred_check_branch
    %12 = sbr.rel (0) target = $region9
  $region8: #{vgg_forward.25} parent=0 // pred_region
    _
  $region9: #{vgg_forward.25} parent=0 // pred_fallthru
    _
  %v14 = vld [vmem:[%s0] sm:$0xff]
  %v15 = vld [vmem:[%s0 + $0x8] sm:$0xff]
  %v16 = vld [vmem:[%s0 + $0x10] sm:$0xf]
  %v17 = vld [vmem:[%s0 + $0x14] sm:$0xff]
  %v18 = vld [vmem:[%s0 + $0x1c] sm:$0xff]
  %v19 = vld [vmem:[%s0 + $0x24] sm:$0xf]
  %v20 = vld [vmem:[%s0 + $0x28] sm:$0xff]
  %v21 = vld [vmem:[%s0 + $0x30] sm:$0xff]
  %v22 = vld [vmem:[%s0 + $0x38] sm:$0xf]
  %v23 = vld [vmem:[%s0 + $0x3c] sm:$0xff]
  %v24 = vld [vmem:[%s0 + $0x44] sm:$0xff]
  %v25 = vld [vmem:[%s0 + $0x4c] sm:$0xf]
  %v26 = vld [vmem:[%s1] sm:$0xf]
  %v27 = vld [vmem:[%s1 + $0x4] sm:$0xf]
  %v28 = vld [vmem:[%s1 + $0x8] sm:$0xf]
  %v29 = vld [vmem:[%s1 + $0xc] sm:$0xf]
  %v30 = vld [vmem:[%s1 + $0x10] sm:$0xf]
  %v31 = vld [vmem:[%s1 + $0x14] sm:$0xf]
  %v32 = vld [vmem:[%s1 + $0x18] sm:$0xf]
  %v33 = vld [vmem:[%s1 + $0x1c] sm:$0xf]
  %v34 = vld [vmem:[%s1 + $0x20] sm:$0xf]
  %v35 = vld [vmem:[%s1 + $0x24] sm:$0xf]
  %v36 = vld [vmem:[%s1 + $0x28] sm:$0xf]
  %v37 = vld [vmem:[%s1 + $0x2c] sm:$0xf]
  %v38 = vld [vmem:[%s1 + $0x30] sm:$0xf]
  %v39 = vld [vmem:[%s1 + $0x34] sm:$0xf]
  %v40 = vld [vmem:[%s1 + $0x38] sm:$0xf]
  %v41 = vld [vmem:[%s1 + $0x3c] sm:$0xf]
  %v42 = vld [vmem:[%s1 + $0x40] sm:$0xf]
  %v43 = vld [vmem:[%s1 + $0x44] sm:$0xf]
  %v44 = vld [vmem:[%s1 + $0x48] sm:$0xf]
  %v45 = vld [vmem:[%s1 + $0x4c] sm:$0xf]
  %v46 = vld [vmem:[%s1 + $0x50] sm:$0xf]
  %v47 = vld [vmem:[%s1 + $0x54] sm:$0xf]
  %v48 = vld [vmem:[%s1 + $0x58] sm:$0xf]
  %v49 = vld [vmem:[%s1 + $0x5c] sm:$0xf]
  %v50 = vld [vmem:[%s1 + $0x60] sm:$0xf]
  %v51 = vld [vmem:[%s1 + $0x64] sm:$0xf]
  %v52 = vld [vmem:[%s1 + $0x68] sm:$0xf]
  %v53 = vld [vmem:[%s1 + $0x6c] sm:$0xf]
  %v54 = vld [vmem:[%s1 + $0x70] sm:$0xf]
  %v55 = vld [vmem:[%s1 + $0x74] sm:$0xf]
  %v56 = vld [vmem:[%s1 + $0x78] sm:$0xf]
  %v57 = vld [vmem:[%s1 + $0x7c] sm:$0xf]
  %v58 = vld [vmem:[%s1 + $0x80] sm:$0xf]
  %v59 = vld [vmem:[%s1 + $0x84] sm:$0xf]
  %v60 = vld [vmem:[%s1 + $0x88] sm:$0xf]
  %v61 = vld [vmem:[%s1 + $0x8c] sm:$0xf]
  %v62 = vld [vmem:[%s1 + $0x90] sm:$0xf]
  %v63 = vld [vmem:[%s1 + $0x94] sm:$0xf]
  %v64 = vld [vmem:[%s1 + $0x98] sm:$0xf]
  %v65 = vld [vmem:[%s1 + $0x9c] sm:$0xf]
  %v66 = vld [vmem:[%s1 + $0xa0] sm:$0xf]
  %v67 = vld [vmem:[%s1 + $0xa4] sm:$0xf]
  %v68 = vld [vmem:[%s1 + $0xa8] sm:$0xf]
  %v69 = vld [vmem:[%s1 + $0xac] sm:$0xf]
  %v70 = vld [vmem:[%s1 + $0xb0] sm:$0xf]
  %v71 = vld [vmem:[%s1 + $0xb4] sm:$0xf]
  %v72 = vld [vmem:[%s1 + $0xb8] sm:$0xf]
  %v73 = vld [vmem:[%s1 + $0xbc] sm:$0xf]
  %v74 = vld [vmem:[%s1 + $0xc0] sm:$0xf]
  %v75 = vld [vmem:[%s1 + $0xc4] sm:$0xf]
  %v76 = vld [vmem:[%s1 + $0xc8] sm:$0xf]
  %v77 = vld [vmem:[%s1 + $0xcc] sm:$0xf]
  %v78 = vld [vmem:[%s1 + $0xd0] sm:$0xf]
  %v79 = vld [vmem:[%s1 + $0xd4] sm:$0xf]
  %v80 = vld [vmem:[%s1 + $0xd8] sm:$0xf]
  %v81 = vld [vmem:[%s1 + $0xdc] sm:$0xf]
  %v82 = vld [vmem:[%s1 + $0xe0] sm:$0xf]
  %v83 = vld [vmem:[%s1 + $0xe4] sm:$0xf]
  %v84 = vld [vmem:[%s1 + $0xe8] sm:$0xf]
  %v85 = vld [vmem:[%s1 + $0xec] sm:$0xf]
  %v86 = vld [vmem:[%s1 + $0xf0] sm:$0xf]
  %v87 = vld [vmem:[%s1 + $0xf4] sm:$0xf]
  %v88 = vld [vmem:[%s1 + $0xf8] sm:$0xf]
  %v89 = vld [vmem:[%s1 + $0xfc] sm:$0xf]
  %v90 = vld [vmem:[%s1 + $0x100] sm:$0xf]
  %v91 = vld [vmem:[%s1 + $0x104] sm:$0xf]
  %v92 = vld [vmem:[%s1 + $0x108] sm:$0xf]
  %v93 = vld [vmem:[%s1 + $0x10c] sm:$0xf]
  %v94 = vld [vmem:[%s1 + $0x110] sm:$0xf]
  %v95 = vld [vmem:[%s1 + $0x114] sm:$0xf]
  %v96 = vld [vmem:[%s1 + $0x118] sm:$0xf]
  %v97 = vld [vmem:[%s1 + $0x11c] sm:$0xf]
  %v110 = vunpack.c.l.b16 %v14
  %v111 = vunpack.c.h.b16 %v14
  %v112 = vunpack.c.l.b16 %v15
  %v113 = vunpack.c.h.b16 %v15
  %v114 = vunpack.c.l.b16 %v16
  %v115 = vunpack.c.l.b16 %v17
  %v116 = vunpack.c.h.b16 %v17
  %v117 = vunpack.c.l.b16 %v18
  %v118 = vunpack.c.h.b16 %v18
  %v119 = vunpack.c.l.b16 %v19
  %v120 = vunpack.c.l.b16 %v20
  %v121 = vunpack.c.h.b16 %v20
  %v122 = vunpack.c.l.b16 %v21
  %v123 = vunpack.c.h.b16 %v21
  %v124 = vunpack.c.l.b16 %v22
  %v125 = vunpack.c.l.b16 %v23
  %v126 = vunpack.c.h.b16 %v23
  %v127 = vunpack.c.l.b16 %v24
  %v128 = vunpack.c.h.b16 %v24
  %v129 = vunpack.c.l.b16 %v25
  %v130 = vpack.c.b16 %v115, %v110
  %v131 = vpack.c.b16 %v116, %v111
  %v132 = vpack.c.b16 %v117, %v112
  %v133 = vpack.c.b16 %v118, %v113
  %v134 = vpack.c.b16 %v119, %v114
  %v135 = vpack.c.b16 %v125, %v120
  %v136 = vpack.c.b16 %v126, %v121
  %v137 = vpack.c.b16 %v127, %v122
  %v138 = vpack.c.b16 %v128, %v123
  %v139 = vpack.c.b16 %v129, %v124
  %v220 = vunpack.c.l.b16 %v26
  %v221 = vunpack.c.l.b16 %v27
  %v222 = vunpack.c.l.b16 %v28
  %v223 = vunpack.c.l.b16 %v29
  %v224 = vunpack.c.l.b16 %v30
  %v225 = vunpack.c.l.b16 %v31
  %v226 = vunpack.c.l.b16 %v32
  %v227 = vunpack.c.l.b16 %v33
  %v228 = vunpack.c.l.b16 %v34
  %v229 = vunpack.c.l.b16 %v35
  %v230 = vunpack.c.l.b16 %v36
  %v231 = vunpack.c.l.b16 %v37
  %v232 = vunpack.c.l.b16 %v38
  %v233 = vunpack.c.l.b16 %v39
  %v234 = vunpack.c.l.b16 %v40
  %v235 = vunpack.c.l.b16 %v41
  %v236 = vunpack.c.l.b16 %v42
  %v237 = vunpack.c.l.b16 %v43
  %v238 = vunpack.c.l.b16 %v44
  %v239 = vunpack.c.l.b16 %v45
  %v240 = vunpack.c.l.b16 %v46
  %v241 = vunpack.c.l.b16 %v47
  %v242 = vunpack.c.l.b16 %v48
  %v243 = vunpack.c.l.b16 %v49
  %v244 = vunpack.c.l.b16 %v50
  %v245 = vunpack.c.l.b16 %v51
  %v246 = vunpack.c.l.b16 %v52
  %v247 = vunpack.c.l.b16 %v53
  %v248 = vunpack.c.l.b16 %v54
  %v249 = vunpack.c.l.b16 %v55
  %v250 = vunpack.c.l.b16 %v56
  %v251 = vunpack.c.l.b16 %v57
  %v252 = vunpack.c.l.b16 %v58
  %v253 = vunpack.c.l.b16 %v59
  %v254 = vunpack.c.l.b16 %v60
  %v255 = vunpack.c.l.b16 %v61
  %v256 = vunpack.c.l.b16 %v62
  %v257 = vunpack.c.l.b16 %v63
  %v258 = vunpack.c.l.b16 %v64
  %v259 = vunpack.c.l.b16 %v65
  %v260 = vunpack.c.l.b16 %v66
  %v261 = vunpack.c.l.b16 %v67
  %v262 = vunpack.c.l.b16 %v68
  %v263 = vunpack.c.l.b16 %v69
  %v264 = vunpack.c.l.b16 %v70
  %v265 = vunpack.c.l.b16 %v71
  %v266 = vunpack.c.l.b16 %v72
  %v267 = vunpack.c.l.b16 %v73
  %v268 = vunpack.c.l.b16 %v74
  %v269 = vunpack.c.l.b16 %v75
  %v270 = vunpack.c.l.b16 %v76
  %v271 = vunpack.c.l.b16 %v77
  %v272 = vunpack.c.l.b16 %v78
  %v273 = vunpack.c.l.b16 %v79
  %v274 = vunpack.c.l.b16 %v80
  %v275 = vunpack.c.l.b16 %v81
  %v276 = vunpack.c.l.b16 %v82
  %v277 = vunpack.c.l.b16 %v83
  %v278 = vunpack.c.l.b16 %v84
  %v279 = vunpack.c.l.b16 %v85
  %v280 = vunpack.c.l.b16 %v86
  %v281 = vunpack.c.l.b16 %v87
  %v282 = vunpack.c.l.b16 %v88
  %v283 = vunpack.c.l.b16 %v89
  %v284 = vunpack.c.l.b16 %v90
  %v285 = vunpack.c.l.b16 %v91
  %v286 = vunpack.c.l.b16 %v92
  %v287 = vunpack.c.l.b16 %v93
  %v288 = vunpack.c.l.b16 %v94
  %v289 = vunpack.c.l.b16 %v95
  %v290 = vunpack.c.l.b16 %v96
  %v291 = vunpack.c.l.b16 %v97
  %v292 = vpack.c.b16 %v221, %v220
  %v293 = vpack.c.b16 %v223, %v222
  %v294 = vpack.c.b16 %v225, %v224
  %v295 = vpack.c.b16 %v227, %v226
  %v296 = vpack.c.b16 %v229, %v228
  %v297 = vpack.c.b16 %v231, %v230
  %v298 = vpack.c.b16 %v233, %v232
  %v299 = vpack.c.b16 %v235, %v234
  %v300 = vpack.c.b16 %v237, %v236
  %v301 = vpack.c.b16 %v239, %v238
  %v302 = vpack.c.b16 %v241, %v240
  %v303 = vpack.c.b16 %v243, %v242
  %v304 = vpack.c.b16 %v245, %v244
  %v305 = vpack.c.b16 %v247, %v246
  %v306 = vpack.c.b16 %v249, %v248
  %v307 = vpack.c.b16 %v251, %v250
  %v308 = vpack.c.b16 %v253, %v252
  %v309 = vpack.c.b16 %v255, %v254
  %v310 = vpack.c.b16 %v257, %v256
  %v311 = vpack.c.b16 %v259, %v258
  %v312 = vpack.c.b16 %v261, %v260
  %v313 = vpack.c.b16 %v263, %v262
  %v314 = vpack.c.b16 %v265, %v264
  %v315 = vpack.c.b16 %v267, %v266
  %v316 = vpack.c.b16 %v269, %v268
  %v317 = vpack.c.b16 %v271, %v270
  %v318 = vpack.c.b16 %v273, %v272
  %v319 = vpack.c.b16 %v275, %v274
  %v320 = vpack.c.b16 %v277, %v276
  %v321 = vpack.c.b16 %v279, %v278
  %v322 = vpack.c.b16 %v281, %v280
  %v323 = vpack.c.b16 %v283, %v282
  %v324 = vpack.c.b16 %v285, %v284
  %v325 = vpack.c.b16 %v287, %v286
  %v326 = vpack.c.b16 %v289, %v288
  %v327 = vpack.c.b16 %v291, %v290
  %vm364 = vcmask 523264
  %v366 = vsel %vm364, %v134, 0
  %v369 = vsel %vm364, %v139, 0
  %371 = vmatpush.bf16.msra.mxu0 %v299
  %372 = vmatpush.bf16.msra.mxu0 %v298
  %373 = vmatpush.bf16.msra.mxu0 %v297
  %374 = vmatpush.bf16.msra.mxu0 %v296
  %375 = vmatpush.bf16.msra.mxu0 %v295
  %376 = vmatpush.bf16.msra.mxu0 %v294
  %377 = vmatpush.bf16.msra.mxu0 %v293
  %378 = vmatpush.bf16.msra.mxu0 %v292
  %379 = vmatmul.bf16.gmra.mxu0 %v130
  %v380 = vpop.f32.mrf.mxu0
  %v381 = vadd.f32 0.0, %v380
  %v382 = vpop.f32.mrf.mxu0
  %v383 = vadd.f32 0.0, %v382
  %384 = vmatmul.bf16.gmra.mxu0 %v135
  %v385 = vpop.f32.mrf.mxu0
  %v386 = vadd.f32 0.0, %v385
  %v387 = vpop.f32.mrf.mxu0
  %v388 = vadd.f32 0.0, %v387
  %389 = vdwg.mxu0
  %390 = vmatpush.bf16.msra.mxu0 %v307
  %391 = vmatpush.bf16.msra.mxu0 %v306
  %392 = vmatpush.bf16.msra.mxu0 %v305
  %393 = vmatpush.bf16.msra.mxu0 %v304
  %394 = vmatpush.bf16.msra.mxu0 %v303
  %395 = vmatpush.bf16.msra.mxu0 %v302
  %396 = vmatpush.bf16.msra.mxu0 %v301
  %397 = vmatpush.bf16.msra.mxu0 %v300
  %398 = vmatmul.bf16.gmra.mxu0 %v131
  %v399 = vpop.f32.mrf.mxu0
  %v400 = vadd.f32 %v381, %v399
  %v401 = vpop.f32.mrf.mxu0
  %v402 = vadd.f32 %v383, %v401
  %403 = vmatmul.bf16.gmra.mxu0 %v136
  %v404 = vpop.f32.mrf.mxu0
  %v405 = vadd.f32 %v386, %v404
  %v406 = vpop.f32.mrf.mxu0
  %v407 = vadd.f32 %v388, %v406
  %408 = vdwg.mxu0
  %409 = vmatpush.bf16.msra.mxu0 %v315
  %410 = vmatpush.bf16.msra.mxu0 %v314
  %411 = vmatpush.bf16.msra.mxu0 %v313
  %412 = vmatpush.bf16.msra.mxu0 %v312
  %413 = vmatpush.bf16.msra.mxu0 %v311
  %414 = vmatpush.bf16.msra.mxu0 %v310
  %415 = vmatpush.bf16.msra.mxu0 %v309
  %416 = vmatpush.bf16.msra.mxu0 %v308
  %417 = vmatmul.bf16.gmra.mxu0 %v132
  %v418 = vpop.f32.mrf.mxu0
  %v419 = vadd.f32 %v400, %v418
  %v420 = vpop.f32.mrf.mxu0
  %v421 = vadd.f32 %v402, %v420
  %422 = vmatmul.bf16.gmra.mxu0 %v137
  %v423 = vpop.f32.mrf.mxu0
  %v424 = vadd.f32 %v405, %v423
  %v425 = vpop.f32.mrf.mxu0
  %v426 = vadd.f32 %v407, %v425
  %427 = vdwg.mxu0
  %428 = vmatpush.bf16.msra.mxu0 %v323
  %429 = vmatpush.bf16.msra.mxu0 %v322
  %430 = vmatpush.bf16.msra.mxu0 %v321
  %431 = vmatpush.bf16.msra.mxu0 %v320
  %432 = vmatpush.bf16.msra.mxu0 %v319
  %433 = vmatpush.bf16.msra.mxu0 %v318
  %434 = vmatpush.bf16.msra.mxu0 %v317
  %435 = vmatpush.bf16.msra.mxu0 %v316
  %436 = vmatmul.bf16.gmra.mxu0 %v133
  %v437 = vpop.f32.mrf.mxu0
  %v438 = vadd.f32 %v419, %v437
  %v439 = vpop.f32.mrf.mxu0
  %v440 = vadd.f32 %v421, %v439
  %441 = vmatmul.bf16.gmra.mxu0 %v138
  %v442 = vpop.f32.mrf.mxu0
  %v443 = vadd.f32 %v424, %v442
  %v444 = vpop.f32.mrf.mxu0
  %v445 = vadd.f32 %v426, %v444
  %446 = vdwg.mxu0
  %447 = vmatpush.bf16.msra.mxu0 0
  %448 = vmatpush.bf16.msra.mxu0 0
  %449 = vmatpush.bf16.msra.mxu0 0
  %450 = vmatpush.bf16.msra.mxu0 0
  %451 = vmatpush.bf16.msra.mxu0 %v327
  %452 = vmatpush.bf16.msra.mxu0 %v326
  %453 = vmatpush.bf16.msra.mxu0 %v325
  %454 = vmatpush.bf16.msra.mxu0 %v324
  %455 = vmatmul.bf16.gmra.mxu0 %v366
  %v456 = vpop.f32.mrf.mxu0
  %v457 = vadd.f32 %v438, %v456
  %v458 = vpop.f32.mrf.mxu0
  %v459 = vadd.f32 %v440, %v458
  %460 = vmatmul.bf16.gmra.mxu0 %v369
  %v461 = vpop.f32.mrf.mxu0
  %v462 = vadd.f32 %v443, %v461
  %v463 = vpop.f32.mrf.mxu0
  %v464 = vadd.f32 %v445, %v463
  %465 = vdwg.mxu0
  %466 = vst [vmem:[%s2] sm:$0xff] %v457
  %467 = vst [vmem:[%s2 + $0x8] sm:$0xff] %v459
  %468 = vst [vmem:[%s2 + $0x10] sm:$0xff] %v462
  %469 = vst [vmem:[%s2 + $0x18] sm:$0xff] %v464
  %v470 = vadd.f32 %v457, %v459
  %v471 = vadd.f32 %v470, %v462
  %v472 = vadd.f32 %v471, %v464
  %v473 = vrot.slane %v472, 4
  %v474 = vadd.f32 %v472, %v473
  %v475 = vrot.slane %v474, 2
  %v476 = vadd.f32 %v474, %v475
  %v477 = vrot.slane %v476, 1
  %v478 = vadd.f32 %v476, %v477
  %v479 = vmul.f32 %v457, %v457
  %v480 = vmul.f32 %v459, %v459
  %v481 = vmul.f32 %v462, %v462
  %v482 = vmul.f32 %v464, %v464
  %v483 = vadd.f32 %v479, %v480
  %v484 = vadd.f32 %v483, %v481
  %v485 = vadd.f32 %v484, %v482
  %v486 = vrot.slane %v485, 4
  %v487 = vadd.f32 %v485, %v486
  %v488 = vrot.slane %v487, 2
  %v489 = vadd.f32 %v487, %v488
  %v490 = vrot.slane %v489, 1
  %v491 = vadd.f32 %v489, %v490
  %vm492 = vcmask 1040384
  %v493 = vsel %vm492, %v478, %v491
  %vm494 = vcmask 1041408
  %v495 = vsel %vm494, %v493, 0.0
  %496 = vst [vmem:[%s3] sm:$0xff] %v495
  // Predicated region
  $region10: #{vgg_forward.25} parent=0 // pred_check
    _
  $region11: #{vgg_forward.25} parent=0 // pred_check_branch
    %498 = sbr.rel (0) target = $region13
  $region12: #{vgg_forward.25} parent=0 // pred_region
    _
  $region13: #{vgg_forward.25} parent=0 // pred_fallthru
    _
  // Predicated region
  $region14: #{vgg_forward.25} parent=0 // pred_check
    _
  $region15: #{vgg_forward.25} parent=0 // pred_check_branch
    %500 = sbr.rel (0) target = $region17
  $region16: #{vgg_forward.25} parent=0 // pred_region
    _
  $region17: #{vgg_forward.25} parent=0 // pred_fallthru
    _
  // Predicated region
  $region18: #{vgg_forward.25} parent=0 // pred_check
    _
  $region19: #{vgg_forward.25} parent=0 // pred_check_branch
    %502 = sbr.rel (0) target = $region21
  $region20: #{vgg_forward.25} parent=0 // pred_region
    _
  $region21: #{vgg_forward.25} parent=0 // pred_fallthru
    _
  // Predicated region
  $region22: #{vgg_forward.25} parent=0 // pred_check
    _
  $region23: #{vgg_forward.25} parent=0 // pred_check_branch
    %504 = sbr.rel (0) target = $region25
  $region24: #{vgg_forward.25} parent=0 // pred_region
    _
  $region25: #{vgg_forward.25} parent=0 // pred_fallthru
    _

// kernel: vgg_forward.28
$region0: #{vgg_forward.28}
  #allocation0 [shape = 'u32[]', space=smem, size = 0x4, offset = 0x4, fixed_abs, tag = 'smem constant byte address 0x4 - core index']
  #allocation1 [shape = 'u32[72,128]{1,0:T(1,128)}', space=vmem, size = 0x9000, scoped, tag = 'internal scratch']
  %s0 = inlined_call_operand.vmem [shape: f32[4,2,2,256], index: 0, kind: input, shape index: {}]
  %s1 = inlined_call_operand.vmem [shape: f32[1,256], index: 1, kind: input, shape index: {}]
  %s2 = inlined_call_operand.vmem [shape: f32[1,256], index: 2, kind: input, shape index: {}]
  %s3 = inlined_call_operand.vmem [shape: bf16[4,2,128], index: 3, kind: output, shape index: {}]
  %s4 = sld [smem:[#allocation0]]
  $region22: #{vgg_forward.28} parent=0
    _
  %s6 = ssub.s32 1, %s4
  %s7 = scalar_select 0, %s6, %s4
  // Predicated region
  $region2: #{vgg_forward.28} parent=0 // pred_check
    _
  $region3: #{vgg_forward.28} parent=0 // pred_check_branch
    %9 = sbr.rel (0) target = $region5
  $region4: #{vgg_forward.28} parent=0 // pred_region
    _
  $region5: #{vgg_forward.28} parent=0 // pred_fallthru
    _
  // Predicated region
  $region6: #{vgg_forward.28} parent=0 // pred_check
    _
  $region7: #{vgg_forward.28} parent=0 // pred_check_branch
    %11 = sbr.rel (0) target = $region9
  $region8: #{vgg_forward.28} parent=0 // pred_region
    _
  $region9: #{vgg_forward.28} parent=0 // pred_fallthru
    _
  // Predicated region
  $region10: #{vgg_forward.28} parent=0 // pred_check
    _
  $region11: #{vgg_forward.28} parent=0 // pred_check_branch
    %13 = sbr.rel (0) target = $region13
  $region12: #{vgg_forward.28} parent=0 // pred_region
    _
  $region13: #{vgg_forward.28} parent=0 // pred_fallthru
    _
  %v14 = vld [vmem:[%s0] sm:$0xf]
  %v15 = vld [vmem:[%s0 + $0x4] sm:$0xf]
  %v16 = vld [vmem:[%s0 + $0x8] sm:$0xf]
  %v17 = vld [vmem:[%s0 + $0xc] sm:$0xf]
  %v18 = vld [vmem:[%s0 + $0x10] sm:$0xf]
  %v19 = vld [vmem:[%s0 + $0x14] sm:$0xf]
  %v20 = vld [vmem:[%s0 + $0x18] sm:$0xf]
  %v21 = vld [vmem:[%s0 + $0x1c] sm:$0xf]
  %v22 = vld [vmem:[%s1] sm:$0x3]
  %v24 = vperm.slane %v22, 0
  %v25 = vperm.slane %v22, 1
  %v26 = vrot.slane %v25, 6
  %vm27 = vcmask 1041408
  %v28 = vsel %vm27, %v24, %v26
  %v30 = vmul.f32 %v14, %v28
  %v31 = vmul.f32 %v15, %v28
  %v32 = vmul.f32 %v16, %v28
  %v33 = vmul.f32 %v17, %v28
  %v34 = vmul.f32 %v18, %v28
  %v35 = vmul.f32 %v19, %v28
  %v36 = vmul.f32 %v20, %v28
  %v37 = vmul.f32 %v21, %v28
  %v38 = vld [vmem:[%s2] sm:$0x3]
  %v40 = vperm.slane %v38, 0
  %v41 = vperm.slane %v38, 1
  %v42 = vrot.slane %v41, 6
  %v43 = vsel %vm27, %v40, %v42
  %v45 = vadd.f32 %v30, %v43
  %v46 = vadd.f32 %v31, %v43
  %v47 = vadd.f32 %v32, %v43
  %v48 = vadd.f32 %v33, %v43
  %v49 = vadd.f32 %v34, %v43
  %v50 = vadd.f32 %v35, %v43
  %v51 = vadd.f32 %v36, %v43
  %v52 = vadd.f32 %v37, %v43
  %v53 = vmax.f32 %v45, 0.0
  %v54 = vmax.f32 %v46, 0.0
  %v55 = vmax.f32 %v47, 0.0
  %v56 = vmax.f32 %v48, 0.0
  %v57 = vmax.f32 %v49, 0.0
  %v58 = vmax.f32 %v50, 0.0
  %v59 = vmax.f32 %v51, 0.0
  %v60 = vmax.f32 %v52, 0.0
  %v61 = vmax.f32 %v53, %v54
  %v62 = vmax.f32 %v55, %v56
  %v63 = vmax.f32 %v57, %v58
  %v64 = vmax.f32 %v59, %v60
  %v69 = vrot.slane %v61, 2
  %v70 = vrot.slane %v62, 2
  %v71 = vrot.slane %v63, 2
  %v72 = vrot.slane %v64, 2
  %v77 = vmax.f32 %v61, %v69
  %v78 = vmax.f32 %v62, %v70
  %v79 = vmax.f32 %v63, %v71
  %v80 = vmax.f32 %v64, %v72
  %v81 = vpack.c.bf16 %v77, %v77
  %v82 = vpack.c.bf16 %v78, %v78
  %v83 = vpack.c.bf16 %v79, %v79
  %v84 = vpack.c.bf16 %v80, %v80
  %85 = vst [vmem:[%s3] sm:$0x1] %v81
  %86 = vst [vmem:[%s3 + $0x1] sm:$0x1] %v82
  %87 = vst [vmem:[%s3 + $0x2] sm:$0x1] %v83
  %88 = vst [vmem:[%s3 + $0x3] sm:$0x1] %v84
  // Predicated region
  $region14: #{vgg_forward.28} parent=0 // pred_check
    _
  $region15: #{vgg_forward.28} parent=0 // pred_check_branch
    %90 = sbr.rel (0) target = $region17
  $region16: #{vgg_forward.28} parent=0 // pred_region
    _
  $region17: #{vgg_forward.28} parent=0 // pred_fallthru
    _
  // Predicated region
  $region18: #{vgg_forward.28} parent=0 // pred_check
    _
  $region19: #{vgg_forward.28} parent=0 // pred_check_branch
    %92 = sbr.rel (0) target = $region21
  $region20: #{vgg_forward.28} parent=0 // pred_region
    _
  $region21: #{vgg_forward.28} parent=0 // pred_fallthru
    _

// kernel: vgg_forward.30
$region0: #{vgg_forward.30}
  #allocation0 [shape = 'u32[]', space=smem, size = 0x4, offset = 0x4, fixed_abs, tag = 'smem constant byte address 0x4 - core index']
  #allocation1 [shape = 'u32[72,128]{1,0:T(1,128)}', space=vmem, size = 0x9000, scoped, tag = 'internal scratch']
  %s0 = inlined_call_operand.vmem [shape: f32[8,128], index: 0, kind: input, shape index: {}]
  %s1 = inlined_call_operand.vmem [shape: f32[1,128], index: 1, kind: input, shape index: {}]
  %s2 = inlined_call_operand.vmem [shape: f32[1,128], index: 2, kind: input, shape index: {}]
  %s3 = inlined_call_operand.vmem [shape: bf16[8,128], index: 3, kind: output, shape index: {}]
  %s4 = sld [smem:[#allocation0]]
  $region22: #{vgg_forward.30} parent=0
    _
  %s6 = ssub.s32 1, %s4
  %s7 = scalar_select 0, %s6, %s4
  // Predicated region
  $region2: #{vgg_forward.30} parent=0 // pred_check
    _
  $region3: #{vgg_forward.30} parent=0 // pred_check_branch
    %9 = sbr.rel (0) target = $region5
  $region4: #{vgg_forward.30} parent=0 // pred_region
    _
  $region5: #{vgg_forward.30} parent=0 // pred_fallthru
    _
  // Predicated region
  $region6: #{vgg_forward.30} parent=0 // pred_check
    _
  $region7: #{vgg_forward.30} parent=0 // pred_check_branch
    %11 = sbr.rel (0) target = $region9
  $region8: #{vgg_forward.30} parent=0 // pred_region
    _
  $region9: #{vgg_forward.30} parent=0 // pred_fallthru
    _
  // Predicated region
  $region10: #{vgg_forward.30} parent=0 // pred_check
    _
  $region11: #{vgg_forward.30} parent=0 // pred_check_branch
    %13 = sbr.rel (0) target = $region13
  $region12: #{vgg_forward.30} parent=0 // pred_region
    _
  $region13: #{vgg_forward.30} parent=0 // pred_fallthru
    _
  %v14 = vld [vmem:[%s0] sm:$0xff]
  %v15 = vld [vmem:[%s1] sm:$0x1]
  %v17 = vperm.slane %v15, 0
  %v19 = vmul.f32 %v14, %v17
  %v20 = vld [vmem:[%s2] sm:$0x1]
  %v22 = vperm.slane %v20, 0
  %v24 = vadd.f32 %v19, %v22
  %v25 = vmax.f32 %v24, 0.0
  %v26 = vpack.c.bf16 %v25, %v25
  %27 = vst [vmem:[%s3] sm:$0xf] %v26
  // Predicated region
  $region14: #{vgg_forward.30} parent=0 // pred_check
    _
  $region15: #{vgg_forward.30} parent=0 // pred_check_branch
    %29 = sbr.rel (0) target = $region17
  $region16: #{vgg_forward.30} parent=0 // pred_region
    _
  $region17: #{vgg_forward.30} parent=0 // pred_fallthru
    _
  // Predicated region
  $region18: #{vgg_forward.30} parent=0 // pred_check
    _
  $region19: #{vgg_forward.30} parent=0 // pred_check_branch
    %31 = sbr.rel (0) target = $region21
  $region20: #{vgg_forward.30} parent=0 // pred_region
    _
  $region21: #{vgg_forward.30} parent=0 // pred_fallthru
    _

// kernel: vgg_forward.32
$region0: #{vgg_forward.32}
  #allocation0 [shape = 'u32[]', space=smem, size = 0x4, offset = 0x4, fixed_abs, tag = 'smem constant byte address 0x4 - core index']
  #allocation1 [shape = 'u32[72,128]{1,0:T(1,128)}', space=vmem, size = 0x9000, scoped, tag = 'internal scratch']
  %s0 = inlined_call_operand.vmem [shape: f32[2,2,1,256], index: 0, kind: input, shape index: {}]
  %s1 = inlined_call_operand.vmem [shape: f32[1,256], index: 1, kind: input, shape index: {}]
  %s2 = inlined_call_operand.vmem [shape: f32[1,256], index: 2, kind: input, shape index: {}]
  %s3 = inlined_call_operand.vmem [shape: bf16[2,1,128], index: 3, kind: output, shape index: {}]
  %s4 = sld [smem:[#allocation0]]
  $region22: #{vgg_forward.32} parent=0
    _
  %s6 = ssub.s32 1, %s4
  %s7 = scalar_select 0, %s6, %s4
  // Predicated region
  $region2: #{vgg_forward.32} parent=0 // pred_check
    _
  $region3: #{vgg_forward.32} parent=0 // pred_check_branch
    %9 = sbr.rel (0) target = $region5
  $region4: #{vgg_forward.32} parent=0 // pred_region
    _
  $region5: #{vgg_forward.32} parent=0 // pred_fallthru
    _
  // Predicated region
  $region6: #{vgg_forward.32} parent=0 // pred_check
    _
  $region7: #{vgg_forward.32} parent=0 // pred_check_branch
    %11 = sbr.rel (0) target = $region9
  $region8: #{vgg_forward.32} parent=0 // pred_region
    _
  $region9: #{vgg_forward.32} parent=0 // pred_fallthru
    _
  // Predicated region
  $region10: #{vgg_forward.32} parent=0 // pred_check
    _
  $region11: #{vgg_forward.32} parent=0 // pred_check_branch
    %13 = sbr.rel (0) target = $region13
  $region12: #{vgg_forward.32} parent=0 // pred_region
    _
  $region13: #{vgg_forward.32} parent=0 // pred_fallthru
    _
  %v14 = vld [vmem:[%s0] sm:$0x3]
  %v15 = vld [vmem:[%s0 + $0x2] sm:$0x3]
  %v16 = vld [vmem:[%s0 + $0x4] sm:$0x3]
  %v17 = vld [vmem:[%s0 + $0x6] sm:$0x3]
  %v18 = vld [vmem:[%s1] sm:$0x3]
  %v19 = vmul.f32 %v14, %v18
  %v20 = vmul.f32 %v15, %v18
  %v21 = vmul.f32 %v16, %v18
  %v22 = vmul.f32 %v17, %v18
  %v23 = vld [vmem:[%s2] sm:$0x3]
  %v24 = vadd.f32 %v19, %v23
  %v25 = vadd.f32 %v20, %v23
  %v26 = vadd.f32 %v21, %v23
  %v27 = vadd.f32 %v22, %v23
  %v28 = vmax.f32 %v24, 0.0
  %v29 = vmax.f32 %v25, 0.0
  %v30 = vmax.f32 %v26, 0.0
  %v31 = vmax.f32 %v27, 0.0
  %v32 = vadd.f32 %v28, %v29
  %v33 = vadd.f32 %v30, %v31
  %v36 = vrot.slane %v32, 1
  %v37 = vrot.slane %v33, 1
  %v40 = vadd.f32 %v32, %v36
  %v41 = vadd.f32 %v33, %v37
  %v42 = vmul.f32 %v40, 0.25
  %v43 = vmul.f32 %v41, 0.25
  %v44 = vpack.c.bf16 %v42, %v42
  %v45 = vpack.c.bf16 %v43, %v43
  %vm46 = vcmask 1040384
  %vm47 = vsmask.f32 256
  %vm48 = vmand %vm46, %vm47
  %v49 = vld [vmem:[%s3] sm:$0x1]
  %v50 = vsel %vm48, %v44, %v49
  %51 = vst [vmem:[%s3] sm:$0x1] %v50
  %v52 = vld [vmem:[%s3 + $0x1] sm:$0x1]
  %v53 = vsel %vm48, %v45, %v52
  %54 = vst [vmem:[%s3 + $0x1] sm:$0x1] %v53
  // Predicated region
  $region14: #{vgg_forward.32} parent=0 // pred_check
    _
  $region15: #{vgg_forward.32} parent=0 // pred_check_branch
    %56 = sbr.rel (0) target = $region17
  $region16: #{vgg_forward.32} parent=0 // pred_region
    _
  $region17: #{vgg_forward.32} parent=0 // pred_fallthru
    _
  // Predicated region
  $region18: #{vgg_forward.32} parent=0 // pred_check
    _
  $region19: #{vgg_forward.32} parent=0 // pred_check_branch
    %58 = sbr.rel (0) target = $region21
  $region20: #{vgg_forward.32} parent=0 // pred_region
    _
  $region21: #{vgg_forward.32} parent=0 // pred_fallthru
    _

// kernel: vgg_forward.27
$region0: #{vgg_forward.27}
  #allocation0 [shape = 'u32[]', space=smem, size = 0x4, offset = 0x4, fixed_abs, tag = 'smem constant byte address 0x4 - core index']
  #allocation1 [shape = 'u32[72,128]{1,0:T(1,128)}', space=vmem, size = 0x9000, scoped, tag = 'internal scratch']
  %s0 = inlined_call_operand.vmem [shape: bf16[32,1152], index: 0, kind: input, shape index: {}]
  %s1 = inlined_call_operand.vmem [shape: bf16[1152,128], index: 1, kind: input, shape index: {}]
  %s2 = inlined_call_operand.vmem [shape: f32[32,128], index: 2, kind: output, shape index: {0}]
  %s3 = inlined_call_operand.vmem [shape: f32[8,128], index: 3, kind: output, shape index: {1}]
  %4 = xla_tuple %s2, %s3
  %s5 = sld [smem:[#allocation0]]
  $region26: #{vgg_forward.27} parent=0
    _
  %s7 = ssub.s32 1, %s5
  %s8 = scalar_select 0, %s7, %s5
  // Predicated region
  $region2: #{vgg_forward.27} parent=0 // pred_check
    _
  $region3: #{vgg_forward.27} parent=0 // pred_check_branch
    %10 = sbr.rel (0) target = $region5
  $region4: #{vgg_forward.27} parent=0 // pred_region
    _
  $region5: #{vgg_forward.27} parent=0 // pred_fallthru
    _
  // Predicated region
  $region6: #{vgg_forward.27} parent=0 // pred_check
    _
  $region7: #{vgg_forward.27} parent=0 // pred_check_branch
    %12 = sbr.rel (0) target = $region9
  $region8: #{vgg_forward.27} parent=0 // pred_region
    _
  $region9: #{vgg_forward.27} parent=0 // pred_fallthru
    _
  %v13 = vld [vmem:[%s0] sm:$0xff]
  %v14 = vld [vmem:[%s0 + $0x8] sm:$0xff]
  %v15 = vld [vmem:[%s0 + $0x10] sm:$0xff]
  %v16 = vld [vmem:[%s0 + $0x18] sm:$0xff]
  %v17 = vld [vmem:[%s0 + $0x20] sm:$0xf]
  %v18 = vld [vmem:[%s0 + $0x24] sm:$0xff]
  %v19 = vld [vmem:[%s0 + $0x2c] sm:$0xff]
  %v20 = vld [vmem:[%s0 + $0x34] sm:$0xff]
  %v21 = vld [vmem:[%s0 + $0x3c] sm:$0xff]
  %v22 = vld [vmem:[%s0 + $0x44] sm:$0xf]
  %v23 = vld [vmem:[%s0 + $0x48] sm:$0xff]
  %v24 = vld [vmem:[%s0 + $0x50] sm:$0xff]
  %v25 = vld [vmem:[%s0 + $0x58] sm:$0xff]
  %v26 = vld [vmem:[%s0 + $0x60] sm:$0xff]
  %v27 = vld [vmem:[%s0 + $0x68] sm:$0xf]
  %v28 = vld [vmem:[%s0 + $0x6c] sm:$0xff]
  %v29 = vld [vmem:[%s0 + $0x74] sm:$0xff]
  %v30 = vld [vmem:[%s0 + $0x7c] sm:$0xff]
  %v31 = vld [vmem:[%s0 + $0x84] sm:$0xff]
  %v32 = vld [vmem:[%s0 + $0x8c] sm:$0xf]
  %v33 = vld [vmem:[%s1] sm:$0xf]
  %v34 = vld [vmem:[%s1 + $0x4] sm:$0xf]
  %v35 = vld [vmem:[%s1 + $0x8] sm:$0xf]
  %v36 = vld [vmem:[%s1 + $0xc] sm:$0xf]
  %v37 = vld [vmem:[%s1 + $0x10] sm:$0xf]
  %v38 = vld [vmem:[%s1 + $0x14] sm:$0xf]
  %v39 = vld [vmem:[%s1 + $0x18] sm:$0xf]
  %v40 = vld [vmem:[%s1 + $0x1c] sm:$0xf]
  %v41 = vld [vmem:[%s1 + $0x20] sm:$0xf]
  %v42 = vld [vmem:[%s1 + $0x24] sm:$0xf]
  %v43 = vld [vmem:[%s1 + $0x28] sm:$0xf]
  %v44 = vld [vmem:[%s1 + $0x2c] sm:$0xf]
  %v45 = vld [vmem:[%s1 + $0x30] sm:$0xf]
  %v46 = vld [vmem:[%s1 + $0x34] sm:$0xf]
  %v47 = vld [vmem:[%s1 + $0x38] sm:$0xf]
  %v48 = vld [vmem:[%s1 + $0x3c] sm:$0xf]
  %v49 = vld [vmem:[%s1 + $0x40] sm:$0xf]
  %v50 = vld [vmem:[%s1 + $0x44] sm:$0xf]
  %v51 = vld [vmem:[%s1 + $0x48] sm:$0xf]
  %v52 = vld [vmem:[%s1 + $0x4c] sm:$0xf]
  %v53 = vld [vmem:[%s1 + $0x50] sm:$0xf]
  %v54 = vld [vmem:[%s1 + $0x54] sm:$0xf]
  %v55 = vld [vmem:[%s1 + $0x58] sm:$0xf]
  %v56 = vld [vmem:[%s1 + $0x5c] sm:$0xf]
  %v57 = vld [vmem:[%s1 + $0x60] sm:$0xf]
  %v58 = vld [vmem:[%s1 + $0x64] sm:$0xf]
  %v59 = vld [vmem:[%s1 + $0x68] sm:$0xf]
  %v60 = vld [vmem:[%s1 + $0x6c] sm:$0xf]
  %v61 = vld [vmem:[%s1 + $0x70] sm:$0xf]
  %v62 = vld [vmem:[%s1 + $0x74] sm:$0xf]
  %v63 = vld [vmem:[%s1 + $0x78] sm:$0xf]
  %v64 = vld [vmem:[%s1 + $0x7c] sm:$0xf]
  %v65 = vld [vmem:[%s1 + $0x80] sm:$0xf]
  %v66 = vld [vmem:[%s1 + $0x84] sm:$0xf]
  %v67 = vld [vmem:[%s1 + $0x88] sm:$0xf]
  %v68 = vld [vmem:[%s1 + $0x8c] sm:$0xf]
  %v69 = vld [vmem:[%s1 + $0x90] sm:$0xf]
  %v70 = vld [vmem:[%s1 + $0x94] sm:$0xf]
  %v71 = vld [vmem:[%s1 + $0x98] sm:$0xf]
  %v72 = vld [vmem:[%s1 + $0x9c] sm:$0xf]
  %v73 = vld [vmem:[%s1 + $0xa0] sm:$0xf]
  %v74 = vld [vmem:[%s1 + $0xa4] sm:$0xf]
  %v75 = vld [vmem:[%s1 + $0xa8] sm:$0xf]
  %v76 = vld [vmem:[%s1 + $0xac] sm:$0xf]
  %v77 = vld [vmem:[%s1 + $0xb0] sm:$0xf]
  %v78 = vld [vmem:[%s1 + $0xb4] sm:$0xf]
  %v79 = vld [vmem:[%s1 + $0xb8] sm:$0xf]
  %v80 = vld [vmem:[%s1 + $0xbc] sm:$0xf]
  %v81 = vld [vmem:[%s1 + $0xc0] sm:$0xf]
  %v82 = vld [vmem:[%s1 + $0xc4] sm:$0xf]
  %v83 = vld [vmem:[%s1 + $0xc8] sm:$0xf]
  %v84 = vld [vmem:[%s1 + $0xcc] sm:$0xf]
  %v85 = vld [vmem:[%s1 + $0xd0] sm:$0xf]
  %v86 = vld [vmem:[%s1 + $0xd4] sm:$0xf]
  %v87 = vld [vmem:[%s1 + $0xd8] sm:$0xf]
  %v88 = vld [vmem:[%s1 + $0xdc] sm:$0xf]
  %v89 = vld [vmem:[%s1 + $0xe0] sm:$0xf]
  %v90 = vld [vmem:[%s1 + $0xe4] sm:$0xf]
  %v91 = vld [vmem:[%s1 + $0xe8] sm:$0xf]
  %v92 = vld [vmem:[%s1 + $0xec] sm:$0xf]
  %v93 = vld [vmem:[%s1 + $0xf0] sm:$0xf]
  %v94 = vld [vmem:[%s1 + $0xf4] sm:$0xf]
  %v95 = vld [vmem:[%s1 + $0xf8] sm:$0xf]
  %v96 = vld [vmem:[%s1 + $0xfc] sm:$0xf]
  %v97 = vld [vmem:[%s1 + $0x100] sm:$0xf]
  %v98 = vld [vmem:[%s1 + $0x104] sm:$0xf]
  %v99 = vld [vmem:[%s1 + $0x108] sm:$0xf]
  %v100 = vld [vmem:[%s1 + $0x10c] sm:$0xf]
  %v101 = vld [vmem:[%s1 + $0x110] sm:$0xf]
  %v102 = vld [vmem:[%s1 + $0x114] sm:$0xf]
  %v103 = vld [vmem:[%s1 + $0x118] sm:$0xf]
  %v104 = vld [vmem:[%s1 + $0x11c] sm:$0xf]
  %v105 = vld [vmem:[%s1 + $0x120] sm:$0xf]
  %v106 = vld [vmem:[%s1 + $0x124] sm:$0xf]
  %v107 = vld [vmem:[%s1 + $0x128] sm:$0xf]
  %v108 = vld [vmem:[%s1 + $0x12c] sm:$0xf]
  %v109 = vld [vmem:[%s1 + $0x130] sm:$0xf]
  %v110 = vld [vmem:[%s1 + $0x134] sm:$0xf]
  %v111 = vld [vmem:[%s1 + $0x138] sm:$0xf]
  %v112 = vld [vmem:[%s1 + $0x13c] sm:$0xf]
  %v113 = vld [vmem:[%s1 + $0x140] sm:$0xf]
  %v114 = vld [vmem:[%s1 + $0x144] sm:$0xf]
  %v115 = vld [vmem:[%s1 + $0x148] sm:$0xf]
  %v116 = vld [vmem:[%s1 + $0x14c] sm:$0xf]
  %v117 = vld [vmem:[%s1 + $0x150] sm:$0xf]
  %v118 = vld [vmem:[%s1 + $0x154] sm:$0xf]
  %v119 = vld [vmem:[%s1 + $0x158] sm:$0xf]
  %v120 = vld [vmem:[%s1 + $0x15c] sm:$0xf]
  %v121 = vld [vmem:[%s1 + $0x160] sm:$0xf]
  %v122 = vld [vmem:[%s1 + $0x164] sm:$0xf]
  %v123 = vld [vmem:[%s1 + $0x168] sm:$0xf]
  %v124 = vld [vmem:[%s1 + $0x16c] sm:$0xf]
  %v125 = vld [vmem:[%s1 + $0x170] sm:$0xf]
  %v126 = vld [vmem:[%s1 + $0x174] sm:$0xf]
  %v127 = vld [vmem:[%s1 + $0x178] sm:$0xf]
  %v128 = vld [vmem:[%s1 + $0x17c] sm:$0xf]
  %v129 = vld [vmem:[%s1 + $0x180] sm:$0xf]
  %v130 = vld [vmem:[%s1 + $0x184] sm:$0xf]
  %v131 = vld [vmem:[%s1 + $0x188] sm:$0xf]
  %v132 = vld [vmem:[%s1 + $0x18c] sm:$0xf]
  %v133 = vld [vmem:[%s1 + $0x190] sm:$0xf]
  %v134 = vld [vmem:[%s1 + $0x194] sm:$0xf]
  %v135 = vld [vmem:[%s1 + $0x198] sm:$0xf]
  %v136 = vld [vmem:[%s1 + $0x19c] sm:$0xf]
  %v137 = vld [vmem:[%s1 + $0x1a0] sm:$0xf]
  %v138 = vld [vmem:[%s1 + $0x1a4] sm:$0xf]
  %v139 = vld [vmem:[%s1 + $0x1a8] sm:$0xf]
  %v140 = vld [vmem:[%s1 + $0x1ac] sm:$0xf]
  %v141 = vld [vmem:[%s1 + $0x1b0] sm:$0xf]
  %v142 = vld [vmem:[%s1 + $0x1b4] sm:$0xf]
  %v143 = vld [vmem:[%s1 + $0x1b8] sm:$0xf]
  %v144 = vld [vmem:[%s1 + $0x1bc] sm:$0xf]
  %v145 = vld [vmem:[%s1 + $0x1c0] sm:$0xf]
  %v146 = vld [vmem:[%s1 + $0x1c4] sm:$0xf]
  %v147 = vld [vmem:[%s1 + $0x1c8] sm:$0xf]
  %v148 = vld [vmem:[%s1 + $0x1cc] sm:$0xf]
  %v149 = vld [vmem:[%s1 + $0x1d0] sm:$0xf]
  %v150 = vld [vmem:[%s1 + $0x1d4] sm:$0xf]
  %v151 = vld [vmem:[%s1 + $0x1d8] sm:$0xf]
  %v152 = vld [vmem:[%s1 + $0x1dc] sm:$0xf]
  %v153 = vld [vmem:[%s1 + $0x1e0] sm:$0xf]
  %v154 = vld [vmem:[%s1 + $0x1e4] sm:$0xf]
  %v155 = vld [vmem:[%s1 + $0x1e8] sm:$0xf]
  %v156 = vld [vmem:[%s1 + $0x1ec] sm:$0xf]
  %v157 = vld [vmem:[%s1 + $0x1f0] sm:$0xf]
  %v158 = vld [vmem:[%s1 + $0x1f4] sm:$0xf]
  %v159 = vld [vmem:[%s1 + $0x1f8] sm:$0xf]
  %v160 = vld [vmem:[%s1 + $0x1fc] sm:$0xf]
  %v161 = vld [vmem:[%s1 + $0x200] sm:$0xf]
  %v162 = vld [vmem:[%s1 + $0x204] sm:$0xf]
  %v163 = vld [vmem:[%s1 + $0x208] sm:$0xf]
  %v164 = vld [vmem:[%s1 + $0x20c] sm:$0xf]
  %v165 = vld [vmem:[%s1 + $0x210] sm:$0xf]
  %v166 = vld [vmem:[%s1 + $0x214] sm:$0xf]
  %v167 = vld [vmem:[%s1 + $0x218] sm:$0xf]
  %v168 = vld [vmem:[%s1 + $0x21c] sm:$0xf]
  %v169 = vld [vmem:[%s1 + $0x220] sm:$0xf]
  %v170 = vld [vmem:[%s1 + $0x224] sm:$0xf]
  %v171 = vld [vmem:[%s1 + $0x228] sm:$0xf]
  %v172 = vld [vmem:[%s1 + $0x22c] sm:$0xf]
  %v173 = vld [vmem:[%s1 + $0x230] sm:$0xf]
  %v174 = vld [vmem:[%s1 + $0x234] sm:$0xf]
  %v175 = vld [vmem:[%s1 + $0x238] sm:$0xf]
  %v176 = vld [vmem:[%s1 + $0x23c] sm:$0xf]
  %v197 = vunpack.c.l.b16 %v13
  %v198 = vunpack.c.h.b16 %v13
  %v199 = vunpack.c.l.b16 %v14
  %v200 = vunpack.c.h.b16 %v14
  %v201 = vunpack.c.l.b16 %v15
  %v202 = vunpack.c.h.b16 %v15
  %v203 = vunpack.c.l.b16 %v16
  %v204 = vunpack.c.h.b16 %v16
  %v205 = vunpack.c.l.b16 %v17
  %v206 = vunpack.c.l.b16 %v18
  %v207 = vunpack.c.h.b16 %v18
  %v208 = vunpack.c.l.b16 %v19
  %v209 = vunpack.c.h.b16 %v19
  %v210 = vunpack.c.l.b16 %v20
  %v211 = vunpack.c.h.b16 %v20
  %v212 = vunpack.c.l.b16 %v21
  %v213 = vunpack.c.h.b16 %v21
  %v214 = vunpack.c.l.b16 %v22
  %v215 = vunpack.c.l.b16 %v23
  %v216 = vunpack.c.h.b16 %v23
  %v217 = vunpack.c.l.b16 %v24
  %v218 = vunpack.c.h.b16 %v24
  %v219 = vunpack.c.l.b16 %v25
  %v220 = vunpack.c.h.b16 %v25
  %v221 = vunpack.c.l.b16 %v26
  %v222 = vunpack.c.h.b16 %v26
  %v223 = vunpack.c.l.b16 %v27
  %v224 = vunpack.c.l.b16 %v28
  %v225 = vunpack.c.h.b16 %v28
  %v226 = vunpack.c.l.b16 %v29
  %v227 = vunpack.c.h.b16 %v29
  %v228 = vunpack.c.l.b16 %v30
  %v229 = vunpack.c.h.b16 %v30
  %v230 = vunpack.c.l.b16 %v31
  %v231 = vunpack.c.h.b16 %v31
  %v232 = vunpack.c.l.b16 %v32
  %v233 = vpack.c.b16 %v206, %v197
  %v234 = vpack.c.b16 %v207, %v198
  %v235 = vpack.c.b16 %v208, %v199
  %v236 = vpack.c.b16 %v209, %v200
  %v237 = vpack.c.b16 %v210, %v201
  %v238 = vpack.c.b16 %v211, %v202
  %v239 = vpack.c.b16 %v212, %v203
  %v240 = vpack.c.b16 %v213, %v204
  %v241 = vpack.c.b16 %v214, %v205
  %v242 = vpack.c.b16 %v224, %v215
  %v243 = vpack.c.b16 %v225, %v216
  %v244 = vpack.c.b16 %v226, %v217
  %v245 = vpack.c.b16 %v227, %v218
  %v246 = vpack.c.b16 %v228, %v219
  %v247 = vpack.c.b16 %v229, %v220
  %v248 = vpack.c.b16 %v230, %v221
  %v249 = vpack.c.b16 %v231, %v222
  %v250 = vpack.c.b16 %v232, %v223
  %v413 = vunpack.c.l.b16 %v33
  %v414 = vunpack.c.l.b16 %v34
  %v415 = vunpack.c.l.b16 %v35
  %v416 = vunpack.c.l.b16 %v36
  %v417 = vunpack.c.l.b16 %v37
  %v418 = vunpack.c.l.b16 %v38
  %v419 = vunpack.c.l.b16 %v39
  %v420 = vunpack.c.l.b16 %v40
  %v421 = vunpack.c.l.b16 %v41
  %v422 = vunpack.c.l.b16 %v42
  %v423 = vunpack.c.l.b16 %v43
  %v424 = vunpack.c.l.b16 %v44
  %v425 = vunpack.c.l.b16 %v45
  %v426 = vunpack.c.l.b16 %v46
  %v427 = vunpack.c.l.b16 %v47
  %v428 = vunpack.c.l.b16 %v48
  %v429 = vunpack.c.l.b16 %v49
  %v430 = vunpack.c.l.b16 %v50
  %v431 = vunpack.c.l.b16 %v51
  %v432 = vunpack.c.l.b16 %v52
  %v433 = vunpack.c.l.b16 %v53
  %v434 = vunpack.c.l.b16 %v54
  %v435 = vunpack.c.l.b16 %v55
  %v436 = vunpack.c.l.b16 %v56
  %v437 = vunpack.c.l.b16 %v57
  %v438 = vunpack.c.l.b16 %v58
  %v439 = vunpack.c.l.b16 %v59
  %v440 = vunpack.c.l.b16 %v60
  %v441 = vunpack.c.l.b16 %v61
  %v442 = vunpack.c.l.b16 %v62
  %v443 = vunpack.c.l.b16 %v63
  %v444 = vunpack.c.l.b16 %v64
  %v445 = vunpack.c.l.b16 %v65
  %v446 = vunpack.c.l.b16 %v66
  %v447 = vunpack.c.l.b16 %v67
  %v448 = vunpack.c.l.b16 %v68
  %v449 = vunpack.c.l.b16 %v69
  %v450 = vunpack.c.l.b16 %v70
  %v451 = vunpack.c.l.b16 %v71
  %v452 = vunpack.c.l.b16 %v72
  %v453 = vunpack.c.l.b16 %v73
  %v454 = vunpack.c.l.b16 %v74
  %v455 = vunpack.c.l.b16 %v75
  %v456 = vunpack.c.l.b16 %v76
  %v457 = vunpack.c.l.b16 %v77
  %v458 = vunpack.c.l.b16 %v78
  %v459 = vunpack.c.l.b16 %v79
  %v460 = vunpack.c.l.b16 %v80
  %v461 = vunpack.c.l.b16 %v81
  %v462 = vunpack.c.l.b16 %v82
  %v463 = vunpack.c.l.b16 %v83
  %v464 = vunpack.c.l.b16 %v84
  %v465 = vunpack.c.l.b16 %v85
  %v466 = vunpack.c.l.b16 %v86
  %v467 = vunpack.c.l.b16 %v87
  %v468 = vunpack.c.l.b16 %v88
  %v469 = vunpack.c.l.b16 %v89
  %v470 = vunpack.c.l.b16 %v90
  %v471 = vunpack.c.l.b16 %v91
  %v472 = vunpack.c.l.b16 %v92
  %v473 = vunpack.c.l.b16 %v93
  %v474 = vunpack.c.l.b16 %v94
  %v475 = vunpack.c.l.b16 %v95
  %v476 = vunpack.c.l.b16 %v96
  %v477 = vunpack.c.l.b16 %v97
  %v478 = vunpack.c.l.b16 %v98
  %v479 = vunpack.c.l.b16 %v99
  %v480 = vunpack.c.l.b16 %v100
  %v481 = vunpack.c.l.b16 %v101
  %v482 = vunpack.c.l.b16 %v102
  %v483 = vunpack.c.l.b16 %v103
  %v484 = vunpack.c.l.b16 %v104
  %v485 = vunpack.c.l.b16 %v105
  %v486 = vunpack.c.l.b16 %v106
  %v487 = vunpack.c.l.b16 %v107
  %v488 = vunpack.c.l.b16 %v108
  %v489 = vunpack.c.l.b16 %v109
  %v490 = vunpack.c.l.b16 %v110
  %v491 = vunpack.c.l.b16 %v111
  %v492 = vunpack.c.l.b16 %v112
  %v493 = vunpack.c.l.b16 %v113
  %v494 = vunpack.c.l.b16 %v114
  %v495 = vunpack.c.l.b16 %v115
  %v496 = vunpack.c.l.b16 %v116
  %v497 = vunpack.c.l.b16 %v117
  %v498 = vunpack.c.l.b16 %v118
  %v499 = vunpack.c.l.b16 %v119
  %v500 = vunpack.c.l.b16 %v120
  %v501 = vunpack.c.l.b16 %v121
  %v502 = vunpack.c.l.b16 %v122
  %v503 = vunpack.c.l.b16 %v123
  %v504 = vunpack.c.l.b16 %v124
  %v505 = vunpack.c.l.b16 %v125
  %v506 = vunpack.c.l.b16 %v126
  %v507 = vunpack.c.l.b16 %v127
  %v508 = vunpack.c.l.b16 %v128
  %v509 = vunpack.c.l.b16 %v129
  %v510 = vunpack.c.l.b16 %v130
  %v511 = vunpack.c.l.b16 %v131
  %v512 = vunpack.c.l.b16 %v132
  %v513 = vunpack.c.l.b16 %v133
  %v514 = vunpack.c.l.b16 %v134
  %v515 = vunpack.c.l.b16 %v135
  %v516 = vunpack.c.l.b16 %v136
  %v517 = vunpack.c.l.b16 %v137
  %v518 = vunpack.c.l.b16 %v138
  %v519 = vunpack.c.l.b16 %v139
  %v520 = vunpack.c.l.b16 %v140
  %v521 = vunpack.c.l.b16 %v141
  %v522 = vunpack.c.l.b16 %v142
  %v523 = vunpack.c.l.b16 %v143
  %v524 = vunpack.c.l.b16 %v144
  %v525 = vunpack.c.l.b16 %v145
  %v526 = vunpack.c.l.b16 %v146
  %v527 = vunpack.c.l.b16 %v147
  %v528 = vunpack.c.l.b16 %v148
  %v529 = vunpack.c.l.b16 %v149
  %v530 = vunpack.c.l.b16 %v150
  %v531 = vunpack.c.l.b16 %v151
  %v532 = vunpack.c.l.b16 %v152
  %v533 = vunpack.c.l.b16 %v153
  %v534 = vunpack.c.l.b16 %v154
  %v535 = vunpack.c.l.b16 %v155
  %v536 = vunpack.c.l.b16 %v156
  %v537 = vunpack.c.l.b16 %v157
  %v538 = vunpack.c.l.b16 %v158
  %v539 = vunpack.c.l.b16 %v159
  %v540 = vunpack.c.l.b16 %v160
  %v541 = vunpack.c.l.b16 %v161
  %v542 = vunpack.c.l.b16 %v162
  %v543 = vunpack.c.l.b16 %v163
  %v544 = vunpack.c.l.b16 %v164
  %v545 = vunpack.c.l.b16 %v165
  %v546 = vunpack.c.l.b16 %v166
  %v547 = vunpack.c.l.b16 %v167
  %v548 = vunpack.c.l.b16 %v168
  %v549 = vunpack.c.l.b16 %v169
  %v550 = vunpack.c.l.b16 %v170
  %v551 = vunpack.c.l.b16 %v171
  %v552 = vunpack.c.l.b16 %v172
  %v553 = vunpack.c.l.b16 %v173
  %v554 = vunpack.c.l.b16 %v174
  %v555 = vunpack.c.l.b16 %v175
  %v556 = vunpack.c.l.b16 %v176
  %v557 = vpack.c.b16 %v414, %v413
  %v558 = vpack.c.b16 %v416, %v415
  %v559 = vpack.c.b16 %v418, %v417
  %v560 = vpack.c.b16 %v420, %v419
  %v561 = vpack.c.b16 %v422, %v421
  %v562 = vpack.c.b16 %v424, %v423
  %v563 = vpack.c.b16 %v426, %v425
  %v564 = vpack.c.b16 %v428, %v427
  %v565 = vpack.c.b16 %v430, %v429
  %v566 = vpack.c.b16 %v432, %v431
  %v567 = vpack.c.b16 %v434, %v433
  %v568 = vpack.c.b16 %v436, %v435
  %v569 = vpack.c.b16 %v438, %v437
  %v570 = vpack.c.b16 %v440, %v439
  %v571 = vpack.c.b16 %v442, %v441
  %v572 = vpack.c.b16 %v444, %v443
  %v573 = vpack.c.b16 %v446, %v445
  %v574 = vpack.c.b16 %v448, %v447
  %v575 = vpack.c.b16 %v450, %v449
  %v576 = vpack.c.b16 %v452, %v451
  %v577 = vpack.c.b16 %v454, %v453
  %v578 = vpack.c.b16 %v456, %v455
  %v579 = vpack.c.b16 %v458, %v457
  %v580 = vpack.c.b16 %v460, %v459
  %v581 = vpack.c.b16 %v462, %v461
  %v582 = vpack.c.b16 %v464, %v463
  %v583 = vpack.c.b16 %v466, %v465
  %v584 = vpack.c.b16 %v468, %v467
  %v585 = vpack.c.b16 %v470, %v469
  %v586 = vpack.c.b16 %v472, %v471
  %v587 = vpack.c.b16 %v474, %v473
  %v588 = vpack.c.b16 %v476, %v475
  %v589 = vpack.c.b16 %v478, %v477
  %v590 = vpack.c.b16 %v480, %v479
  %v591 = vpack.c.b16 %v482, %v481
  %v592 = vpack.c.b16 %v484, %v483
  %v593 = vpack.c.b16 %v486, %v485
  %v594 = vpack.c.b16 %v488, %v487
  %v595 = vpack.c.b16 %v490, %v489
  %v596 = vpack.c.b16 %v492, %v491
  %v597 = vpack.c.b16 %v494, %v493
  %v598 = vpack.c.b16 %v496, %v495
  %v599 = vpack.c.b16 %v498, %v497
  %v600 = vpack.c.b16 %v500, %v499
  %v601 = vpack.c.b16 %v502, %v501
  %v602 = vpack.c.b16 %v504, %v503
  %v603 = vpack.c.b16 %v506, %v505
  %v604 = vpack.c.b16 %v508, %v507
  %v605 = vpack.c.b16 %v510, %v509
  %v606 = vpack.c.b16 %v512, %v511
  %v607 = vpack.c.b16 %v514, %v513
  %v608 = vpack.c.b16 %v516, %v515
  %v609 = vpack.c.b16 %v518, %v517
  %v610 = vpack.c.b16 %v520, %v519
  %v611 = vpack.c.b16 %v522, %v521
  %v612 = vpack.c.b16 %v524, %v523
  %v613 = vpack.c.b16 %v526, %v525
  %v614 = vpack.c.b16 %v528, %v527
  %v615 = vpack.c.b16 %v530, %v529
  %v616 = vpack.c.b16 %v532, %v531
  %v617 = vpack.c.b16 %v534, %v533
  %v618 = vpack.c.b16 %v536, %v535
  %v619 = vpack.c.b16 %v538, %v537
  %v620 = vpack.c.b16 %v540, %v539
  %v621 = vpack.c.b16 %v542, %v541
  %v622 = vpack.c.b16 %v544, %v543
  %v623 = vpack.c.b16 %v546, %v545
  %v624 = vpack.c.b16 %v548, %v547
  %v625 = vpack.c.b16 %v550, %v549
  %v626 = vpack.c.b16 %v552, %v551
  %v627 = vpack.c.b16 %v554, %v553
  %v628 = vpack.c.b16 %v556, %v555
  %701 = vmatpush.bf16.msra.mxu0 %v564
  %702 = vmatpush.bf16.msra.mxu0 %v563
  %703 = vmatpush.bf16.msra.mxu0 %v562
  %704 = vmatpush.bf16.msra.mxu0 %v561
  %705 = vmatpush.bf16.msra.mxu0 %v560
  %706 = vmatpush.bf16.msra.mxu0 %v559
  %707 = vmatpush.bf16.msra.mxu0 %v558
  %708 = vmatpush.bf16.msra.mxu0 %v557
  %709 = vmatmul.bf16.gmra.mxu0 %v233
  %v710 = vpop.f32.mrf.mxu0
  %v711 = vadd.f32 0.0, %v710
  %v712 = vpop.f32.mrf.mxu0
  %v713 = vadd.f32 0.0, %v712
  %714 = vmatmul.bf16.gmra.mxu0 %v242
  %v715 = vpop.f32.mrf.mxu0
  %v716 = vadd.f32 0.0, %v715
  %v717 = vpop.f32.mrf.mxu0
  %v718 = vadd.f32 0.0, %v717
  %719 = vdwg.mxu0
  %720 = vmatpush.bf16.msra.mxu0 %v572
  %721 = vmatpush.bf16.msra.mxu0 %v571
  %722 = vmatpush.bf16.msra.mxu0 %v570
  %723 = vmatpush.bf16.msra.mxu0 %v569
  %724 = vmatpush.bf16.msra.mxu0 %v568
  %725 = vmatpush.bf16.msra.mxu0 %v567
  %726 = vmatpush.bf16.msra.mxu0 %v566
  %727 = vmatpush.bf16.msra.mxu0 %v565
  %728 = vmatmul.bf16.gmra.mxu0 %v234
  %v729 = vpop.f32.mrf.mxu0
  %v730 = vadd.f32 %v711, %v729
  %v731 = vpop.f32.mrf.mxu0
  %v732 = vadd.f32 %v713, %v731
  %733 = vmatmul.bf16.gmra.mxu0 %v243
  %v734 = vpop.f32.mrf.mxu0
  %v735 = vadd.f32 %v716, %v734
  %v736 = vpop.f32.mrf.mxu0
  %v737 = vadd.f32 %v718, %v736
  %738 = vdwg.mxu0
  %739 = vmatpush.bf16.msra.mxu0 %v580
  %740 = vmatpush.bf16.msra.mxu0 %v579
  %741 = vmatpush.bf16.msra.mxu0 %v578
  %742 = vmatpush.bf16.msra.mxu0 %v577
  %743 = vmatpush.bf16.msra.mxu0 %v576
  %744 = vmatpush.bf16.msra.mxu0 %v575
  %745 = vmatpush.bf16.msra.mxu0 %v574
  %746 = vmatpush.bf16.msra.mxu0 %v573
  %747 = vmatmul.bf16.gmra.mxu0 %v235
  %v748 = vpop.f32.mrf.mxu0
  %v749 = vadd.f32 %v730, %v748
  %v750 = vpop.f32.mrf.mxu0
  %v751 = vadd.f32 %v732, %v750
  %752 = vmatmul.bf16.gmra.mxu0 %v244
  %v753 = vpop.f32.mrf.mxu0
  %v754 = vadd.f32 %v735, %v753
  %v755 = vpop.f32.mrf.mxu0
  %v756 = vadd.f32 %v737, %v755
  %757 = vdwg.mxu0
  %758 = vmatpush.bf16.msra.mxu0 %v588
  %759 = vmatpush.bf16.msra.mxu0 %v587
  %760 = vmatpush.bf16.msra.mxu0 %v586
  %761 = vmatpush.bf16.msra.mxu0 %v585
  %762 = vmatpush.bf16.msra.mxu0 %v584
  %763 = vmatpush.bf16.msra.mxu0 %v583
  %764 = vmatpush.bf16.msra.mxu0 %v582
  %765 = vmatpush.bf16.msra.mxu0 %v581
  %766 = vmatmul.bf16.gmra.mxu0 %v236
  %v767 = vpop.f32.mrf.mxu0
  %v768 = vadd.f32 %v749, %v767
  %v769 = vpop.f32.mrf.mxu0
  %v770 = vadd.f32 %v751, %v769
  %771 = vmatmul.bf16.gmra.mxu0 %v245
  %v772 = vpop.f32.mrf.mxu0
  %v773 = vadd.f32 %v754, %v772
  %v774 = vpop.f32.mrf.mxu0
  %v775 = vadd.f32 %v756, %v774
  %776 = vdwg.mxu0
  %777 = vmatpush.bf16.msra.mxu0 %v596
  %778 = vmatpush.bf16.msra.mxu0 %v595
  %779 = vmatpush.bf16.msra.mxu0 %v594
  %780 = vmatpush.bf16.msra.mxu0 %v593
  %781 = vmatpush.bf16.msra.mxu0 %v592
  %782 = vmatpush.bf16.msra.mxu0 %v591
  %783 = vmatpush.bf16.msra.mxu0 %v590
  %784 = vmatpush.bf16.msra.mxu0 %v589
  %785 = vmatmul.bf16.gmra.mxu0 %v237
  %v786 = vpop.f32.mrf.mxu0
  %v787 = vadd.f32 %v768, %v786
  %v788 = vpop.f32.mrf.mxu0
  %v789 = vadd.f32 %v770, %v788
  %790 = vmatmul.bf16.gmra.mxu0 %v246
  %v791 = vpop.f32.mrf.mxu0
  %v792 = vadd.f32 %v773, %v791
  %v793 = vpop.f32.mrf.mxu0
  %v794 = vadd.f32 %v775, %v793
  %795 = vdwg.mxu0
  %796 = vmatpush.bf16.msra.mxu0 %v604
  %797 = vmatpush.bf16.msra.mxu0 %v603
  %798 = vmatpush.bf16.msra.mxu0 %v602
  %799 = vmatpush.bf16.msra.mxu0 %v601
  %800 = vmatpush.bf16.msra.mxu0 %v600
  %801 = vmatpush.bf16.msra.mxu0 %v599
  %802 = vmatpush.bf16.msra.mxu0 %v598
  %803 = vmatpush.bf16.msra.mxu0 %v597
  %804 = vmatmul.bf16.gmra.mxu0 %v238
  %v805 = vpop.f32.mrf.mxu0
  %v806 = vadd.f32 %v787, %v805
  %v807 = vpop.f32.mrf.mxu0
  %v808 = vadd.f32 %v789, %v807
  %809 = vmatmul.bf16.gmra.mxu0 %v247
  %v810 = vpop.f32.mrf.mxu0
  %v811 = vadd.f32 %v792, %v810
  %v812 = vpop.f32.mrf.mxu0
  %v813 = vadd.f32 %v794, %v812
  %814 = vdwg.mxu0
  %815 = vmatpush.bf16.msra.mxu0 %v612
  %816 = vmatpush.bf16.msra.mxu0 %v611
  %817 = vmatpush.bf16.msra.mxu0 %v610
  %818 = vmatpush.bf16.msra.mxu0 %v609
  %819 = vmatpush.bf16.msra.mxu0 %v608
  %820 = vmatpush.bf16.msra.mxu0 %v607
  %821 = vmatpush.bf16.msra.mxu0 %v606
  %822 = vmatpush.bf16.msra.mxu0 %v605
  %823 = vmatmul.bf16.gmra.mxu0 %v239
  %v824 = vpop.f32.mrf.mxu0
  %v825 = vadd.f32 %v806, %v824
  %v826 = vpop.f32.mrf.mxu0
  %v827 = vadd.f32 %v808, %v826
  %828 = vmatmul.bf16.gmra.mxu0 %v248
  %v829 = vpop.f32.mrf.mxu0
  %v830 = vadd.f32 %v811, %v829
  %v831 = vpop.f32.mrf.mxu0
  %v832 = vadd.f32 %v813, %v831
  %833 = vdwg.mxu0
  %834 = vmatpush.bf16.msra.mxu0 %v620
  %835 = vmatpush.bf16.msra.mxu0 %v619
  %836 = vmatpush.bf16.msra.mxu0 %v618
  %837 = vmatpush.bf16.msra.mxu0 %v617
  %838 = vmatpush.bf16.msra.mxu0 %v616
  %839 = vmatpush.bf16.msra.mxu0 %v615
  %840 = vmatpush.bf16.msra.mxu0 %v614
  %841 = vmatpush.bf16.msra.mxu0 %v613
  %842 = vmatmul.bf16.gmra.mxu0 %v240
  %v843 = vpop.f32.mrf.mxu0
  %v844 = vadd.f32 %v825, %v843
  %v845 = vpop.f32.mrf.mxu0
  %v846 = vadd.f32 %v827, %v845
  %847 = vmatmul.bf16.gmra.mxu0 %v249
  %v848 = vpop.f32.mrf.mxu0
  %v849 = vadd.f32 %v830, %v848
  %v850 = vpop.f32.mrf.mxu0
  %v851 = vadd.f32 %v832, %v850
  %852 = vdwg.mxu0
  %853 = vmatpush.bf16.msra.mxu0 %v628
  %854 = vmatpush.bf16.msra.mxu0 %v627
  %855 = vmatpush.bf16.msra.mxu0 %v626
  %856 = vmatpush.bf16.msra.mxu0 %v625
  %857 = vmatpush.bf16.msra.mxu0 %v624
  %858 = vmatpush.bf16.msra.mxu0 %v623
  %859 = vmatpush.bf16.msra.mxu0 %v622
  %860 = vmatpush.bf16.msra.mxu0 %v621
  %861 = vmatmul.bf16.gmra.mxu0 %v241
  %v862 = vpop.f32.mrf.mxu0
  %v863 = vadd.f32 %v844, %v862
  %v864 = vpop.f32.mrf.mxu0
  %v865 = vadd.f32 %v846, %v864
  %866 = vmatmul.bf16.gmra.mxu0 %v250
  %v867 = vpop.f32.mrf.mxu0
  %v868 = vadd.f32 %v849, %v867
  %v869 = vpop.f32.mrf.mxu0
  %v870 = vadd.f32 %v851, %v869
  %871 = vdwg.mxu0
  %872 = vst [vmem:[%s2] sm:$0xff] %v863
  %873 = vst [vmem:[%s2 + $0x8] sm:$0xff] %v865
  %874 = vst [vmem:[%s2 + $0x10] sm:$0xff] %v868
  %875 = vst [vmem:[%s2 + $0x18] sm:$0xff] %v870
  %v876 = vadd.f32 %v863, %v865
  %v877 = vadd.f32 %v876, %v868
  %v878 = vadd.f32 %v877, %v870
  %v879 = vrot.slane %v878, 4
  %v880 = vadd.f32 %v878, %v879
  %v881 = vrot.slane %v880, 2
  %v882 = vadd.f32 %v880, %v881
  %v883 = vrot.slane %v882, 1
  %v884 = vadd.f32 %v882, %v883
  %v885 = vmul.f32 %v863, %v863
  %v886 = vmul.f32 %v865, %v865
  %v887 = vmul.f32 %v868, %v868
  %v888 = vmul.f32 %v870, %v870
  %v889 = vadd.f32 %v885, %v886
  %v890 = vadd.f32 %v889, %v887
  %v891 = vadd.f32 %v890, %v888
  %v892 = vrot.slane %v891, 4
  %v893 = vadd.f32 %v891, %v892
  %v894 = vrot.slane %v893, 2
  %v895 = vadd.f32 %v893, %v894
  %v896 = vrot.slane %v895, 1
  %v897 = vadd.f32 %v895, %v896
  %vm898 = vcmask 1040384
  %v899 = vsel %vm898, %v884, %v897
  %vm900 = vcmask 1041408
  %v901 = vsel %vm900, %v899, 0.0
  %902 = vst [vmem:[%s3] sm:$0xff] %v901
  // Predicated region
  $region10: #{vgg_forward.27} parent=0 // pred_check
    _
  $region11: #{vgg_forward.27} parent=0 // pred_check_branch
    %904 = sbr.rel (0) target = $region13
  $region12: #{vgg_forward.27} parent=0 // pred_region
    _
  $region13: #{vgg_forward.27} parent=0 // pred_fallthru
    _
  // Predicated region
  $region14: #{vgg_forward.27} parent=0 // pred_check
    _
  $region15: #{vgg_forward.27} parent=0 // pred_check_branch
    %906 = sbr.rel (0) target = $region17
  $region16: #{vgg_forward.27} parent=0 // pred_region
    _
  $region17: #{vgg_forward.27} parent=0 // pred_fallthru
    _
  // Predicated region
  $region18: #{vgg_forward.27} parent=0 // pred_check
    _
  $region19: #{vgg_forward.27} parent=0 // pred_check_branch
    %908 = sbr.rel (0) target = $region21
  $region20: #{vgg_forward.27} parent=0 // pred_region
    _
  $region21: #{vgg_forward.27} parent=0 // pred_fallthru
    _
  // Predicated region
  $region22: #{vgg_forward.27} parent=0 // pred_check
    _
  $region23: #{vgg_forward.27} parent=0 // pred_check_branch
    %910 = sbr.rel (0) target = $region25
  $region24: #{vgg_forward.27} parent=0 // pred_region
    _
  $region25: #{vgg_forward.27} parent=0 // pred_fallthru
    _

// kernel: vgg_forward.29
$region0: #{vgg_forward.29}
  #allocation0 [shape = 'u32[]', space=smem, size = 0x4, offset = 0x4, fixed_abs, tag = 'smem constant byte address 0x4 - core index']
  #allocation1 [shape = 'u32[72,128]{1,0:T(1,128)}', space=vmem, size = 0x9000, scoped, tag = 'internal scratch']
  %s0 = inlined_call_operand.vmem [shape: bf16[8,1152], index: 0, kind: input, shape index: {}]
  %s1 = inlined_call_operand.vmem [shape: bf16[1152,128], index: 1, kind: input, shape index: {}]
  %s2 = inlined_call_operand.vmem [shape: f32[8,128], index: 2, kind: output, shape index: {0}]
  %s3 = inlined_call_operand.vmem [shape: f32[8,128], index: 3, kind: output, shape index: {1}]
  %4 = xla_tuple %s2, %s3
  %s5 = sld [smem:[#allocation0]]
  $region26: #{vgg_forward.29} parent=0
    _
  %s7 = ssub.s32 1, %s5
  %s8 = scalar_select 0, %s7, %s5
  // Predicated region
  $region2: #{vgg_forward.29} parent=0 // pred_check
    _
  $region3: #{vgg_forward.29} parent=0 // pred_check_branch
    %10 = sbr.rel (0) target = $region5
  $region4: #{vgg_forward.29} parent=0 // pred_region
    _
  $region5: #{vgg_forward.29} parent=0 // pred_fallthru
    _
  // Predicated region
  $region6: #{vgg_forward.29} parent=0 // pred_check
    _
  $region7: #{vgg_forward.29} parent=0 // pred_check_branch
    %12 = sbr.rel (0) target = $region9
  $region8: #{vgg_forward.29} parent=0 // pred_region
    _
  $region9: #{vgg_forward.29} parent=0 // pred_fallthru
    _
  %v13 = vld [vmem:[%s0] sm:$0xff]
  %v14 = vld [vmem:[%s0 + $0x8] sm:$0xff]
  %v15 = vld [vmem:[%s0 + $0x10] sm:$0xff]
  %v16 = vld [vmem:[%s0 + $0x18] sm:$0xff]
  %v17 = vld [vmem:[%s0 + $0x20] sm:$0xf]
  %v18 = vld [vmem:[%s1] sm:$0xf]
  %v19 = vld [vmem:[%s1 + $0x4] sm:$0xf]
  %v20 = vld [vmem:[%s1 + $0x8] sm:$0xf]
  %v21 = vld [vmem:[%s1 + $0xc] sm:$0xf]
  %v22 = vld [vmem:[%s1 + $0x10] sm:$0xf]
  %v23 = vld [vmem:[%s1 + $0x14] sm:$0xf]
  %v24 = vld [vmem:[%s1 + $0x18] sm:$0xf]
  %v25 = vld [vmem:[%s1 + $0x1c] sm:$0xf]
  %v26 = vld [vmem:[%s1 + $0x20] sm:$0xf]
  %v27 = vld [vmem:[%s1 + $0x24] sm:$0xf]
  %v28 = vld [vmem:[%s1 + $0x28] sm:$0xf]
  %v29 = vld [vmem:[%s1 + $0x2c] sm:$0xf]
  %v30 = vld [vmem:[%s1 + $0x30] sm:$0xf]
  %v31 = vld [vmem:[%s1 + $0x34] sm:$0xf]
  %v32 = vld [vmem:[%s1 + $0x38] sm:$0xf]
  %v33 = vld [vmem:[%s1 + $0x3c] sm:$0xf]
  %v34 = vld [vmem:[%s1 + $0x40] sm:$0xf]
  %v35 = vld [vmem:[%s1 + $0x44] sm:$0xf]
  %v36 = vld [vmem:[%s1 + $0x48] sm:$0xf]
  %v37 = vld [vmem:[%s1 + $0x4c] sm:$0xf]
  %v38 = vld [vmem:[%s1 + $0x50] sm:$0xf]
  %v39 = vld [vmem:[%s1 + $0x54] sm:$0xf]
  %v40 = vld [vmem:[%s1 + $0x58] sm:$0xf]
  %v41 = vld [vmem:[%s1 + $0x5c] sm:$0xf]
  %v42 = vld [vmem:[%s1 + $0x60] sm:$0xf]
  %v43 = vld [vmem:[%s1 + $0x64] sm:$0xf]
  %v44 = vld [vmem:[%s1 + $0x68] sm:$0xf]
  %v45 = vld [vmem:[%s1 + $0x6c] sm:$0xf]
  %v46 = vld [vmem:[%s1 + $0x70] sm:$0xf]
  %v47 = vld [vmem:[%s1 + $0x74] sm:$0xf]
  %v48 = vld [vmem:[%s1 + $0x78] sm:$0xf]
  %v49 = vld [vmem:[%s1 + $0x7c] sm:$0xf]
  %v50 = vld [vmem:[%s1 + $0x80] sm:$0xf]
  %v51 = vld [vmem:[%s1 + $0x84] sm:$0xf]
  %v52 = vld [vmem:[%s1 + $0x88] sm:$0xf]
  %v53 = vld [vmem:[%s1 + $0x8c] sm:$0xf]
  %v54 = vld [vmem:[%s1 + $0x90] sm:$0xf]
  %v55 = vld [vmem:[%s1 + $0x94] sm:$0xf]
  %v56 = vld [vmem:[%s1 + $0x98] sm:$0xf]
  %v57 = vld [vmem:[%s1 + $0x9c] sm:$0xf]
  %v58 = vld [vmem:[%s1 + $0xa0] sm:$0xf]
  %v59 = vld [vmem:[%s1 + $0xa4] sm:$0xf]
  %v60 = vld [vmem:[%s1 + $0xa8] sm:$0xf]
  %v61 = vld [vmem:[%s1 + $0xac] sm:$0xf]
  %v62 = vld [vmem:[%s1 + $0xb0] sm:$0xf]
  %v63 = vld [vmem:[%s1 + $0xb4] sm:$0xf]
  %v64 = vld [vmem:[%s1 + $0xb8] sm:$0xf]
  %v65 = vld [vmem:[%s1 + $0xbc] sm:$0xf]
  %v66 = vld [vmem:[%s1 + $0xc0] sm:$0xf]
  %v67 = vld [vmem:[%s1 + $0xc4] sm:$0xf]
  %v68 = vld [vmem:[%s1 + $0xc8] sm:$0xf]
  %v69 = vld [vmem:[%s1 + $0xcc] sm:$0xf]
  %v70 = vld [vmem:[%s1 + $0xd0] sm:$0xf]
  %v71 = vld [vmem:[%s1 + $0xd4] sm:$0xf]
  %v72 = vld [vmem:[%s1 + $0xd8] sm:$0xf]
  %v73 = vld [vmem:[%s1 + $0xdc] sm:$0xf]
  %v74 = vld [vmem:[%s1 + $0xe0] sm:$0xf]
  %v75 = vld [vmem:[%s1 + $0xe4] sm:$0xf]
  %v76 = vld [vmem:[%s1 + $0xe8] sm:$0xf]
  %v77 = vld [vmem:[%s1 + $0xec] sm:$0xf]
  %v78 = vld [vmem:[%s1 + $0xf0] sm:$0xf]
  %v79 = vld [vmem:[%s1 + $0xf4] sm:$0xf]
  %v80 = vld [vmem:[%s1 + $0xf8] sm:$0xf]
  %v81 = vld [vmem:[%s1 + $0xfc] sm:$0xf]
  %v82 = vld [vmem:[%s1 + $0x100] sm:$0xf]
  %v83 = vld [vmem:[%s1 + $0x104] sm:$0xf]
  %v84 = vld [vmem:[%s1 + $0x108] sm:$0xf]
  %v85 = vld [vmem:[%s1 + $0x10c] sm:$0xf]
  %v86 = vld [vmem:[%s1 + $0x110] sm:$0xf]
  %v87 = vld [vmem:[%s1 + $0x114] sm:$0xf]
  %v88 = vld [vmem:[%s1 + $0x118] sm:$0xf]
  %v89 = vld [vmem:[%s1 + $0x11c] sm:$0xf]
  %v90 = vld [vmem:[%s1 + $0x120] sm:$0xf]
  %v91 = vld [vmem:[%s1 + $0x124] sm:$0xf]
  %v92 = vld [vmem:[%s1 + $0x128] sm:$0xf]
  %v93 = vld [vmem:[%s1 + $0x12c] sm:$0xf]
  %v94 = vld [vmem:[%s1 + $0x130] sm:$0xf]
  %v95 = vld [vmem:[%s1 + $0x134] sm:$0xf]
  %v96 = vld [vmem:[%s1 + $0x138] sm:$0xf]
  %v97 = vld [vmem:[%s1 + $0x13c] sm:$0xf]
  %v98 = vld [vmem:[%s1 + $0x140] sm:$0xf]
  %v99 = vld [vmem:[%s1 + $0x144] sm:$0xf]
  %v100 = vld [vmem:[%s1 + $0x148] sm:$0xf]
  %v101 = vld [vmem:[%s1 + $0x14c] sm:$0xf]
  %v102 = vld [vmem:[%s1 + $0x150] sm:$0xf]
  %v103 = vld [vmem:[%s1 + $0x154] sm:$0xf]
  %v104 = vld [vmem:[%s1 + $0x158] sm:$0xf]
  %v105 = vld [vmem:[%s1 + $0x15c] sm:$0xf]
  %v106 = vld [vmem:[%s1 + $0x160] sm:$0xf]
  %v107 = vld [vmem:[%s1 + $0x164] sm:$0xf]
  %v108 = vld [vmem:[%s1 + $0x168] sm:$0xf]
  %v109 = vld [vmem:[%s1 + $0x16c] sm:$0xf]
  %v110 = vld [vmem:[%s1 + $0x170] sm:$0xf]
  %v111 = vld [vmem:[%s1 + $0x174] sm:$0xf]
  %v112 = vld [vmem:[%s1 + $0x178] sm:$0xf]
  %v113 = vld [vmem:[%s1 + $0x17c] sm:$0xf]
  %v114 = vld [vmem:[%s1 + $0x180] sm:$0xf]
  %v115 = vld [vmem:[%s1 + $0x184] sm:$0xf]
  %v116 = vld [vmem:[%s1 + $0x188] sm:$0xf]
  %v117 = vld [vmem:[%s1 + $0x18c] sm:$0xf]
  %v118 = vld [vmem:[%s1 + $0x190] sm:$0xf]
  %v119 = vld [vmem:[%s1 + $0x194] sm:$0xf]
  %v120 = vld [vmem:[%s1 + $0x198] sm:$0xf]
  %v121 = vld [vmem:[%s1 + $0x19c] sm:$0xf]
  %v122 = vld [vmem:[%s1 + $0x1a0] sm:$0xf]
  %v123 = vld [vmem:[%s1 + $0x1a4] sm:$0xf]
  %v124 = vld [vmem:[%s1 + $0x1a8] sm:$0xf]
  %v125 = vld [vmem:[%s1 + $0x1ac] sm:$0xf]
  %v126 = vld [vmem:[%s1 + $0x1b0] sm:$0xf]
  %v127 = vld [vmem:[%s1 + $0x1b4] sm:$0xf]
  %v128 = vld [vmem:[%s1 + $0x1b8] sm:$0xf]
  %v129 = vld [vmem:[%s1 + $0x1bc] sm:$0xf]
  %v130 = vld [vmem:[%s1 + $0x1c0] sm:$0xf]
  %v131 = vld [vmem:[%s1 + $0x1c4] sm:$0xf]
  %v132 = vld [vmem:[%s1 + $0x1c8] sm:$0xf]
  %v133 = vld [vmem:[%s1 + $0x1cc] sm:$0xf]
  %v134 = vld [vmem:[%s1 + $0x1d0] sm:$0xf]
  %v135 = vld [vmem:[%s1 + $0x1d4] sm:$0xf]
  %v136 = vld [vmem:[%s1 + $0x1d8] sm:$0xf]
  %v137 = vld [vmem:[%s1 + $0x1dc] sm:$0xf]
  %v138 = vld [vmem:[%s1 + $0x1e0] sm:$0xf]
  %v139 = vld [vmem:[%s1 + $0x1e4] sm:$0xf]
  %v140 = vld [vmem:[%s1 + $0x1e8] sm:$0xf]
  %v141 = vld [vmem:[%s1 + $0x1ec] sm:$0xf]
  %v142 = vld [vmem:[%s1 + $0x1f0] sm:$0xf]
  %v143 = vld [vmem:[%s1 + $0x1f4] sm:$0xf]
  %v144 = vld [vmem:[%s1 + $0x1f8] sm:$0xf]
  %v145 = vld [vmem:[%s1 + $0x1fc] sm:$0xf]
  %v146 = vld [vmem:[%s1 + $0x200] sm:$0xf]
  %v147 = vld [vmem:[%s1 + $0x204] sm:$0xf]
  %v148 = vld [vmem:[%s1 + $0x208] sm:$0xf]
  %v149 = vld [vmem:[%s1 + $0x20c] sm:$0xf]
  %v150 = vld [vmem:[%s1 + $0x210] sm:$0xf]
  %v151 = vld [vmem:[%s1 + $0x214] sm:$0xf]
  %v152 = vld [vmem:[%s1 + $0x218] sm:$0xf]
  %v153 = vld [vmem:[%s1 + $0x21c] sm:$0xf]
  %v154 = vld [vmem:[%s1 + $0x220] sm:$0xf]
  %v155 = vld [vmem:[%s1 + $0x224] sm:$0xf]
  %v156 = vld [vmem:[%s1 + $0x228] sm:$0xf]
  %v157 = vld [vmem:[%s1 + $0x22c] sm:$0xf]
  %v158 = vld [vmem:[%s1 + $0x230] sm:$0xf]
  %v159 = vld [vmem:[%s1 + $0x234] sm:$0xf]
  %v160 = vld [vmem:[%s1 + $0x238] sm:$0xf]
  %v161 = vld [vmem:[%s1 + $0x23c] sm:$0xf]
  %v167 = vunpack.c.l.b16 %v13
  %v168 = vunpack.c.h.b16 %v13
  %v169 = vunpack.c.l.b16 %v14
  %v170 = vunpack.c.h.b16 %v14
  %v171 = vunpack.c.l.b16 %v15
  %v172 = vunpack.c.h.b16 %v15
  %v173 = vunpack.c.l.b16 %v16
  %v174 = vunpack.c.h.b16 %v16
  %v175 = vunpack.c.l.b16 %v17
  %v176 = vpack.c.b16 %v167, %v167
  %v177 = vpack.c.b16 %v168, %v168
  %v178 = vpack.c.b16 %v169, %v169
  %v179 = vpack.c.b16 %v170, %v170
  %v180 = vpack.c.b16 %v171, %v171
  %v181 = vpack.c.b16 %v172, %v172
  %v182 = vpack.c.b16 %v173, %v173
  %v183 = vpack.c.b16 %v174, %v174
  %v184 = vpack.c.b16 %v175, %v175
  %v338 = vunpack.c.l.b16 %v18
  %v339 = vunpack.c.l.b16 %v19
  %v340 = vunpack.c.l.b16 %v20
  %v341 = vunpack.c.l.b16 %v21
  %v342 = vunpack.c.l.b16 %v22
  %v343 = vunpack.c.l.b16 %v23
  %v344 = vunpack.c.l.b16 %v24
  %v345 = vunpack.c.l.b16 %v25
  %v346 = vunpack.c.l.b16 %v26
  %v347 = vunpack.c.l.b16 %v27
  %v348 = vunpack.c.l.b16 %v28
  %v349 = vunpack.c.l.b16 %v29
  %v350 = vunpack.c.l.b16 %v30
  %v351 = vunpack.c.l.b16 %v31
  %v352 = vunpack.c.l.b16 %v32
  %v353 = vunpack.c.l.b16 %v33
  %v354 = vunpack.c.l.b16 %v34
  %v355 = vunpack.c.l.b16 %v35
  %v356 = vunpack.c.l.b16 %v36
  %v357 = vunpack.c.l.b16 %v37
  %v358 = vunpack.c.l.b16 %v38
  %v359 = vunpack.c.l.b16 %v39
  %v360 = vunpack.c.l.b16 %v40
  %v361 = vunpack.c.l.b16 %v41
  %v362 = vunpack.c.l.b16 %v42
  %v363 = vunpack.c.l.b16 %v43
  %v364 = vunpack.c.l.b16 %v44
  %v365 = vunpack.c.l.b16 %v45
  %v366 = vunpack.c.l.b16 %v46
  %v367 = vunpack.c.l.b16 %v47
  %v368 = vunpack.c.l.b16 %v48
  %v369 = vunpack.c.l.b16 %v49
  %v370 = vunpack.c.l.b16 %v50
  %v371 = vunpack.c.l.b16 %v51
  %v372 = vunpack.c.l.b16 %v52
  %v373 = vunpack.c.l.b16 %v53
  %v374 = vunpack.c.l.b16 %v54
  %v375 = vunpack.c.l.b16 %v55
  %v376 = vunpack.c.l.b16 %v56
  %v377 = vunpack.c.l.b16 %v57
  %v378 = vunpack.c.l.b16 %v58
  %v379 = vunpack.c.l.b16 %v59
  %v380 = vunpack.c.l.b16 %v60
  %v381 = vunpack.c.l.b16 %v61
  %v382 = vunpack.c.l.b16 %v62
  %v383 = vunpack.c.l.b16 %v63
  %v384 = vunpack.c.l.b16 %v64
  %v385 = vunpack.c.l.b16 %v65
  %v386 = vunpack.c.l.b16 %v66
  %v387 = vunpack.c.l.b16 %v67
  %v388 = vunpack.c.l.b16 %v68
  %v389 = vunpack.c.l.b16 %v69
  %v390 = vunpack.c.l.b16 %v70
  %v391 = vunpack.c.l.b16 %v71
  %v392 = vunpack.c.l.b16 %v72
  %v393 = vunpack.c.l.b16 %v73
  %v394 = vunpack.c.l.b16 %v74
  %v395 = vunpack.c.l.b16 %v75
  %v396 = vunpack.c.l.b16 %v76
  %v397 = vunpack.c.l.b16 %v77
  %v398 = vunpack.c.l.b16 %v78
  %v399 = vunpack.c.l.b16 %v79
  %v400 = vunpack.c.l.b16 %v80
  %v401 = vunpack.c.l.b16 %v81
  %v402 = vunpack.c.l.b16 %v82
  %v403 = vunpack.c.l.b16 %v83
  %v404 = vunpack.c.l.b16 %v84
  %v405 = vunpack.c.l.b16 %v85
  %v406 = vunpack.c.l.b16 %v86
  %v407 = vunpack.c.l.b16 %v87
  %v408 = vunpack.c.l.b16 %v88
  %v409 = vunpack.c.l.b16 %v89
  %v410 = vunpack.c.l.b16 %v90
  %v411 = vunpack.c.l.b16 %v91
  %v412 = vunpack.c.l.b16 %v92
  %v413 = vunpack.c.l.b16 %v93
  %v414 = vunpack.c.l.b16 %v94
  %v415 = vunpack.c.l.b16 %v95
  %v416 = vunpack.c.l.b16 %v96
  %v417 = vunpack.c.l.b16 %v97
  %v418 = vunpack.c.l.b16 %v98
  %v419 = vunpack.c.l.b16 %v99
  %v420 = vunpack.c.l.b16 %v100
  %v421 = vunpack.c.l.b16 %v101
  %v422 = vunpack.c.l.b16 %v102
  %v423 = vunpack.c.l.b16 %v103
  %v424 = vunpack.c.l.b16 %v104
  %v425 = vunpack.c.l.b16 %v105
  %v426 = vunpack.c.l.b16 %v106
  %v427 = vunpack.c.l.b16 %v107
  %v428 = vunpack.c.l.b16 %v108
  %v429 = vunpack.c.l.b16 %v109
  %v430 = vunpack.c.l.b16 %v110
  %v431 = vunpack.c.l.b16 %v111
  %v432 = vunpack.c.l.b16 %v112
  %v433 = vunpack.c.l.b16 %v113
  %v434 = vunpack.c.l.b16 %v114
  %v435 = vunpack.c.l.b16 %v115
  %v436 = vunpack.c.l.b16 %v116
  %v437 = vunpack.c.l.b16 %v117
  %v438 = vunpack.c.l.b16 %v118
  %v439 = vunpack.c.l.b16 %v119
  %v440 = vunpack.c.l.b16 %v120
  %v441 = vunpack.c.l.b16 %v121
  %v442 = vunpack.c.l.b16 %v122
  %v443 = vunpack.c.l.b16 %v123
  %v444 = vunpack.c.l.b16 %v124
  %v445 = vunpack.c.l.b16 %v125
  %v446 = vunpack.c.l.b16 %v126
  %v447 = vunpack.c.l.b16 %v127
  %v448 = vunpack.c.l.b16 %v128
  %v449 = vunpack.c.l.b16 %v129
  %v450 = vunpack.c.l.b16 %v130
  %v451 = vunpack.c.l.b16 %v131
  %v452 = vunpack.c.l.b16 %v132
  %v453 = vunpack.c.l.b16 %v133
  %v454 = vunpack.c.l.b16 %v134
  %v455 = vunpack.c.l.b16 %v135
  %v456 = vunpack.c.l.b16 %v136
  %v457 = vunpack.c.l.b16 %v137
  %v458 = vunpack.c.l.b16 %v138
  %v459 = vunpack.c.l.b16 %v139
  %v460 = vunpack.c.l.b16 %v140
  %v461 = vunpack.c.l.b16 %v141
  %v462 = vunpack.c.l.b16 %v142
  %v463 = vunpack.c.l.b16 %v143
  %v464 = vunpack.c.l.b16 %v144
  %v465 = vunpack.c.l.b16 %v145
  %v466 = vunpack.c.l.b16 %v146
  %v467 = vunpack.c.l.b16 %v147
  %v468 = vunpack.c.l.b16 %v148
  %v469 = vunpack.c.l.b16 %v149
  %v470 = vunpack.c.l.b16 %v150
  %v471 = vunpack.c.l.b16 %v151
  %v472 = vunpack.c.l.b16 %v152
  %v473 = vunpack.c.l.b16 %v153
  %v474 = vunpack.c.l.b16 %v154
  %v475 = vunpack.c.l.b16 %v155
  %v476 = vunpack.c.l.b16 %v156
  %v477 = vunpack.c.l.b16 %v157
  %v478 = vunpack.c.l.b16 %v158
  %v479 = vunpack.c.l.b16 %v159
  %v480 = vunpack.c.l.b16 %v160
  %v481 = vunpack.c.l.b16 %v161
  %v482 = vpack.c.b16 %v339, %v338
  %v483 = vpack.c.b16 %v341, %v340
  %v484 = vpack.c.b16 %v343, %v342
  %v485 = vpack.c.b16 %v345, %v344
  %v486 = vpack.c.b16 %v347, %v346
  %v487 = vpack.c.b16 %v349, %v348
  %v488 = vpack.c.b16 %v351, %v350
  %v489 = vpack.c.b16 %v353, %v352
  %v490 = vpack.c.b16 %v355, %v354
  %v491 = vpack.c.b16 %v357, %v356
  %v492 = vpack.c.b16 %v359, %v358
  %v493 = vpack.c.b16 %v361, %v360
  %v494 = vpack.c.b16 %v363, %v362
  %v495 = vpack.c.b16 %v365, %v364
  %v496 = vpack.c.b16 %v367, %v366
  %v497 = vpack.c.b16 %v369, %v368
  %v498 = vpack.c.b16 %v371, %v370
  %v499 = vpack.c.b16 %v373, %v372
  %v500 = vpack.c.b16 %v375, %v374
  %v501 = vpack.c.b16 %v377, %v376
  %v502 = vpack.c.b16 %v379, %v378
  %v503 = vpack.c.b16 %v381, %v380
  %v504 = vpack.c.b16 %v383, %v382
  %v505 = vpack.c.b16 %v385, %v384
  %v506 = vpack.c.b16 %v387, %v386
  %v507 = vpack.c.b16 %v389, %v388
  %v508 = vpack.c.b16 %v391, %v390
  %v509 = vpack.c.b16 %v393, %v392
  %v510 = vpack.c.b16 %v395, %v394
  %v511 = vpack.c.b16 %v397, %v396
  %v512 = vpack.c.b16 %v399, %v398
  %v513 = vpack.c.b16 %v401, %v400
  %v514 = vpack.c.b16 %v403, %v402
  %v515 = vpack.c.b16 %v405, %v404
  %v516 = vpack.c.b16 %v407, %v406
  %v517 = vpack.c.b16 %v409, %v408
  %v518 = vpack.c.b16 %v411, %v410
  %v519 = vpack.c.b16 %v413, %v412
  %v520 = vpack.c.b16 %v415, %v414
  %v521 = vpack.c.b16 %v417, %v416
  %v522 = vpack.c.b16 %v419, %v418
  %v523 = vpack.c.b16 %v421, %v420
  %v524 = vpack.c.b16 %v423, %v422
  %v525 = vpack.c.b16 %v425, %v424
  %v526 = vpack.c.b16 %v427, %v426
  %v527 = vpack.c.b16 %v429, %v428
  %v528 = vpack.c.b16 %v431, %v430
  %v529 = vpack.c.b16 %v433, %v432
  %v530 = vpack.c.b16 %v435, %v434
  %v531 = vpack.c.b16 %v437, %v436
  %v532 = vpack.c.b16 %v439, %v438
  %v533 = vpack.c.b16 %v441, %v440
  %v534 = vpack.c.b16 %v443, %v442
  %v535 = vpack.c.b16 %v445, %v444
  %v536 = vpack.c.b16 %v447, %v446
  %v537 = vpack.c.b16 %v449, %v448
  %v538 = vpack.c.b16 %v451, %v450
  %v539 = vpack.c.b16 %v453, %v452
  %v540 = vpack.c.b16 %v455, %v454
  %v541 = vpack.c.b16 %v457, %v456
  %v542 = vpack.c.b16 %v459, %v458
  %v543 = vpack.c.b16 %v461, %v460
  %v544 = vpack.c.b16 %v463, %v462
  %v545 = vpack.c.b16 %v465, %v464
  %v546 = vpack.c.b16 %v467, %v466
  %v547 = vpack.c.b16 %v469, %v468
  %v548 = vpack.c.b16 %v471, %v470
  %v549 = vpack.c.b16 %v473, %v472
  %v550 = vpack.c.b16 %v475, %v474
  %v551 = vpack.c.b16 %v477, %v476
  %v552 = vpack.c.b16 %v479, %v478
  %v553 = vpack.c.b16 %v481, %v480
  %626 = vmatpush.bf16.msra.mxu0 %v489
  %627 = vmatpush.bf16.msra.mxu0 %v488
  %628 = vmatpush.bf16.msra.mxu0 %v487
  %629 = vmatpush.bf16.msra.mxu0 %v486
  %630 = vmatpush.bf16.msra.mxu0 %v485
  %631 = vmatpush.bf16.msra.mxu0 %v484
  %632 = vmatpush.bf16.msra.mxu0 %v483
  %633 = vmatpush.bf16.msra.mxu0 %v482
  %634 = vmatmul.bf16.gmra.mxu0 %v176
  %v635 = vpop.f32.mrf.mxu0
  %v636 = vadd.f32 0.0, %v635
  %v637 = vpop.f32.mrf.mxu0
  %638 = vdwg.mxu0
  %639 = vmatpush.bf16.msra.mxu0 %v497
  %640 = vmatpush.bf16.msra.mxu0 %v496
  %641 = vmatpush.bf16.msra.mxu0 %v495
  %642 = vmatpush.bf16.msra.mxu0 %v494
  %643 = vmatpush.bf16.msra.mxu0 %v493
  %644 = vmatpush.bf16.msra.mxu0 %v492
  %645 = vmatpush.bf16.msra.mxu0 %v491
  %646 = vmatpush.bf16.msra.mxu0 %v490
  %647 = vmatmul.bf16.gmra.mxu0 %v177
  %v648 = vpop.f32.mrf.mxu0
  %v649 = vadd.f32 %v636, %v648
  %v650 = vpop.f32.mrf.mxu0
  %651 = vdwg.mxu0
  %652 = vmatpush.bf16.msra.mxu0 %v505
  %653 = vmatpush.bf16.msra.mxu0 %v504
  %654 = vmatpush.bf16.msra.mxu0 %v503
  %655 = vmatpush.bf16.msra.mxu0 %v502
  %656 = vmatpush.bf16.msra.mxu0 %v501
  %657 = vmatpush.bf16.msra.mxu0 %v500
  %658 = vmatpush.bf16.msra.mxu0 %v499
  %659 = vmatpush.bf16.msra.mxu0 %v498
  %660 = vmatmul.bf16.gmra.mxu0 %v178
  %v661 = vpop.f32.mrf.mxu0
  %v662 = vadd.f32 %v649, %v661
  %v663 = vpop.f32.mrf.mxu0
  %664 = vdwg.mxu0
  %665 = vmatpush.bf16.msra.mxu0 %v513
  %666 = vmatpush.bf16.msra.mxu0 %v512
  %667 = vmatpush.bf16.msra.mxu0 %v511
  %668 = vmatpush.bf16.msra.mxu0 %v510
  %669 = vmatpush.bf16.msra.mxu0 %v509
  %670 = vmatpush.bf16.msra.mxu0 %v508
  %671 = vmatpush.bf16.msra.mxu0 %v507
  %672 = vmatpush.bf16.msra.mxu0 %v506
  %673 = vmatmul.bf16.gmra.mxu0 %v179
  %v674 = vpop.f32.mrf.mxu0
  %v675 = vadd.f32 %v662, %v674
  %v676 = vpop.f32.mrf.mxu0
  %677 = vdwg.mxu0
  %678 = vmatpush.bf16.msra.mxu0 %v521
  %679 = vmatpush.bf16.msra.mxu0 %v520
  %680 = vmatpush.bf16.msra.mxu0 %v519
  %681 = vmatpush.bf16.msra.mxu0 %v518
  %682 = vmatpush.bf16.msra.mxu0 %v517
  %683 = vmatpush.bf16.msra.mxu0 %v516
  %684 = vmatpush.bf16.msra.mxu0 %v515
  %685 = vmatpush.bf16.msra.mxu0 %v514
  %686 = vmatmul.bf16.gmra.mxu0 %v180
  %v687 = vpop.f32.mrf.mxu0
  %v688 = vadd.f32 %v675, %v687
  %v689 = vpop.f32.mrf.mxu0
  %690 = vdwg.mxu0
  %691 = vmatpush.bf16.msra.mxu0 %v529
  %692 = vmatpush.bf16.msra.mxu0 %v528
  %693 = vmatpush.bf16.msra.mxu0 %v527
  %694 = vmatpush.bf16.msra.mxu0 %v526
  %695 = vmatpush.bf16.msra.mxu0 %v525
  %696 = vmatpush.bf16.msra.mxu0 %v524
  %697 = vmatpush.bf16.msra.mxu0 %v523
  %698 = vmatpush.bf16.msra.mxu0 %v522
  %699 = vmatmul.bf16.gmra.mxu0 %v181
  %v700 = vpop.f32.mrf.mxu0
  %v701 = vadd.f32 %v688, %v700
  %v702 = vpop.f32.mrf.mxu0
  %703 = vdwg.mxu0
  %704 = vmatpush.bf16.msra.mxu0 %v537
  %705 = vmatpush.bf16.msra.mxu0 %v536
  %706 = vmatpush.bf16.msra.mxu0 %v535
  %707 = vmatpush.bf16.msra.mxu0 %v534
  %708 = vmatpush.bf16.msra.mxu0 %v533
  %709 = vmatpush.bf16.msra.mxu0 %v532
  %710 = vmatpush.bf16.msra.mxu0 %v531
  %711 = vmatpush.bf16.msra.mxu0 %v530
  %712 = vmatmul.bf16.gmra.mxu0 %v182
  %v713 = vpop.f32.mrf.mxu0
  %v714 = vadd.f32 %v701, %v713
  %v715 = vpop.f32.mrf.mxu0
  %716 = vdwg.mxu0
  %717 = vmatpush.bf16.msra.mxu0 %v545
  %718 = vmatpush.bf16.msra.mxu0 %v544
  %719 = vmatpush.bf16.msra.mxu0 %v543
  %720 = vmatpush.bf16.msra.mxu0 %v542
  %721 = vmatpush.bf16.msra.mxu0 %v541
  %722 = vmatpush.bf16.msra.mxu0 %v540
  %723 = vmatpush.bf16.msra.mxu0 %v539
  %724 = vmatpush.bf16.msra.mxu0 %v538
  %725 = vmatmul.bf16.gmra.mxu0 %v183
  %v726 = vpop.f32.mrf.mxu0
  %v727 = vadd.f32 %v714, %v726
  %v728 = vpop.f32.mrf.mxu0
  %729 = vdwg.mxu0
  %730 = vmatpush.bf16.msra.mxu0 %v553
  %731 = vmatpush.bf16.msra.mxu0 %v552
  %732 = vmatpush.bf16.msra.mxu0 %v551
  %733 = vmatpush.bf16.msra.mxu0 %v550
  %734 = vmatpush.bf16.msra.mxu0 %v549
  %735 = vmatpush.bf16.msra.mxu0 %v548
  %736 = vmatpush.bf16.msra.mxu0 %v547
  %737 = vmatpush.bf16.msra.mxu0 %v546
  %738 = vmatmul.bf16.gmra.mxu0 %v184
  %v739 = vpop.f32.mrf.mxu0
  %v740 = vadd.f32 %v727, %v739
  %v741 = vpop.f32.mrf.mxu0
  %742 = vdwg.mxu0
  %743 = vst [vmem:[%s2] sm:$0xff] %v740
  %v744 = vrot.slane %v740, 4
  %v745 = vadd.f32 %v740, %v744
  %v746 = vrot.slane %v745, 2
  %v747 = vadd.f32 %v745, %v746
  %v748 = vrot.slane %v747, 1
  %v749 = vadd.f32 %v747, %v748
  %v750 = vmul.f32 %v740, %v740
  %v751 = vrot.slane %v750, 4
  %v752 = vadd.f32 %v750, %v751
  %v753 = vrot.slane %v752, 2
  %v754 = vadd.f32 %v752, %v753
  %v755 = vrot.slane %v754, 1
  %v756 = vadd.f32 %v754, %v755
  %vm757 = vcmask 1040384
  %v758 = vsel %vm757, %v749, %v756
  %vm759 = vcmask 1041408
  %v760 = vsel %vm759, %v758, 0.0
  %761 = vst [vmem:[%s3] sm:$0xff] %v760
  // Predicated region
  $region10: #{vgg_forward.29} parent=0 // pred_check
    _
  $region11: #{vgg_forward.29} parent=0 // pred_check_branch
    %763 = sbr.rel (0) target = $region13
  $region12: #{vgg_forward.29} parent=0 // pred_region
    _
  $region13: #{vgg_forward.29} parent=0 // pred_fallthru
    _
  // Predicated region
  $region14: #{vgg_forward.29} parent=0 // pred_check
    _
  $region15: #{vgg_forward.29} parent=0 // pred_check_branch
    %765 = sbr.rel (0) target = $region17
  $region16: #{vgg_forward.29} parent=0 // pred_region
    _
  $region17: #{vgg_forward.29} parent=0 // pred_fallthru
    _
  // Predicated region
  $region18: #{vgg_forward.29} parent=0 // pred_check
    _
  $region19: #{vgg_forward.29} parent=0 // pred_check_branch
    %767 = sbr.rel (0) target = $region21
  $region20: #{vgg_forward.29} parent=0 // pred_region
    _
  $region21: #{vgg_forward.29} parent=0 // pred_fallthru
    _
  // Predicated region
  $region22: #{vgg_forward.29} parent=0 // pred_check
    _
  $region23: #{vgg_forward.29} parent=0 // pred_check_branch
    %769 = sbr.rel (0) target = $region25
  $region24: #{vgg_forward.29} parent=0 // pred_region
    _
  $region25: #{vgg_forward.29} parent=0 // pred_fallthru
    _

// kernel: vgg_forward.33
$region0: #{vgg_forward.33}
  #allocation0 [shape = 'u32[]', space=smem, size = 0x4, offset = 0x4, fixed_abs, tag = 'smem constant byte address 0x4 - core index']
  #allocation1 [shape = 'u32[72,128]{1,0:T(1,128)}', space=vmem, size = 0x9000, scoped, tag = 'internal scratch']
  %s0 = inlined_call_operand.vmem [shape: bf16[8,128], index: 0, kind: input, shape index: {}]
  %s1 = inlined_call_operand.vmem [shape: bf16[128,1024], index: 1, kind: input, shape index: {}]
  %s2 = inlined_call_operand.vmem [shape: f32[1,1024], index: 2, kind: input, shape index: {}]
  %s3 = inlined_call_operand.vmem [shape: f32[8,1024], index: 3, kind: output, shape index: {}]
  %s4 = sld [smem:[#allocation0]]
  $region22: #{vgg_forward.33} parent=0
    _
  %s6 = ssub.s32 1, %s4
  %s7 = scalar_select 0, %s6, %s4
  // Predicated region
  $region2: #{vgg_forward.33} parent=0 // pred_check
    _
  $region3: #{vgg_forward.33} parent=0 // pred_check_branch
    %9 = sbr.rel (0) target = $region5
  $region4: #{vgg_forward.33} parent=0 // pred_region
    _
  $region5: #{vgg_forward.33} parent=0 // pred_fallthru
    _
  // Predicated region
  $region6: #{vgg_forward.33} parent=0 // pred_check
    _
  $region7: #{vgg_forward.33} parent=0 // pred_check_branch
    %11 = sbr.rel (0) target = $region9
  $region8: #{vgg_forward.33} parent=0 // pred_region
    _
  $region9: #{vgg_forward.33} parent=0 // pred_fallthru
    _
  // Predicated region
  $region10: #{vgg_forward.33} parent=0 // pred_check
    _
  $region11: #{vgg_forward.33} parent=0 // pred_check_branch
    %13 = sbr.rel (0) target = $region13
  $region12: #{vgg_forward.33} parent=0 // pred_region
    _
  $region13: #{vgg_forward.33} parent=0 // pred_fallthru
    _
  %v14 = vld [vmem:[%s0] sm:$0xf]
  %v15 = vld [vmem:[%s1] sm:$0xff]
  %v16 = vld [vmem:[%s1 + $0x8] sm:$0xff]
  %v17 = vld [vmem:[%s1 + $0x10] sm:$0xff]
  %v18 = vld [vmem:[%s1 + $0x18] sm:$0xff]
  %v19 = vld [vmem:[%s1 + $0x20] sm:$0xff]
  %v20 = vld [vmem:[%s1 + $0x28] sm:$0xff]
  %v21 = vld [vmem:[%s1 + $0x30] sm:$0xff]
  %v22 = vld [vmem:[%s1 + $0x38] sm:$0xff]
  %v23 = vld [vmem:[%s1 + $0x40] sm:$0xff]
  %v24 = vld [vmem:[%s1 + $0x48] sm:$0xff]
  %v25 = vld [vmem:[%s1 + $0x50] sm:$0xff]
  %v26 = vld [vmem:[%s1 + $0x58] sm:$0xff]
  %v27 = vld [vmem:[%s1 + $0x60] sm:$0xff]
  %v28 = vld [vmem:[%s1 + $0x68] sm:$0xff]
  %v29 = vld [vmem:[%s1 + $0x70] sm:$0xff]
  %v30 = vld [vmem:[%s1 + $0x78] sm:$0xff]
  %v31 = vld [vmem:[%s1 + $0x80] sm:$0xff]
  %v32 = vld [vmem:[%s1 + $0x88] sm:$0xff]
  %v33 = vld [vmem:[%s1 + $0x90] sm:$0xff]
  %v34 = vld [vmem:[%s1 + $0x98] sm:$0xff]
  %v35 = vld [vmem:[%s1 + $0xa0] sm:$0xff]
  %v36 = vld [vmem:[%s1 + $0xa8] sm:$0xff]
  %v37 = vld [vmem:[%s1 + $0xb0] sm:$0xff]
  %v38 = vld [vmem:[%s1 + $0xb8] sm:$0xff]
  %v39 = vld [vmem:[%s1 + $0xc0] sm:$0xff]
  %v40 = vld [vmem:[%s1 + $0xc8] sm:$0xff]
  %v41 = vld [vmem:[%s1 + $0xd0] sm:$0xff]
  %v42 = vld [vmem:[%s1 + $0xd8] sm:$0xff]
  %v43 = vld [vmem:[%s1 + $0xe0] sm:$0xff]
  %v44 = vld [vmem:[%s1 + $0xe8] sm:$0xff]
  %v45 = vld [vmem:[%s1 + $0xf0] sm:$0xff]
  %v46 = vld [vmem:[%s1 + $0xf8] sm:$0xff]
  %v47 = vld [vmem:[%s1 + $0x100] sm:$0xff]
  %v48 = vld [vmem:[%s1 + $0x108] sm:$0xff]
  %v49 = vld [vmem:[%s1 + $0x110] sm:$0xff]
  %v50 = vld [vmem:[%s1 + $0x118] sm:$0xff]
  %v51 = vld [vmem:[%s1 + $0x120] sm:$0xff]
  %v52 = vld [vmem:[%s1 + $0x128] sm:$0xff]
  %v53 = vld [vmem:[%s1 + $0x130] sm:$0xff]
  %v54 = vld [vmem:[%s1 + $0x138] sm:$0xff]
  %v55 = vld [vmem:[%s1 + $0x140] sm:$0xff]
  %v56 = vld [vmem:[%s1 + $0x148] sm:$0xff]
  %v57 = vld [vmem:[%s1 + $0x150] sm:$0xff]
  %v58 = vld [vmem:[%s1 + $0x158] sm:$0xff]
  %v59 = vld [vmem:[%s1 + $0x160] sm:$0xff]
  %v60 = vld [vmem:[%s1 + $0x168] sm:$0xff]
  %v61 = vld [vmem:[%s1 + $0x170] sm:$0xff]
  %v62 = vld [vmem:[%s1 + $0x178] sm:$0xff]
  %v63 = vld [vmem:[%s1 + $0x180] sm:$0xff]
  %v64 = vld [vmem:[%s1 + $0x188] sm:$0xff]
  %v65 = vld [vmem:[%s1 + $0x190] sm:$0xff]
  %v66 = vld [vmem:[%s1 + $0x198] sm:$0xff]
  %v67 = vld [vmem:[%s1 + $0x1a0] sm:$0xff]
  %v68 = vld [vmem:[%s1 + $0x1a8] sm:$0xff]
  %v69 = vld [vmem:[%s1 + $0x1b0] sm:$0xff]
  %v70 = vld [vmem:[%s1 + $0x1b8] sm:$0xff]
  %v71 = vld [vmem:[%s1 + $0x1c0] sm:$0xff]
  %v72 = vld [vmem:[%s1 + $0x1c8] sm:$0xff]
  %v73 = vld [vmem:[%s1 + $0x1d0] sm:$0xff]
  %v74 = vld [vmem:[%s1 + $0x1d8] sm:$0xff]
  %v75 = vld [vmem:[%s1 + $0x1e0] sm:$0xff]
  %v76 = vld [vmem:[%s1 + $0x1e8] sm:$0xff]
  %v77 = vld [vmem:[%s1 + $0x1f0] sm:$0xff]
  %v78 = vld [vmem:[%s1 + $0x1f8] sm:$0xff]
  %v79 = vld [vmem:[%s2] sm:$0xff]
  %v81 = vperm.slane %v79, 0
  %v82 = vperm.slane %v79, 1
  %v83 = vperm.slane %v79, 2
  %v84 = vperm.slane %v79, 3
  %v85 = vperm.slane %v79, 4
  %v86 = vperm.slane %v79, 5
  %v87 = vperm.slane %v79, 6
  %v88 = vperm.slane %v79, 7
  %v161 = vunpack.c.l.b16 %v15
  %v162 = vunpack.c.h.b16 %v15
  %v163 = vunpack.c.l.b16 %v16
  %v164 = vunpack.c.h.b16 %v16
  %v165 = vunpack.c.l.b16 %v17
  %v166 = vunpack.c.h.b16 %v17
  %v167 = vunpack.c.l.b16 %v18
  %v168 = vunpack.c.h.b16 %v18
  %v169 = vunpack.c.l.b16 %v19
  %v170 = vunpack.c.h.b16 %v19
  %v171 = vunpack.c.l.b16 %v20
  %v172 = vunpack.c.h.b16 %v20
  %v173 = vunpack.c.l.b16 %v21
  %v174 = vunpack.c.h.b16 %v21
  %v175 = vunpack.c.l.b16 %v22
  %v176 = vunpack.c.h.b16 %v22
  %v177 = vunpack.c.l.b16 %v23
  %v178 = vunpack.c.h.b16 %v23
  %v179 = vunpack.c.l.b16 %v24
  %v180 = vunpack.c.h.b16 %v24
  %v181 = vunpack.c.l.b16 %v25
  %v182 = vunpack.c.h.b16 %v25
  %v183 = vunpack.c.l.b16 %v26
  %v184 = vunpack.c.h.b16 %v26
  %v185 = vunpack.c.l.b16 %v27
  %v186 = vunpack.c.h.b16 %v27
  %v187 = vunpack.c.l.b16 %v28
  %v188 = vunpack.c.h.b16 %v28
  %v189 = vunpack.c.l.b16 %v29
  %v190 = vunpack.c.h.b16 %v29
  %v191 = vunpack.c.l.b16 %v30
  %v192 = vunpack.c.h.b16 %v30
  %v193 = vunpack.c.l.b16 %v31
  %v194 = vunpack.c.h.b16 %v31
  %v195 = vunpack.c.l.b16 %v32
  %v196 = vunpack.c.h.b16 %v32
  %v197 = vunpack.c.l.b16 %v33
  %v198 = vunpack.c.h.b16 %v33
  %v199 = vunpack.c.l.b16 %v34
  %v200 = vunpack.c.h.b16 %v34
  %v201 = vunpack.c.l.b16 %v35
  %v202 = vunpack.c.h.b16 %v35
  %v203 = vunpack.c.l.b16 %v36
  %v204 = vunpack.c.h.b16 %v36
  %v205 = vunpack.c.l.b16 %v37
  %v206 = vunpack.c.h.b16 %v37
  %v207 = vunpack.c.l.b16 %v38
  %v208 = vunpack.c.h.b16 %v38
  %v209 = vunpack.c.l.b16 %v39
  %v210 = vunpack.c.h.b16 %v39
  %v211 = vunpack.c.l.b16 %v40
  %v212 = vunpack.c.h.b16 %v40
  %v213 = vunpack.c.l.b16 %v41
  %v214 = vunpack.c.h.b16 %v41
  %v215 = vunpack.c.l.b16 %v42
  %v216 = vunpack.c.h.b16 %v42
  %v217 = vunpack.c.l.b16 %v43
  %v218 = vunpack.c.h.b16 %v43
  %v219 = vunpack.c.l.b16 %v44
  %v220 = vunpack.c.h.b16 %v44
  %v221 = vunpack.c.l.b16 %v45
  %v222 = vunpack.c.h.b16 %v45
  %v223 = vunpack.c.l.b16 %v46
  %v224 = vunpack.c.h.b16 %v46
  %v225 = vunpack.c.l.b16 %v47
  %v226 = vunpack.c.h.b16 %v47
  %v227 = vunpack.c.l.b16 %v48
  %v228 = vunpack.c.h.b16 %v48
  %v229 = vunpack.c.l.b16 %v49
  %v230 = vunpack.c.h.b16 %v49
  %v231 = vunpack.c.l.b16 %v50
  %v232 = vunpack.c.h.b16 %v50
  %v233 = vunpack.c.l.b16 %v51
  %v234 = vunpack.c.h.b16 %v51
  %v235 = vunpack.c.l.b16 %v52
  %v236 = vunpack.c.h.b16 %v52
  %v237 = vunpack.c.l.b16 %v53
  %v238 = vunpack.c.h.b16 %v53
  %v239 = vunpack.c.l.b16 %v54
  %v240 = vunpack.c.h.b16 %v54
  %v241 = vunpack.c.l.b16 %v55
  %v242 = vunpack.c.h.b16 %v55
  %v243 = vunpack.c.l.b16 %v56
  %v244 = vunpack.c.h.b16 %v56
  %v245 = vunpack.c.l.b16 %v57
  %v246 = vunpack.c.h.b16 %v57
  %v247 = vunpack.c.l.b16 %v58
  %v248 = vunpack.c.h.b16 %v58
  %v249 = vunpack.c.l.b16 %v59
  %v250 = vunpack.c.h.b16 %v59
  %v251 = vunpack.c.l.b16 %v60
  %v252 = vunpack.c.h.b16 %v60
  %v253 = vunpack.c.l.b16 %v61
  %v254 = vunpack.c.h.b16 %v61
  %v255 = vunpack.c.l.b16 %v62
  %v256 = vunpack.c.h.b16 %v62
  %v257 = vunpack.c.l.b16 %v63
  %v258 = vunpack.c.h.b16 %v63
  %v259 = vunpack.c.l.b16 %v64
  %v260 = vunpack.c.h.b16 %v64
  %v261 = vunpack.c.l.b16 %v65
  %v262 = vunpack.c.h.b16 %v65
  %v263 = vunpack.c.l.b16 %v66
  %v264 = vunpack.c.h.b16 %v66
  %v265 = vunpack.c.l.b16 %v67
  %v266 = vunpack.c.h.b16 %v67
  %v267 = vunpack.c.l.b16 %v68
  %v268 = vunpack.c.h.b16 %v68
  %v269 = vunpack.c.l.b16 %v69
  %v270 = vunpack.c.h.b16 %v69
  %v271 = vunpack.c.l.b16 %v70
  %v272 = vunpack.c.h.b16 %v70
  %v273 = vunpack.c.l.b16 %v71
  %v274 = vunpack.c.h.b16 %v71
  %v275 = vunpack.c.l.b16 %v72
  %v276 = vunpack.c.h.b16 %v72
  %v277 = vunpack.c.l.b16 %v73
  %v278 = vunpack.c.h.b16 %v73
  %v279 = vunpack.c.l.b16 %v74
  %v280 = vunpack.c.h.b16 %v74
  %v281 = vunpack.c.l.b16 %v75
  %v282 = vunpack.c.h.b16 %v75
  %v283 = vunpack.c.l.b16 %v76
  %v284 = vunpack.c.h.b16 %v76
  %v285 = vunpack.c.l.b16 %v77
  %v286 = vunpack.c.h.b16 %v77
  %v287 = vunpack.c.l.b16 %v78
  %v288 = vunpack.c.h.b16 %v78
  %v289 = vpack.c.b16 %v169, %v161
  %v290 = vpack.c.b16 %v170, %v162
  %v291 = vpack.c.b16 %v171, %v163
  %v292 = vpack.c.b16 %v172, %v164
  %v293 = vpack.c.b16 %v173, %v165
  %v294 = vpack.c.b16 %v174, %v166
  %v295 = vpack.c.b16 %v175, %v167
  %v296 = vpack.c.b16 %v176, %v168
  %v297 = vpack.c.b16 %v185, %v177
  %v298 = vpack.c.b16 %v186, %v178
  %v299 = vpack.c.b16 %v187, %v179
  %v300 = vpack.c.b16 %v188, %v180
  %v301 = vpack.c.b16 %v189, %v181
  %v302 = vpack.c.b16 %v190, %v182
  %v303 = vpack.c.b16 %v191, %v183
  %v304 = vpack.c.b16 %v192, %v184
  %v305 = vpack.c.b16 %v201, %v193
  %v306 = vpack.c.b16 %v202, %v194
  %v307 = vpack.c.b16 %v203, %v195
  %v308 = vpack.c.b16 %v204, %v196
  %v309 = vpack.c.b16 %v205, %v197
  %v310 = vpack.c.b16 %v206, %v198
  %v311 = vpack.c.b16 %v207, %v199
  %v312 = vpack.c.b16 %v208, %v200
  %v313 = vpack.c.b16 %v217, %v209
  %v314 = vpack.c.b16 %v218, %v210
  %v315 = vpack.c.b16 %v219, %v211
  %v316 = vpack.c.b16 %v220, %v212
  %v317 = vpack.c.b16 %v221, %v213
  %v318 = vpack.c.b16 %v222, %v214
  %v319 = vpack.c.b16 %v223, %v215
  %v320 = vpack.c.b16 %v224, %v216
  %v321 = vpack.c.b16 %v233, %v225
  %v322 = vpack.c.b16 %v234, %v226
  %v323 = vpack.c.b16 %v235, %v227
  %v324 = vpack.c.b16 %v236, %v228
  %v325 = vpack.c.b16 %v237, %v229
  %v326 = vpack.c.b16 %v238, %v230
  %v327 = vpack.c.b16 %v239, %v231
  %v328 = vpack.c.b16 %v240, %v232
  %v329 = vpack.c.b16 %v249, %v241
  %v330 = vpack.c.b16 %v250, %v242
  %v331 = vpack.c.b16 %v251, %v243
  %v332 = vpack.c.b16 %v252, %v244
  %v333 = vpack.c.b16 %v253, %v245
  %v334 = vpack.c.b16 %v254, %v246
  %v335 = vpack.c.b16 %v255, %v247
  %v336 = vpack.c.b16 %v256, %v248
  %v337 = vpack.c.b16 %v265, %v257
  %v338 = vpack.c.b16 %v266, %v258
  %v339 = vpack.c.b16 %v267, %v259
  %v340 = vpack.c.b16 %v268, %v260
  %v341 = vpack.c.b16 %v269, %v261
  %v342 = vpack.c.b16 %v270, %v262
  %v343 = vpack.c.b16 %v271, %v263
  %v344 = vpack.c.b16 %v272, %v264
  %v345 = vpack.c.b16 %v281, %v273
  %v346 = vpack.c.b16 %v282, %v274
  %v347 = vpack.c.b16 %v283, %v275
  %v348 = vpack.c.b16 %v284, %v276
  %v349 = vpack.c.b16 %v285, %v277
  %v350 = vpack.c.b16 %v286, %v278
  %v351 = vpack.c.b16 %v287, %v279
  %v352 = vpack.c.b16 %v288, %v280
  %417 = vmatpush.bf16.msra.mxu0 %v345
  %418 = vmatpush.bf16.msra.mxu0 %v337
  %419 = vmatpush.bf16.msra.mxu0 %v329
  %420 = vmatpush.bf16.msra.mxu0 %v321
  %421 = vmatpush.bf16.msra.mxu0 %v313
  %422 = vmatpush.bf16.msra.mxu0 %v305
  %423 = vmatpush.bf16.msra.mxu0 %v297
  %424 = vmatpush.bf16.msra.mxu0 %v289
  %425 = vmatmul.bf16.gmra.mxu0 %v14
  %v426 = vpop.f32.mrf.mxu0
  %v427 = vadd.f32 %v81, %v426
  %v428 = vpop.f32.mrf.mxu0
  %429 = vdwg.mxu0
  %430 = vmatpush.bf16.msra.mxu0 %v346
  %431 = vmatpush.bf16.msra.mxu0 %v338
  %432 = vmatpush.bf16.msra.mxu0 %v330
  %433 = vmatpush.bf16.msra.mxu0 %v322
  %434 = vmatpush.bf16.msra.mxu0 %v314
  %435 = vmatpush.bf16.msra.mxu0 %v306
  %436 = vmatpush.bf16.msra.mxu0 %v298
  %437 = vmatpush.bf16.msra.mxu0 %v290
  %438 = vmatmul.bf16.gmra.mxu0 %v14
  %v439 = vpop.f32.mrf.mxu0
  %v440 = vadd.f32 %v82, %v439
  %v441 = vpop.f32.mrf.mxu0
  %442 = vdwg.mxu0
  %443 = vmatpush.bf16.msra.mxu0 %v347
  %444 = vmatpush.bf16.msra.mxu0 %v339
  %445 = vmatpush.bf16.msra.mxu0 %v331
  %446 = vmatpush.bf16.msra.mxu0 %v323
  %447 = vmatpush.bf16.msra.mxu0 %v315
  %448 = vmatpush.bf16.msra.mxu0 %v307
  %449 = vmatpush.bf16.msra.mxu0 %v299
  %450 = vmatpush.bf16.msra.mxu0 %v291
  %451 = vmatmul.bf16.gmra.mxu0 %v14
  %v452 = vpop.f32.mrf.mxu0
  %v453 = vadd.f32 %v83, %v452
  %v454 = vpop.f32.mrf.mxu0
  %455 = vdwg.mxu0
  %456 = vmatpush.bf16.msra.mxu0 %v348
  %457 = vmatpush.bf16.msra.mxu0 %v340
  %458 = vmatpush.bf16.msra.mxu0 %v332
  %459 = vmatpush.bf16.msra.mxu0 %v324
  %460 = vmatpush.bf16.msra.mxu0 %v316
  %461 = vmatpush.bf16.msra.mxu0 %v308
  %462 = vmatpush.bf16.msra.mxu0 %v300
  %463 = vmatpush.bf16.msra.mxu0 %v292
  %464 = vmatmul.bf16.gmra.mxu0 %v14
  %v465 = vpop.f32.mrf.mxu0
  %v466 = vadd.f32 %v84, %v465
  %v467 = vpop.f32.mrf.mxu0
  %468 = vdwg.mxu0
  %469 = vmatpush.bf16.msra.mxu0 %v349
  %470 = vmatpush.bf16.msra.mxu0 %v341
  %471 = vmatpush.bf16.msra.mxu0 %v333
  %472 = vmatpush.bf16.msra.mxu0 %v325
  %473 = vmatpush.bf16.msra.mxu0 %v317
  %474 = vmatpush.bf16.msra.mxu0 %v309
  %475 = vmatpush.bf16.msra.mxu0 %v301
  %476 = vmatpush.bf16.msra.mxu0 %v293
  %477 = vmatmul.bf16.gmra.mxu0 %v14
  %v478 = vpop.f32.mrf.mxu0
  %v479 = vadd.f32 %v85, %v478
  %v480 = vpop.f32.mrf.mxu0
  %481 = vdwg.mxu0
  %482 = vmatpush.bf16.msra.mxu0 %v350
  %483 = vmatpush.bf16.msra.mxu0 %v342
  %484 = vmatpush.bf16.msra.mxu0 %v334
  %485 = vmatpush.bf16.msra.mxu0 %v326
  %486 = vmatpush.bf16.msra.mxu0 %v318
  %487 = vmatpush.bf16.msra.mxu0 %v310
  %488 = vmatpush.bf16.msra.mxu0 %v302
  %489 = vmatpush.bf16.msra.mxu0 %v294
  %490 = vmatmul.bf16.gmra.mxu0 %v14
  %v491 = vpop.f32.mrf.mxu0
  %v492 = vadd.f32 %v86, %v491
  %v493 = vpop.f32.mrf.mxu0
  %494 = vdwg.mxu0
  %495 = vmatpush.bf16.msra.mxu0 %v351
  %496 = vmatpush.bf16.msra.mxu0 %v343
  %497 = vmatpush.bf16.msra.mxu0 %v335
  %498 = vmatpush.bf16.msra.mxu0 %v327
  %499 = vmatpush.bf16.msra.mxu0 %v319
  %500 = vmatpush.bf16.msra.mxu0 %v311
  %501 = vmatpush.bf16.msra.mxu0 %v303
  %502 = vmatpush.bf16.msra.mxu0 %v295
  %503 = vmatmul.bf16.gmra.mxu0 %v14
  %v504 = vpop.f32.mrf.mxu0
  %v505 = vadd.f32 %v87, %v504
  %v506 = vpop.f32.mrf.mxu0
  %507 = vdwg.mxu0
  %508 = vmatpush.bf16.msra.mxu0 %v352
  %509 = vmatpush.bf16.msra.mxu0 %v344
  %510 = vmatpush.bf16.msra.mxu0 %v336
  %511 = vmatpush.bf16.msra.mxu0 %v328
  %512 = vmatpush.bf16.msra.mxu0 %v320
  %513 = vmatpush.bf16.msra.mxu0 %v312
  %514 = vmatpush.bf16.msra.mxu0 %v304
  %515 = vmatpush.bf16.msra.mxu0 %v296
  %516 = vmatmul.bf16.gmra.mxu0 %v14
  %v517 = vpop.f32.mrf.mxu0
  %v518 = vadd.f32 %v88, %v517
  %v519 = vpop.f32.mrf.mxu0
  %520 = vdwg.mxu0
  %521 = vst [vmem:[%s3] sm:$0xff] %v427
  %522 = vst [vmem:[%s3 + $0x8] sm:$0xff] %v440
  %523 = vst [vmem:[%s3 + $0x10] sm:$0xff] %v453
  %524 = vst [vmem:[%s3 + $0x18] sm:$0xff] %v466
  %525 = vst [vmem:[%s3 + $0x20] sm:$0xff] %v479
  %526 = vst [vmem:[%s3 + $0x28] sm:$0xff] %v492
  %527 = vst [vmem:[%s3 + $0x30] sm:$0xff] %v505
  %528 = vst [vmem:[%s3 + $0x38] sm:$0xff] %v518
  // Predicated region
  $region14: #{vgg_forward.33} parent=0 // pred_check
    _
  $region15: #{vgg_forward.33} parent=0 // pred_check_branch
    %530 = sbr.rel (0) target = $region17
  $region16: #{vgg_forward.33} parent=0 // pred_region
    _
  $region17: #{vgg_forward.33} parent=0 // pred_fallthru
    _
  // Predicated region
  $region18: #{vgg_forward.33} parent=0 // pred_check
    _
  $region19: #{vgg_forward.33} parent=0 // pred_check_branch
    %532 = sbr.rel (0) target = $region21
  $region20: #{vgg_forward.33} parent=0 // pred_region
    _
  $region21: #{vgg_forward.33} parent=0 // pred_fallthru
    _

</llo_original>
